<compile_context>
chip_gen: v7x
topology: tpu7x:2x2x1
jax: 0.10.0
libtpu: 0.0.40
codegen_flags: <defaults>
</compile_context>

<pallas_src>
import functools

import jax
import jax.numpy as jnp
from jax.experimental import pallas as pl
from jax.experimental.pallas import tpu as pltpu


# -----------------------------------------------------------------------------
# Tiling plan helpers (shared by weight pre-packing and the kernel call site)
# -----------------------------------------------------------------------------
def _round_up(v, m):
    return (v + m - 1) // m * m


def _k_plan(K):
    """Padded contraction length Kp and K-tile tk (Kp % tk == 0)."""
    if K <= 1024:
        Kp = _round_up(K, 32)          # full-extent K block -> minimal padding
        return Kp, Kp
    Kp = _round_up(K, 128)
    for tk in (512, 384, 256, 128):
        if Kp % tk == 0:
            return Kp, tk
    return Kp, 128


def _n_plan(N):
    Np = _round_up(N, 128)
    tn = 256 if Np % 256 == 0 else 128  # lane-dense, MXU-wide on v6e/v7x
    return Np, tn


def _m_plan(M):
    if M <= 256:
        Mp = _round_up(M, 8)
        return Mp, Mp
    Mp = _round_up(M, 256)
    return Mp, 256                      # >=2 M-tiles for big M -> megacore on v7x


# -----------------------------------------------------------------------------
# Pallas kernels: fused matmul + bias (+ residual) (+ ReLU)
# -----------------------------------------------------------------------------
def _mm_kernel_single(x_ref, w_ref, b_ref, *rest, relu, has_residual):
    """Single K step: write the output tile directly (no scratch round-trip)."""
    if has_residual:
        r_ref, o_ref = rest
    else:
        (o_ref,) = rest
    acc = jnp.dot(x_ref[...], w_ref[...], preferred_element_type=jnp.float32)
    out = acc + b_ref[...]
    if has_residual:
        out = out + r_ref[...]
    if relu:
        out = jnp.maximum(out, 0.0)
    o_ref[...] = out.astype(o_ref.dtype)


def _mm_kernel_multi(x_ref, w_ref, b_ref, *rest, relu, has_residual):
    """K-tiled: accumulate in f32 VMEM scratch, epilogue on the last K step."""
    if has_residual:
        r_ref, o_ref, acc_ref = rest
    else:
        o_ref, acc_ref = rest
    k = pl.program_id(2)

    @pl.when(k == 0)
    def _():
        acc_ref[...] = jnp.zeros_like(acc_ref)

    acc_ref[...] += jnp.dot(x_ref[...], w_ref[...],
                            preferred_element_type=jnp.float32)

    @pl.when(k == pl.num_programs(2) - 1)
    def _():
        out = acc_ref[...] + b_ref[...]
        if has_residual:
            out = out + r_ref[...]
        if relu:
            out = jnp.maximum(out, 0.0)
        o_ref[...] = out.astype(o_ref.dtype)


def fused_matmul_packed(x, w_packed, bias, residual=None, relu=False):
    """out = relu((x @ w_packed)[:M,:N] + bias [+ residual]).

    x        : (M, K) float  (cast to bf16 MXU operand here)
    w_packed : (Kp, Np) bf16 (BN scale folded in, pre-padded, pre-transposed)
    bias     : (N,) f32      (unpadded; N is recovered statically from its shape)
    residual : optional (M, N) f32
    """
    M, K = x.shape
    KpW, NpW = w_packed.shape
    N = bias.shape[0]

    Kp, tk = _k_plan(K)
    Np, tn = _n_plan(N)
    Mp, tm = _m_plan(M)
    assert (Kp, Np) == (KpW, NpW), "weight packing does not match call-site plan"

    nm, nn, nk = Mp // tm, Np // tn, Kp // tk

    xp = jnp.zeros((Mp, Kp), jnp.bfloat16).at[:M, :K].set(x.astype(jnp.bfloat16))
    bp = jnp.zeros((1, Np), jnp.float32).at[0, :N].set(bias.astype(jnp.float32))

    has_residual = residual is not None
    inputs = [xp, w_packed, bp]
    in_specs = [
        pl.BlockSpec((tm, tk), lambda i, j, k: (i, k)),
        pl.BlockSpec((tk, tn), lambda i, j, k: (k, j)),
        pl.BlockSpec((1, tn), lambda i, j, k: (0, j)),
    ]
    if has_residual:
        rp = jnp.zeros((Mp, Np), jnp.float32).at[:M, :N].set(
            residual.astype(jnp.float32))
        inputs.append(rp)
        in_specs.append(pl.BlockSpec((tm, tn), lambda i, j, k: (i, j)))

    if nk == 1:
        kernel = functools.partial(_mm_kernel_single, relu=relu,
                                   has_residual=has_residual)
        scratch_shapes = []
    else:
        kernel = functools.partial(_mm_kernel_multi, relu=relu,
                                   has_residual=has_residual)
        scratch_shapes = [pltpu.VMEM((tm, tn), jnp.float32)]

    out = pl.pallas_call(
        kernel,
        out_shape=jax.ShapeDtypeStruct((Mp, Np), jnp.float32),
        grid_spec=pltpu.PrefetchScalarGridSpec(
            num_scalar_prefetch=0,
            grid=(nm, nn, nk),
            in_specs=in_specs,
            out_specs=pl.BlockSpec((tm, tn), lambda i, j, k: (i, j)),
            scratch_shapes=scratch_shapes,
        ),
        compiler_params=pltpu.CompilerParams(
            dimension_semantics=("parallel", "parallel", "arbitrary")),
    )(*inputs)
    return out[:M, :N]


# -----------------------------------------------------------------------------
# im2col + packed conv wrappers (plain JAX strided slices / reshapes only)
# -----------------------------------------------------------------------------
# TODO(synk): fuse the 3x3 patch gather into the kernel (shifted-window DMAs)
# to avoid the 9x activation HBM traffic of im2col.
def _im2col3x3(x, stride):
    # x: NHWC, 3x3 kernel, padding=1, static Python `stride`.
    n, h, w, c = x.shape
    xp = jnp.pad(x, ((0, 0), (1, 1), (1, 1), (0, 0)))
    ho = (h + 2 - 3) // stride + 1
    wo = (w + 2 - 3) // stride + 1
    cols = []
    for i in range(3):
        for j in range(3):
            cols.append(xp[:, i:i + stride * ho:stride,
                           j:j + stride * wo:stride, :])
    patches = jnp.concatenate(cols, axis=-1)        # (N, Ho, Wo, 9*C)
    return patches.reshape(n * ho * wo, 9 * c), (n, ho, wo)


def conv3x3_packed(x, wb, stride, relu, residual=None):
    """3x3 conv (pad=1, no bias) + folded-BN + optional residual + optional ReLU."""
    patches, (n, ho, wo) = _im2col3x3(x, stride)
    cout = wb["b"].shape[0]
    res = None if residual is None else residual.reshape(n * ho * wo, cout)
    out = fused_matmul_packed(patches, wb["w"], wb["b"], residual=res, relu=relu)
    return out.reshape(n, ho, wo, cout)


def conv1x1_packed(x, wb, stride):
    """1x1 conv (no bias, stride s) + folded-BN -- downsample shortcut."""
    xs = x[:, ::stride, ::stride, :]
    n, ho, wo, cin = xs.shape
    cout = wb["b"].shape[0]
    out = fused_matmul_packed(xs.reshape(n * ho * wo, cin), wb["w"], wb["b"],
                              relu=False)
    return out.reshape(n, ho, wo, cout)


def basic_block_packed(x, blk, stride):
    out = conv3x3_packed(x, blk["conv1"], stride=stride, relu=True)
    if "down" in blk:
        shortcut = conv1x1_packed(x, blk["down"], stride=stride)
    else:
        shortcut = x
    # PyTorch BasicBlock: out = relu(bn2(conv2(out)) + shortcut)
    out = conv3x3_packed(out, blk["conv2"], stride=1, relu=True,
                         residual=shortcut)
    return out


# -----------------------------------------------------------------------------
# BN folding + one-time weight pre-packing (runs eagerly, outside the forward)
# -----------------------------------------------------------------------------
def _bn_fold(bn, eps=1e-5):
    scale = bn["gamma"] / jnp.sqrt(bn["var"] + eps)
    bias = bn["beta"] - bn["mean"] * scale
    return scale, bias


def _pack_matmul_weight(wmat, scale, bias):
    """wmat (K,N) f32 -> padded bf16 with per-column scale folded in."""
    K, N = wmat.shape
    Kp, _ = _k_plan(K)
    Np, _ = _n_plan(N)
    w_scaled = (wmat * scale[None, :]).astype(jnp.bfloat16)
    wp = jnp.zeros((Kp, Np), jnp.bfloat16).at[:K, :N].set(w_scaled)
    return {"w": wp, "b": bias.astype(jnp.float32)}


def _pack_conv3x3(w_oihw, bn):
    cout = w_oihw.shape[0]
    # (O,I,kh,kw) -> (kh,kw,I,O) -> (kh*kw*I, O)  (matches im2col ordering)
    wmat = jnp.transpose(w_oihw, (2, 3, 1, 0)).reshape(-1, cout)
    scale, bias = _bn_fold(bn)
    return _pack_matmul_weight(wmat, scale, bias)


def _pack_conv1x1(w_oihw, bn):
    cout, cin = w_oihw.shape[:2]
    wmat = jnp.transpose(w_oihw.reshape(cout, cin), (1, 0))  # (Cin, Cout)
    scale, bias = _bn_fold(bn)
    return _pack_matmul_weight(wmat, scale, bias)


def _pack_linear(w, b):
    n = w.shape[1]
    return _pack_matmul_weight(w, jnp.ones((n,), jnp.float32), b)


def pack_params(raw):
    packed = {"stem": _pack_conv3x3(raw["conv1_w"], raw["bn1"])}
    for li in range(1, 5):
        blocks = []
        for blk in raw[f"layer{li}"]:
            pb = {
                "conv1": _pack_conv3x3(blk["conv1_w"], blk["bn1"]),
                "conv2": _pack_conv3x3(blk["conv2_w"], blk["bn2"]),
            }
            if "down_w" in blk:
                pb["down"] = _pack_conv1x1(blk["down_w"], blk["down_bn"])
            blocks.append(pb)
        packed[f"layer{li}"] = blocks
    packed["fc1"] = _pack_linear(raw["fc1_w"], raw["fc1_b"])
    packed["fc2"] = _pack_linear(raw["fc2_w"], raw["fc2_b"])
    packed["fc3"] = _pack_linear(raw["fc3_w"], raw["fc3_b"])
    return packed


# -----------------------------------------------------------------------------
# Deterministic raw parameter construction (mirrors ResNet18_Dense.__init__)
# -----------------------------------------------------------------------------
def _init_conv(key, cout, cin, kh, kw):
    fan_in = cin * kh * kw
    return (jax.random.normal(key, (cout, cin, kh, kw), jnp.float32)
            / jnp.sqrt(float(fan_in)))


def _init_bn(key, c):
    k1, k2, k3 = jax.random.split(key, 3)
    return dict(
        gamma=1.0 + 0.1 * jax.random.normal(k1, (c,), jnp.float32),
        beta=0.1 * jax.random.normal(k2, (c,), jnp.float32),
        mean=0.1 * jax.random.normal(k3, (c,), jnp.float32),
        var=jnp.ones((c,), jnp.float32),
    )


def _init_linear(key, cin, cout):
    k1, k2 = jax.random.split(key)
    w = jax.random.normal(k1, (cin, cout), jnp.float32) / jnp.sqrt(float(cin))
    b = 0.1 * jax.random.normal(k2, (cout,), jnp.float32)
    return w, b


# Static architecture description (num_blocks = [2,2,2,2]).  Strides must be
# Python ints so the strided im2col slicing stays static under jit.
LAYER_STRIDES = ((1, 1), (2, 1), (2, 1), (2, 1))


def init_resnet18_dense(key, base_width=16, num_classes=10):
    keys = iter(jax.random.split(key, 256))
    params = {}
    params["conv1_w"] = _init_conv(next(keys), base_width, 3, 3, 3)
    params["bn1"] = _init_bn(next(keys), base_width)

    in_planes = base_width
    planes_cfg = [base_width, base_width * 2, base_width * 4, base_width * 8]
    for li, planes in enumerate(planes_cfg, start=1):
        blocks = []
        for stride in LAYER_STRIDES[li - 1]:
            blk = {
                "conv1_w": _init_conv(next(keys), planes, in_planes, 3, 3),
                "bn1": _init_bn(next(keys), planes),
                "conv2_w": _init_conv(next(keys), planes, planes, 3, 3),
                "bn2": _init_bn(next(keys), planes),
            }
            if stride != 1 or in_planes != planes:
                blk["down_w"] = _init_conv(next(keys), planes, in_planes, 1, 1)
                blk["down_bn"] = _init_bn(next(keys), planes)
            blocks.append(blk)
            in_planes = planes
        params[f"layer{li}"] = blocks

    params["fc1_w"], params["fc1_b"] = _init_linear(next(keys), base_width * 8, 1024)
    params["fc2_w"], params["fc2_b"] = _init_linear(next(keys), 1024, 1024)
    params["fc3_w"], params["fc3_b"] = _init_linear(next(keys), 1024, num_classes)
    return params


# -----------------------------------------------------------------------------
# Forward pass (probe=False path of ResNet18_Dense.forward)
# -----------------------------------------------------------------------------
def resnet18_dense_forward(x_nchw, packed):
    # layout: PyTorch NCHW input -> NHWC for the kernel pipeline.
    x = jnp.transpose(x_nchw.astype(jnp.float32), (0, 2, 3, 1))

    out = conv3x3_packed(x, packed["stem"], stride=1, relu=True)
    for li in range(4):
        for bi, blk in enumerate(packed[f"layer{li + 1}"]):
            out = basic_block_packed(out, blk, LAYER_STRIDES[li][bi])

    # AdaptiveAvgPool2d(1): mean over spatial dims (small reduction, JAX glue).
    pooled = jnp.mean(out, axis=(1, 2))  # (N, 8*base_width)

    # fc1/fc2/fc3 are 1x1 convs on a 1x1 map == biased linears (no ReLU between,
    # exactly as in the PyTorch forward).
    d = fused_matmul_packed(pooled, packed["fc1"]["w"], packed["fc1"]["b"])
    d = fused_matmul_packed(d, packed["fc2"]["w"], packed["fc2"]["b"])
    d = fused_matmul_packed(d, packed["fc3"]["w"], packed["fc3"]["b"])
    return d  # (N, num_classes) == out.flatten(1)


if __name__ == "__main__":
    key = jax.random.PRNGKey(0)
    k_params, k_x = jax.random.split(key)

    BASE_WIDTH = 16        # small base width for a quick synthetic run
    NUM_CLASSES = 10
    raw_params = init_resnet18_dense(k_params, base_width=BASE_WIDTH,
                                     num_classes=NUM_CLASSES)
    packed_params = pack_params(raw_params)   # one-time: fold BN, pad, bf16

    x = jax.random.normal(k_x, (2, 3, 16, 16), jnp.float32)  # NCHW, like PyTorch

    fwd = jax.jit(resnet18_dense_forward)
    logits = jax.block_until_ready(fwd(x, packed_params))

    assert logits.shape == (2, NUM_CLASSES), logits.shape
    assert bool(jnp.all(jnp.isfinite(logits)))
    print("KERNEL_OK")
</pallas_src>

<mosaic_0001>
module attributes {stable_mosaic.version = 11 : i64} {
  func.func @_mm_kernel_single(%arg0: i32, %arg1: i32, %arg2: i32, %arg3: memref<256x32xbf16, #tpu.memory_space<vmem>>, %arg4: memref<32x128xbf16, #tpu.memory_space<vmem>>, %arg5: memref<1x128xf32, #tpu.memory_space<vmem>>, %arg6: memref<256x128xf32, #tpu.memory_space<vmem>>) attributes {dimension_semantics = [#tpu.dimension_semantics<parallel>, #tpu.dimension_semantics<parallel>, #tpu.dimension_semantics<arbitrary>], iteration_bounds = array<i64: 2, 1, 1>, scalar_prefetch = 0 : i64, scratch_operands = 0 : i64, tpu.core_type = #tpu.core_type<tc>, window_params = [{transform_indices = @transform_0, window_bounds = array<i64: 256, 32>}, {transform_indices = @transform_1, window_bounds = array<i64: 32, 128>}, {transform_indices = @transform_2, window_bounds = array<i64: 1, 128>}, {transform_indices = @transform_3, window_bounds = array<i64: 256, 128>}]} {
    %c0 = arith.constant 0 : index
    %c0_0 = arith.constant 0 : index
    %0 = vector.load %arg3[%c0, %c0_0] : memref<256x32xbf16, #tpu.memory_space<vmem>>, vector<256x32xbf16>
    %c0_1 = arith.constant 0 : index
    %c0_2 = arith.constant 0 : index
    %1 = vector.load %arg4[%c0_1, %c0_2] : memref<32x128xbf16, #tpu.memory_space<vmem>>, vector<32x128xbf16>
    %cst = arith.constant dense<0.000000e+00> : vector<256x128xf32>
    %2 = tpu.matmul %0, %1, %cst {dimension_numbers = #tpu.dot_dimension_numbers<[1], [0], [0], [1], [0, 0, 1, 1], [], []>} : vector<256x32xbf16>, vector<32x128xbf16>, vector<256x128xf32> -> vector<256x128xf32>
    %c0_3 = arith.constant 0 : index
    %c0_4 = arith.constant 0 : index
    %3 = vector.load %arg5[%c0_3, %c0_4] : memref<1x128xf32, #tpu.memory_space<vmem>>, vector<1x128xf32>
    %4 = vector.broadcast %3 : vector<1x128xf32> to vector<256x128xf32>
    %5 = arith.addf %2, %4 : vector<256x128xf32>
    %cst_5 = arith.constant 0.000000e+00 : f32
    %6 = vector.broadcast %cst_5 : f32 to vector<256x128xf32>
    %7 = arith.maximumf %5, %6 : vector<256x128xf32>
    %c0_6 = arith.constant 0 : index
    %c0_7 = arith.constant 0 : index
    %8 = vector.load %arg6[%c0_6, %c0_7] : memref<256x128xf32, #tpu.memory_space<vmem>>, vector<256x128xf32>
    tpu.vector_store %arg6[%c0_6, %c0_7], %7 {strides = array<i32>} : memref<256x128xf32, #tpu.memory_space<vmem>>, vector<256x128xf32>,
    return
  }
  func.func @transform_0(%arg0: i32, %arg1: i32, %arg2: i32) -> (i32, i32) {
    %c0_i32 = arith.constant 0 : i32
    return %arg0, %arg2 : i32, i32
  }
  func.func @transform_1(%arg0: i32, %arg1: i32, %arg2: i32) -> (i32, i32) {
    %c0_i32 = arith.constant 0 : i32
    return %arg2, %arg1 : i32, i32
  }
  func.func @transform_2(%arg0: i32, %arg1: i32, %arg2: i32) -> (i32, i32) {
    %c0_i32 = arith.constant 0 : i32
    %c0_i32_0 = arith.constant 0 : i32
    return %c0_i32, %arg1 : i32, i32
  }
  func.func @transform_3(%arg0: i32, %arg1: i32, %arg2: i32) -> (i32, i32) {
    %c0_i32 = arith.constant 0 : i32
    return %arg0, %arg1 : i32, i32
  }
}

module attributes {stable_mosaic.version = 11 : i64} {
  func.func @_mm_kernel_single(%arg0: i32, %arg1: i32, %arg2: i32, %arg3: memref<256x160xbf16, #tpu.memory_space<vmem>>, %arg4: memref<160x128xbf16, #tpu.memory_space<vmem>>, %arg5: memref<1x128xf32, #tpu.memory_space<vmem>>, %arg6: memref<256x128xf32, #tpu.memory_space<vmem>>) attributes {dimension_semantics = [#tpu.dimension_semantics<parallel>, #tpu.dimension_semantics<parallel>, #tpu.dimension_semantics<arbitrary>], iteration_bounds = array<i64: 2, 1, 1>, scalar_prefetch = 0 : i64, scratch_operands = 0 : i64, tpu.core_type = #tpu.core_type<tc>, window_params = [{transform_indices = @transform_0, window_bounds = array<i64: 256, 160>}, {transform_indices = @transform_1, window_bounds = array<i64: 160, 128>}, {transform_indices = @transform_2, window_bounds = array<i64: 1, 128>}, {transform_indices = @transform_3, window_bounds = array<i64: 256, 128>}]} {
    %c0 = arith.constant 0 : index
    %c0_0 = arith.constant 0 : index
    %0 = vector.load %arg3[%c0, %c0_0] : memref<256x160xbf16, #tpu.memory_space<vmem>>, vector<256x160xbf16>
    %c0_1 = arith.constant 0 : index
    %c0_2 = arith.constant 0 : index
    %1 = vector.load %arg4[%c0_1, %c0_2] : memref<160x128xbf16, #tpu.memory_space<vmem>>, vector<160x128xbf16>
    %cst = arith.constant dense<0.000000e+00> : vector<256x128xf32>
    %2 = tpu.matmul %0, %1, %cst {dimension_numbers = #tpu.dot_dimension_numbers<[1], [0], [0], [1], [0, 0, 1, 1], [], []>} : vector<256x160xbf16>, vector<160x128xbf16>, vector<256x128xf32> -> vector<256x128xf32>
    %c0_3 = arith.constant 0 : index
    %c0_4 = arith.constant 0 : index
    %3 = vector.load %arg5[%c0_3, %c0_4] : memref<1x128xf32, #tpu.memory_space<vmem>>, vector<1x128xf32>
    %4 = vector.broadcast %3 : vector<1x128xf32> to vector<256x128xf32>
    %5 = arith.addf %2, %4 : vector<256x128xf32>
    %cst_5 = arith.constant 0.000000e+00 : f32
    %6 = vector.broadcast %cst_5 : f32 to vector<256x128xf32>
    %7 = arith.maximumf %5, %6 : vector<256x128xf32>
    %c0_6 = arith.constant 0 : index
    %c0_7 = arith.constant 0 : index
    %8 = vector.load %arg6[%c0_6, %c0_7] : memref<256x128xf32, #tpu.memory_space<vmem>>, vector<256x128xf32>
    tpu.vector_store %arg6[%c0_6, %c0_7], %7 {strides = array<i32>} : memref<256x128xf32, #tpu.memory_space<vmem>>, vector<256x128xf32>,
    return
  }
  func.func @transform_0(%arg0: i32, %arg1: i32, %arg2: i32) -> (i32, i32) {
    %c0_i32 = arith.constant 0 : i32
    return %arg0, %arg2 : i32, i32
  }
  func.func @transform_1(%arg0: i32, %arg1: i32, %arg2: i32) -> (i32, i32) {
    %c0_i32 = arith.constant 0 : i32
    return %arg2, %arg1 : i32, i32
  }
  func.func @transform_2(%arg0: i32, %arg1: i32, %arg2: i32) -> (i32, i32) {
    %c0_i32 = arith.constant 0 : i32
    %c0_i32_0 = arith.constant 0 : i32
    return %c0_i32, %arg1 : i32, i32
  }
  func.func @transform_3(%arg0: i32, %arg1: i32, %arg2: i32) -> (i32, i32) {
    %c0_i32 = arith.constant 0 : i32
    return %arg0, %arg1 : i32, i32
  }
}

module attributes {stable_mosaic.version = 11 : i64} {
  func.func @_mm_kernel_single(%arg0: i32, %arg1: i32, %arg2: i32, %arg3: memref<256x160xbf16, #tpu.memory_space<vmem>>, %arg4: memref<160x128xbf16, #tpu.memory_space<vmem>>, %arg5: memref<1x128xf32, #tpu.memory_space<vmem>>, %arg6: memref<256x128xf32, #tpu.memory_space<vmem>>, %arg7: memref<256x128xf32, #tpu.memory_space<vmem>>) attributes {dimension_semantics = [#tpu.dimension_semantics<parallel>, #tpu.dimension_semantics<parallel>, #tpu.dimension_semantics<arbitrary>], iteration_bounds = array<i64: 2, 1, 1>, scalar_prefetch = 0 : i64, scratch_operands = 0 : i64, tpu.core_type = #tpu.core_type<tc>, window_params = [{transform_indices = @transform_0, window_bounds = array<i64: 256, 160>}, {transform_indices = @transform_1, window_bounds = array<i64: 160, 128>}, {transform_indices = @transform_2, window_bounds = array<i64: 1, 128>}, {transform_indices = @transform_3, window_bounds = array<i64: 256, 128>}, {transform_indices = @transform_4, window_bounds = array<i64: 256, 128>}]} {
    %c0 = arith.constant 0 : index
    %c0_0 = arith.constant 0 : index
    %0 = vector.load %arg3[%c0, %c0_0] : memref<256x160xbf16, #tpu.memory_space<vmem>>, vector<256x160xbf16>
    %c0_1 = arith.constant 0 : index
    %c0_2 = arith.constant 0 : index
    %1 = vector.load %arg4[%c0_1, %c0_2] : memref<160x128xbf16, #tpu.memory_space<vmem>>, vector<160x128xbf16>
    %cst = arith.constant dense<0.000000e+00> : vector<256x128xf32>
    %2 = tpu.matmul %0, %1, %cst {dimension_numbers = #tpu.dot_dimension_numbers<[1], [0], [0], [1], [0, 0, 1, 1], [], []>} : vector<256x160xbf16>, vector<160x128xbf16>, vector<256x128xf32> -> vector<256x128xf32>
    %c0_3 = arith.constant 0 : index
    %c0_4 = arith.constant 0 : index
    %3 = vector.load %arg5[%c0_3, %c0_4] : memref<1x128xf32, #tpu.memory_space<vmem>>, vector<1x128xf32>
    %4 = vector.broadcast %3 : vector<1x128xf32> to vector<256x128xf32>
    %5 = arith.addf %2, %4 : vector<256x128xf32>
    %c0_5 = arith.constant 0 : index
    %c0_6 = arith.constant 0 : index
    %6 = vector.load %arg6[%c0_5, %c0_6] : memref<256x128xf32, #tpu.memory_space<vmem>>, vector<256x128xf32>
    %7 = arith.addf %5, %6 : vector<256x128xf32>
    %cst_7 = arith.constant 0.000000e+00 : f32
    %8 = vector.broadcast %cst_7 : f32 to vector<256x128xf32>
    %9 = arith.maximumf %7, %8 : vector<256x128xf32>
    %c0_8 = arith.constant 0 : index
    %c0_9 = arith.constant 0 : index
    %10 = vector.load %arg7[%c0_8, %c0_9] : memref<256x128xf32, #tpu.memory_space<vmem>>, vector<256x128xf32>
    tpu.vector_store %arg7[%c0_8, %c0_9], %9 {strides = array<i32>} : memref<256x128xf32, #tpu.memory_space<vmem>>, vector<256x128xf32>,
    return
  }
  func.func @transform_0(%arg0: i32, %arg1: i32, %arg2: i32) -> (i32, i32) {
    %c0_i32 = arith.constant 0 : i32
    return %arg0, %arg2 : i32, i32
  }
  func.func @transform_1(%arg0: i32, %arg1: i32, %arg2: i32) -> (i32, i32) {
    %c0_i32 = arith.constant 0 : i32
    return %arg2, %arg1 : i32, i32
  }
  func.func @transform_2(%arg0: i32, %arg1: i32, %arg2: i32) -> (i32, i32) {
    %c0_i32 = arith.constant 0 : i32
    %c0_i32_0 = arith.constant 0 : i32
    return %c0_i32, %arg1 : i32, i32
  }
  func.func @transform_3(%arg0: i32, %arg1: i32, %arg2: i32) -> (i32, i32) {
    %c0_i32 = arith.constant 0 : i32
    return %arg0, %arg1 : i32, i32
  }
  func.func @transform_4(%arg0: i32, %arg1: i32, %arg2: i32) -> (i32, i32) {
    %c0_i32 = arith.constant 0 : i32
    return %arg0, %arg1 : i32, i32
  }
}

module attributes {stable_mosaic.version = 11 : i64} {
  func.func @_mm_kernel_single(%arg0: i32, %arg1: i32, %arg2: i32, %arg3: memref<128x160xbf16, #tpu.memory_space<vmem>>, %arg4: memref<160x128xbf16, #tpu.memory_space<vmem>>, %arg5: memref<1x128xf32, #tpu.memory_space<vmem>>, %arg6: memref<128x128xf32, #tpu.memory_space<vmem>>) attributes {dimension_semantics = [#tpu.dimension_semantics<parallel>, #tpu.dimension_semantics<parallel>, #tpu.dimension_semantics<arbitrary>], iteration_bounds = array<i64: 1, 1, 1>, scalar_prefetch = 0 : i64, scratch_operands = 0 : i64, tpu.core_type = #tpu.core_type<tc>, window_params = [{transform_indices = @transform_0, window_bounds = array<i64: 128, 160>}, {transform_indices = @transform_1, window_bounds = array<i64: 160, 128>}, {transform_indices = @transform_2, window_bounds = array<i64: 1, 128>}, {transform_indices = @transform_3, window_bounds = array<i64: 128, 128>}]} {
    %c0 = arith.constant 0 : index
    %c0_0 = arith.constant 0 : index
    %0 = vector.load %arg3[%c0, %c0_0] : memref<128x160xbf16, #tpu.memory_space<vmem>>, vector<128x160xbf16>
    %c0_1 = arith.constant 0 : index
    %c0_2 = arith.constant 0 : index
    %1 = vector.load %arg4[%c0_1, %c0_2] : memref<160x128xbf16, #tpu.memory_space<vmem>>, vector<160x128xbf16>
    %cst = arith.constant dense<0.000000e+00> : vector<128x128xf32>
    %2 = tpu.matmul %0, %1, %cst {dimension_numbers = #tpu.dot_dimension_numbers<[1], [0], [0], [1], [0, 0, 1, 1], [], []>} : vector<128x160xbf16>, vector<160x128xbf16>, vector<128x128xf32> -> vector<128x128xf32>
    %c0_3 = arith.constant 0 : index
    %c0_4 = arith.constant 0 : index
    %3 = vector.load %arg5[%c0_3, %c0_4] : memref<1x128xf32, #tpu.memory_space<vmem>>, vector<1x128xf32>
    %4 = vector.broadcast %3 : vector<1x128xf32> to vector<128x128xf32>
    %5 = arith.addf %2, %4 : vector<128x128xf32>
    %cst_5 = arith.constant 0.000000e+00 : f32
    %6 = vector.broadcast %cst_5 : f32 to vector<128x128xf32>
    %7 = arith.maximumf %5, %6 : vector<128x128xf32>
    %c0_6 = arith.constant 0 : index
    %c0_7 = arith.constant 0 : index
    %8 = vector.load %arg6[%c0_6, %c0_7] : memref<128x128xf32, #tpu.memory_space<vmem>>, vector<128x128xf32>
    tpu.vector_store %arg6[%c0_6, %c0_7], %7 {strides = array<i32>} : memref<128x128xf32, #tpu.memory_space<vmem>>, vector<128x128xf32>,
    return
  }
  func.func @transform_0(%arg0: i32, %arg1: i32, %arg2: i32) -> (i32, i32) {
    %c0_i32 = arith.constant 0 : i32
    return %arg0, %arg2 : i32, i32
  }
  func.func @transform_1(%arg0: i32, %arg1: i32, %arg2: i32) -> (i32, i32) {
    %c0_i32 = arith.constant 0 : i32
    return %arg2, %arg1 : i32, i32
  }
  func.func @transform_2(%arg0: i32, %arg1: i32, %arg2: i32) -> (i32, i32) {
    %c0_i32 = arith.constant 0 : i32
    %c0_i32_0 = arith.constant 0 : i32
    return %c0_i32, %arg1 : i32, i32
  }
  func.func @transform_3(%arg0: i32, %arg1: i32, %arg2: i32) -> (i32, i32) {
    %c0_i32 = arith.constant 0 : i32
    return %arg0, %arg1 : i32, i32
  }
}

module attributes {stable_mosaic.version = 11 : i64} {
  func.func @_mm_kernel_single(%arg0: i32, %arg1: i32, %arg2: i32, %arg3: memref<128x288xbf16, #tpu.memory_space<vmem>>, %arg4: memref<288x128xbf16, #tpu.memory_space<vmem>>, %arg5: memref<1x128xf32, #tpu.memory_space<vmem>>, %arg6: memref<128x128xf32, #tpu.memory_space<vmem>>) attributes {dimension_semantics = [#tpu.dimension_semantics<parallel>, #tpu.dimension_semantics<parallel>, #tpu.dimension_semantics<arbitrary>], iteration_bounds = array<i64: 1, 1, 1>, scalar_prefetch = 0 : i64, scratch_operands = 0 : i64, tpu.core_type = #tpu.core_type<tc>, window_params = [{transform_indices = @transform_0, window_bounds = array<i64: 128, 288>}, {transform_indices = @transform_1, window_bounds = array<i64: 288, 128>}, {transform_indices = @transform_2, window_bounds = array<i64: 1, 128>}, {transform_indices = @transform_3, window_bounds = array<i64: 128, 128>}]} {
    %c0 = arith.constant 0 : index
    %c0_0 = arith.constant 0 : index
    %0 = vector.load %arg3[%c0, %c0_0] : memref<128x288xbf16, #tpu.memory_space<vmem>>, vector<128x288xbf16>
    %c0_1 = arith.constant 0 : index
    %c0_2 = arith.constant 0 : index
    %1 = vector.load %arg4[%c0_1, %c0_2] : memref<288x128xbf16, #tpu.memory_space<vmem>>, vector<288x128xbf16>
    %cst = arith.constant dense<0.000000e+00> : vector<128x128xf32>
    %2 = tpu.matmul %0, %1, %cst {dimension_numbers = #tpu.dot_dimension_numbers<[1], [0], [0], [1], [0, 0, 1, 1], [], []>} : vector<128x288xbf16>, vector<288x128xbf16>, vector<128x128xf32> -> vector<128x128xf32>
    %c0_3 = arith.constant 0 : index
    %c0_4 = arith.constant 0 : index
    %3 = vector.load %arg5[%c0_3, %c0_4] : memref<1x128xf32, #tpu.memory_space<vmem>>, vector<1x128xf32>
    %4 = vector.broadcast %3 : vector<1x128xf32> to vector<128x128xf32>
    %5 = arith.addf %2, %4 : vector<128x128xf32>
    %cst_5 = arith.constant 0.000000e+00 : f32
    %6 = vector.broadcast %cst_5 : f32 to vector<128x128xf32>
    %7 = arith.maximumf %5, %6 : vector<128x128xf32>
    %c0_6 = arith.constant 0 : index
    %c0_7 = arith.constant 0 : index
    %8 = vector.load %arg6[%c0_6, %c0_7] : memref<128x128xf32, #tpu.memory_space<vmem>>, vector<128x128xf32>
    tpu.vector_store %arg6[%c0_6, %c0_7], %7 {strides = array<i32>} : memref<128x128xf32, #tpu.memory_space<vmem>>, vector<128x128xf32>,
    return
  }
  func.func @transform_0(%arg0: i32, %arg1: i32, %arg2: i32) -> (i32, i32) {
    %c0_i32 = arith.constant 0 : i32
    return %arg0, %arg2 : i32, i32
  }
  func.func @transform_1(%arg0: i32, %arg1: i32, %arg2: i32) -> (i32, i32) {
    %c0_i32 = arith.constant 0 : i32
    return %arg2, %arg1 : i32, i32
  }
  func.func @transform_2(%arg0: i32, %arg1: i32, %arg2: i32) -> (i32, i32) {
    %c0_i32 = arith.constant 0 : i32
    %c0_i32_0 = arith.constant 0 : i32
    return %c0_i32, %arg1 : i32, i32
  }
  func.func @transform_3(%arg0: i32, %arg1: i32, %arg2: i32) -> (i32, i32) {
    %c0_i32 = arith.constant 0 : i32
    return %arg0, %arg1 : i32, i32
  }
}

module attributes {stable_mosaic.version = 11 : i64} {
  func.func @_mm_kernel_single(%arg0: i32, %arg1: i32, %arg2: i32, %arg3: memref<128x32xbf16, #tpu.memory_space<vmem>>, %arg4: memref<32x128xbf16, #tpu.memory_space<vmem>>, %arg5: memref<1x128xf32, #tpu.memory_space<vmem>>, %arg6: memref<128x128xf32, #tpu.memory_space<vmem>>) attributes {dimension_semantics = [#tpu.dimension_semantics<parallel>, #tpu.dimension_semantics<parallel>, #tpu.dimension_semantics<arbitrary>], iteration_bounds = array<i64: 1, 1, 1>, scalar_prefetch = 0 : i64, scratch_operands = 0 : i64, tpu.core_type = #tpu.core_type<tc>, window_params = [{transform_indices = @transform_0, window_bounds = array<i64: 128, 32>}, {transform_indices = @transform_1, window_bounds = array<i64: 32, 128>}, {transform_indices = @transform_2, window_bounds = array<i64: 1, 128>}, {transform_indices = @transform_3, window_bounds = array<i64: 128, 128>}]} {
    %c0 = arith.constant 0 : index
    %c0_0 = arith.constant 0 : index
    %0 = vector.load %arg3[%c0, %c0_0] : memref<128x32xbf16, #tpu.memory_space<vmem>>, vector<128x32xbf16>
    %c0_1 = arith.constant 0 : index
    %c0_2 = arith.constant 0 : index
    %1 = vector.load %arg4[%c0_1, %c0_2] : memref<32x128xbf16, #tpu.memory_space<vmem>>, vector<32x128xbf16>
    %cst = arith.constant dense<0.000000e+00> : vector<128x128xf32>
    %2 = tpu.matmul %0, %1, %cst {dimension_numbers = #tpu.dot_dimension_numbers<[1], [0], [0], [1], [0, 0, 1, 1], [], []>} : vector<128x32xbf16>, vector<32x128xbf16>, vector<128x128xf32> -> vector<128x128xf32>
    %c0_3 = arith.constant 0 : index
    %c0_4 = arith.constant 0 : index
    %3 = vector.load %arg5[%c0_3, %c0_4] : memref<1x128xf32, #tpu.memory_space<vmem>>, vector<1x128xf32>
    %4 = vector.broadcast %3 : vector<1x128xf32> to vector<128x128xf32>
    %5 = arith.addf %2, %4 : vector<128x128xf32>
    %c0_5 = arith.constant 0 : index
    %c0_6 = arith.constant 0 : index
    %6 = vector.load %arg6[%c0_5, %c0_6] : memref<128x128xf32, #tpu.memory_space<vmem>>, vector<128x128xf32>
    tpu.vector_store %arg6[%c0_5, %c0_6], %5 {strides = array<i32>} : memref<128x128xf32, #tpu.memory_space<vmem>>, vector<128x128xf32>,
    return
  }
  func.func @transform_0(%arg0: i32, %arg1: i32, %arg2: i32) -> (i32, i32) {
    %c0_i32 = arith.constant 0 : i32
    return %arg0, %arg2 : i32, i32
  }
  func.func @transform_1(%arg0: i32, %arg1: i32, %arg2: i32) -> (i32, i32) {
    %c0_i32 = arith.constant 0 : i32
    return %arg2, %arg1 : i32, i32
  }
  func.func @transform_2(%arg0: i32, %arg1: i32, %arg2: i32) -> (i32, i32) {
    %c0_i32 = arith.constant 0 : i32
    %c0_i32_0 = arith.constant 0 : i32
    return %c0_i32, %arg1 : i32, i32
  }
  func.func @transform_3(%arg0: i32, %arg1: i32, %arg2: i32) -> (i32, i32) {
    %c0_i32 = arith.constant 0 : i32
    return %arg0, %arg1 : i32, i32
  }
}

module attributes {stable_mosaic.version = 11 : i64} {
  func.func @_mm_kernel_single(%arg0: i32, %arg1: i32, %arg2: i32, %arg3: memref<128x288xbf16, #tpu.memory_space<vmem>>, %arg4: memref<288x128xbf16, #tpu.memory_space<vmem>>, %arg5: memref<1x128xf32, #tpu.memory_space<vmem>>, %arg6: memref<128x128xf32, #tpu.memory_space<vmem>>, %arg7: memref<128x128xf32, #tpu.memory_space<vmem>>) attributes {dimension_semantics = [#tpu.dimension_semantics<parallel>, #tpu.dimension_semantics<parallel>, #tpu.dimension_semantics<arbitrary>], iteration_bounds = array<i64: 1, 1, 1>, scalar_prefetch = 0 : i64, scratch_operands = 0 : i64, tpu.core_type = #tpu.core_type<tc>, window_params = [{transform_indices = @transform_0, window_bounds = array<i64: 128, 288>}, {transform_indices = @transform_1, window_bounds = array<i64: 288, 128>}, {transform_indices = @transform_2, window_bounds = array<i64: 1, 128>}, {transform_indices = @transform_3, window_bounds = array<i64: 128, 128>}, {transform_indices = @transform_4, window_bounds = array<i64: 128, 128>}]} {
    %c0 = arith.constant 0 : index
    %c0_0 = arith.constant 0 : index
    %0 = vector.load %arg3[%c0, %c0_0] : memref<128x288xbf16, #tpu.memory_space<vmem>>, vector<128x288xbf16>
    %c0_1 = arith.constant 0 : index
    %c0_2 = arith.constant 0 : index
    %1 = vector.load %arg4[%c0_1, %c0_2] : memref<288x128xbf16, #tpu.memory_space<vmem>>, vector<288x128xbf16>
    %cst = arith.constant dense<0.000000e+00> : vector<128x128xf32>
    %2 = tpu.matmul %0, %1, %cst {dimension_numbers = #tpu.dot_dimension_numbers<[1], [0], [0], [1], [0, 0, 1, 1], [], []>} : vector<128x288xbf16>, vector<288x128xbf16>, vector<128x128xf32> -> vector<128x128xf32>
    %c0_3 = arith.constant 0 : index
    %c0_4 = arith.constant 0 : index
    %3 = vector.load %arg5[%c0_3, %c0_4] : memref<1x128xf32, #tpu.memory_space<vmem>>, vector<1x128xf32>
    %4 = vector.broadcast %3 : vector<1x128xf32> to vector<128x128xf32>
    %5 = arith.addf %2, %4 : vector<128x128xf32>
    %c0_5 = arith.constant 0 : index
    %c0_6 = arith.constant 0 : index
    %6 = vector.load %arg6[%c0_5, %c0_6] : memref<128x128xf32, #tpu.memory_space<vmem>>, vector<128x128xf32>
    %7 = arith.addf %5, %6 : vector<128x128xf32>
    %cst_7 = arith.constant 0.000000e+00 : f32
    %8 = vector.broadcast %cst_7 : f32 to vector<128x128xf32>
    %9 = arith.maximumf %7, %8 : vector<128x128xf32>
    %c0_8 = arith.constant 0 : index
    %c0_9 = arith.constant 0 : index
    %10 = vector.load %arg7[%c0_8, %c0_9] : memref<128x128xf32, #tpu.memory_space<vmem>>, vector<128x128xf32>
    tpu.vector_store %arg7[%c0_8, %c0_9], %9 {strides = array<i32>} : memref<128x128xf32, #tpu.memory_space<vmem>>, vector<128x128xf32>,
    return
  }
  func.func @transform_0(%arg0: i32, %arg1: i32, %arg2: i32) -> (i32, i32) {
    %c0_i32 = arith.constant 0 : i32
    return %arg0, %arg2 : i32, i32
  }
  func.func @transform_1(%arg0: i32, %arg1: i32, %arg2: i32) -> (i32, i32) {
    %c0_i32 = arith.constant 0 : i32
    return %arg2, %arg1 : i32, i32
  }
  func.func @transform_2(%arg0: i32, %arg1: i32, %arg2: i32) -> (i32, i32) {
    %c0_i32 = arith.constant 0 : i32
    %c0_i32_0 = arith.constant 0 : i32
    return %c0_i32, %arg1 : i32, i32
  }
  func.func @transform_3(%arg0: i32, %arg1: i32, %arg2: i32) -> (i32, i32) {
    %c0_i32 = arith.constant 0 : i32
    return %arg0, %arg1 : i32, i32
  }
  func.func @transform_4(%arg0: i32, %arg1: i32, %arg2: i32) -> (i32, i32) {
    %c0_i32 = arith.constant 0 : i32
    return %arg0, %arg1 : i32, i32
  }
}

module attributes {stable_mosaic.version = 11 : i64} {
  func.func @_mm_kernel_single(%arg0: i32, %arg1: i32, %arg2: i32, %arg3: memref<32x288xbf16, #tpu.memory_space<vmem>>, %arg4: memref<288x128xbf16, #tpu.memory_space<vmem>>, %arg5: memref<1x128xf32, #tpu.memory_space<vmem>>, %arg6: memref<32x128xf32, #tpu.memory_space<vmem>>) attributes {dimension_semantics = [#tpu.dimension_semantics<parallel>, #tpu.dimension_semantics<parallel>, #tpu.dimension_semantics<arbitrary>], iteration_bounds = array<i64: 1, 1, 1>, scalar_prefetch = 0 : i64, scratch_operands = 0 : i64, tpu.core_type = #tpu.core_type<tc>, window_params = [{transform_indices = @transform_0, window_bounds = array<i64: 32, 288>}, {transform_indices = @transform_1, window_bounds = array<i64: 288, 128>}, {transform_indices = @transform_2, window_bounds = array<i64: 1, 128>}, {transform_indices = @transform_3, window_bounds = array<i64: 32, 128>}]} {
    %c0 = arith.constant 0 : index
    %c0_0 = arith.constant 0 : index
    %0 = vector.load %arg3[%c0, %c0_0] : memref<32x288xbf16, #tpu.memory_space<vmem>>, vector<32x288xbf16>
    %c0_1 = arith.constant 0 : index
    %c0_2 = arith.constant 0 : index
    %1 = vector.load %arg4[%c0_1, %c0_2] : memref<288x128xbf16, #tpu.memory_space<vmem>>, vector<288x128xbf16>
    %cst = arith.constant dense<0.000000e+00> : vector<32x128xf32>
    %2 = tpu.matmul %0, %1, %cst {dimension_numbers = #tpu.dot_dimension_numbers<[1], [0], [0], [1], [0, 0, 1, 1], [], []>} : vector<32x288xbf16>, vector<288x128xbf16>, vector<32x128xf32> -> vector<32x128xf32>
    %c0_3 = arith.constant 0 : index
    %c0_4 = arith.constant 0 : index
    %3 = vector.load %arg5[%c0_3, %c0_4] : memref<1x128xf32, #tpu.memory_space<vmem>>, vector<1x128xf32>
    %4 = vector.broadcast %3 : vector<1x128xf32> to vector<32x128xf32>
    %5 = arith.addf %2, %4 : vector<32x128xf32>
    %cst_5 = arith.constant 0.000000e+00 : f32
    %6 = vector.broadcast %cst_5 : f32 to vector<32x128xf32>
    %7 = arith.maximumf %5, %6 : vector<32x128xf32>
    %c0_6 = arith.constant 0 : index
    %c0_7 = arith.constant 0 : index
    %8 = vector.load %arg6[%c0_6, %c0_7] : memref<32x128xf32, #tpu.memory_space<vmem>>, vector<32x128xf32>
    tpu.vector_store %arg6[%c0_6, %c0_7], %7 {strides = array<i32>} : memref<32x128xf32, #tpu.memory_space<vmem>>, vector<32x128xf32>,
    return
  }
  func.func @transform_0(%arg0: i32, %arg1: i32, %arg2: i32) -> (i32, i32) {
    %c0_i32 = arith.constant 0 : i32
    return %arg0, %arg2 : i32, i32
  }
  func.func @transform_1(%arg0: i32, %arg1: i32, %arg2: i32) -> (i32, i32) {
    %c0_i32 = arith.constant 0 : i32
    return %arg2, %arg1 : i32, i32
  }
  func.func @transform_2(%arg0: i32, %arg1: i32, %arg2: i32) -> (i32, i32) {
    %c0_i32 = arith.constant 0 : i32
    %c0_i32_0 = arith.constant 0 : i32
    return %c0_i32, %arg1 : i32, i32
  }
  func.func @transform_3(%arg0: i32, %arg1: i32, %arg2: i32) -> (i32, i32) {
    %c0_i32 = arith.constant 0 : i32
    return %arg0, %arg1 : i32, i32
  }
}

module attributes {stable_mosaic.version = 11 : i64} {
  func.func @_mm_kernel_single(%arg0: i32, %arg1: i32, %arg2: i32, %arg3: memref<32x32xbf16, #tpu.memory_space<vmem>>, %arg4: memref<32x128xbf16, #tpu.memory_space<vmem>>, %arg5: memref<1x128xf32, #tpu.memory_space<vmem>>, %arg6: memref<32x128xf32, #tpu.memory_space<vmem>>) attributes {dimension_semantics = [#tpu.dimension_semantics<parallel>, #tpu.dimension_semantics<parallel>, #tpu.dimension_semantics<arbitrary>], iteration_bounds = array<i64: 1, 1, 1>, scalar_prefetch = 0 : i64, scratch_operands = 0 : i64, tpu.core_type = #tpu.core_type<tc>, window_params = [{transform_indices = @transform_0, window_bounds = array<i64: 32, 32>}, {transform_indices = @transform_1, window_bounds = array<i64: 32, 128>}, {transform_indices = @transform_2, window_bounds = array<i64: 1, 128>}, {transform_indices = @transform_3, window_bounds = array<i64: 32, 128>}]} {
    %c0 = arith.constant 0 : index
    %c0_0 = arith.constant 0 : index
    %0 = vector.load %arg3[%c0, %c0_0] : memref<32x32xbf16, #tpu.memory_space<vmem>>, vector<32x32xbf16>
    %c0_1 = arith.constant 0 : index
    %c0_2 = arith.constant 0 : index
    %1 = vector.load %arg4[%c0_1, %c0_2] : memref<32x128xbf16, #tpu.memory_space<vmem>>, vector<32x128xbf16>
    %cst = arith.constant dense<0.000000e+00> : vector<32x128xf32>
    %2 = tpu.matmul %0, %1, %cst {dimension_numbers = #tpu.dot_dimension_numbers<[1], [0], [0], [1], [0, 0, 1, 1], [], []>} : vector<32x32xbf16>, vector<32x128xbf16>, vector<32x128xf32> -> vector<32x128xf32>
    %c0_3 = arith.constant 0 : index
    %c0_4 = arith.constant 0 : index
    %3 = vector.load %arg5[%c0_3, %c0_4] : memref<1x128xf32, #tpu.memory_space<vmem>>, vector<1x128xf32>
    %4 = vector.broadcast %3 : vector<1x128xf32> to vector<32x128xf32>
    %5 = arith.addf %2, %4 : vector<32x128xf32>
    %c0_5 = arith.constant 0 : index
    %c0_6 = arith.constant 0 : index
    %6 = vector.load %arg6[%c0_5, %c0_6] : memref<32x128xf32, #tpu.memory_space<vmem>>, vector<32x128xf32>
    tpu.vector_store %arg6[%c0_5, %c0_6], %5 {strides = array<i32>} : memref<32x128xf32, #tpu.memory_space<vmem>>, vector<32x128xf32>,
    return
  }
  func.func @transform_0(%arg0: i32, %arg1: i32, %arg2: i32) -> (i32, i32) {
    %c0_i32 = arith.constant 0 : i32
    return %arg0, %arg2 : i32, i32
  }
  func.func @transform_1(%arg0: i32, %arg1: i32, %arg2: i32) -> (i32, i32) {
    %c0_i32 = arith.constant 0 : i32
    return %arg2, %arg1 : i32, i32
  }
  func.func @transform_2(%arg0: i32, %arg1: i32, %arg2: i32) -> (i32, i32) {
    %c0_i32 = arith.constant 0 : i32
    %c0_i32_0 = arith.constant 0 : i32
    return %c0_i32, %arg1 : i32, i32
  }
  func.func @transform_3(%arg0: i32, %arg1: i32, %arg2: i32) -> (i32, i32) {
    %c0_i32 = arith.constant 0 : i32
    return %arg0, %arg1 : i32, i32
  }
}

module attributes {stable_mosaic.version = 11 : i64} {
  func.func @_mm_kernel_single(%arg0: i32, %arg1: i32, %arg2: i32, %arg3: memref<32x576xbf16, #tpu.memory_space<vmem>>, %arg4: memref<576x128xbf16, #tpu.memory_space<vmem>>, %arg5: memref<1x128xf32, #tpu.memory_space<vmem>>, %arg6: memref<32x128xf32, #tpu.memory_space<vmem>>) attributes {dimension_semantics = [#tpu.dimension_semantics<parallel>, #tpu.dimension_semantics<parallel>, #tpu.dimension_semantics<arbitrary>], iteration_bounds = array<i64: 1, 1, 1>, scalar_prefetch = 0 : i64, scratch_operands = 0 : i64, tpu.core_type = #tpu.core_type<tc>, window_params = [{transform_indices = @transform_0, window_bounds = array<i64: 32, 576>}, {transform_indices = @transform_1, window_bounds = array<i64: 576, 128>}, {transform_indices = @transform_2, window_bounds = array<i64: 1, 128>}, {transform_indices = @transform_3, window_bounds = array<i64: 32, 128>}]} {
    %c0 = arith.constant 0 : index
    %c0_0 = arith.constant 0 : index
    %0 = vector.load %arg3[%c0, %c0_0] : memref<32x576xbf16, #tpu.memory_space<vmem>>, vector<32x576xbf16>
    %c0_1 = arith.constant 0 : index
    %c0_2 = arith.constant 0 : index
    %1 = vector.load %arg4[%c0_1, %c0_2] : memref<576x128xbf16, #tpu.memory_space<vmem>>, vector<576x128xbf16>
    %cst = arith.constant dense<0.000000e+00> : vector<32x128xf32>
    %2 = tpu.matmul %0, %1, %cst {dimension_numbers = #tpu.dot_dimension_numbers<[1], [0], [0], [1], [0, 0, 1, 1], [], []>} : vector<32x576xbf16>, vector<576x128xbf16>, vector<32x128xf32> -> vector<32x128xf32>
    %c0_3 = arith.constant 0 : index
    %c0_4 = arith.constant 0 : index
    %3 = vector.load %arg5[%c0_3, %c0_4] : memref<1x128xf32, #tpu.memory_space<vmem>>, vector<1x128xf32>
    %4 = vector.broadcast %3 : vector<1x128xf32> to vector<32x128xf32>
    %5 = arith.addf %2, %4 : vector<32x128xf32>
    %cst_5 = arith.constant 0.000000e+00 : f32
    %6 = vector.broadcast %cst_5 : f32 to vector<32x128xf32>
    %7 = arith.maximumf %5, %6 : vector<32x128xf32>
    %c0_6 = arith.constant 0 : index
    %c0_7 = arith.constant 0 : index
    %8 = vector.load %arg6[%c0_6, %c0_7] : memref<32x128xf32, #tpu.memory_space<vmem>>, vector<32x128xf32>
    tpu.vector_store %arg6[%c0_6, %c0_7], %7 {strides = array<i32>} : memref<32x128xf32, #tpu.memory_space<vmem>>, vector<32x128xf32>,
    return
  }
  func.func @transform_0(%arg0: i32, %arg1: i32, %arg2: i32) -> (i32, i32) {
    %c0_i32 = arith.constant 0 : i32
    return %arg0, %arg2 : i32, i32
  }
  func.func @transform_1(%arg0: i32, %arg1: i32, %arg2: i32) -> (i32, i32) {
    %c0_i32 = arith.constant 0 : i32
    return %arg2, %arg1 : i32, i32
  }
  func.func @transform_2(%arg0: i32, %arg1: i32, %arg2: i32) -> (i32, i32) {
    %c0_i32 = arith.constant 0 : i32
    %c0_i32_0 = arith.constant 0 : i32
    return %c0_i32, %arg1 : i32, i32
  }
  func.func @transform_3(%arg0: i32, %arg1: i32, %arg2: i32) -> (i32, i32) {
    %c0_i32 = arith.constant 0 : i32
    return %arg0, %arg1 : i32, i32
  }
}

module attributes {stable_mosaic.version = 11 : i64} {
  func.func @_mm_kernel_single(%arg0: i32, %arg1: i32, %arg2: i32, %arg3: memref<32x576xbf16, #tpu.memory_space<vmem>>, %arg4: memref<576x128xbf16, #tpu.memory_space<vmem>>, %arg5: memref<1x128xf32, #tpu.memory_space<vmem>>, %arg6: memref<32x128xf32, #tpu.memory_space<vmem>>, %arg7: memref<32x128xf32, #tpu.memory_space<vmem>>) attributes {dimension_semantics = [#tpu.dimension_semantics<parallel>, #tpu.dimension_semantics<parallel>, #tpu.dimension_semantics<arbitrary>], iteration_bounds = array<i64: 1, 1, 1>, scalar_prefetch = 0 : i64, scratch_operands = 0 : i64, tpu.core_type = #tpu.core_type<tc>, window_params = [{transform_indices = @transform_0, window_bounds = array<i64: 32, 576>}, {transform_indices = @transform_1, window_bounds = array<i64: 576, 128>}, {transform_indices = @transform_2, window_bounds = array<i64: 1, 128>}, {transform_indices = @transform_3, window_bounds = array<i64: 32, 128>}, {transform_indices = @transform_4, window_bounds = array<i64: 32, 128>}]} {
    %c0 = arith.constant 0 : index
    %c0_0 = arith.constant 0 : index
    %0 = vector.load %arg3[%c0, %c0_0] : memref<32x576xbf16, #tpu.memory_space<vmem>>, vector<32x576xbf16>
    %c0_1 = arith.constant 0 : index
    %c0_2 = arith.constant 0 : index
    %1 = vector.load %arg4[%c0_1, %c0_2] : memref<576x128xbf16, #tpu.memory_space<vmem>>, vector<576x128xbf16>
    %cst = arith.constant dense<0.000000e+00> : vector<32x128xf32>
    %2 = tpu.matmul %0, %1, %cst {dimension_numbers = #tpu.dot_dimension_numbers<[1], [0], [0], [1], [0, 0, 1, 1], [], []>} : vector<32x576xbf16>, vector<576x128xbf16>, vector<32x128xf32> -> vector<32x128xf32>
    %c0_3 = arith.constant 0 : index
    %c0_4 = arith.constant 0 : index
    %3 = vector.load %arg5[%c0_3, %c0_4] : memref<1x128xf32, #tpu.memory_space<vmem>>, vector<1x128xf32>
    %4 = vector.broadcast %3 : vector<1x128xf32> to vector<32x128xf32>
    %5 = arith.addf %2, %4 : vector<32x128xf32>
    %c0_5 = arith.constant 0 : index
    %c0_6 = arith.constant 0 : index
    %6 = vector.load %arg6[%c0_5, %c0_6] : memref<32x128xf32, #tpu.memory_space<vmem>>, vector<32x128xf32>
    %7 = arith.addf %5, %6 : vector<32x128xf32>
    %cst_7 = arith.constant 0.000000e+00 : f32
    %8 = vector.broadcast %cst_7 : f32 to vector<32x128xf32>
    %9 = arith.maximumf %7, %8 : vector<32x128xf32>
    %c0_8 = arith.constant 0 : index
    %c0_9 = arith.constant 0 : index
    %10 = vector.load %arg7[%c0_8, %c0_9] : memref<32x128xf32, #tpu.memory_space<vmem>>, vector<32x128xf32>
    tpu.vector_store %arg7[%c0_8, %c0_9], %9 {strides = array<i32>} : memref<32x128xf32, #tpu.memory_space<vmem>>, vector<32x128xf32>,
    return
  }
  func.func @transform_0(%arg0: i32, %arg1: i32, %arg2: i32) -> (i32, i32) {
    %c0_i32 = arith.constant 0 : i32
    return %arg0, %arg2 : i32, i32
  }
  func.func @transform_1(%arg0: i32, %arg1: i32, %arg2: i32) -> (i32, i32) {
    %c0_i32 = arith.constant 0 : i32
    return %arg2, %arg1 : i32, i32
  }
  func.func @transform_2(%arg0: i32, %arg1: i32, %arg2: i32) -> (i32, i32) {
    %c0_i32 = arith.constant 0 : i32
    %c0_i32_0 = arith.constant 0 : i32
    return %c0_i32, %arg1 : i32, i32
  }
  func.func @transform_3(%arg0: i32, %arg1: i32, %arg2: i32) -> (i32, i32) {
    %c0_i32 = arith.constant 0 : i32
    return %arg0, %arg1 : i32, i32
  }
  func.func @transform_4(%arg0: i32, %arg1: i32, %arg2: i32) -> (i32, i32) {
    %c0_i32 = arith.constant 0 : i32
    return %arg0, %arg1 : i32, i32
  }
}

module attributes {stable_mosaic.version = 11 : i64} {
  func.func @_mm_kernel_single(%arg0: i32, %arg1: i32, %arg2: i32, %arg3: memref<8x576xbf16, #tpu.memory_space<vmem>>, %arg4: memref<576x128xbf16, #tpu.memory_space<vmem>>, %arg5: memref<1x128xf32, #tpu.memory_space<vmem>>, %arg6: memref<8x128xf32, #tpu.memory_space<vmem>>) attributes {dimension_semantics = [#tpu.dimension_semantics<parallel>, #tpu.dimension_semantics<parallel>, #tpu.dimension_semantics<arbitrary>], iteration_bounds = array<i64: 1, 1, 1>, scalar_prefetch = 0 : i64, scratch_operands = 0 : i64, tpu.core_type = #tpu.core_type<tc>, window_params = [{transform_indices = @transform_0, window_bounds = array<i64: 8, 576>}, {transform_indices = @transform_1, window_bounds = array<i64: 576, 128>}, {transform_indices = @transform_2, window_bounds = array<i64: 1, 128>}, {transform_indices = @transform_3, window_bounds = array<i64: 8, 128>}]} {
    %c0 = arith.constant 0 : index
    %c0_0 = arith.constant 0 : index
    %0 = vector.load %arg3[%c0, %c0_0] : memref<8x576xbf16, #tpu.memory_space<vmem>>, vector<8x576xbf16>
    %c0_1 = arith.constant 0 : index
    %c0_2 = arith.constant 0 : index
    %1 = vector.load %arg4[%c0_1, %c0_2] : memref<576x128xbf16, #tpu.memory_space<vmem>>, vector<576x128xbf16>
    %cst = arith.constant dense<0.000000e+00> : vector<8x128xf32>
    %2 = tpu.matmul %0, %1, %cst {dimension_numbers = #tpu.dot_dimension_numbers<[1], [0], [0], [1], [0, 0, 1, 1], [], []>} : vector<8x576xbf16>, vector<576x128xbf16>, vector<8x128xf32> -> vector<8x128xf32>
    %c0_3 = arith.constant 0 : index
    %c0_4 = arith.constant 0 : index
    %3 = vector.load %arg5[%c0_3, %c0_4] : memref<1x128xf32, #tpu.memory_space<vmem>>, vector<1x128xf32>
    %4 = vector.broadcast %3 : vector<1x128xf32> to vector<8x128xf32>
    %5 = arith.addf %2, %4 : vector<8x128xf32>
    %cst_5 = arith.constant 0.000000e+00 : f32
    %6 = vector.broadcast %cst_5 : f32 to vector<8x128xf32>
    %7 = arith.maximumf %5, %6 : vector<8x128xf32>
    %c0_6 = arith.constant 0 : index
    %c0_7 = arith.constant 0 : index
    %8 = vector.load %arg6[%c0_6, %c0_7] : memref<8x128xf32, #tpu.memory_space<vmem>>, vector<8x128xf32>
    tpu.vector_store %arg6[%c0_6, %c0_7], %7 {strides = array<i32>} : memref<8x128xf32, #tpu.memory_space<vmem>>, vector<8x128xf32>,
    return
  }
  func.func @transform_0(%arg0: i32, %arg1: i32, %arg2: i32) -> (i32, i32) {
    %c0_i32 = arith.constant 0 : i32
    return %arg0, %arg2 : i32, i32
  }
  func.func @transform_1(%arg0: i32, %arg1: i32, %arg2: i32) -> (i32, i32) {
    %c0_i32 = arith.constant 0 : i32
    return %arg2, %arg1 : i32, i32
  }
  func.func @transform_2(%arg0: i32, %arg1: i32, %arg2: i32) -> (i32, i32) {
    %c0_i32 = arith.constant 0 : i32
    %c0_i32_0 = arith.constant 0 : i32
    return %c0_i32, %arg1 : i32, i32
  }
  func.func @transform_3(%arg0: i32, %arg1: i32, %arg2: i32) -> (i32, i32) {
    %c0_i32 = arith.constant 0 : i32
    return %arg0, %arg1 : i32, i32
  }
}

module attributes {stable_mosaic.version = 11 : i64} {
  func.func @_mm_kernel_single(%arg0: i32, %arg1: i32, %arg2: i32, %arg3: memref<8x64xbf16, #tpu.memory_space<vmem>>, %arg4: memref<64x128xbf16, #tpu.memory_space<vmem>>, %arg5: memref<1x128xf32, #tpu.memory_space<vmem>>, %arg6: memref<8x128xf32, #tpu.memory_space<vmem>>) attributes {dimension_semantics = [#tpu.dimension_semantics<parallel>, #tpu.dimension_semantics<parallel>, #tpu.dimension_semantics<arbitrary>], iteration_bounds = array<i64: 1, 1, 1>, scalar_prefetch = 0 : i64, scratch_operands = 0 : i64, tpu.core_type = #tpu.core_type<tc>, window_params = [{transform_indices = @transform_0, window_bounds = array<i64: 8, 64>}, {transform_indices = @transform_1, window_bounds = array<i64: 64, 128>}, {transform_indices = @transform_2, window_bounds = array<i64: 1, 128>}, {transform_indices = @transform_3, window_bounds = array<i64: 8, 128>}]} {
    %c0 = arith.constant 0 : index
    %c0_0 = arith.constant 0 : index
    %0 = vector.load %arg3[%c0, %c0_0] : memref<8x64xbf16, #tpu.memory_space<vmem>>, vector<8x64xbf16>
    %c0_1 = arith.constant 0 : index
    %c0_2 = arith.constant 0 : index
    %1 = vector.load %arg4[%c0_1, %c0_2] : memref<64x128xbf16, #tpu.memory_space<vmem>>, vector<64x128xbf16>
    %cst = arith.constant dense<0.000000e+00> : vector<8x128xf32>
    %2 = tpu.matmul %0, %1, %cst {dimension_numbers = #tpu.dot_dimension_numbers<[1], [0], [0], [1], [0, 0, 1, 1], [], []>} : vector<8x64xbf16>, vector<64x128xbf16>, vector<8x128xf32> -> vector<8x128xf32>
    %c0_3 = arith.constant 0 : index
    %c0_4 = arith.constant 0 : index
    %3 = vector.load %arg5[%c0_3, %c0_4] : memref<1x128xf32, #tpu.memory_space<vmem>>, vector<1x128xf32>
    %4 = vector.broadcast %3 : vector<1x128xf32> to vector<8x128xf32>
    %5 = arith.addf %2, %4 : vector<8x128xf32>
    %c0_5 = arith.constant 0 : index
    %c0_6 = arith.constant 0 : index
    %6 = vector.load %arg6[%c0_5, %c0_6] : memref<8x128xf32, #tpu.memory_space<vmem>>, vector<8x128xf32>
    tpu.vector_store %arg6[%c0_5, %c0_6], %5 {strides = array<i32>} : memref<8x128xf32, #tpu.memory_space<vmem>>, vector<8x128xf32>,
    return
  }
  func.func @transform_0(%arg0: i32, %arg1: i32, %arg2: i32) -> (i32, i32) {
    %c0_i32 = arith.constant 0 : i32
    return %arg0, %arg2 : i32, i32
  }
  func.func @transform_1(%arg0: i32, %arg1: i32, %arg2: i32) -> (i32, i32) {
    %c0_i32 = arith.constant 0 : i32
    return %arg2, %arg1 : i32, i32
  }
  func.func @transform_2(%arg0: i32, %arg1: i32, %arg2: i32) -> (i32, i32) {
    %c0_i32 = arith.constant 0 : i32
    %c0_i32_0 = arith.constant 0 : i32
    return %c0_i32, %arg1 : i32, i32
  }
  func.func @transform_3(%arg0: i32, %arg1: i32, %arg2: i32) -> (i32, i32) {
    %c0_i32 = arith.constant 0 : i32
    return %arg0, %arg1 : i32, i32
  }
}

module attributes {stable_mosaic.version = 11 : i64} {
  func.func @_mm_kernel_multi(%arg0: i32, %arg1: i32, %arg2: i32, %arg3: memref<8x384xbf16, #tpu.memory_space<vmem>>, %arg4: memref<384x128xbf16, #tpu.memory_space<vmem>>, %arg5: memref<1x128xf32, #tpu.memory_space<vmem>>, %arg6: memref<8x128xf32, #tpu.memory_space<vmem>>, %arg7: memref<8x128xf32, #tpu.memory_space<vmem>>, %arg8: memref<8x128xf32, #tpu.memory_space<vmem>>) attributes {dimension_semantics = [#tpu.dimension_semantics<parallel>, #tpu.dimension_semantics<parallel>, #tpu.dimension_semantics<arbitrary>], iteration_bounds = array<i64: 1, 1, 3>, scalar_prefetch = 0 : i64, scratch_operands = 1 : i64, tpu.core_type = #tpu.core_type<tc>, window_params = [{transform_indices = @transform_0, window_bounds = array<i64: 8, 384>}, {transform_indices = @transform_1, window_bounds = array<i64: 384, 128>}, {transform_indices = @transform_2, window_bounds = array<i64: 1, 128>}, {transform_indices = @transform_3, window_bounds = array<i64: 8, 128>}, {transform_indices = @transform_4, window_bounds = array<i64: 8, 128>}]} {
    %c0_i32 = arith.constant 0 : i32
    %0 = arith.cmpi eq, %arg2, %c0_i32 : i32
    %1 = arith.extui %0 : i1 to i32
    %c0_i32_0 = arith.constant 0 : i32
    %2 = arith.cmpi ne, %1, %c0_i32_0 : i32
    scf.if %2 {
      %cst_9 = arith.constant 0.000000e+00 : f32
      %12 = vector.broadcast %cst_9 : f32 to vector<8x128xf32>
      %c0_10 = arith.constant 0 : index
      %c0_11 = arith.constant 0 : index
      %13 = vector.load %arg8[%c0_10, %c0_11] : memref<8x128xf32, #tpu.memory_space<vmem>>, vector<8x128xf32>
      tpu.vector_store %arg8[%c0_10, %c0_11], %12 {strides = array<i32>} : memref<8x128xf32, #tpu.memory_space<vmem>>, vector<8x128xf32>,
    } else {
    }
    %c0 = arith.constant 0 : index
    %c0_1 = arith.constant 0 : index
    %3 = vector.load %arg8[%c0, %c0_1] : memref<8x128xf32, #tpu.memory_space<vmem>>, vector<8x128xf32>
    %c0_2 = arith.constant 0 : index
    %c0_3 = arith.constant 0 : index
    %4 = vector.load %arg3[%c0_2, %c0_3] : memref<8x384xbf16, #tpu.memory_space<vmem>>, vector<8x384xbf16>
    %c0_4 = arith.constant 0 : index
    %c0_5 = arith.constant 0 : index
    %5 = vector.load %arg4[%c0_4, %c0_5] : memref<384x128xbf16, #tpu.memory_space<vmem>>, vector<384x128xbf16>
    %cst = arith.constant dense<0.000000e+00> : vector<8x128xf32>
    %6 = tpu.matmul %4, %5, %cst {dimension_numbers = #tpu.dot_dimension_numbers<[1], [0], [0], [1], [0, 0, 1, 1], [], []>} : vector<8x384xbf16>, vector<384x128xbf16>, vector<8x128xf32> -> vector<8x128xf32>
    %7 = arith.addf %3, %6 : vector<8x128xf32>
    %c0_6 = arith.constant 0 : index
    %c0_7 = arith.constant 0 : index
    %8 = vector.load %arg8[%c0_6, %c0_7] : memref<8x128xf32, #tpu.memory_space<vmem>>, vector<8x128xf32>
    tpu.vector_store %arg8[%c0_6, %c0_7], %7 {strides = array<i32>} : memref<8x128xf32, #tpu.memory_space<vmem>>, vector<8x128xf32>,
    %c2_i32 = arith.constant 2 : i32
    %9 = arith.cmpi eq, %arg2, %c2_i32 : i32
    %10 = arith.extui %9 : i1 to i32
    %c0_i32_8 = arith.constant 0 : i32
    %11 = arith.cmpi ne, %10, %c0_i32_8 : i32
    scf.if %11 {
      %c0_9 = arith.constant 0 : index
      %c0_10 = arith.constant 0 : index
      %12 = vector.load %arg8[%c0_9, %c0_10] : memref<8x128xf32, #tpu.memory_space<vmem>>, vector<8x128xf32>
      %c0_11 = arith.constant 0 : index
      %c0_12 = arith.constant 0 : index
      %13 = vector.load %arg5[%c0_11, %c0_12] : memref<1x128xf32, #tpu.memory_space<vmem>>, vector<1x128xf32>
      %14 = vector.broadcast %13 : vector<1x128xf32> to vector<8x128xf32>
      %15 = arith.addf %12, %14 : vector<8x128xf32>
      %c0_13 = arith.constant 0 : index
      %c0_14 = arith.constant 0 : index
      %16 = vector.load %arg6[%c0_13, %c0_14] : memref<8x128xf32, #tpu.memory_space<vmem>>, vector<8x128xf32>
      %17 = arith.addf %15, %16 : vector<8x128xf32>
      %cst_15 = arith.constant 0.000000e+00 : f32
      %18 = vector.broadcast %cst_15 : f32 to vector<8x128xf32>
      %19 = arith.maximumf %17, %18 : vector<8x128xf32>
      %c0_16 = arith.constant 0 : index
      %c0_17 = arith.constant 0 : index
      %20 = vector.load %arg7[%c0_16, %c0_17] : memref<8x128xf32, #tpu.memory_space<vmem>>, vector<8x128xf32>
      tpu.vector_store %arg7[%c0_16, %c0_17], %19 {strides = array<i32>} : memref<8x128xf32, #tpu.memory_space<vmem>>, vector<8x128xf32>,
    } else {
    }
    return
  }
  func.func @transform_0(%arg0: i32, %arg1: i32, %arg2: i32) -> (i32, i32) {
    %c0_i32 = arith.constant 0 : i32
    return %arg0, %arg2 : i32, i32
  }
  func.func @transform_1(%arg0: i32, %arg1: i32, %arg2: i32) -> (i32, i32) {
    %c0_i32 = arith.constant 0 : i32
    return %arg2, %arg1 : i32, i32
  }
  func.func @transform_2(%arg0: i32, %arg1: i32, %arg2: i32) -> (i32, i32) {
    %c0_i32 = arith.constant 0 : i32
    %c0_i32_0 = arith.constant 0 : i32
    return %c0_i32, %arg1 : i32, i32
  }
  func.func @transform_3(%arg0: i32, %arg1: i32, %arg2: i32) -> (i32, i32) {
    %c0_i32 = arith.constant 0 : i32
    return %arg0, %arg1 : i32, i32
  }
  func.func @transform_4(%arg0: i32, %arg1: i32, %arg2: i32) -> (i32, i32) {
    %c0_i32 = arith.constant 0 : i32
    return %arg0, %arg1 : i32, i32
  }
}

module attributes {stable_mosaic.version = 11 : i64} {
  func.func @_mm_kernel_multi(%arg0: i32, %arg1: i32, %arg2: i32, %arg3: memref<8x384xbf16, #tpu.memory_space<vmem>>, %arg4: memref<384x128xbf16, #tpu.memory_space<vmem>>, %arg5: memref<1x128xf32, #tpu.memory_space<vmem>>, %arg6: memref<8x128xf32, #tpu.memory_space<vmem>>, %arg7: memref<8x128xf32, #tpu.memory_space<vmem>>) attributes {dimension_semantics = [#tpu.dimension_semantics<parallel>, #tpu.dimension_semantics<parallel>, #tpu.dimension_semantics<arbitrary>], iteration_bounds = array<i64: 1, 1, 3>, scalar_prefetch = 0 : i64, scratch_operands = 1 : i64, tpu.core_type = #tpu.core_type<tc>, window_params = [{transform_indices = @transform_0, window_bounds = array<i64: 8, 384>}, {transform_indices = @transform_1, window_bounds = array<i64: 384, 128>}, {transform_indices = @transform_2, window_bounds = array<i64: 1, 128>}, {transform_indices = @transform_3, window_bounds = array<i64: 8, 128>}]} {
    %c0_i32 = arith.constant 0 : i32
    %0 = arith.cmpi eq, %arg2, %c0_i32 : i32
    %1 = arith.extui %0 : i1 to i32
    %c0_i32_0 = arith.constant 0 : i32
    %2 = arith.cmpi ne, %1, %c0_i32_0 : i32
    scf.if %2 {
      %cst_9 = arith.constant 0.000000e+00 : f32
      %12 = vector.broadcast %cst_9 : f32 to vector<8x128xf32>
      %c0_10 = arith.constant 0 : index
      %c0_11 = arith.constant 0 : index
      %13 = vector.load %arg7[%c0_10, %c0_11] : memref<8x128xf32, #tpu.memory_space<vmem>>, vector<8x128xf32>
      tpu.vector_store %arg7[%c0_10, %c0_11], %12 {strides = array<i32>} : memref<8x128xf32, #tpu.memory_space<vmem>>, vector<8x128xf32>,
    } else {
    }
    %c0 = arith.constant 0 : index
    %c0_1 = arith.constant 0 : index
    %3 = vector.load %arg7[%c0, %c0_1] : memref<8x128xf32, #tpu.memory_space<vmem>>, vector<8x128xf32>
    %c0_2 = arith.constant 0 : index
    %c0_3 = arith.constant 0 : index
    %4 = vector.load %arg3[%c0_2, %c0_3] : memref<8x384xbf16, #tpu.memory_space<vmem>>, vector<8x384xbf16>
    %c0_4 = arith.constant 0 : index
    %c0_5 = arith.constant 0 : index
    %5 = vector.load %arg4[%c0_4, %c0_5] : memref<384x128xbf16, #tpu.memory_space<vmem>>, vector<384x128xbf16>
    %cst = arith.constant dense<0.000000e+00> : vector<8x128xf32>
    %6 = tpu.matmul %4, %5, %cst {dimension_numbers = #tpu.dot_dimension_numbers<[1], [0], [0], [1], [0, 0, 1, 1], [], []>} : vector<8x384xbf16>, vector<384x128xbf16>, vector<8x128xf32> -> vector<8x128xf32>
    %7 = arith.addf %3, %6 : vector<8x128xf32>
    %c0_6 = arith.constant 0 : index
    %c0_7 = arith.constant 0 : index
    %8 = vector.load %arg7[%c0_6, %c0_7] : memref<8x128xf32, #tpu.memory_space<vmem>>, vector<8x128xf32>
    tpu.vector_store %arg7[%c0_6, %c0_7], %7 {strides = array<i32>} : memref<8x128xf32, #tpu.memory_space<vmem>>, vector<8x128xf32>,
    %c2_i32 = arith.constant 2 : i32
    %9 = arith.cmpi eq, %arg2, %c2_i32 : i32
    %10 = arith.extui %9 : i1 to i32
    %c0_i32_8 = arith.constant 0 : i32
    %11 = arith.cmpi ne, %10, %c0_i32_8 : i32
    scf.if %11 {
      %c0_9 = arith.constant 0 : index
      %c0_10 = arith.constant 0 : index
      %12 = vector.load %arg7[%c0_9, %c0_10] : memref<8x128xf32, #tpu.memory_space<vmem>>, vector<8x128xf32>
      %c0_11 = arith.constant 0 : index
      %c0_12 = arith.constant 0 : index
      %13 = vector.load %arg5[%c0_11, %c0_12] : memref<1x128xf32, #tpu.memory_space<vmem>>, vector<1x128xf32>
      %14 = vector.broadcast %13 : vector<1x128xf32> to vector<8x128xf32>
      %15 = arith.addf %12, %14 : vector<8x128xf32>
      %cst_13 = arith.constant 0.000000e+00 : f32
      %16 = vector.broadcast %cst_13 : f32 to vector<8x128xf32>
      %17 = arith.maximumf %15, %16 : vector<8x128xf32>
      %c0_14 = arith.constant 0 : index
      %c0_15 = arith.constant 0 : index
      %18 = vector.load %arg6[%c0_14, %c0_15] : memref<8x128xf32, #tpu.memory_space<vmem>>, vector<8x128xf32>
      tpu.vector_store %arg6[%c0_14, %c0_15], %17 {strides = array<i32>} : memref<8x128xf32, #tpu.memory_space<vmem>>, vector<8x128xf32>,
    } else {
    }
    return
  }
  func.func @transform_0(%arg0: i32, %arg1: i32, %arg2: i32) -> (i32, i32) {
    %c0_i32 = arith.constant 0 : i32
    return %arg0, %arg2 : i32, i32
  }
  func.func @transform_1(%arg0: i32, %arg1: i32, %arg2: i32) -> (i32, i32) {
    %c0_i32 = arith.constant 0 : i32
    return %arg2, %arg1 : i32, i32
  }
  func.func @transform_2(%arg0: i32, %arg1: i32, %arg2: i32) -> (i32, i32) {
    %c0_i32 = arith.constant 0 : i32
    %c0_i32_0 = arith.constant 0 : i32
    return %c0_i32, %arg1 : i32, i32
  }
  func.func @transform_3(%arg0: i32, %arg1: i32, %arg2: i32) -> (i32, i32) {
    %c0_i32 = arith.constant 0 : i32
    return %arg0, %arg1 : i32, i32
  }
}

module attributes {stable_mosaic.version = 11 : i64} {
  func.func @_mm_kernel_single(%arg0: i32, %arg1: i32, %arg2: i32, %arg3: memref<8x128xbf16, #tpu.memory_space<vmem>>, %arg4: memref<128x256xbf16, #tpu.memory_space<vmem>>, %arg5: memref<1x256xf32, #tpu.memory_space<vmem>>, %arg6: memref<8x256xf32, #tpu.memory_space<vmem>>) attributes {dimension_semantics = [#tpu.dimension_semantics<parallel>, #tpu.dimension_semantics<parallel>, #tpu.dimension_semantics<arbitrary>], iteration_bounds = array<i64: 1, 4, 1>, scalar_prefetch = 0 : i64, scratch_operands = 0 : i64, tpu.core_type = #tpu.core_type<tc>, window_params = [{transform_indices = @transform_0, window_bounds = array<i64: 8, 128>}, {transform_indices = @transform_1, window_bounds = array<i64: 128, 256>}, {transform_indices = @transform_2, window_bounds = array<i64: 1, 256>}, {transform_indices = @transform_3, window_bounds = array<i64: 8, 256>}]} {
    %c0 = arith.constant 0 : index
    %c0_0 = arith.constant 0 : index
    %0 = vector.load %arg3[%c0, %c0_0] : memref<8x128xbf16, #tpu.memory_space<vmem>>, vector<8x128xbf16>
    %c0_1 = arith.constant 0 : index
    %c0_2 = arith.constant 0 : index
    %1 = vector.load %arg4[%c0_1, %c0_2] : memref<128x256xbf16, #tpu.memory_space<vmem>>, vector<128x256xbf16>
    %cst = arith.constant dense<0.000000e+00> : vector<8x256xf32>
    %2 = tpu.matmul %0, %1, %cst {dimension_numbers = #tpu.dot_dimension_numbers<[1], [0], [0], [1], [0, 0, 1, 1], [], []>} : vector<8x128xbf16>, vector<128x256xbf16>, vector<8x256xf32> -> vector<8x256xf32>
    %c0_3 = arith.constant 0 : index
    %c0_4 = arith.constant 0 : index
    %3 = vector.load %arg5[%c0_3, %c0_4] : memref<1x256xf32, #tpu.memory_space<vmem>>, vector<1x256xf32>
    %4 = vector.broadcast %3 : vector<1x256xf32> to vector<8x256xf32>
    %5 = arith.addf %2, %4 : vector<8x256xf32>
    %c0_5 = arith.constant 0 : index
    %c0_6 = arith.constant 0 : index
    %6 = vector.load %arg6[%c0_5, %c0_6] : memref<8x256xf32, #tpu.memory_space<vmem>>, vector<8x256xf32>
    tpu.vector_store %arg6[%c0_5, %c0_6], %5 {strides = array<i32>} : memref<8x256xf32, #tpu.memory_space<vmem>>, vector<8x256xf32>,
    return
  }
  func.func @transform_0(%arg0: i32, %arg1: i32, %arg2: i32) -> (i32, i32) {
    %c0_i32 = arith.constant 0 : i32
    return %arg0, %arg2 : i32, i32
  }
  func.func @transform_1(%arg0: i32, %arg1: i32, %arg2: i32) -> (i32, i32) {
    %c0_i32 = arith.constant 0 : i32
    return %arg2, %arg1 : i32, i32
  }
  func.func @transform_2(%arg0: i32, %arg1: i32, %arg2: i32) -> (i32, i32) {
    %c0_i32 = arith.constant 0 : i32
    %c0_i32_0 = arith.constant 0 : i32
    return %c0_i32, %arg1 : i32, i32
  }
  func.func @transform_3(%arg0: i32, %arg1: i32, %arg2: i32) -> (i32, i32) {
    %c0_i32 = arith.constant 0 : i32
    return %arg0, %arg1 : i32, i32
  }
}

module attributes {stable_mosaic.version = 11 : i64} {
  func.func @_mm_kernel_single(%arg0: i32, %arg1: i32, %arg2: i32, %arg3: memref<8x1024xbf16, #tpu.memory_space<vmem>>, %arg4: memref<1024x256xbf16, #tpu.memory_space<vmem>>, %arg5: memref<1x256xf32, #tpu.memory_space<vmem>>, %arg6: memref<8x256xf32, #tpu.memory_space<vmem>>) attributes {dimension_semantics = [#tpu.dimension_semantics<parallel>, #tpu.dimension_semantics<parallel>, #tpu.dimension_semantics<arbitrary>], iteration_bounds = array<i64: 1, 4, 1>, scalar_prefetch = 0 : i64, scratch_operands = 0 : i64, tpu.core_type = #tpu.core_type<tc>, window_params = [{transform_indices = @transform_0, window_bounds = array<i64: 8, 1024>}, {transform_indices = @transform_1, window_bounds = array<i64: 1024, 256>}, {transform_indices = @transform_2, window_bounds = array<i64: 1, 256>}, {transform_indices = @transform_3, window_bounds = array<i64: 8, 256>}]} {
    %c0 = arith.constant 0 : index
    %c0_0 = arith.constant 0 : index
    %0 = vector.load %arg3[%c0, %c0_0] : memref<8x1024xbf16, #tpu.memory_space<vmem>>, vector<8x1024xbf16>
    %c0_1 = arith.constant 0 : index
    %c0_2 = arith.constant 0 : index
    %1 = vector.load %arg4[%c0_1, %c0_2] : memref<1024x256xbf16, #tpu.memory_space<vmem>>, vector<1024x256xbf16>
    %cst = arith.constant dense<0.000000e+00> : vector<8x256xf32>
    %2 = tpu.matmul %0, %1, %cst {dimension_numbers = #tpu.dot_dimension_numbers<[1], [0], [0], [1], [0, 0, 1, 1], [], []>} : vector<8x1024xbf16>, vector<1024x256xbf16>, vector<8x256xf32> -> vector<8x256xf32>
    %c0_3 = arith.constant 0 : index
    %c0_4 = arith.constant 0 : index
    %3 = vector.load %arg5[%c0_3, %c0_4] : memref<1x256xf32, #tpu.memory_space<vmem>>, vector<1x256xf32>
    %4 = vector.broadcast %3 : vector<1x256xf32> to vector<8x256xf32>
    %5 = arith.addf %2, %4 : vector<8x256xf32>
    %c0_5 = arith.constant 0 : index
    %c0_6 = arith.constant 0 : index
    %6 = vector.load %arg6[%c0_5, %c0_6] : memref<8x256xf32, #tpu.memory_space<vmem>>, vector<8x256xf32>
    tpu.vector_store %arg6[%c0_5, %c0_6], %5 {strides = array<i32>} : memref<8x256xf32, #tpu.memory_space<vmem>>, vector<8x256xf32>,
    return
  }
  func.func @transform_0(%arg0: i32, %arg1: i32, %arg2: i32) -> (i32, i32) {
    %c0_i32 = arith.constant 0 : i32
    return %arg0, %arg2 : i32, i32
  }
  func.func @transform_1(%arg0: i32, %arg1: i32, %arg2: i32) -> (i32, i32) {
    %c0_i32 = arith.constant 0 : i32
    return %arg2, %arg1 : i32, i32
  }
  func.func @transform_2(%arg0: i32, %arg1: i32, %arg2: i32) -> (i32, i32) {
    %c0_i32 = arith.constant 0 : i32
    %c0_i32_0 = arith.constant 0 : i32
    return %c0_i32, %arg1 : i32, i32
  }
  func.func @transform_3(%arg0: i32, %arg1: i32, %arg2: i32) -> (i32, i32) {
    %c0_i32 = arith.constant 0 : i32
    return %arg0, %arg1 : i32, i32
  }
}

module attributes {stable_mosaic.version = 11 : i64} {
  func.func @_mm_kernel_single(%arg0: i32, %arg1: i32, %arg2: i32, %arg3: memref<8x1024xbf16, #tpu.memory_space<vmem>>, %arg4: memref<1024x128xbf16, #tpu.memory_space<vmem>>, %arg5: memref<1x128xf32, #tpu.memory_space<vmem>>, %arg6: memref<8x128xf32, #tpu.memory_space<vmem>>) attributes {dimension_semantics = [#tpu.dimension_semantics<parallel>, #tpu.dimension_semantics<parallel>, #tpu.dimension_semantics<arbitrary>], iteration_bounds = array<i64: 1, 1, 1>, scalar_prefetch = 0 : i64, scratch_operands = 0 : i64, tpu.core_type = #tpu.core_type<tc>, window_params = [{transform_indices = @transform_0, window_bounds = array<i64: 8, 1024>}, {transform_indices = @transform_1, window_bounds = array<i64: 1024, 128>}, {transform_indices = @transform_2, window_bounds = array<i64: 1, 128>}, {transform_indices = @transform_3, window_bounds = array<i64: 8, 128>}]} {
    %c0 = arith.constant 0 : index
    %c0_0 = arith.constant 0 : index
    %0 = vector.load %arg3[%c0, %c0_0] : memref<8x1024xbf16, #tpu.memory_space<vmem>>, vector<8x1024xbf16>
    %c0_1 = arith.constant 0 : index
    %c0_2 = arith.constant 0 : index
    %1 = vector.load %arg4[%c0_1, %c0_2] : memref<1024x128xbf16, #tpu.memory_space<vmem>>, vector<1024x128xbf16>
    %cst = arith.constant dense<0.000000e+00> : vector<8x128xf32>
    %2 = tpu.matmul %0, %1, %cst {dimension_numbers = #tpu.dot_dimension_numbers<[1], [0], [0], [1], [0, 0, 1, 1], [], []>} : vector<8x1024xbf16>, vector<1024x128xbf16>, vector<8x128xf32> -> vector<8x128xf32>
    %c0_3 = arith.constant 0 : index
    %c0_4 = arith.constant 0 : index
    %3 = vector.load %arg5[%c0_3, %c0_4] : memref<1x128xf32, #tpu.memory_space<vmem>>, vector<1x128xf32>
    %4 = vector.broadcast %3 : vector<1x128xf32> to vector<8x128xf32>
    %5 = arith.addf %2, %4 : vector<8x128xf32>
    %c0_5 = arith.constant 0 : index
    %c0_6 = arith.constant 0 : index
    %6 = vector.load %arg6[%c0_5, %c0_6] : memref<8x128xf32, #tpu.memory_space<vmem>>, vector<8x128xf32>
    tpu.vector_store %arg6[%c0_5, %c0_6], %5 {strides = array<i32>} : memref<8x128xf32, #tpu.memory_space<vmem>>, vector<8x128xf32>,
    return
  }
  func.func @transform_0(%arg0: i32, %arg1: i32, %arg2: i32) -> (i32, i32) {
    %c0_i32 = arith.constant 0 : i32
    return %arg0, %arg2 : i32, i32
  }
  func.func @transform_1(%arg0: i32, %arg1: i32, %arg2: i32) -> (i32, i32) {
    %c0_i32 = arith.constant 0 : i32
    return %arg2, %arg1 : i32, i32
  }
  func.func @transform_2(%arg0: i32, %arg1: i32, %arg2: i32) -> (i32, i32) {
    %c0_i32 = arith.constant 0 : i32
    %c0_i32_0 = arith.constant 0 : i32
    return %c0_i32, %arg1 : i32, i32
  }
  func.func @transform_3(%arg0: i32, %arg1: i32, %arg2: i32) -> (i32, i32) {
    %c0_i32 = arith.constant 0 : i32
    return %arg0, %arg1 : i32, i32
  }
}

</mosaic_0001>

<llo_original>
// kernel: resnet18_dense_forward.23
$region0: #{resnet18_dense_forward.23}
  #allocation0 [shape = 'u32[]', space=smem, size = 0x4, offset = 0x4, fixed_abs, tag = 'smem constant byte address 0x4 - core index']
  #allocation1 [shape = 'u32[144,128]{1,0:T(1,128)}', space=vmem, size = 0x12000, scoped, tag = 'internal scratch']
  %s0 = inlined_call_operand.vmem [shape: bf16[512,32], index: 0, kind: input, shape index: {}]
  %s1 = inlined_call_operand.hbm [shape: bf16[32,128], index: 1, kind: input, shape index: {}]
  %s2 = inlined_call_operand.vmem [shape: f32[1,128], index: 2, kind: input, shape index: {}]
  %s3 = inlined_call_operand.vmem [shape: f32[512,128], index: 3, kind: output, shape index: {}]
  %s4 = sld [smem:[#allocation0]]
  $region49: #{resnet18_dense_forward.23} parent=0
    _
  %s6 = ssub.s32 1, %s4
  %s7 = scalar_select 0, %s6, %s4
  $region1: #{resnet18_dense_forward.23} parent=0
    #allocation2 [shape = 'u8[8192]{0}', space=vmem, size = 0x2000, scoped, tag = 'input window, operand 1, single buffered']
    #allocation3 [shape = 's32[2]{0}', space=sflag, size = 0x8, scoped, tag = 'scoped memory for resnet18_dense_forward.23']
    %8 = vsyncpa [#allocation3], 0
    loop: start=0, step=1, limit=4
    $region2: #{resnet18_dense_forward.23} parent=1 // loop_pre_header
      _
    $region3: #{resnet18_dense_forward.23} parent=1 // loop_header
      %s10 = sphi 0, %s14
      %p11 = scmp.ge.s32.totalorder %s10, 4
      %s17 = sphi 0, %s36
      %s18 = sphi 0, %s32
      %s19 = sphi 0, %s28
      %s20 = sphi 0, %s17
      %s21 = sphi 0, %s18
      %s22 = sphi 0, %s19
      %s23 = sphi 0, %s20
      %s24 = sphi 0, %s21
      %s25 = sphi 0, %s22
      %s41 = sphi 0, %s43
      %s44 = sphi 0, %s41
      %s45 = sphi 0, %s44
      %s61 = sphi 0, %s45
      %s69 = sphi 0, %s71
      %s72 = sphi 0, %s69
      %s73 = sphi 0, %s72
      %s89 = sphi 0, %s73
      %s95 = sphi 0, %s97
      %s98 = sphi 0, %s95
      %s99 = sphi 0, %s98
      %s115 = sphi 0, %s99
      %s123 = sphi 0, %s125
      %s126 = sphi 0, %s123
      %s127 = sphi 0, %s126
      %s143 = sphi 0, %s127
    $region4: #{resnet18_dense_forward.23} parent=1 // loop_header_branch
      %13 = sbr.rel (%p11) target = $region8
    $region5: #{resnet18_dense_forward.23} parent=1 // loop_body
      %s15 = ssub.s32 %s10, 1
      %s16 = ssub.s32 %s10, 2
      %s26 = sadd.s32 1, %s19
      %p27 = scmp.ge.s32.totalorder %s26, 1
      %s28 = scalar_select %p27, 0, %s26
      %s29 = sadd.s32 1, %s18
      %s30 = scalar_select %p27, %s29, %s18
      %p31 = scmp.ge.s32.totalorder %s30, 1
      %s32 = scalar_select %p31, 0, %s30
      %s33 = sadd.s32 1, %s17
      %s34 = scalar_select %p31, %s33, %s17
      %p35 = scmp.ge.s32.totalorder %s34, 2
      %s36 = scalar_select %p35, 0, %s34
      %s37 = ssub.s32 %s17, %s36
      %s38 = ssub.s32 %s19, %s28
      %s39 = sor.u32 %s37, %s38
      %p40 = scmp.eq.s32.totalorder %s39, 0
      %s42 = sadd.s32 %s41, 1
      %s43 = scalar_select %p40, %s41, %s42
      %p46 = pneg %p40
      %p47 = scmp.eq.s32.totalorder %s10, 1
      %p48 = por %p46, %p47
      %p49 = scmp.ne.s32.totalorder %s41, %s44
      %p50 = scmp.eq.s32.totalorder %s10, 0
      %p51 = por %p49, %p50
      %p52 = scmp.ne.s32.totalorder %s41, %s44
      %p53 = scmp.eq.s32.totalorder %s15, 1
      %p54 = por %p52, %p53
      %p55 = scmp.ne.s32.totalorder %s44, %s45
      %p56 = scmp.eq.s32.totalorder %s15, 0
      %p57 = por %p55, %p56
      %p58 = scmp.ne.s32.totalorder %s44, %s45
      %p59 = scmp.eq.s32.totalorder %s16, 1
      %p60 = por %p58, %p59
      %p62 = scmp.ne.s32.totalorder %s45, %s61
      %p63 = scmp.eq.s32.totalorder %s16, 0
      %p64 = por %p62, %p63
      %s65 = ssub.s32 %s19, %s28
      %s66 = ssub.s32 %s18, %s32
      %s67 = sor.u32 %s65, %s66
      %p68 = scmp.eq.s32.totalorder %s67, 0
      %s70 = sadd.s32 %s69, 1
      %s71 = scalar_select %p68, %s69, %s70
      %p74 = pneg %p68
      %p75 = scmp.eq.s32.totalorder %s10, 1
      %p76 = por %p74, %p75
      %p77 = scmp.ne.s32.totalorder %s69, %s72
      %p78 = scmp.eq.s32.totalorder %s10, 0
      %p79 = por %p77, %p78
      %p80 = scmp.ne.s32.totalorder %s69, %s72
      %p81 = scmp.eq.s32.totalorder %s15, 1
      %p82 = por %p80, %p81
      %p83 = scmp.ne.s32.totalorder %s72, %s73
      %p84 = scmp.eq.s32.totalorder %s15, 0
      %p85 = por %p83, %p84
      %p86 = scmp.ne.s32.totalorder %s72, %s73
      %p87 = scmp.eq.s32.totalorder %s16, 1
      %p88 = por %p86, %p87
      %p90 = scmp.ne.s32.totalorder %s73, %s89
      %p91 = scmp.eq.s32.totalorder %s16, 0
      %p92 = por %p90, %p91
      %s93 = ssub.s32 %s18, %s32
      %p94 = scmp.eq.s32.totalorder %s93, 0
      %s96 = sadd.s32 %s95, 1
      %s97 = scalar_select %p94, %s95, %s96
      %p100 = pneg %p94
      %p101 = scmp.eq.s32.totalorder %s10, 1
      %p102 = por %p100, %p101
      %p103 = scmp.ne.s32.totalorder %s95, %s98
      %p104 = scmp.eq.s32.totalorder %s10, 0
      %p105 = por %p103, %p104
      %p106 = scmp.ne.s32.totalorder %s95, %s98
      %p107 = scmp.eq.s32.totalorder %s15, 1
      %p108 = por %p106, %p107
      %p109 = scmp.ne.s32.totalorder %s98, %s99
      %p110 = scmp.eq.s32.totalorder %s15, 0
      %p111 = por %p109, %p110
      %p112 = scmp.ne.s32.totalorder %s98, %s99
      %p113 = scmp.eq.s32.totalorder %s16, 1
      %p114 = por %p112, %p113
      %p116 = scmp.ne.s32.totalorder %s99, %s115
      %p117 = scmp.eq.s32.totalorder %s16, 0
      %p118 = por %p116, %p117
      %s119 = ssub.s32 %s17, %s36
      %s120 = ssub.s32 %s18, %s32
      %s121 = sor.u32 %s119, %s120
      %p122 = scmp.eq.s32.totalorder %s121, 0
      %s124 = sadd.s32 %s123, 1
      %s125 = scalar_select %p122, %s123, %s124
      %p128 = pneg %p122
      %p129 = scmp.eq.s32.totalorder %s10, 1
      %p130 = por %p128, %p129
      %p131 = scmp.ne.s32.totalorder %s123, %s126
      %p132 = scmp.eq.s32.totalorder %s10, 0
      %p133 = por %p131, %p132
      %p134 = scmp.ne.s32.totalorder %s123, %s126
      %p135 = scmp.eq.s32.totalorder %s15, 1
      %p136 = por %p134, %p135
      %p137 = scmp.ne.s32.totalorder %s126, %s127
      %p138 = scmp.eq.s32.totalorder %s15, 0
      %p139 = por %p137, %p138
      %p140 = scmp.ne.s32.totalorder %s126, %s127
      %p141 = scmp.eq.s32.totalorder %s16, 1
      %p142 = por %p140, %p141
      %p144 = scmp.ne.s32.totalorder %s127, %s143
      %p145 = scmp.eq.s32.totalorder %s16, 0
      %p146 = por %p144, %p145
      %p147 = scmp.le.s32.totalorder 1, %s10
      %p148 = scmp.lt.s32.totalorder %s10, 3
      %p149 = pnand %p147, %p148
      %p150 = pneg %p149
      // Predicated region
      $region9: #{resnet18_dense_forward.23} parent=5 // pred_check
        _
      $region10: #{resnet18_dense_forward.23} parent=5 // pred_check_branch
        %152 = sbr.rel (%p149) target = $region12
      $region11: #{resnet18_dense_forward.23} parent=5 // pred_region
        %s153 = ssub.s32 %s10, 1
        // Predicated region
        $region13: #{resnet18_dense_forward.23} parent=11 // pred_check
          %p154 = pneg %p85
        $region14: #{resnet18_dense_forward.23} parent=11 // pred_check_branch
          %156 = sbr.rel (%p154) target = $region16
        $region15: #{resnet18_dense_forward.23} parent=11 // pred_region
          %s157 = smul.u32 4, %s22
          %s159 = ssub.s32 256, 256
          %160 = vsyncadd [#allocation3], %s159
          %s161 = sadd.s32 %s21, %s157
          %s162 = smul.addr %s161, 64
          %s163 = scalar_lea.hbm %s1, %s162
          %s164 = sshll.u32 [#allocation2], 4
          %s165 = int_to_ptr.vmem [resolvable:$true] %s164
          %170 = dma.hbm_to_vmem [thread:$0]  %s163, 256, %s165, [#allocation3], 64, 64, 4
        $region16: #{resnet18_dense_forward.23} parent=11 // pred_fallthru
          _
        // Predicated region
        $region17: #{resnet18_dense_forward.23} parent=11 // pred_check
          %p171 = pneg %p111
        $region18: #{resnet18_dense_forward.23} parent=11 // pred_check_branch
          %173 = sbr.rel (%p171) target = $region20
        $region19: #{resnet18_dense_forward.23} parent=11 // pred_region
          %p174 = scmp.lt.s32.totalorder %s21, 0
          %s175 = scalar_select %p174, %s21, 0
          %s176 = scalar_lea.vmem %s2, %s175
        $region20: #{resnet18_dense_forward.23} parent=11 // pred_fallthru
          _
      $region12: #{resnet18_dense_forward.23} parent=5 // pred_fallthru
        _
      %p177 = scmp.lt.s32.totalorder %s10, 2
      // Predicated region
      $region21: #{resnet18_dense_forward.23} parent=5 // pred_check
        %p178 = pneg %p177
      $region22: #{resnet18_dense_forward.23} parent=5 // pred_check_branch
        %180 = sbr.rel (%p178) target = $region24
      $region23: #{resnet18_dense_forward.23} parent=5 // pred_region
        // Predicated region
        $region25: #{resnet18_dense_forward.23} parent=23 // pred_check
          %p181 = pneg %p51
        $region26: #{resnet18_dense_forward.23} parent=23 // pred_check_branch
          %183 = sbr.rel (%p181) target = $region28
        $region27: #{resnet18_dense_forward.23} parent=23 // pred_region
          %s184 = smul.u32 32, %s17
          %p185 = scmp.lt.s32.totalorder %s184, 63
          %s186 = scalar_select %p185, %s184, 63
          %p187 = scmp.lt.s32.totalorder %s19, 0
          %s188 = scalar_select %p187, %s19, 0
          %s189 = sadd.s32 %s188, %s186
          %s190 = smul.addr %s189, 4
          %s191 = scalar_lea.vmem %s0, %s190
          %s192 = smul.u32 32, %s17
        $region28: #{resnet18_dense_forward.23} parent=23 // pred_fallthru
          _
      $region24: #{resnet18_dense_forward.23} parent=5 // pred_fallthru
        _
      %p193 = scmp.le.s32.totalorder 1, %s10
      %p194 = scmp.lt.s32.totalorder %s10, 3
      %p195 = pnand %p193, %p194
      %p196 = pneg %p195
      // Predicated region
      $region29: #{resnet18_dense_forward.23} parent=5 // pred_check
        _
      $region30: #{resnet18_dense_forward.23} parent=5 // pred_check_branch
        %198 = sbr.rel (%p195) target = $region32
      $region31: #{resnet18_dense_forward.23} parent=5 // pred_region
        %s199 = ssub.s32 %s10, 1
        // Predicated region
        $region33: #{resnet18_dense_forward.23} parent=31 // pred_check
          %p200 = pneg %p85
        $region34: #{resnet18_dense_forward.23} parent=31 // pred_check_branch
          %202 = sbr.rel (%p200) target = $region36
        $region35: #{resnet18_dense_forward.23} parent=31 // pred_region
          %203 = dma.done [#allocation3], 256
        $region36: #{resnet18_dense_forward.23} parent=31 // pred_fallthru
          _
        %s204 = smul.u32 32, %s20
        %p205 = scmp.lt.s32.totalorder %s204, 63
        %s206 = scalar_select %p205, %s204, 63
        %p207 = scmp.lt.s32.totalorder %s22, 0
        %s208 = scalar_select %p207, %s22, 0
        %s209 = sadd.s32 %s208, %s206
        %s210 = smul.addr %s209, 4
        %s211 = scalar_lea.vmem %s0, %s210
        %p212 = pneg %p57
        %p213 = pneg %p54
        %p214 = pneg %p85
        %p215 = pneg %p82
        %p216 = scmp.lt.s32.totalorder %s21, 0
        %s217 = scalar_select %p216, %s21, 0
        %s218 = scalar_lea.vmem %s2, %s217
        %p219 = pneg %p111
        %p220 = pneg %p108
        %p221 = pneg %p139
        %p222 = pneg %p136
        %s223 = smul.u32 32, %s20
        %p224 = scmp.lt.s32.totalorder %s223, 63
        %s225 = scalar_select %p224, %s223, 63
        %p226 = scmp.lt.s32.totalorder %s21, 0
        %s227 = scalar_select %p226, %s21, 0
        %s228 = sadd.s32 %s227, %s225
        %s229 = smul.addr %s228, 8
        %s230 = scalar_lea.vmem %s3, %s229
        %s231 = smul.u32 32, %s20
        %p232 = scmp.lt.s32.totalorder %s231, 63
        %s233 = scalar_select %p232, %s231, 63
        %p234 = scmp.lt.s32.totalorder %s22, 0
        %s235 = scalar_select %p234, %s22, 0
        %s236 = sadd.s32 %s235, %s233
        %s237 = smul.addr %s236, 4
        %s238 = scalar_lea.vmem %s0, %s237
        %s239 = smul.u32 32, %s20
        %s240 = smul.u32 4, %s22
        %p241 = scmp.lt.s32.totalorder %s21, 0
        %s242 = scalar_select %p241, %s21, 0
        %s243 = scalar_lea.vmem %s2, %s242
        %s244 = smul.u32 32, %s20
        %p245 = scmp.lt.s32.totalorder %s244, 63
        %s246 = scalar_select %p245, %s244, 63
        %p247 = scmp.lt.s32.totalorder %s21, 0
        %s248 = scalar_select %p247, %s21, 0
        %s249 = sadd.s32 %s248, %s246
        %s250 = smul.addr %s249, 8
        %s251 = scalar_lea.vmem %s3, %s250
        %s252 = smul.u32 32, %s20
        %v254 = vld [vmem:[%s238] sm:$0xf]
        %v255 = vld [vmem:[%s238 + $0x4] sm:$0xf]
        %v256 = vld [vmem:[%s238 + $0x8] sm:$0xf]
        %v257 = vld [vmem:[%s238 + $0xc] sm:$0xf]
        %v258 = vld [vmem:[%s238 + $0x10] sm:$0xf]
        %v259 = vld [vmem:[%s238 + $0x14] sm:$0xf]
        %v260 = vld [vmem:[%s238 + $0x18] sm:$0xf]
        %v261 = vld [vmem:[%s238 + $0x1c] sm:$0xf]
        %v262 = vld [vmem:[%s238 + $0x20] sm:$0xf]
        %v263 = vld [vmem:[%s238 + $0x24] sm:$0xf]
        %v264 = vld [vmem:[%s238 + $0x28] sm:$0xf]
        %v265 = vld [vmem:[%s238 + $0x2c] sm:$0xf]
        %v266 = vld [vmem:[%s238 + $0x30] sm:$0xf]
        %v267 = vld [vmem:[%s238 + $0x34] sm:$0xf]
        %v268 = vld [vmem:[%s238 + $0x38] sm:$0xf]
        %v269 = vld [vmem:[%s238 + $0x3c] sm:$0xf]
        %v270 = vld [vmem:[%s238 + $0x40] sm:$0xf]
        %v271 = vld [vmem:[%s238 + $0x44] sm:$0xf]
        %v272 = vld [vmem:[%s238 + $0x48] sm:$0xf]
        %v273 = vld [vmem:[%s238 + $0x4c] sm:$0xf]
        %v274 = vld [vmem:[%s238 + $0x50] sm:$0xf]
        %v275 = vld [vmem:[%s238 + $0x54] sm:$0xf]
        %v276 = vld [vmem:[%s238 + $0x58] sm:$0xf]
        %v277 = vld [vmem:[%s238 + $0x5c] sm:$0xf]
        %v278 = vld [vmem:[%s238 + $0x60] sm:$0xf]
        %v279 = vld [vmem:[%s238 + $0x64] sm:$0xf]
        %v280 = vld [vmem:[%s238 + $0x68] sm:$0xf]
        %v281 = vld [vmem:[%s238 + $0x6c] sm:$0xf]
        %v282 = vld [vmem:[%s238 + $0x70] sm:$0xf]
        %v283 = vld [vmem:[%s238 + $0x74] sm:$0xf]
        %v284 = vld [vmem:[%s238 + $0x78] sm:$0xf]
        %v285 = vld [vmem:[%s238 + $0x7c] sm:$0xf]
        %v286 = vld [vmem:[#allocation2] sm:$0xf]
        %v287 = vld [vmem:[#allocation2 + $0x4] sm:$0xf]
        %v288 = vld [vmem:[#allocation2 + $0x8] sm:$0xf]
        %v289 = vld [vmem:[#allocation2 + $0xc] sm:$0xf]
        %v290 = vld [vmem:[%s243] sm:$0x1]
        %v292 = vlaneseq
        %v293 = vshrl.u32 %v292, 7
        %v294 = vsub.s32 0, %v293
        %v295 = vrot.slane %v290, %v294
        %v329 = vunpack.c.l.b16 %v254
        %v330 = vunpack.c.l.b16 %v255
        %v331 = vunpack.c.l.b16 %v256
        %v332 = vunpack.c.l.b16 %v257
        %v333 = vunpack.c.l.b16 %v258
        %v334 = vunpack.c.l.b16 %v259
        %v335 = vunpack.c.l.b16 %v260
        %v336 = vunpack.c.l.b16 %v261
        %v337 = vunpack.c.l.b16 %v262
        %v338 = vunpack.c.l.b16 %v263
        %v339 = vunpack.c.l.b16 %v264
        %v340 = vunpack.c.l.b16 %v265
        %v341 = vunpack.c.l.b16 %v266
        %v342 = vunpack.c.l.b16 %v267
        %v343 = vunpack.c.l.b16 %v268
        %v344 = vunpack.c.l.b16 %v269
        %v345 = vunpack.c.l.b16 %v270
        %v346 = vunpack.c.l.b16 %v271
        %v347 = vunpack.c.l.b16 %v272
        %v348 = vunpack.c.l.b16 %v273
        %v349 = vunpack.c.l.b16 %v274
        %v350 = vunpack.c.l.b16 %v275
        %v351 = vunpack.c.l.b16 %v276
        %v352 = vunpack.c.l.b16 %v277
        %v353 = vunpack.c.l.b16 %v278
        %v354 = vunpack.c.l.b16 %v279
        %v355 = vunpack.c.l.b16 %v280
        %v356 = vunpack.c.l.b16 %v281
        %v357 = vunpack.c.l.b16 %v282
        %v358 = vunpack.c.l.b16 %v283
        %v359 = vunpack.c.l.b16 %v284
        %v360 = vunpack.c.l.b16 %v285
        %v361 = vpack.c.b16 %v330, %v329
        %v362 = vpack.c.b16 %v332, %v331
        %v363 = vpack.c.b16 %v334, %v333
        %v364 = vpack.c.b16 %v336, %v335
        %v365 = vpack.c.b16 %v338, %v337
        %v366 = vpack.c.b16 %v340, %v339
        %v367 = vpack.c.b16 %v342, %v341
        %v368 = vpack.c.b16 %v344, %v343
        %v369 = vpack.c.b16 %v346, %v345
        %v370 = vpack.c.b16 %v348, %v347
        %v371 = vpack.c.b16 %v350, %v349
        %v372 = vpack.c.b16 %v352, %v351
        %v373 = vpack.c.b16 %v354, %v353
        %v374 = vpack.c.b16 %v356, %v355
        %v375 = vpack.c.b16 %v358, %v357
        %v376 = vpack.c.b16 %v360, %v359
        %v381 = vunpack.c.l.b16 %v286
        %v382 = vunpack.c.l.b16 %v287
        %v383 = vunpack.c.l.b16 %v288
        %v384 = vunpack.c.l.b16 %v289
        %v385 = vpack.c.b16 %v382, %v381
        %v386 = vpack.c.b16 %v384, %v383
        %vm389 = vcmask 261120
        %v391 = vsel %vm389, %v361, 0
        %v394 = vsel %vm389, %v362, 0
        %v397 = vsel %vm389, %v363, 0
        %v400 = vsel %vm389, %v364, 0
        %v403 = vsel %vm389, %v365, 0
        %v406 = vsel %vm389, %v366, 0
        %v409 = vsel %vm389, %v367, 0
        %v412 = vsel %vm389, %v368, 0
        %v415 = vsel %vm389, %v369, 0
        %v418 = vsel %vm389, %v370, 0
        %v421 = vsel %vm389, %v371, 0
        %v424 = vsel %vm389, %v372, 0
        %v427 = vsel %vm389, %v373, 0
        %v430 = vsel %vm389, %v374, 0
        %v433 = vsel %vm389, %v375, 0
        %v436 = vsel %vm389, %v376, 0
        %438 = vmatprep.subr.bf16.mxu0 0
        %439 = vmatpush1.bf16.msra.mxu0 %v385
        %440 = vmatprep.subr.bf16.mxu0 0
        %441 = vmatpush1.bf16.msra.mxu0 %v386
        %442 = vmatprep.subr.bf16.mxu0 0
        %443 = vmatpush1.bf16.msra.mxu0 0
        %444 = vmatprep.subr.bf16.mxu0 0
        %445 = vmatpush1.bf16.msra.mxu0 0
        %446 = vmatprep.subr.bf16.mxu0 0
        %447 = vmatpush1.bf16.msra.mxu0 0
        %448 = vmatprep.subr.bf16.mxu0 0
        %449 = vmatpush1.bf16.msra.mxu0 0
        %450 = vmatprep.subr.bf16.mxu0 0
        %451 = vmatpush1.bf16.msra.mxu0 0
        %452 = vmatprep.subr.bf16.mxu0 0
        %453 = vmatpush1.bf16.msra.mxu0 0
        %454 = vmatprep.subr.bf16.mxu0 0
        %455 = vmatpush1.bf16.msra.mxu0 0
        %456 = vmatprep.subr.bf16.mxu0 0
        %457 = vmatpush1.bf16.msra.mxu0 0
        %458 = vmatprep.subr.bf16.mxu0 0
        %459 = vmatpush1.bf16.msra.mxu0 0
        %460 = vmatprep.subr.bf16.mxu0 0
        %461 = vmatpush1.bf16.msra.mxu0 0
        %462 = vmatprep.subr.bf16.mxu0 0
        %463 = vmatpush1.bf16.msra.mxu0 0
        %464 = vmatprep.subr.bf16.mxu0 0
        %465 = vmatpush1.bf16.msra.mxu0 0
        %466 = vmatprep.subr.bf16.mxu0 0
        %467 = vmatpush1.bf16.msra.mxu0 0
        %468 = vmatprep.subr.bf16.mxu0 0
        %469 = vmatpush1.bf16.msra.mxu0 0
        %470 = vmatprep.mubr.bf16.mxu0 0
        %471 = vmatmul.mubr.bf16.gmra.mrb[0].mxu0 %v391
        %v472 = vpop.f32.mrb[0].mxu0
        %v473 = vadd.f32 %v295, %v472
        %v474 = vpop.f32.mrb[0].mxu0
        %v475 = vpop.f32.mrb[0].mxu0
        %v476 = vadd.f32 %v295, %v475
        %v477 = vpop.f32.mrb[0].mxu0
        %478 = vmatprep.mubr.bf16.mxu0 0
        %479 = vmatmul.mubr.bf16.gmra.mrb[0].mxu0 %v394
        %v480 = vpop.f32.mrb[0].mxu0
        %v481 = vadd.f32 %v295, %v480
        %v482 = vpop.f32.mrb[0].mxu0
        %v483 = vpop.f32.mrb[0].mxu0
        %v484 = vadd.f32 %v295, %v483
        %v485 = vpop.f32.mrb[0].mxu0
        %486 = vmatprep.mubr.bf16.mxu0 0
        %487 = vmatmul.mubr.bf16.gmra.mrb[0].mxu0 %v397
        %v488 = vpop.f32.mrb[0].mxu0
        %v489 = vadd.f32 %v295, %v488
        %v490 = vpop.f32.mrb[0].mxu0
        %v491 = vpop.f32.mrb[0].mxu0
        %v492 = vadd.f32 %v295, %v491
        %v493 = vpop.f32.mrb[0].mxu0
        %494 = vmatprep.mubr.bf16.mxu0 0
        %495 = vmatmul.mubr.bf16.gmra.mrb[0].mxu0 %v400
        %v496 = vpop.f32.mrb[0].mxu0
        %v497 = vadd.f32 %v295, %v496
        %v498 = vpop.f32.mrb[0].mxu0
        %v499 = vpop.f32.mrb[0].mxu0
        %v500 = vadd.f32 %v295, %v499
        %v501 = vpop.f32.mrb[0].mxu0
        %502 = vmatprep.mubr.bf16.mxu0 0
        %503 = vmatmul.mubr.bf16.gmra.mrb[0].mxu0 %v403
        %v504 = vpop.f32.mrb[0].mxu0
        %v505 = vadd.f32 %v295, %v504
        %v506 = vpop.f32.mrb[0].mxu0
        %v507 = vpop.f32.mrb[0].mxu0
        %v508 = vadd.f32 %v295, %v507
        %v509 = vpop.f32.mrb[0].mxu0
        %510 = vmatprep.mubr.bf16.mxu0 0
        %511 = vmatmul.mubr.bf16.gmra.mrb[0].mxu0 %v406
        %v512 = vpop.f32.mrb[0].mxu0
        %v513 = vadd.f32 %v295, %v512
        %v514 = vpop.f32.mrb[0].mxu0
        %v515 = vpop.f32.mrb[0].mxu0
        %v516 = vadd.f32 %v295, %v515
        %v517 = vpop.f32.mrb[0].mxu0
        %518 = vmatprep.mubr.bf16.mxu0 0
        %519 = vmatmul.mubr.bf16.gmra.mrb[0].mxu0 %v409
        %v520 = vpop.f32.mrb[0].mxu0
        %v521 = vadd.f32 %v295, %v520
        %v522 = vpop.f32.mrb[0].mxu0
        %v523 = vpop.f32.mrb[0].mxu0
        %v524 = vadd.f32 %v295, %v523
        %v525 = vpop.f32.mrb[0].mxu0
        %526 = vmatprep.mubr.bf16.mxu0 0
        %527 = vmatmul.mubr.bf16.gmra.mrb[0].mxu0 %v412
        %v528 = vpop.f32.mrb[0].mxu0
        %v529 = vadd.f32 %v295, %v528
        %v530 = vpop.f32.mrb[0].mxu0
        %v531 = vpop.f32.mrb[0].mxu0
        %v532 = vadd.f32 %v295, %v531
        %v533 = vpop.f32.mrb[0].mxu0
        %534 = vmatprep.mubr.bf16.mxu0 0
        %535 = vmatmul.mubr.bf16.gmra.mrb[0].mxu0 %v415
        %v536 = vpop.f32.mrb[0].mxu0
        %v537 = vadd.f32 %v295, %v536
        %v538 = vpop.f32.mrb[0].mxu0
        %v539 = vpop.f32.mrb[0].mxu0
        %v540 = vadd.f32 %v295, %v539
        %v541 = vpop.f32.mrb[0].mxu0
        %542 = vmatprep.mubr.bf16.mxu0 0
        %543 = vmatmul.mubr.bf16.gmra.mrb[0].mxu0 %v418
        %v544 = vpop.f32.mrb[0].mxu0
        %v545 = vadd.f32 %v295, %v544
        %v546 = vpop.f32.mrb[0].mxu0
        %v547 = vpop.f32.mrb[0].mxu0
        %v548 = vadd.f32 %v295, %v547
        %v549 = vpop.f32.mrb[0].mxu0
        %550 = vmatprep.mubr.bf16.mxu0 0
        %551 = vmatmul.mubr.bf16.gmra.mrb[0].mxu0 %v421
        %v552 = vpop.f32.mrb[0].mxu0
        %v553 = vadd.f32 %v295, %v552
        %v554 = vpop.f32.mrb[0].mxu0
        %v555 = vpop.f32.mrb[0].mxu0
        %v556 = vadd.f32 %v295, %v555
        %v557 = vpop.f32.mrb[0].mxu0
        %558 = vmatprep.mubr.bf16.mxu0 0
        %559 = vmatmul.mubr.bf16.gmra.mrb[0].mxu0 %v424
        %v560 = vpop.f32.mrb[0].mxu0
        %v561 = vadd.f32 %v295, %v560
        %v562 = vpop.f32.mrb[0].mxu0
        %v563 = vpop.f32.mrb[0].mxu0
        %v564 = vadd.f32 %v295, %v563
        %v565 = vpop.f32.mrb[0].mxu0
        %566 = vmatprep.mubr.bf16.mxu0 0
        %567 = vmatmul.mubr.bf16.gmra.mrb[0].mxu0 %v427
        %v568 = vpop.f32.mrb[0].mxu0
        %v569 = vadd.f32 %v295, %v568
        %v570 = vpop.f32.mrb[0].mxu0
        %v571 = vpop.f32.mrb[0].mxu0
        %v572 = vadd.f32 %v295, %v571
        %v573 = vpop.f32.mrb[0].mxu0
        %574 = vmatprep.mubr.bf16.mxu0 0
        %575 = vmatmul.mubr.bf16.gmra.mrb[0].mxu0 %v430
        %v576 = vpop.f32.mrb[0].mxu0
        %v577 = vadd.f32 %v295, %v576
        %v578 = vpop.f32.mrb[0].mxu0
        %v579 = vpop.f32.mrb[0].mxu0
        %v580 = vadd.f32 %v295, %v579
        %v581 = vpop.f32.mrb[0].mxu0
        %582 = vmatprep.mubr.bf16.mxu0 0
        %583 = vmatmul.mubr.bf16.gmra.mrb[0].mxu0 %v433
        %v584 = vpop.f32.mrb[0].mxu0
        %v585 = vadd.f32 %v295, %v584
        %v586 = vpop.f32.mrb[0].mxu0
        %v587 = vpop.f32.mrb[0].mxu0
        %v588 = vadd.f32 %v295, %v587
        %v589 = vpop.f32.mrb[0].mxu0
        %590 = vmatprep.mubr.bf16.mxu0 0
        %591 = vmatmul.mubr.bf16.gmra.mrb[0].mxu0 %v436
        %v592 = vpop.f32.mrb[0].mxu0
        %v593 = vadd.f32 %v295, %v592
        %v594 = vpop.f32.mrb[0].mxu0
        %v595 = vpop.f32.mrb[0].mxu0
        %v596 = vadd.f32 %v295, %v595
        %v597 = vpop.f32.mrb[0].mxu0
        %598 = vdwg.mxu0
        %v599 = vmax.f32 %v473, 0.0
        %v600 = vmax.f32 %v476, 0.0
        %v601 = vmax.f32 %v481, 0.0
        %v602 = vmax.f32 %v484, 0.0
        %v603 = vmax.f32 %v489, 0.0
        %v604 = vmax.f32 %v492, 0.0
        %v605 = vmax.f32 %v497, 0.0
        %v606 = vmax.f32 %v500, 0.0
        %v607 = vmax.f32 %v505, 0.0
        %v608 = vmax.f32 %v508, 0.0
        %v609 = vmax.f32 %v513, 0.0
        %v610 = vmax.f32 %v516, 0.0
        %v611 = vmax.f32 %v521, 0.0
        %v612 = vmax.f32 %v524, 0.0
        %v613 = vmax.f32 %v529, 0.0
        %v614 = vmax.f32 %v532, 0.0
        %v615 = vmax.f32 %v537, 0.0
        %v616 = vmax.f32 %v540, 0.0
        %v617 = vmax.f32 %v545, 0.0
        %v618 = vmax.f32 %v548, 0.0
        %v619 = vmax.f32 %v553, 0.0
        %v620 = vmax.f32 %v556, 0.0
        %v621 = vmax.f32 %v561, 0.0
        %v622 = vmax.f32 %v564, 0.0
        %v623 = vmax.f32 %v569, 0.0
        %v624 = vmax.f32 %v572, 0.0
        %v625 = vmax.f32 %v577, 0.0
        %v626 = vmax.f32 %v580, 0.0
        %v627 = vmax.f32 %v585, 0.0
        %v628 = vmax.f32 %v588, 0.0
        %v629 = vmax.f32 %v593, 0.0
        %v630 = vmax.f32 %v596, 0.0
        %631 = vst [vmem:[%s251] sm:$0xff] %v599
        %632 = vst [vmem:[%s251 + $0x8] sm:$0xff] %v600
        %633 = vst [vmem:[%s251 + $0x10] sm:$0xff] %v601
        %634 = vst [vmem:[%s251 + $0x18] sm:$0xff] %v602
        %635 = vst [vmem:[%s251 + $0x20] sm:$0xff] %v603
        %636 = vst [vmem:[%s251 + $0x28] sm:$0xff] %v604
        %637 = vst [vmem:[%s251 + $0x30] sm:$0xff] %v605
        %638 = vst [vmem:[%s251 + $0x38] sm:$0xff] %v606
        %639 = vst [vmem:[%s251 + $0x40] sm:$0xff] %v607
        %640 = vst [vmem:[%s251 + $0x48] sm:$0xff] %v608
        %641 = vst [vmem:[%s251 + $0x50] sm:$0xff] %v609
        %642 = vst [vmem:[%s251 + $0x58] sm:$0xff] %v610
        %643 = vst [vmem:[%s251 + $0x60] sm:$0xff] %v611
        %644 = vst [vmem:[%s251 + $0x68] sm:$0xff] %v612
        %645 = vst [vmem:[%s251 + $0x70] sm:$0xff] %v613
        %646 = vst [vmem:[%s251 + $0x78] sm:$0xff] %v614
        %647 = vst [vmem:[%s251 + $0x80] sm:$0xff] %v615
        %648 = vst [vmem:[%s251 + $0x88] sm:$0xff] %v616
        %649 = vst [vmem:[%s251 + $0x90] sm:$0xff] %v617
        %650 = vst [vmem:[%s251 + $0x98] sm:$0xff] %v618
        %651 = vst [vmem:[%s251 + $0xa0] sm:$0xff] %v619
        %652 = vst [vmem:[%s251 + $0xa8] sm:$0xff] %v620
        %653 = vst [vmem:[%s251 + $0xb0] sm:$0xff] %v621
        %654 = vst [vmem:[%s251 + $0xb8] sm:$0xff] %v622
        %655 = vst [vmem:[%s251 + $0xc0] sm:$0xff] %v623
        %656 = vst [vmem:[%s251 + $0xc8] sm:$0xff] %v624
        %657 = vst [vmem:[%s251 + $0xd0] sm:$0xff] %v625
        %658 = vst [vmem:[%s251 + $0xd8] sm:$0xff] %v626
        %659 = vst [vmem:[%s251 + $0xe0] sm:$0xff] %v627
        %660 = vst [vmem:[%s251 + $0xe8] sm:$0xff] %v628
        %661 = vst [vmem:[%s251 + $0xf0] sm:$0xff] %v629
        %662 = vst [vmem:[%s251 + $0xf8] sm:$0xff] %v630
        %s663 = smul.u32 32, %s20
        %p664 = scmp.lt.s32.totalorder %s663, 63
        %s665 = scalar_select %p664, %s663, 63
        %p666 = scmp.lt.s32.totalorder %s21, 0
        %s667 = scalar_select %p666, %s21, 0
        %s668 = sadd.s32 %s667, %s665
        %s669 = smul.addr %s668, 8
        %s670 = scalar_lea.vmem %s3, %s669
        // Predicated region
        $region37: #{resnet18_dense_forward.23} parent=31 // pred_check
          %p671 = pneg %p136
        $region38: #{resnet18_dense_forward.23} parent=31 // pred_check_branch
          %673 = sbr.rel (%p671) target = $region40
        $region39: #{resnet18_dense_forward.23} parent=31 // pred_region
          %s674 = smul.u32 32, %s20
        $region40: #{resnet18_dense_forward.23} parent=31 // pred_fallthru
          _
      $region32: #{resnet18_dense_forward.23} parent=5 // pred_fallthru
        _
      %p675 = scmp.le.s32.totalorder 2, %s10
      // Predicated region
      $region41: #{resnet18_dense_forward.23} parent=5 // pred_check
        %p676 = pneg %p675
      $region42: #{resnet18_dense_forward.23} parent=5 // pred_check_branch
        %678 = sbr.rel (%p676) target = $region44
      $region43: #{resnet18_dense_forward.23} parent=5 // pred_region
        %s679 = ssub.s32 %s10, 2
        // Predicated region
        $region45: #{resnet18_dense_forward.23} parent=43 // pred_check
          %p680 = pneg %p142
        $region46: #{resnet18_dense_forward.23} parent=43 // pred_check_branch
          %682 = sbr.rel (%p680) target = $region48
        $region47: #{resnet18_dense_forward.23} parent=43 // pred_region
          %s683 = smul.u32 32, %s23
          %p684 = scmp.lt.s32.totalorder %s683, 63
          %s685 = scalar_select %p684, %s683, 63
          %p686 = scmp.lt.s32.totalorder %s24, 0
          %s687 = scalar_select %p686, %s24, 0
          %s688 = sadd.s32 %s687, %s685
          %s689 = smul.addr %s688, 8
          %s690 = scalar_lea.vmem %s3, %s689
        $region48: #{resnet18_dense_forward.23} parent=43 // pred_fallthru
          _
      $region44: #{resnet18_dense_forward.23} parent=5 // pred_fallthru
        _
    $region6: #{resnet18_dense_forward.23} parent=1 // loop_footer
      %s14 = sadd.s32 1, %s10
    $region7: #{resnet18_dense_forward.23} parent=1 // loop_footer_branch
      %9 = sbr.rel target = $region3
    $region8: #{resnet18_dense_forward.23} parent=1 // loop_exit
      _
    %691 = vsyncpa [#allocation3], 1
    %s692 = scalar_lea.sflag [#allocation3], 1
    %693 = vsyncpa %s692, 1

// kernel: resnet18_dense_forward.24
$region0: #{resnet18_dense_forward.24}
  #allocation0 [shape = 'u32[]', space=smem, size = 0x4, offset = 0x4, fixed_abs, tag = 'smem constant byte address 0x4 - core index']
  #allocation1 [shape = 'u32[144,128]{1,0:T(1,128)}', space=vmem, size = 0x12000, scoped, tag = 'internal scratch']
  %s0 = inlined_call_operand.vmem [shape: bf16[512,160], index: 0, kind: input, shape index: {}]
  %s1 = inlined_call_operand.vmem [shape: bf16[160,128], index: 1, kind: input, shape index: {}]
  %s2 = inlined_call_operand.vmem [shape: f32[1,128], index: 2, kind: input, shape index: {}]
  %s3 = inlined_call_operand.vmem [shape: f32[512,128], index: 3, kind: output, shape index: {}]
  %s4 = sld [smem:[#allocation0]]
  $region45: #{resnet18_dense_forward.24} parent=0
    _
  %s6 = ssub.s32 1, %s4
  %s7 = scalar_select 0, %s6, %s4
  loop: start=0, step=1, limit=4
  $region2: #{resnet18_dense_forward.24} parent=0 // loop_pre_header
    _
  $region3: #{resnet18_dense_forward.24} parent=0 // loop_header
    %s9 = sphi 0, %s13
    %p10 = scmp.ge.s32.totalorder %s9, 4
    %s16 = sphi 0, %s35
    %s17 = sphi 0, %s31
    %s18 = sphi 0, %s27
    %s19 = sphi 0, %s16
    %s20 = sphi 0, %s17
    %s21 = sphi 0, %s18
    %s22 = sphi 0, %s19
    %s23 = sphi 0, %s20
    %s24 = sphi 0, %s21
    %s40 = sphi 0, %s42
    %s43 = sphi 0, %s40
    %s44 = sphi 0, %s43
    %s60 = sphi 0, %s44
    %s68 = sphi 0, %s70
    %s71 = sphi 0, %s68
    %s72 = sphi 0, %s71
    %s88 = sphi 0, %s72
    %s94 = sphi 0, %s96
    %s97 = sphi 0, %s94
    %s98 = sphi 0, %s97
    %s114 = sphi 0, %s98
    %s122 = sphi 0, %s124
    %s125 = sphi 0, %s122
    %s126 = sphi 0, %s125
    %s142 = sphi 0, %s126
  $region4: #{resnet18_dense_forward.24} parent=0 // loop_header_branch
    %12 = sbr.rel (%p10) target = $region8
  $region5: #{resnet18_dense_forward.24} parent=0 // loop_body
    %s14 = ssub.s32 %s9, 1
    %s15 = ssub.s32 %s9, 2
    %s25 = sadd.s32 1, %s18
    %p26 = scmp.ge.s32.totalorder %s25, 1
    %s27 = scalar_select %p26, 0, %s25
    %s28 = sadd.s32 1, %s17
    %s29 = scalar_select %p26, %s28, %s17
    %p30 = scmp.ge.s32.totalorder %s29, 1
    %s31 = scalar_select %p30, 0, %s29
    %s32 = sadd.s32 1, %s16
    %s33 = scalar_select %p30, %s32, %s16
    %p34 = scmp.ge.s32.totalorder %s33, 2
    %s35 = scalar_select %p34, 0, %s33
    %s36 = ssub.s32 %s16, %s35
    %s37 = ssub.s32 %s18, %s27
    %s38 = sor.u32 %s36, %s37
    %p39 = scmp.eq.s32.totalorder %s38, 0
    %s41 = sadd.s32 %s40, 1
    %s42 = scalar_select %p39, %s40, %s41
    %p45 = pneg %p39
    %p46 = scmp.eq.s32.totalorder %s9, 1
    %p47 = por %p45, %p46
    %p48 = scmp.ne.s32.totalorder %s40, %s43
    %p49 = scmp.eq.s32.totalorder %s9, 0
    %p50 = por %p48, %p49
    %p51 = scmp.ne.s32.totalorder %s40, %s43
    %p52 = scmp.eq.s32.totalorder %s14, 1
    %p53 = por %p51, %p52
    %p54 = scmp.ne.s32.totalorder %s43, %s44
    %p55 = scmp.eq.s32.totalorder %s14, 0
    %p56 = por %p54, %p55
    %p57 = scmp.ne.s32.totalorder %s43, %s44
    %p58 = scmp.eq.s32.totalorder %s15, 1
    %p59 = por %p57, %p58
    %p61 = scmp.ne.s32.totalorder %s44, %s60
    %p62 = scmp.eq.s32.totalorder %s15, 0
    %p63 = por %p61, %p62
    %s64 = ssub.s32 %s18, %s27
    %s65 = ssub.s32 %s17, %s31
    %s66 = sor.u32 %s64, %s65
    %p67 = scmp.eq.s32.totalorder %s66, 0
    %s69 = sadd.s32 %s68, 1
    %s70 = scalar_select %p67, %s68, %s69
    %p73 = pneg %p67
    %p74 = scmp.eq.s32.totalorder %s9, 1
    %p75 = por %p73, %p74
    %p76 = scmp.ne.s32.totalorder %s68, %s71
    %p77 = scmp.eq.s32.totalorder %s9, 0
    %p78 = por %p76, %p77
    %p79 = scmp.ne.s32.totalorder %s68, %s71
    %p80 = scmp.eq.s32.totalorder %s14, 1
    %p81 = por %p79, %p80
    %p82 = scmp.ne.s32.totalorder %s71, %s72
    %p83 = scmp.eq.s32.totalorder %s14, 0
    %p84 = por %p82, %p83
    %p85 = scmp.ne.s32.totalorder %s71, %s72
    %p86 = scmp.eq.s32.totalorder %s15, 1
    %p87 = por %p85, %p86
    %p89 = scmp.ne.s32.totalorder %s72, %s88
    %p90 = scmp.eq.s32.totalorder %s15, 0
    %p91 = por %p89, %p90
    %s92 = ssub.s32 %s17, %s31
    %p93 = scmp.eq.s32.totalorder %s92, 0
    %s95 = sadd.s32 %s94, 1
    %s96 = scalar_select %p93, %s94, %s95
    %p99 = pneg %p93
    %p100 = scmp.eq.s32.totalorder %s9, 1
    %p101 = por %p99, %p100
    %p102 = scmp.ne.s32.totalorder %s94, %s97
    %p103 = scmp.eq.s32.totalorder %s9, 0
    %p104 = por %p102, %p103
    %p105 = scmp.ne.s32.totalorder %s94, %s97
    %p106 = scmp.eq.s32.totalorder %s14, 1
    %p107 = por %p105, %p106
    %p108 = scmp.ne.s32.totalorder %s97, %s98
    %p109 = scmp.eq.s32.totalorder %s14, 0
    %p110 = por %p108, %p109
    %p111 = scmp.ne.s32.totalorder %s97, %s98
    %p112 = scmp.eq.s32.totalorder %s15, 1
    %p113 = por %p111, %p112
    %p115 = scmp.ne.s32.totalorder %s98, %s114
    %p116 = scmp.eq.s32.totalorder %s15, 0
    %p117 = por %p115, %p116
    %s118 = ssub.s32 %s16, %s35
    %s119 = ssub.s32 %s17, %s31
    %s120 = sor.u32 %s118, %s119
    %p121 = scmp.eq.s32.totalorder %s120, 0
    %s123 = sadd.s32 %s122, 1
    %s124 = scalar_select %p121, %s122, %s123
    %p127 = pneg %p121
    %p128 = scmp.eq.s32.totalorder %s9, 1
    %p129 = por %p127, %p128
    %p130 = scmp.ne.s32.totalorder %s122, %s125
    %p131 = scmp.eq.s32.totalorder %s9, 0
    %p132 = por %p130, %p131
    %p133 = scmp.ne.s32.totalorder %s122, %s125
    %p134 = scmp.eq.s32.totalorder %s14, 1
    %p135 = por %p133, %p134
    %p136 = scmp.ne.s32.totalorder %s125, %s126
    %p137 = scmp.eq.s32.totalorder %s14, 0
    %p138 = por %p136, %p137
    %p139 = scmp.ne.s32.totalorder %s125, %s126
    %p140 = scmp.eq.s32.totalorder %s15, 1
    %p141 = por %p139, %p140
    %p143 = scmp.ne.s32.totalorder %s126, %s142
    %p144 = scmp.eq.s32.totalorder %s15, 0
    %p145 = por %p143, %p144
    %p146 = scmp.le.s32.totalorder 1, %s9
    %p147 = scmp.lt.s32.totalorder %s9, 3
    %p148 = pnand %p146, %p147
    %p149 = pneg %p148
    // Predicated region
    $region9: #{resnet18_dense_forward.24} parent=5 // pred_check
      _
    $region10: #{resnet18_dense_forward.24} parent=5 // pred_check_branch
      %151 = sbr.rel (%p148) target = $region12
    $region11: #{resnet18_dense_forward.24} parent=5 // pred_region
      %s152 = ssub.s32 %s9, 1
      // Predicated region
      $region13: #{resnet18_dense_forward.24} parent=11 // pred_check
        %p153 = pneg %p84
      $region14: #{resnet18_dense_forward.24} parent=11 // pred_check_branch
        %155 = sbr.rel (%p153) target = $region16
      $region15: #{resnet18_dense_forward.24} parent=11 // pred_region
        %s156 = smul.u32 20, %s21
        %p157 = scmp.lt.s32.totalorder %s156, 19
        %s158 = scalar_select %p157, %s156, 19
        %p159 = scmp.lt.s32.totalorder %s20, 0
        %s160 = scalar_select %p159, %s20, 0
        %s161 = sadd.s32 %s160, %s158
        %s162 = smul.addr %s161, 4
        %s163 = scalar_lea.vmem %s1, %s162
        %s164 = smul.u32 20, %s21
      $region16: #{resnet18_dense_forward.24} parent=11 // pred_fallthru
        _
      // Predicated region
      $region17: #{resnet18_dense_forward.24} parent=11 // pred_check
        %p165 = pneg %p110
      $region18: #{resnet18_dense_forward.24} parent=11 // pred_check_branch
        %167 = sbr.rel (%p165) target = $region20
      $region19: #{resnet18_dense_forward.24} parent=11 // pred_region
        %p168 = scmp.lt.s32.totalorder %s20, 0
        %s169 = scalar_select %p168, %s20, 0
        %s170 = scalar_lea.vmem %s2, %s169
      $region20: #{resnet18_dense_forward.24} parent=11 // pred_fallthru
        _
    $region12: #{resnet18_dense_forward.24} parent=5 // pred_fallthru
      _
    %p171 = scmp.lt.s32.totalorder %s9, 2
    // Predicated region
    $region21: #{resnet18_dense_forward.24} parent=5 // pred_check
      %p172 = pneg %p171
    $region22: #{resnet18_dense_forward.24} parent=5 // pred_check_branch
      %174 = sbr.rel (%p172) target = $region24
    $region23: #{resnet18_dense_forward.24} parent=5 // pred_region
      // Predicated region
      $region25: #{resnet18_dense_forward.24} parent=23 // pred_check
        %p175 = pneg %p50
      $region26: #{resnet18_dense_forward.24} parent=23 // pred_check_branch
        %177 = sbr.rel (%p175) target = $region28
      $region27: #{resnet18_dense_forward.24} parent=23 // pred_region
        %s178 = smul.u32 32, %s16
        %s179 = smul.u32 2, %s18
        %p180 = scmp.lt.s32.totalorder %s178, 63
        %s181 = scalar_select %p180, %s178, 63
        %p182 = scmp.lt.s32.totalorder %s179, 1
        %s183 = scalar_select %p182, %s179, 1
        %s184 = smul.addr %s181, 2
        %s185 = sadd.s32 %s183, %s184
        %s186 = smul.addr %s185, 4
        %s187 = scalar_lea.vmem %s0, %s186
        %s188 = smul.u32 32, %s16
        %s189 = smul.u32 2, %s18
      $region28: #{resnet18_dense_forward.24} parent=23 // pred_fallthru
        _
    $region24: #{resnet18_dense_forward.24} parent=5 // pred_fallthru
      _
    %p190 = scmp.le.s32.totalorder 1, %s9
    %p191 = scmp.lt.s32.totalorder %s9, 3
    %p192 = pnand %p190, %p191
    %p193 = pneg %p192
    // Predicated region
    $region29: #{resnet18_dense_forward.24} parent=5 // pred_check
      _
    $region30: #{resnet18_dense_forward.24} parent=5 // pred_check_branch
      %195 = sbr.rel (%p192) target = $region32
    $region31: #{resnet18_dense_forward.24} parent=5 // pred_region
      %s196 = ssub.s32 %s9, 1
      %s197 = smul.u32 32, %s19
      %s198 = smul.u32 2, %s21
      %p199 = scmp.lt.s32.totalorder %s197, 63
      %s200 = scalar_select %p199, %s197, 63
      %p201 = scmp.lt.s32.totalorder %s198, 1
      %s202 = scalar_select %p201, %s198, 1
      %s203 = smul.addr %s200, 2
      %s204 = sadd.s32 %s202, %s203
      %s205 = smul.addr %s204, 4
      %s206 = scalar_lea.vmem %s0, %s205
      %p207 = pneg %p56
      %p208 = pneg %p53
      %s209 = smul.u32 20, %s21
      %p210 = scmp.lt.s32.totalorder %s209, 19
      %s211 = scalar_select %p210, %s209, 19
      %p212 = scmp.lt.s32.totalorder %s20, 0
      %s213 = scalar_select %p212, %s20, 0
      %s214 = sadd.s32 %s213, %s211
      %s215 = smul.addr %s214, 4
      %s216 = scalar_lea.vmem %s1, %s215
      %p217 = pneg %p84
      %p218 = pneg %p81
      %p219 = scmp.lt.s32.totalorder %s20, 0
      %s220 = scalar_select %p219, %s20, 0
      %s221 = scalar_lea.vmem %s2, %s220
      %p222 = pneg %p110
      %p223 = pneg %p107
      %p224 = pneg %p138
      %p225 = pneg %p135
      %s226 = smul.u32 32, %s19
      %p227 = scmp.lt.s32.totalorder %s226, 63
      %s228 = scalar_select %p227, %s226, 63
      %p229 = scmp.lt.s32.totalorder %s20, 0
      %s230 = scalar_select %p229, %s20, 0
      %s231 = sadd.s32 %s230, %s228
      %s232 = smul.addr %s231, 8
      %s233 = scalar_lea.vmem %s3, %s232
      %s234 = smul.u32 32, %s19
      %s235 = smul.u32 2, %s21
      %p236 = scmp.lt.s32.totalorder %s234, 63
      %s237 = scalar_select %p236, %s234, 63
      %p238 = scmp.lt.s32.totalorder %s235, 1
      %s239 = scalar_select %p238, %s235, 1
      %s240 = smul.addr %s237, 2
      %s241 = sadd.s32 %s239, %s240
      %s242 = smul.addr %s241, 4
      %s243 = scalar_lea.vmem %s0, %s242
      %s244 = smul.u32 32, %s19
      %s245 = smul.u32 2, %s21
      %s246 = smul.u32 20, %s21
      %p247 = scmp.lt.s32.totalorder %s246, 19
      %s248 = scalar_select %p247, %s246, 19
      %p249 = scmp.lt.s32.totalorder %s20, 0
      %s250 = scalar_select %p249, %s20, 0
      %s251 = sadd.s32 %s250, %s248
      %s252 = smul.addr %s251, 4
      %s253 = scalar_lea.vmem %s1, %s252
      %s254 = smul.u32 20, %s21
      %p255 = scmp.lt.s32.totalorder %s20, 0
      %s256 = scalar_select %p255, %s20, 0
      %s257 = scalar_lea.vmem %s2, %s256
      %s258 = smul.u32 32, %s19
      %p259 = scmp.lt.s32.totalorder %s258, 63
      %s260 = scalar_select %p259, %s258, 63
      %p261 = scmp.lt.s32.totalorder %s20, 0
      %s262 = scalar_select %p261, %s20, 0
      %s263 = sadd.s32 %s262, %s260
      %s264 = smul.addr %s263, 8
      %s265 = scalar_lea.vmem %s3, %s264
      %s266 = smul.u32 32, %s19
      %v268 = vld [vmem:[%s243] sm:$0xff]
      %v269 = vld [vmem:[%s243 + $0x8] sm:$0xff]
      %v270 = vld [vmem:[%s243 + $0x10] sm:$0xff]
      %v271 = vld [vmem:[%s243 + $0x18] sm:$0xff]
      %v272 = vld [vmem:[%s243 + $0x20] sm:$0xff]
      %v273 = vld [vmem:[%s243 + $0x28] sm:$0xff]
      %v274 = vld [vmem:[%s243 + $0x30] sm:$0xff]
      %v275 = vld [vmem:[%s243 + $0x38] sm:$0xff]
      %v276 = vld [vmem:[%s243 + $0x40] sm:$0xff]
      %v277 = vld [vmem:[%s243 + $0x48] sm:$0xff]
      %v278 = vld [vmem:[%s243 + $0x50] sm:$0xff]
      %v279 = vld [vmem:[%s243 + $0x58] sm:$0xff]
      %v280 = vld [vmem:[%s243 + $0x60] sm:$0xff]
      %v281 = vld [vmem:[%s243 + $0x68] sm:$0xff]
      %v282 = vld [vmem:[%s243 + $0x70] sm:$0xff]
      %v283 = vld [vmem:[%s243 + $0x78] sm:$0xff]
      %v284 = vld [vmem:[%s243 + $0x80] sm:$0xff]
      %v285 = vld [vmem:[%s243 + $0x88] sm:$0xff]
      %v286 = vld [vmem:[%s243 + $0x90] sm:$0xff]
      %v287 = vld [vmem:[%s243 + $0x98] sm:$0xff]
      %v288 = vld [vmem:[%s243 + $0xa0] sm:$0xff]
      %v289 = vld [vmem:[%s243 + $0xa8] sm:$0xff]
      %v290 = vld [vmem:[%s243 + $0xb0] sm:$0xff]
      %v291 = vld [vmem:[%s243 + $0xb8] sm:$0xff]
      %v292 = vld [vmem:[%s243 + $0xc0] sm:$0xff]
      %v293 = vld [vmem:[%s243 + $0xc8] sm:$0xff]
      %v294 = vld [vmem:[%s243 + $0xd0] sm:$0xff]
      %v295 = vld [vmem:[%s243 + $0xd8] sm:$0xff]
      %v296 = vld [vmem:[%s243 + $0xe0] sm:$0xff]
      %v297 = vld [vmem:[%s243 + $0xe8] sm:$0xff]
      %v298 = vld [vmem:[%s243 + $0xf0] sm:$0xff]
      %v299 = vld [vmem:[%s243 + $0xf8] sm:$0xff]
      %v300 = vld [vmem:[%s253] sm:$0xf]
      %v301 = vld [vmem:[%s253 + $0x4] sm:$0xf]
      %v302 = vld [vmem:[%s253 + $0x8] sm:$0xf]
      %v303 = vld [vmem:[%s253 + $0xc] sm:$0xf]
      %v304 = vld [vmem:[%s253 + $0x10] sm:$0xf]
      %v305 = vld [vmem:[%s253 + $0x14] sm:$0xf]
      %v306 = vld [vmem:[%s253 + $0x18] sm:$0xf]
      %v307 = vld [vmem:[%s253 + $0x1c] sm:$0xf]
      %v308 = vld [vmem:[%s253 + $0x20] sm:$0xf]
      %v309 = vld [vmem:[%s253 + $0x24] sm:$0xf]
      %v310 = vld [vmem:[%s253 + $0x28] sm:$0xf]
      %v311 = vld [vmem:[%s253 + $0x2c] sm:$0xf]
      %v312 = vld [vmem:[%s253 + $0x30] sm:$0xf]
      %v313 = vld [vmem:[%s253 + $0x34] sm:$0xf]
      %v314 = vld [vmem:[%s253 + $0x38] sm:$0xf]
      %v315 = vld [vmem:[%s253 + $0x3c] sm:$0xf]
      %v316 = vld [vmem:[%s253 + $0x40] sm:$0xf]
      %v317 = vld [vmem:[%s253 + $0x44] sm:$0xf]
      %v318 = vld [vmem:[%s253 + $0x48] sm:$0xf]
      %v319 = vld [vmem:[%s253 + $0x4c] sm:$0xf]
      %v320 = vld [vmem:[%s257] sm:$0x1]
      %v322 = vlaneseq
      %v323 = vshrl.u32 %v322, 7
      %v324 = vsub.s32 0, %v323
      %v325 = vrot.slane %v320, %v324
      %v359 = vunpack.c.l.b16 %v268
      %v360 = vunpack.c.h.b16 %v268
      %v361 = vunpack.c.l.b16 %v269
      %v362 = vunpack.c.h.b16 %v269
      %v363 = vunpack.c.l.b16 %v270
      %v364 = vunpack.c.h.b16 %v270
      %v365 = vunpack.c.l.b16 %v271
      %v366 = vunpack.c.h.b16 %v271
      %v367 = vunpack.c.l.b16 %v272
      %v368 = vunpack.c.h.b16 %v272
      %v369 = vunpack.c.l.b16 %v273
      %v370 = vunpack.c.h.b16 %v273
      %v371 = vunpack.c.l.b16 %v274
      %v372 = vunpack.c.h.b16 %v274
      %v373 = vunpack.c.l.b16 %v275
      %v374 = vunpack.c.h.b16 %v275
      %v375 = vunpack.c.l.b16 %v276
      %v376 = vunpack.c.h.b16 %v276
      %v377 = vunpack.c.l.b16 %v277
      %v378 = vunpack.c.h.b16 %v277
      %v379 = vunpack.c.l.b16 %v278
      %v380 = vunpack.c.h.b16 %v278
      %v381 = vunpack.c.l.b16 %v279
      %v382 = vunpack.c.h.b16 %v279
      %v383 = vunpack.c.l.b16 %v280
      %v384 = vunpack.c.h.b16 %v280
      %v385 = vunpack.c.l.b16 %v281
      %v386 = vunpack.c.h.b16 %v281
      %v387 = vunpack.c.l.b16 %v282
      %v388 = vunpack.c.h.b16 %v282
      %v389 = vunpack.c.l.b16 %v283
      %v390 = vunpack.c.h.b16 %v283
      %v391 = vunpack.c.l.b16 %v284
      %v392 = vunpack.c.h.b16 %v284
      %v393 = vunpack.c.l.b16 %v285
      %v394 = vunpack.c.h.b16 %v285
      %v395 = vunpack.c.l.b16 %v286
      %v396 = vunpack.c.h.b16 %v286
      %v397 = vunpack.c.l.b16 %v287
      %v398 = vunpack.c.h.b16 %v287
      %v399 = vunpack.c.l.b16 %v288
      %v400 = vunpack.c.h.b16 %v288
      %v401 = vunpack.c.l.b16 %v289
      %v402 = vunpack.c.h.b16 %v289
      %v403 = vunpack.c.l.b16 %v290
      %v404 = vunpack.c.h.b16 %v290
      %v405 = vunpack.c.l.b16 %v291
      %v406 = vunpack.c.h.b16 %v291
      %v407 = vunpack.c.l.b16 %v292
      %v408 = vunpack.c.h.b16 %v292
      %v409 = vunpack.c.l.b16 %v293
      %v410 = vunpack.c.h.b16 %v293
      %v411 = vunpack.c.l.b16 %v294
      %v412 = vunpack.c.h.b16 %v294
      %v413 = vunpack.c.l.b16 %v295
      %v414 = vunpack.c.h.b16 %v295
      %v415 = vunpack.c.l.b16 %v296
      %v416 = vunpack.c.h.b16 %v296
      %v417 = vunpack.c.l.b16 %v297
      %v418 = vunpack.c.h.b16 %v297
      %v419 = vunpack.c.l.b16 %v298
      %v420 = vunpack.c.h.b16 %v298
      %v421 = vunpack.c.l.b16 %v299
      %v422 = vunpack.c.h.b16 %v299
      %v423 = vpack.c.b16 %v361, %v359
      %v424 = vpack.c.b16 %v362, %v360
      %v425 = vpack.c.b16 %v365, %v363
      %v426 = vpack.c.b16 %v366, %v364
      %v427 = vpack.c.b16 %v369, %v367
      %v428 = vpack.c.b16 %v370, %v368
      %v429 = vpack.c.b16 %v373, %v371
      %v430 = vpack.c.b16 %v374, %v372
      %v431 = vpack.c.b16 %v377, %v375
      %v432 = vpack.c.b16 %v378, %v376
      %v433 = vpack.c.b16 %v381, %v379
      %v434 = vpack.c.b16 %v382, %v380
      %v435 = vpack.c.b16 %v385, %v383
      %v436 = vpack.c.b16 %v386, %v384
      %v437 = vpack.c.b16 %v389, %v387
      %v438 = vpack.c.b16 %v390, %v388
      %v439 = vpack.c.b16 %v393, %v391
      %v440 = vpack.c.b16 %v394, %v392
      %v441 = vpack.c.b16 %v397, %v395
      %v442 = vpack.c.b16 %v398, %v396
      %v443 = vpack.c.b16 %v401, %v399
      %v444 = vpack.c.b16 %v402, %v400
      %v445 = vpack.c.b16 %v405, %v403
      %v446 = vpack.c.b16 %v406, %v404
      %v447 = vpack.c.b16 %v409, %v407
      %v448 = vpack.c.b16 %v410, %v408
      %v449 = vpack.c.b16 %v413, %v411
      %v450 = vpack.c.b16 %v414, %v412
      %v451 = vpack.c.b16 %v417, %v415
      %v452 = vpack.c.b16 %v418, %v416
      %v453 = vpack.c.b16 %v421, %v419
      %v454 = vpack.c.b16 %v422, %v420
      %v491 = vunpack.c.l.b16 %v300
      %v492 = vunpack.c.l.b16 %v301
      %v493 = vunpack.c.l.b16 %v302
      %v494 = vunpack.c.l.b16 %v303
      %v495 = vunpack.c.l.b16 %v304
      %v496 = vunpack.c.l.b16 %v305
      %v497 = vunpack.c.l.b16 %v306
      %v498 = vunpack.c.l.b16 %v307
      %v499 = vunpack.c.l.b16 %v308
      %v500 = vunpack.c.l.b16 %v309
      %v501 = vunpack.c.l.b16 %v310
      %v502 = vunpack.c.l.b16 %v311
      %v503 = vunpack.c.l.b16 %v312
      %v504 = vunpack.c.l.b16 %v313
      %v505 = vunpack.c.l.b16 %v314
      %v506 = vunpack.c.l.b16 %v315
      %v507 = vunpack.c.l.b16 %v316
      %v508 = vunpack.c.l.b16 %v317
      %v509 = vunpack.c.l.b16 %v318
      %v510 = vunpack.c.l.b16 %v319
      %v511 = vpack.c.b16 %v492, %v491
      %v512 = vpack.c.b16 %v494, %v493
      %v513 = vpack.c.b16 %v496, %v495
      %v514 = vpack.c.b16 %v498, %v497
      %v515 = vpack.c.b16 %v500, %v499
      %v516 = vpack.c.b16 %v502, %v501
      %v517 = vpack.c.b16 %v504, %v503
      %v518 = vpack.c.b16 %v506, %v505
      %v519 = vpack.c.b16 %v508, %v507
      %v520 = vpack.c.b16 %v510, %v509
      %vm531 = vcmask 261120
      %v533 = vsel %vm531, %v424, 0
      %v536 = vsel %vm531, %v426, 0
      %v539 = vsel %vm531, %v428, 0
      %v542 = vsel %vm531, %v430, 0
      %v545 = vsel %vm531, %v432, 0
      %v548 = vsel %vm531, %v434, 0
      %v551 = vsel %vm531, %v436, 0
      %v554 = vsel %vm531, %v438, 0
      %v557 = vsel %vm531, %v440, 0
      %v560 = vsel %vm531, %v442, 0
      %v563 = vsel %vm531, %v444, 0
      %v566 = vsel %vm531, %v446, 0
      %v569 = vsel %vm531, %v448, 0
      %v572 = vsel %vm531, %v450, 0
      %v575 = vsel %vm531, %v452, 0
      %v578 = vsel %vm531, %v454, 0
      %580 = vmatprep.subr.bf16.mxu0 0
      %581 = vmatpush1.bf16.msra.mxu0 %v511
      %582 = vmatprep.subr.bf16.mxu0 0
      %583 = vmatpush1.bf16.msra.mxu0 %v512
      %584 = vmatprep.subr.bf16.mxu0 0
      %585 = vmatpush1.bf16.msra.mxu0 %v513
      %586 = vmatprep.subr.bf16.mxu0 0
      %587 = vmatpush1.bf16.msra.mxu0 %v514
      %588 = vmatprep.subr.bf16.mxu0 0
      %589 = vmatpush1.bf16.msra.mxu0 %v515
      %590 = vmatprep.subr.bf16.mxu0 0
      %591 = vmatpush1.bf16.msra.mxu0 %v516
      %592 = vmatprep.subr.bf16.mxu0 0
      %593 = vmatpush1.bf16.msra.mxu0 %v517
      %594 = vmatprep.subr.bf16.mxu0 0
      %595 = vmatpush1.bf16.msra.mxu0 %v518
      %596 = vmatprep.subr.bf16.mxu0 0
      %597 = vmatpush1.bf16.msra.mxu0 %v519
      %598 = vmatprep.subr.bf16.mxu0 0
      %599 = vmatpush1.bf16.msra.mxu0 %v520
      %600 = vmatprep.subr.bf16.mxu0 0
      %601 = vmatpush1.bf16.msra.mxu0 0
      %602 = vmatprep.subr.bf16.mxu0 0
      %603 = vmatpush1.bf16.msra.mxu0 0
      %604 = vmatprep.subr.bf16.mxu0 0
      %605 = vmatpush1.bf16.msra.mxu0 0
      %606 = vmatprep.subr.bf16.mxu0 0
      %607 = vmatpush1.bf16.msra.mxu0 0
      %608 = vmatprep.subr.bf16.mxu0 0
      %609 = vmatpush1.bf16.msra.mxu0 0
      %610 = vmatprep.subr.bf16.mxu0 0
      %611 = vmatpush1.bf16.msra.mxu0 0
      %612 = vmatprep.mubr.bf16.mxu0 %v533
      %613 = vmatmul.mubr.bf16.gmra.mrb[0].mxu0 %v423
      %v614 = vpop.f32.mrb[0].mxu0
      %v615 = vadd.f32 %v325, %v614
      %v616 = vpop.f32.mrb[0].mxu0
      %v617 = vpop.f32.mrb[0].mxu0
      %v618 = vadd.f32 %v325, %v617
      %v619 = vpop.f32.mrb[0].mxu0
      %620 = vmatprep.mubr.bf16.mxu0 %v536
      %621 = vmatmul.mubr.bf16.gmra.mrb[0].mxu0 %v425
      %v622 = vpop.f32.mrb[0].mxu0
      %v623 = vadd.f32 %v325, %v622
      %v624 = vpop.f32.mrb[0].mxu0
      %v625 = vpop.f32.mrb[0].mxu0
      %v626 = vadd.f32 %v325, %v625
      %v627 = vpop.f32.mrb[0].mxu0
      %628 = vmatprep.mubr.bf16.mxu0 %v539
      %629 = vmatmul.mubr.bf16.gmra.mrb[0].mxu0 %v427
      %v630 = vpop.f32.mrb[0].mxu0
      %v631 = vadd.f32 %v325, %v630
      %v632 = vpop.f32.mrb[0].mxu0
      %v633 = vpop.f32.mrb[0].mxu0
      %v634 = vadd.f32 %v325, %v633
      %v635 = vpop.f32.mrb[0].mxu0
      %636 = vmatprep.mubr.bf16.mxu0 %v542
      %637 = vmatmul.mubr.bf16.gmra.mrb[0].mxu0 %v429
      %v638 = vpop.f32.mrb[0].mxu0
      %v639 = vadd.f32 %v325, %v638
      %v640 = vpop.f32.mrb[0].mxu0
      %v641 = vpop.f32.mrb[0].mxu0
      %v642 = vadd.f32 %v325, %v641
      %v643 = vpop.f32.mrb[0].mxu0
      %644 = vmatprep.mubr.bf16.mxu0 %v545
      %645 = vmatmul.mubr.bf16.gmra.mrb[0].mxu0 %v431
      %v646 = vpop.f32.mrb[0].mxu0
      %v647 = vadd.f32 %v325, %v646
      %v648 = vpop.f32.mrb[0].mxu0
      %v649 = vpop.f32.mrb[0].mxu0
      %v650 = vadd.f32 %v325, %v649
      %v651 = vpop.f32.mrb[0].mxu0
      %652 = vmatprep.mubr.bf16.mxu0 %v548
      %653 = vmatmul.mubr.bf16.gmra.mrb[0].mxu0 %v433
      %v654 = vpop.f32.mrb[0].mxu0
      %v655 = vadd.f32 %v325, %v654
      %v656 = vpop.f32.mrb[0].mxu0
      %v657 = vpop.f32.mrb[0].mxu0
      %v658 = vadd.f32 %v325, %v657
      %v659 = vpop.f32.mrb[0].mxu0
      %660 = vmatprep.mubr.bf16.mxu0 %v551
      %661 = vmatmul.mubr.bf16.gmra.mrb[0].mxu0 %v435
      %v662 = vpop.f32.mrb[0].mxu0
      %v663 = vadd.f32 %v325, %v662
      %v664 = vpop.f32.mrb[0].mxu0
      %v665 = vpop.f32.mrb[0].mxu0
      %v666 = vadd.f32 %v325, %v665
      %v667 = vpop.f32.mrb[0].mxu0
      %668 = vmatprep.mubr.bf16.mxu0 %v554
      %669 = vmatmul.mubr.bf16.gmra.mrb[0].mxu0 %v437
      %v670 = vpop.f32.mrb[0].mxu0
      %v671 = vadd.f32 %v325, %v670
      %v672 = vpop.f32.mrb[0].mxu0
      %v673 = vpop.f32.mrb[0].mxu0
      %v674 = vadd.f32 %v325, %v673
      %v675 = vpop.f32.mrb[0].mxu0
      %676 = vmatprep.mubr.bf16.mxu0 %v557
      %677 = vmatmul.mubr.bf16.gmra.mrb[0].mxu0 %v439
      %v678 = vpop.f32.mrb[0].mxu0
      %v679 = vadd.f32 %v325, %v678
      %v680 = vpop.f32.mrb[0].mxu0
      %v681 = vpop.f32.mrb[0].mxu0
      %v682 = vadd.f32 %v325, %v681
      %v683 = vpop.f32.mrb[0].mxu0
      %684 = vmatprep.mubr.bf16.mxu0 %v560
      %685 = vmatmul.mubr.bf16.gmra.mrb[0].mxu0 %v441
      %v686 = vpop.f32.mrb[0].mxu0
      %v687 = vadd.f32 %v325, %v686
      %v688 = vpop.f32.mrb[0].mxu0
      %v689 = vpop.f32.mrb[0].mxu0
      %v690 = vadd.f32 %v325, %v689
      %v691 = vpop.f32.mrb[0].mxu0
      %692 = vmatprep.mubr.bf16.mxu0 %v563
      %693 = vmatmul.mubr.bf16.gmra.mrb[0].mxu0 %v443
      %v694 = vpop.f32.mrb[0].mxu0
      %v695 = vadd.f32 %v325, %v694
      %v696 = vpop.f32.mrb[0].mxu0
      %v697 = vpop.f32.mrb[0].mxu0
      %v698 = vadd.f32 %v325, %v697
      %v699 = vpop.f32.mrb[0].mxu0
      %700 = vmatprep.mubr.bf16.mxu0 %v566
      %701 = vmatmul.mubr.bf16.gmra.mrb[0].mxu0 %v445
      %v702 = vpop.f32.mrb[0].mxu0
      %v703 = vadd.f32 %v325, %v702
      %v704 = vpop.f32.mrb[0].mxu0
      %v705 = vpop.f32.mrb[0].mxu0
      %v706 = vadd.f32 %v325, %v705
      %v707 = vpop.f32.mrb[0].mxu0
      %708 = vmatprep.mubr.bf16.mxu0 %v569
      %709 = vmatmul.mubr.bf16.gmra.mrb[0].mxu0 %v447
      %v710 = vpop.f32.mrb[0].mxu0
      %v711 = vadd.f32 %v325, %v710
      %v712 = vpop.f32.mrb[0].mxu0
      %v713 = vpop.f32.mrb[0].mxu0
      %v714 = vadd.f32 %v325, %v713
      %v715 = vpop.f32.mrb[0].mxu0
      %716 = vmatprep.mubr.bf16.mxu0 %v572
      %717 = vmatmul.mubr.bf16.gmra.mrb[0].mxu0 %v449
      %v718 = vpop.f32.mrb[0].mxu0
      %v719 = vadd.f32 %v325, %v718
      %v720 = vpop.f32.mrb[0].mxu0
      %v721 = vpop.f32.mrb[0].mxu0
      %v722 = vadd.f32 %v325, %v721
      %v723 = vpop.f32.mrb[0].mxu0
      %724 = vmatprep.mubr.bf16.mxu0 %v575
      %725 = vmatmul.mubr.bf16.gmra.mrb[0].mxu0 %v451
      %v726 = vpop.f32.mrb[0].mxu0
      %v727 = vadd.f32 %v325, %v726
      %v728 = vpop.f32.mrb[0].mxu0
      %v729 = vpop.f32.mrb[0].mxu0
      %v730 = vadd.f32 %v325, %v729
      %v731 = vpop.f32.mrb[0].mxu0
      %732 = vmatprep.mubr.bf16.mxu0 %v578
      %733 = vmatmul.mubr.bf16.gmra.mrb[0].mxu0 %v453
      %v734 = vpop.f32.mrb[0].mxu0
      %v735 = vadd.f32 %v325, %v734
      %v736 = vpop.f32.mrb[0].mxu0
      %v737 = vpop.f32.mrb[0].mxu0
      %v738 = vadd.f32 %v325, %v737
      %v739 = vpop.f32.mrb[0].mxu0
      %740 = vdwg.mxu0
      %v741 = vmax.f32 %v615, 0.0
      %v742 = vmax.f32 %v618, 0.0
      %v743 = vmax.f32 %v623, 0.0
      %v744 = vmax.f32 %v626, 0.0
      %v745 = vmax.f32 %v631, 0.0
      %v746 = vmax.f32 %v634, 0.0
      %v747 = vmax.f32 %v639, 0.0
      %v748 = vmax.f32 %v642, 0.0
      %v749 = vmax.f32 %v647, 0.0
      %v750 = vmax.f32 %v650, 0.0
      %v751 = vmax.f32 %v655, 0.0
      %v752 = vmax.f32 %v658, 0.0
      %v753 = vmax.f32 %v663, 0.0
      %v754 = vmax.f32 %v666, 0.0
      %v755 = vmax.f32 %v671, 0.0
      %v756 = vmax.f32 %v674, 0.0
      %v757 = vmax.f32 %v679, 0.0
      %v758 = vmax.f32 %v682, 0.0
      %v759 = vmax.f32 %v687, 0.0
      %v760 = vmax.f32 %v690, 0.0
      %v761 = vmax.f32 %v695, 0.0
      %v762 = vmax.f32 %v698, 0.0
      %v763 = vmax.f32 %v703, 0.0
      %v764 = vmax.f32 %v706, 0.0
      %v765 = vmax.f32 %v711, 0.0
      %v766 = vmax.f32 %v714, 0.0
      %v767 = vmax.f32 %v719, 0.0
      %v768 = vmax.f32 %v722, 0.0
      %v769 = vmax.f32 %v727, 0.0
      %v770 = vmax.f32 %v730, 0.0
      %v771 = vmax.f32 %v735, 0.0
      %v772 = vmax.f32 %v738, 0.0
      %773 = vst [vmem:[%s265] sm:$0xff] %v741
      %774 = vst [vmem:[%s265 + $0x8] sm:$0xff] %v742
      %775 = vst [vmem:[%s265 + $0x10] sm:$0xff] %v743
      %776 = vst [vmem:[%s265 + $0x18] sm:$0xff] %v744
      %777 = vst [vmem:[%s265 + $0x20] sm:$0xff] %v745
      %778 = vst [vmem:[%s265 + $0x28] sm:$0xff] %v746
      %779 = vst [vmem:[%s265 + $0x30] sm:$0xff] %v747
      %780 = vst [vmem:[%s265 + $0x38] sm:$0xff] %v748
      %781 = vst [vmem:[%s265 + $0x40] sm:$0xff] %v749
      %782 = vst [vmem:[%s265 + $0x48] sm:$0xff] %v750
      %783 = vst [vmem:[%s265 + $0x50] sm:$0xff] %v751
      %784 = vst [vmem:[%s265 + $0x58] sm:$0xff] %v752
      %785 = vst [vmem:[%s265 + $0x60] sm:$0xff] %v753
      %786 = vst [vmem:[%s265 + $0x68] sm:$0xff] %v754
      %787 = vst [vmem:[%s265 + $0x70] sm:$0xff] %v755
      %788 = vst [vmem:[%s265 + $0x78] sm:$0xff] %v756
      %789 = vst [vmem:[%s265 + $0x80] sm:$0xff] %v757
      %790 = vst [vmem:[%s265 + $0x88] sm:$0xff] %v758
      %791 = vst [vmem:[%s265 + $0x90] sm:$0xff] %v759
      %792 = vst [vmem:[%s265 + $0x98] sm:$0xff] %v760
      %793 = vst [vmem:[%s265 + $0xa0] sm:$0xff] %v761
      %794 = vst [vmem:[%s265 + $0xa8] sm:$0xff] %v762
      %795 = vst [vmem:[%s265 + $0xb0] sm:$0xff] %v763
      %796 = vst [vmem:[%s265 + $0xb8] sm:$0xff] %v764
      %797 = vst [vmem:[%s265 + $0xc0] sm:$0xff] %v765
      %798 = vst [vmem:[%s265 + $0xc8] sm:$0xff] %v766
      %799 = vst [vmem:[%s265 + $0xd0] sm:$0xff] %v767
      %800 = vst [vmem:[%s265 + $0xd8] sm:$0xff] %v768
      %801 = vst [vmem:[%s265 + $0xe0] sm:$0xff] %v769
      %802 = vst [vmem:[%s265 + $0xe8] sm:$0xff] %v770
      %803 = vst [vmem:[%s265 + $0xf0] sm:$0xff] %v771
      %804 = vst [vmem:[%s265 + $0xf8] sm:$0xff] %v772
      %s805 = smul.u32 32, %s19
      %p806 = scmp.lt.s32.totalorder %s805, 63
      %s807 = scalar_select %p806, %s805, 63
      %p808 = scmp.lt.s32.totalorder %s20, 0
      %s809 = scalar_select %p808, %s20, 0
      %s810 = sadd.s32 %s809, %s807
      %s811 = smul.addr %s810, 8
      %s812 = scalar_lea.vmem %s3, %s811
      // Predicated region
      $region33: #{resnet18_dense_forward.24} parent=31 // pred_check
        %p813 = pneg %p135
      $region34: #{resnet18_dense_forward.24} parent=31 // pred_check_branch
        %815 = sbr.rel (%p813) target = $region36
      $region35: #{resnet18_dense_forward.24} parent=31 // pred_region
        %s816 = smul.u32 32, %s19
      $region36: #{resnet18_dense_forward.24} parent=31 // pred_fallthru
        _
    $region32: #{resnet18_dense_forward.24} parent=5 // pred_fallthru
      _
    %p817 = scmp.le.s32.totalorder 2, %s9
    // Predicated region
    $region37: #{resnet18_dense_forward.24} parent=5 // pred_check
      %p818 = pneg %p817
    $region38: #{resnet18_dense_forward.24} parent=5 // pred_check_branch
      %820 = sbr.rel (%p818) target = $region40
    $region39: #{resnet18_dense_forward.24} parent=5 // pred_region
      %s821 = ssub.s32 %s9, 2
      // Predicated region
      $region41: #{resnet18_dense_forward.24} parent=39 // pred_check
        %p822 = pneg %p141
      $region42: #{resnet18_dense_forward.24} parent=39 // pred_check_branch
        %824 = sbr.rel (%p822) target = $region44
      $region43: #{resnet18_dense_forward.24} parent=39 // pred_region
        %s825 = smul.u32 32, %s22
        %p826 = scmp.lt.s32.totalorder %s825, 63
        %s827 = scalar_select %p826, %s825, 63
        %p828 = scmp.lt.s32.totalorder %s23, 0
        %s829 = scalar_select %p828, %s23, 0
        %s830 = sadd.s32 %s829, %s827
        %s831 = smul.addr %s830, 8
        %s832 = scalar_lea.vmem %s3, %s831
      $region44: #{resnet18_dense_forward.24} parent=39 // pred_fallthru
        _
    $region40: #{resnet18_dense_forward.24} parent=5 // pred_fallthru
      _
  $region6: #{resnet18_dense_forward.24} parent=0 // loop_footer
    %s13 = sadd.s32 1, %s9
  $region7: #{resnet18_dense_forward.24} parent=0 // loop_footer_branch
    %8 = sbr.rel target = $region3
  $region8: #{resnet18_dense_forward.24} parent=0 // loop_exit
    _

// kernel: resnet18_dense_forward.25
$region0: #{resnet18_dense_forward.25}
  #allocation0 [shape = 'u32[]', space=smem, size = 0x4, offset = 0x4, fixed_abs, tag = 'smem constant byte address 0x4 - core index']
  #allocation1 [shape = 'u32[144,128]{1,0:T(1,128)}', space=vmem, size = 0x12000, scoped, tag = 'internal scratch']
  %s0 = inlined_call_operand.vmem [shape: bf16[512,160], index: 0, kind: input, shape index: {}]
  %s1 = inlined_call_operand.vmem [shape: bf16[160,128], index: 1, kind: input, shape index: {}]
  %s2 = inlined_call_operand.vmem [shape: f32[1,128], index: 2, kind: input, shape index: {}]
  %s3 = inlined_call_operand.vmem [shape: f32[512,128], index: 3, kind: input, shape index: {}]
  %s4 = inlined_call_operand.vmem [shape: f32[512,128], index: 4, kind: output, shape index: {}]
  %s5 = sld [smem:[#allocation0]]
  $region49: #{resnet18_dense_forward.25} parent=0
    _
  %s7 = ssub.s32 1, %s5
  %s8 = scalar_select 0, %s7, %s5
  loop: start=0, step=1, limit=4
  $region2: #{resnet18_dense_forward.25} parent=0 // loop_pre_header
    _
  $region3: #{resnet18_dense_forward.25} parent=0 // loop_header
    %s10 = sphi 0, %s14
    %p11 = scmp.ge.s32.totalorder %s10, 4
    %s17 = sphi 0, %s36
    %s18 = sphi 0, %s32
    %s19 = sphi 0, %s28
    %s20 = sphi 0, %s17
    %s21 = sphi 0, %s18
    %s22 = sphi 0, %s19
    %s23 = sphi 0, %s20
    %s24 = sphi 0, %s21
    %s25 = sphi 0, %s22
    %s41 = sphi 0, %s43
    %s44 = sphi 0, %s41
    %s45 = sphi 0, %s44
    %s61 = sphi 0, %s45
    %s69 = sphi 0, %s71
    %s72 = sphi 0, %s69
    %s73 = sphi 0, %s72
    %s89 = sphi 0, %s73
    %s95 = sphi 0, %s97
    %s98 = sphi 0, %s95
    %s99 = sphi 0, %s98
    %s115 = sphi 0, %s99
    %s123 = sphi 0, %s125
    %s126 = sphi 0, %s123
    %s127 = sphi 0, %s126
    %s143 = sphi 0, %s127
    %s151 = sphi 0, %s153
    %s154 = sphi 0, %s151
    %s155 = sphi 0, %s154
    %s171 = sphi 0, %s155
  $region4: #{resnet18_dense_forward.25} parent=0 // loop_header_branch
    %13 = sbr.rel (%p11) target = $region8
  $region5: #{resnet18_dense_forward.25} parent=0 // loop_body
    %s15 = ssub.s32 %s10, 1
    %s16 = ssub.s32 %s10, 2
    %s26 = sadd.s32 1, %s19
    %p27 = scmp.ge.s32.totalorder %s26, 1
    %s28 = scalar_select %p27, 0, %s26
    %s29 = sadd.s32 1, %s18
    %s30 = scalar_select %p27, %s29, %s18
    %p31 = scmp.ge.s32.totalorder %s30, 1
    %s32 = scalar_select %p31, 0, %s30
    %s33 = sadd.s32 1, %s17
    %s34 = scalar_select %p31, %s33, %s17
    %p35 = scmp.ge.s32.totalorder %s34, 2
    %s36 = scalar_select %p35, 0, %s34
    %s37 = ssub.s32 %s17, %s36
    %s38 = ssub.s32 %s19, %s28
    %s39 = sor.u32 %s37, %s38
    %p40 = scmp.eq.s32.totalorder %s39, 0
    %s42 = sadd.s32 %s41, 1
    %s43 = scalar_select %p40, %s41, %s42
    %p46 = pneg %p40
    %p47 = scmp.eq.s32.totalorder %s10, 1
    %p48 = por %p46, %p47
    %p49 = scmp.ne.s32.totalorder %s41, %s44
    %p50 = scmp.eq.s32.totalorder %s10, 0
    %p51 = por %p49, %p50
    %p52 = scmp.ne.s32.totalorder %s41, %s44
    %p53 = scmp.eq.s32.totalorder %s15, 1
    %p54 = por %p52, %p53
    %p55 = scmp.ne.s32.totalorder %s44, %s45
    %p56 = scmp.eq.s32.totalorder %s15, 0
    %p57 = por %p55, %p56
    %p58 = scmp.ne.s32.totalorder %s44, %s45
    %p59 = scmp.eq.s32.totalorder %s16, 1
    %p60 = por %p58, %p59
    %p62 = scmp.ne.s32.totalorder %s45, %s61
    %p63 = scmp.eq.s32.totalorder %s16, 0
    %p64 = por %p62, %p63
    %s65 = ssub.s32 %s19, %s28
    %s66 = ssub.s32 %s18, %s32
    %s67 = sor.u32 %s65, %s66
    %p68 = scmp.eq.s32.totalorder %s67, 0
    %s70 = sadd.s32 %s69, 1
    %s71 = scalar_select %p68, %s69, %s70
    %p74 = pneg %p68
    %p75 = scmp.eq.s32.totalorder %s10, 1
    %p76 = por %p74, %p75
    %p77 = scmp.ne.s32.totalorder %s69, %s72
    %p78 = scmp.eq.s32.totalorder %s10, 0
    %p79 = por %p77, %p78
    %p80 = scmp.ne.s32.totalorder %s69, %s72
    %p81 = scmp.eq.s32.totalorder %s15, 1
    %p82 = por %p80, %p81
    %p83 = scmp.ne.s32.totalorder %s72, %s73
    %p84 = scmp.eq.s32.totalorder %s15, 0
    %p85 = por %p83, %p84
    %p86 = scmp.ne.s32.totalorder %s72, %s73
    %p87 = scmp.eq.s32.totalorder %s16, 1
    %p88 = por %p86, %p87
    %p90 = scmp.ne.s32.totalorder %s73, %s89
    %p91 = scmp.eq.s32.totalorder %s16, 0
    %p92 = por %p90, %p91
    %s93 = ssub.s32 %s18, %s32
    %p94 = scmp.eq.s32.totalorder %s93, 0
    %s96 = sadd.s32 %s95, 1
    %s97 = scalar_select %p94, %s95, %s96
    %p100 = pneg %p94
    %p101 = scmp.eq.s32.totalorder %s10, 1
    %p102 = por %p100, %p101
    %p103 = scmp.ne.s32.totalorder %s95, %s98
    %p104 = scmp.eq.s32.totalorder %s10, 0
    %p105 = por %p103, %p104
    %p106 = scmp.ne.s32.totalorder %s95, %s98
    %p107 = scmp.eq.s32.totalorder %s15, 1
    %p108 = por %p106, %p107
    %p109 = scmp.ne.s32.totalorder %s98, %s99
    %p110 = scmp.eq.s32.totalorder %s15, 0
    %p111 = por %p109, %p110
    %p112 = scmp.ne.s32.totalorder %s98, %s99
    %p113 = scmp.eq.s32.totalorder %s16, 1
    %p114 = por %p112, %p113
    %p116 = scmp.ne.s32.totalorder %s99, %s115
    %p117 = scmp.eq.s32.totalorder %s16, 0
    %p118 = por %p116, %p117
    %s119 = ssub.s32 %s17, %s36
    %s120 = ssub.s32 %s18, %s32
    %s121 = sor.u32 %s119, %s120
    %p122 = scmp.eq.s32.totalorder %s121, 0
    %s124 = sadd.s32 %s123, 1
    %s125 = scalar_select %p122, %s123, %s124
    %p128 = pneg %p122
    %p129 = scmp.eq.s32.totalorder %s10, 1
    %p130 = por %p128, %p129
    %p131 = scmp.ne.s32.totalorder %s123, %s126
    %p132 = scmp.eq.s32.totalorder %s10, 0
    %p133 = por %p131, %p132
    %p134 = scmp.ne.s32.totalorder %s123, %s126
    %p135 = scmp.eq.s32.totalorder %s15, 1
    %p136 = por %p134, %p135
    %p137 = scmp.ne.s32.totalorder %s126, %s127
    %p138 = scmp.eq.s32.totalorder %s15, 0
    %p139 = por %p137, %p138
    %p140 = scmp.ne.s32.totalorder %s126, %s127
    %p141 = scmp.eq.s32.totalorder %s16, 1
    %p142 = por %p140, %p141
    %p144 = scmp.ne.s32.totalorder %s127, %s143
    %p145 = scmp.eq.s32.totalorder %s16, 0
    %p146 = por %p144, %p145
    %s147 = ssub.s32 %s17, %s36
    %s148 = ssub.s32 %s18, %s32
    %s149 = sor.u32 %s147, %s148
    %p150 = scmp.eq.s32.totalorder %s149, 0
    %s152 = sadd.s32 %s151, 1
    %s153 = scalar_select %p150, %s151, %s152
    %p156 = pneg %p150
    %p157 = scmp.eq.s32.totalorder %s10, 1
    %p158 = por %p156, %p157
    %p159 = scmp.ne.s32.totalorder %s151, %s154
    %p160 = scmp.eq.s32.totalorder %s10, 0
    %p161 = por %p159, %p160
    %p162 = scmp.ne.s32.totalorder %s151, %s154
    %p163 = scmp.eq.s32.totalorder %s15, 1
    %p164 = por %p162, %p163
    %p165 = scmp.ne.s32.totalorder %s154, %s155
    %p166 = scmp.eq.s32.totalorder %s15, 0
    %p167 = por %p165, %p166
    %p168 = scmp.ne.s32.totalorder %s154, %s155
    %p169 = scmp.eq.s32.totalorder %s16, 1
    %p170 = por %p168, %p169
    %p172 = scmp.ne.s32.totalorder %s155, %s171
    %p173 = scmp.eq.s32.totalorder %s16, 0
    %p174 = por %p172, %p173
    %p175 = scmp.le.s32.totalorder 1, %s10
    %p176 = scmp.lt.s32.totalorder %s10, 3
    %p177 = pnand %p175, %p176
    %p178 = pneg %p177
    // Predicated region
    $region9: #{resnet18_dense_forward.25} parent=5 // pred_check
      _
    $region10: #{resnet18_dense_forward.25} parent=5 // pred_check_branch
      %180 = sbr.rel (%p177) target = $region12
    $region11: #{resnet18_dense_forward.25} parent=5 // pred_region
      %s181 = ssub.s32 %s10, 1
      // Predicated region
      $region13: #{resnet18_dense_forward.25} parent=11 // pred_check
        %p182 = pneg %p85
      $region14: #{resnet18_dense_forward.25} parent=11 // pred_check_branch
        %184 = sbr.rel (%p182) target = $region16
      $region15: #{resnet18_dense_forward.25} parent=11 // pred_region
        %s185 = smul.u32 20, %s22
        %p186 = scmp.lt.s32.totalorder %s185, 19
        %s187 = scalar_select %p186, %s185, 19
        %p188 = scmp.lt.s32.totalorder %s21, 0
        %s189 = scalar_select %p188, %s21, 0
        %s190 = sadd.s32 %s189, %s187
        %s191 = smul.addr %s190, 4
        %s192 = scalar_lea.vmem %s1, %s191
        %s193 = smul.u32 20, %s22
      $region16: #{resnet18_dense_forward.25} parent=11 // pred_fallthru
        _
      // Predicated region
      $region17: #{resnet18_dense_forward.25} parent=11 // pred_check
        %p194 = pneg %p111
      $region18: #{resnet18_dense_forward.25} parent=11 // pred_check_branch
        %196 = sbr.rel (%p194) target = $region20
      $region19: #{resnet18_dense_forward.25} parent=11 // pred_region
        %p197 = scmp.lt.s32.totalorder %s21, 0
        %s198 = scalar_select %p197, %s21, 0
        %s199 = scalar_lea.vmem %s2, %s198
      $region20: #{resnet18_dense_forward.25} parent=11 // pred_fallthru
        _
    $region12: #{resnet18_dense_forward.25} parent=5 // pred_fallthru
      _
    %p200 = scmp.lt.s32.totalorder %s10, 2
    // Predicated region
    $region21: #{resnet18_dense_forward.25} parent=5 // pred_check
      %p201 = pneg %p200
    $region22: #{resnet18_dense_forward.25} parent=5 // pred_check_branch
      %203 = sbr.rel (%p201) target = $region24
    $region23: #{resnet18_dense_forward.25} parent=5 // pred_region
      // Predicated region
      $region25: #{resnet18_dense_forward.25} parent=23 // pred_check
        %p204 = pneg %p51
      $region26: #{resnet18_dense_forward.25} parent=23 // pred_check_branch
        %206 = sbr.rel (%p204) target = $region28
      $region27: #{resnet18_dense_forward.25} parent=23 // pred_region
        %s207 = smul.u32 32, %s17
        %s208 = smul.u32 2, %s19
        %p209 = scmp.lt.s32.totalorder %s207, 63
        %s210 = scalar_select %p209, %s207, 63
        %p211 = scmp.lt.s32.totalorder %s208, 1
        %s212 = scalar_select %p211, %s208, 1
        %s213 = smul.addr %s210, 2
        %s214 = sadd.s32 %s212, %s213
        %s215 = smul.addr %s214, 4
        %s216 = scalar_lea.vmem %s0, %s215
        %s217 = smul.u32 32, %s17
        %s218 = smul.u32 2, %s19
      $region28: #{resnet18_dense_forward.25} parent=23 // pred_fallthru
        _
      // Predicated region
      $region29: #{resnet18_dense_forward.25} parent=23 // pred_check
        %p219 = pneg %p133
      $region30: #{resnet18_dense_forward.25} parent=23 // pred_check_branch
        %221 = sbr.rel (%p219) target = $region32
      $region31: #{resnet18_dense_forward.25} parent=23 // pred_region
        %s222 = smul.u32 32, %s17
        %p223 = scmp.lt.s32.totalorder %s222, 63
        %s224 = scalar_select %p223, %s222, 63
        %p225 = scmp.lt.s32.totalorder %s18, 0
        %s226 = scalar_select %p225, %s18, 0
        %s227 = sadd.s32 %s226, %s224
        %s228 = smul.addr %s227, 8
        %s229 = scalar_lea.vmem %s3, %s228
        %s230 = smul.u32 32, %s17
      $region32: #{resnet18_dense_forward.25} parent=23 // pred_fallthru
        _
    $region24: #{resnet18_dense_forward.25} parent=5 // pred_fallthru
      _
    %p231 = scmp.le.s32.totalorder 1, %s10
    %p232 = scmp.lt.s32.totalorder %s10, 3
    %p233 = pnand %p231, %p232
    %p234 = pneg %p233
    // Predicated region
    $region33: #{resnet18_dense_forward.25} parent=5 // pred_check
      _
    $region34: #{resnet18_dense_forward.25} parent=5 // pred_check_branch
      %236 = sbr.rel (%p233) target = $region36
    $region35: #{resnet18_dense_forward.25} parent=5 // pred_region
      %s237 = ssub.s32 %s10, 1
      %s238 = smul.u32 32, %s20
      %s239 = smul.u32 2, %s22
      %p240 = scmp.lt.s32.totalorder %s238, 63
      %s241 = scalar_select %p240, %s238, 63
      %p242 = scmp.lt.s32.totalorder %s239, 1
      %s243 = scalar_select %p242, %s239, 1
      %s244 = smul.addr %s241, 2
      %s245 = sadd.s32 %s243, %s244
      %s246 = smul.addr %s245, 4
      %s247 = scalar_lea.vmem %s0, %s246
      %p248 = pneg %p57
      %p249 = pneg %p54
      %s250 = smul.u32 20, %s22
      %p251 = scmp.lt.s32.totalorder %s250, 19
      %s252 = scalar_select %p251, %s250, 19
      %p253 = scmp.lt.s32.totalorder %s21, 0
      %s254 = scalar_select %p253, %s21, 0
      %s255 = sadd.s32 %s254, %s252
      %s256 = smul.addr %s255, 4
      %s257 = scalar_lea.vmem %s1, %s256
      %p258 = pneg %p85
      %p259 = pneg %p82
      %p260 = scmp.lt.s32.totalorder %s21, 0
      %s261 = scalar_select %p260, %s21, 0
      %s262 = scalar_lea.vmem %s2, %s261
      %p263 = pneg %p111
      %p264 = pneg %p108
      %s265 = smul.u32 32, %s20
      %p266 = scmp.lt.s32.totalorder %s265, 63
      %s267 = scalar_select %p266, %s265, 63
      %p268 = scmp.lt.s32.totalorder %s21, 0
      %s269 = scalar_select %p268, %s21, 0
      %s270 = sadd.s32 %s269, %s267
      %s271 = smul.addr %s270, 8
      %s272 = scalar_lea.vmem %s3, %s271
      %p273 = pneg %p139
      %p274 = pneg %p136
      %p275 = pneg %p167
      %p276 = pneg %p164
      %s277 = smul.u32 32, %s20
      %p278 = scmp.lt.s32.totalorder %s277, 63
      %s279 = scalar_select %p278, %s277, 63
      %p280 = scmp.lt.s32.totalorder %s21, 0
      %s281 = scalar_select %p280, %s21, 0
      %s282 = sadd.s32 %s281, %s279
      %s283 = smul.addr %s282, 8
      %s284 = scalar_lea.vmem %s4, %s283
      %s285 = smul.u32 32, %s20
      %s286 = smul.u32 2, %s22
      %p287 = scmp.lt.s32.totalorder %s285, 63
      %s288 = scalar_select %p287, %s285, 63
      %p289 = scmp.lt.s32.totalorder %s286, 1
      %s290 = scalar_select %p289, %s286, 1
      %s291 = smul.addr %s288, 2
      %s292 = sadd.s32 %s290, %s291
      %s293 = smul.addr %s292, 4
      %s294 = scalar_lea.vmem %s0, %s293
      %s295 = smul.u32 32, %s20
      %s296 = smul.u32 2, %s22
      %s297 = smul.u32 20, %s22
      %p298 = scmp.lt.s32.totalorder %s297, 19
      %s299 = scalar_select %p298, %s297, 19
      %p300 = scmp.lt.s32.totalorder %s21, 0
      %s301 = scalar_select %p300, %s21, 0
      %s302 = sadd.s32 %s301, %s299
      %s303 = smul.addr %s302, 4
      %s304 = scalar_lea.vmem %s1, %s303
      %s305 = smul.u32 20, %s22
      %p306 = scmp.lt.s32.totalorder %s21, 0
      %s307 = scalar_select %p306, %s21, 0
      %s308 = scalar_lea.vmem %s2, %s307
      %s309 = smul.u32 32, %s20
      %p310 = scmp.lt.s32.totalorder %s309, 63
      %s311 = scalar_select %p310, %s309, 63
      %p312 = scmp.lt.s32.totalorder %s21, 0
      %s313 = scalar_select %p312, %s21, 0
      %s314 = sadd.s32 %s313, %s311
      %s315 = smul.addr %s314, 8
      %s316 = scalar_lea.vmem %s3, %s315
      %s317 = smul.u32 32, %s20
      %s318 = smul.u32 32, %s20
      %p319 = scmp.lt.s32.totalorder %s318, 63
      %s320 = scalar_select %p319, %s318, 63
      %p321 = scmp.lt.s32.totalorder %s21, 0
      %s322 = scalar_select %p321, %s21, 0
      %s323 = sadd.s32 %s322, %s320
      %s324 = smul.addr %s323, 8
      %s325 = scalar_lea.vmem %s4, %s324
      %s326 = smul.u32 32, %s20
      %v328 = vld [vmem:[%s294] sm:$0xff]
      %v329 = vld [vmem:[%s294 + $0x8] sm:$0xff]
      %v330 = vld [vmem:[%s294 + $0x10] sm:$0xff]
      %v331 = vld [vmem:[%s294 + $0x18] sm:$0xff]
      %v332 = vld [vmem:[%s294 + $0x20] sm:$0xff]
      %v333 = vld [vmem:[%s294 + $0x28] sm:$0xff]
      %v334 = vld [vmem:[%s294 + $0x30] sm:$0xff]
      %v335 = vld [vmem:[%s294 + $0x38] sm:$0xff]
      %v336 = vld [vmem:[%s294 + $0x40] sm:$0xff]
      %v337 = vld [vmem:[%s294 + $0x48] sm:$0xff]
      %v338 = vld [vmem:[%s294 + $0x50] sm:$0xff]
      %v339 = vld [vmem:[%s294 + $0x58] sm:$0xff]
      %v340 = vld [vmem:[%s294 + $0x60] sm:$0xff]
      %v341 = vld [vmem:[%s294 + $0x68] sm:$0xff]
      %v342 = vld [vmem:[%s294 + $0x70] sm:$0xff]
      %v343 = vld [vmem:[%s294 + $0x78] sm:$0xff]
      %v344 = vld [vmem:[%s294 + $0x80] sm:$0xff]
      %v345 = vld [vmem:[%s294 + $0x88] sm:$0xff]
      %v346 = vld [vmem:[%s294 + $0x90] sm:$0xff]
      %v347 = vld [vmem:[%s294 + $0x98] sm:$0xff]
      %v348 = vld [vmem:[%s294 + $0xa0] sm:$0xff]
      %v349 = vld [vmem:[%s294 + $0xa8] sm:$0xff]
      %v350 = vld [vmem:[%s294 + $0xb0] sm:$0xff]
      %v351 = vld [vmem:[%s294 + $0xb8] sm:$0xff]
      %v352 = vld [vmem:[%s294 + $0xc0] sm:$0xff]
      %v353 = vld [vmem:[%s294 + $0xc8] sm:$0xff]
      %v354 = vld [vmem:[%s294 + $0xd0] sm:$0xff]
      %v355 = vld [vmem:[%s294 + $0xd8] sm:$0xff]
      %v356 = vld [vmem:[%s294 + $0xe0] sm:$0xff]
      %v357 = vld [vmem:[%s294 + $0xe8] sm:$0xff]
      %v358 = vld [vmem:[%s294 + $0xf0] sm:$0xff]
      %v359 = vld [vmem:[%s294 + $0xf8] sm:$0xff]
      %v360 = vld [vmem:[%s304] sm:$0xf]
      %v361 = vld [vmem:[%s304 + $0x4] sm:$0xf]
      %v362 = vld [vmem:[%s304 + $0x8] sm:$0xf]
      %v363 = vld [vmem:[%s304 + $0xc] sm:$0xf]
      %v364 = vld [vmem:[%s304 + $0x10] sm:$0xf]
      %v365 = vld [vmem:[%s304 + $0x14] sm:$0xf]
      %v366 = vld [vmem:[%s304 + $0x18] sm:$0xf]
      %v367 = vld [vmem:[%s304 + $0x1c] sm:$0xf]
      %v368 = vld [vmem:[%s304 + $0x20] sm:$0xf]
      %v369 = vld [vmem:[%s304 + $0x24] sm:$0xf]
      %v370 = vld [vmem:[%s304 + $0x28] sm:$0xf]
      %v371 = vld [vmem:[%s304 + $0x2c] sm:$0xf]
      %v372 = vld [vmem:[%s304 + $0x30] sm:$0xf]
      %v373 = vld [vmem:[%s304 + $0x34] sm:$0xf]
      %v374 = vld [vmem:[%s304 + $0x38] sm:$0xf]
      %v375 = vld [vmem:[%s304 + $0x3c] sm:$0xf]
      %v376 = vld [vmem:[%s304 + $0x40] sm:$0xf]
      %v377 = vld [vmem:[%s304 + $0x44] sm:$0xf]
      %v378 = vld [vmem:[%s304 + $0x48] sm:$0xf]
      %v379 = vld [vmem:[%s304 + $0x4c] sm:$0xf]
      %v380 = vld [vmem:[%s308] sm:$0x1]
      %v382 = vlaneseq
      %v383 = vshrl.u32 %v382, 7
      %v384 = vsub.s32 0, %v383
      %v385 = vrot.slane %v380, %v384
      %v419 = vunpack.c.l.b16 %v328
      %v420 = vunpack.c.h.b16 %v328
      %v421 = vunpack.c.l.b16 %v329
      %v422 = vunpack.c.h.b16 %v329
      %v423 = vunpack.c.l.b16 %v330
      %v424 = vunpack.c.h.b16 %v330
      %v425 = vunpack.c.l.b16 %v331
      %v426 = vunpack.c.h.b16 %v331
      %v427 = vunpack.c.l.b16 %v332
      %v428 = vunpack.c.h.b16 %v332
      %v429 = vunpack.c.l.b16 %v333
      %v430 = vunpack.c.h.b16 %v333
      %v431 = vunpack.c.l.b16 %v334
      %v432 = vunpack.c.h.b16 %v334
      %v433 = vunpack.c.l.b16 %v335
      %v434 = vunpack.c.h.b16 %v335
      %v435 = vunpack.c.l.b16 %v336
      %v436 = vunpack.c.h.b16 %v336
      %v437 = vunpack.c.l.b16 %v337
      %v438 = vunpack.c.h.b16 %v337
      %v439 = vunpack.c.l.b16 %v338
      %v440 = vunpack.c.h.b16 %v338
      %v441 = vunpack.c.l.b16 %v339
      %v442 = vunpack.c.h.b16 %v339
      %v443 = vunpack.c.l.b16 %v340
      %v444 = vunpack.c.h.b16 %v340
      %v445 = vunpack.c.l.b16 %v341
      %v446 = vunpack.c.h.b16 %v341
      %v447 = vunpack.c.l.b16 %v342
      %v448 = vunpack.c.h.b16 %v342
      %v449 = vunpack.c.l.b16 %v343
      %v450 = vunpack.c.h.b16 %v343
      %v451 = vunpack.c.l.b16 %v344
      %v452 = vunpack.c.h.b16 %v344
      %v453 = vunpack.c.l.b16 %v345
      %v454 = vunpack.c.h.b16 %v345
      %v455 = vunpack.c.l.b16 %v346
      %v456 = vunpack.c.h.b16 %v346
      %v457 = vunpack.c.l.b16 %v347
      %v458 = vunpack.c.h.b16 %v347
      %v459 = vunpack.c.l.b16 %v348
      %v460 = vunpack.c.h.b16 %v348
      %v461 = vunpack.c.l.b16 %v349
      %v462 = vunpack.c.h.b16 %v349
      %v463 = vunpack.c.l.b16 %v350
      %v464 = vunpack.c.h.b16 %v350
      %v465 = vunpack.c.l.b16 %v351
      %v466 = vunpack.c.h.b16 %v351
      %v467 = vunpack.c.l.b16 %v352
      %v468 = vunpack.c.h.b16 %v352
      %v469 = vunpack.c.l.b16 %v353
      %v470 = vunpack.c.h.b16 %v353
      %v471 = vunpack.c.l.b16 %v354
      %v472 = vunpack.c.h.b16 %v354
      %v473 = vunpack.c.l.b16 %v355
      %v474 = vunpack.c.h.b16 %v355
      %v475 = vunpack.c.l.b16 %v356
      %v476 = vunpack.c.h.b16 %v356
      %v477 = vunpack.c.l.b16 %v357
      %v478 = vunpack.c.h.b16 %v357
      %v479 = vunpack.c.l.b16 %v358
      %v480 = vunpack.c.h.b16 %v358
      %v481 = vunpack.c.l.b16 %v359
      %v482 = vunpack.c.h.b16 %v359
      %v483 = vpack.c.b16 %v421, %v419
      %v484 = vpack.c.b16 %v422, %v420
      %v485 = vpack.c.b16 %v425, %v423
      %v486 = vpack.c.b16 %v426, %v424
      %v487 = vpack.c.b16 %v429, %v427
      %v488 = vpack.c.b16 %v430, %v428
      %v489 = vpack.c.b16 %v433, %v431
      %v490 = vpack.c.b16 %v434, %v432
      %v491 = vpack.c.b16 %v437, %v435
      %v492 = vpack.c.b16 %v438, %v436
      %v493 = vpack.c.b16 %v441, %v439
      %v494 = vpack.c.b16 %v442, %v440
      %v495 = vpack.c.b16 %v445, %v443
      %v496 = vpack.c.b16 %v446, %v444
      %v497 = vpack.c.b16 %v449, %v447
      %v498 = vpack.c.b16 %v450, %v448
      %v499 = vpack.c.b16 %v453, %v451
      %v500 = vpack.c.b16 %v454, %v452
      %v501 = vpack.c.b16 %v457, %v455
      %v502 = vpack.c.b16 %v458, %v456
      %v503 = vpack.c.b16 %v461, %v459
      %v504 = vpack.c.b16 %v462, %v460
      %v505 = vpack.c.b16 %v465, %v463
      %v506 = vpack.c.b16 %v466, %v464
      %v507 = vpack.c.b16 %v469, %v467
      %v508 = vpack.c.b16 %v470, %v468
      %v509 = vpack.c.b16 %v473, %v471
      %v510 = vpack.c.b16 %v474, %v472
      %v511 = vpack.c.b16 %v477, %v475
      %v512 = vpack.c.b16 %v478, %v476
      %v513 = vpack.c.b16 %v481, %v479
      %v514 = vpack.c.b16 %v482, %v480
      %v551 = vunpack.c.l.b16 %v360
      %v552 = vunpack.c.l.b16 %v361
      %v553 = vunpack.c.l.b16 %v362
      %v554 = vunpack.c.l.b16 %v363
      %v555 = vunpack.c.l.b16 %v364
      %v556 = vunpack.c.l.b16 %v365
      %v557 = vunpack.c.l.b16 %v366
      %v558 = vunpack.c.l.b16 %v367
      %v559 = vunpack.c.l.b16 %v368
      %v560 = vunpack.c.l.b16 %v369
      %v561 = vunpack.c.l.b16 %v370
      %v562 = vunpack.c.l.b16 %v371
      %v563 = vunpack.c.l.b16 %v372
      %v564 = vunpack.c.l.b16 %v373
      %v565 = vunpack.c.l.b16 %v374
      %v566 = vunpack.c.l.b16 %v375
      %v567 = vunpack.c.l.b16 %v376
      %v568 = vunpack.c.l.b16 %v377
      %v569 = vunpack.c.l.b16 %v378
      %v570 = vunpack.c.l.b16 %v379
      %v571 = vpack.c.b16 %v552, %v551
      %v572 = vpack.c.b16 %v554, %v553
      %v573 = vpack.c.b16 %v556, %v555
      %v574 = vpack.c.b16 %v558, %v557
      %v575 = vpack.c.b16 %v560, %v559
      %v576 = vpack.c.b16 %v562, %v561
      %v577 = vpack.c.b16 %v564, %v563
      %v578 = vpack.c.b16 %v566, %v565
      %v579 = vpack.c.b16 %v568, %v567
      %v580 = vpack.c.b16 %v570, %v569
      %vm591 = vcmask 261120
      %v593 = vsel %vm591, %v484, 0
      %v596 = vsel %vm591, %v486, 0
      %v599 = vsel %vm591, %v488, 0
      %v602 = vsel %vm591, %v490, 0
      %v605 = vsel %vm591, %v492, 0
      %v608 = vsel %vm591, %v494, 0
      %v611 = vsel %vm591, %v496, 0
      %v614 = vsel %vm591, %v498, 0
      %v617 = vsel %vm591, %v500, 0
      %v620 = vsel %vm591, %v502, 0
      %v623 = vsel %vm591, %v504, 0
      %v626 = vsel %vm591, %v506, 0
      %v629 = vsel %vm591, %v508, 0
      %v632 = vsel %vm591, %v510, 0
      %v635 = vsel %vm591, %v512, 0
      %v638 = vsel %vm591, %v514, 0
      %640 = vmatprep.subr.bf16.mxu0 0
      %641 = vmatpush1.bf16.msra.mxu0 %v571
      %642 = vmatprep.subr.bf16.mxu0 0
      %643 = vmatpush1.bf16.msra.mxu0 %v572
      %644 = vmatprep.subr.bf16.mxu0 0
      %645 = vmatpush1.bf16.msra.mxu0 %v573
      %646 = vmatprep.subr.bf16.mxu0 0
      %647 = vmatpush1.bf16.msra.mxu0 %v574
      %648 = vmatprep.subr.bf16.mxu0 0
      %649 = vmatpush1.bf16.msra.mxu0 %v575
      %650 = vmatprep.subr.bf16.mxu0 0
      %651 = vmatpush1.bf16.msra.mxu0 %v576
      %652 = vmatprep.subr.bf16.mxu0 0
      %653 = vmatpush1.bf16.msra.mxu0 %v577
      %654 = vmatprep.subr.bf16.mxu0 0
      %655 = vmatpush1.bf16.msra.mxu0 %v578
      %656 = vmatprep.subr.bf16.mxu0 0
      %657 = vmatpush1.bf16.msra.mxu0 %v579
      %658 = vmatprep.subr.bf16.mxu0 0
      %659 = vmatpush1.bf16.msra.mxu0 %v580
      %660 = vmatprep.subr.bf16.mxu0 0
      %661 = vmatpush1.bf16.msra.mxu0 0
      %662 = vmatprep.subr.bf16.mxu0 0
      %663 = vmatpush1.bf16.msra.mxu0 0
      %664 = vmatprep.subr.bf16.mxu0 0
      %665 = vmatpush1.bf16.msra.mxu0 0
      %666 = vmatprep.subr.bf16.mxu0 0
      %667 = vmatpush1.bf16.msra.mxu0 0
      %668 = vmatprep.subr.bf16.mxu0 0
      %669 = vmatpush1.bf16.msra.mxu0 0
      %670 = vmatprep.subr.bf16.mxu0 0
      %671 = vmatpush1.bf16.msra.mxu0 0
      %672 = vmatprep.mubr.bf16.mxu0 %v593
      %673 = vmatmul.mubr.bf16.gmra.mrb[0].mxu0 %v483
      %v674 = vpop.f32.mrb[0].mxu0
      %v675 = vadd.f32 %v385, %v674
      %v676 = vpop.f32.mrb[0].mxu0
      %v677 = vpop.f32.mrb[0].mxu0
      %v678 = vadd.f32 %v385, %v677
      %v679 = vpop.f32.mrb[0].mxu0
      %680 = vmatprep.mubr.bf16.mxu0 %v596
      %681 = vmatmul.mubr.bf16.gmra.mrb[0].mxu0 %v485
      %v682 = vpop.f32.mrb[0].mxu0
      %v683 = vadd.f32 %v385, %v682
      %v684 = vpop.f32.mrb[0].mxu0
      %v685 = vpop.f32.mrb[0].mxu0
      %v686 = vadd.f32 %v385, %v685
      %v687 = vpop.f32.mrb[0].mxu0
      %688 = vmatprep.mubr.bf16.mxu0 %v599
      %689 = vmatmul.mubr.bf16.gmra.mrb[0].mxu0 %v487
      %v690 = vpop.f32.mrb[0].mxu0
      %v691 = vadd.f32 %v385, %v690
      %v692 = vpop.f32.mrb[0].mxu0
      %v693 = vpop.f32.mrb[0].mxu0
      %v694 = vadd.f32 %v385, %v693
      %v695 = vpop.f32.mrb[0].mxu0
      %696 = vmatprep.mubr.bf16.mxu0 %v602
      %697 = vmatmul.mubr.bf16.gmra.mrb[0].mxu0 %v489
      %v698 = vpop.f32.mrb[0].mxu0
      %v699 = vadd.f32 %v385, %v698
      %v700 = vpop.f32.mrb[0].mxu0
      %v701 = vpop.f32.mrb[0].mxu0
      %v702 = vadd.f32 %v385, %v701
      %v703 = vpop.f32.mrb[0].mxu0
      %704 = vmatprep.mubr.bf16.mxu0 %v605
      %705 = vmatmul.mubr.bf16.gmra.mrb[0].mxu0 %v491
      %v706 = vpop.f32.mrb[0].mxu0
      %v707 = vadd.f32 %v385, %v706
      %v708 = vpop.f32.mrb[0].mxu0
      %v709 = vpop.f32.mrb[0].mxu0
      %v710 = vadd.f32 %v385, %v709
      %v711 = vpop.f32.mrb[0].mxu0
      %712 = vmatprep.mubr.bf16.mxu0 %v608
      %713 = vmatmul.mubr.bf16.gmra.mrb[0].mxu0 %v493
      %v714 = vpop.f32.mrb[0].mxu0
      %v715 = vadd.f32 %v385, %v714
      %v716 = vpop.f32.mrb[0].mxu0
      %v717 = vpop.f32.mrb[0].mxu0
      %v718 = vadd.f32 %v385, %v717
      %v719 = vpop.f32.mrb[0].mxu0
      %720 = vmatprep.mubr.bf16.mxu0 %v611
      %721 = vmatmul.mubr.bf16.gmra.mrb[0].mxu0 %v495
      %v722 = vpop.f32.mrb[0].mxu0
      %v723 = vadd.f32 %v385, %v722
      %v724 = vpop.f32.mrb[0].mxu0
      %v725 = vpop.f32.mrb[0].mxu0
      %v726 = vadd.f32 %v385, %v725
      %v727 = vpop.f32.mrb[0].mxu0
      %728 = vmatprep.mubr.bf16.mxu0 %v614
      %729 = vmatmul.mubr.bf16.gmra.mrb[0].mxu0 %v497
      %v730 = vpop.f32.mrb[0].mxu0
      %v731 = vadd.f32 %v385, %v730
      %v732 = vpop.f32.mrb[0].mxu0
      %v733 = vpop.f32.mrb[0].mxu0
      %v734 = vadd.f32 %v385, %v733
      %v735 = vpop.f32.mrb[0].mxu0
      %736 = vmatprep.mubr.bf16.mxu0 %v617
      %737 = vmatmul.mubr.bf16.gmra.mrb[0].mxu0 %v499
      %v738 = vpop.f32.mrb[0].mxu0
      %v739 = vadd.f32 %v385, %v738
      %v740 = vpop.f32.mrb[0].mxu0
      %v741 = vpop.f32.mrb[0].mxu0
      %v742 = vadd.f32 %v385, %v741
      %v743 = vpop.f32.mrb[0].mxu0
      %744 = vmatprep.mubr.bf16.mxu0 %v620
      %745 = vmatmul.mubr.bf16.gmra.mrb[0].mxu0 %v501
      %v746 = vpop.f32.mrb[0].mxu0
      %v747 = vadd.f32 %v385, %v746
      %v748 = vpop.f32.mrb[0].mxu0
      %v749 = vpop.f32.mrb[0].mxu0
      %v750 = vadd.f32 %v385, %v749
      %v751 = vpop.f32.mrb[0].mxu0
      %752 = vmatprep.mubr.bf16.mxu0 %v623
      %753 = vmatmul.mubr.bf16.gmra.mrb[0].mxu0 %v503
      %v754 = vpop.f32.mrb[0].mxu0
      %v755 = vadd.f32 %v385, %v754
      %v756 = vpop.f32.mrb[0].mxu0
      %v757 = vpop.f32.mrb[0].mxu0
      %v758 = vadd.f32 %v385, %v757
      %v759 = vpop.f32.mrb[0].mxu0
      %760 = vmatprep.mubr.bf16.mxu0 %v626
      %761 = vmatmul.mubr.bf16.gmra.mrb[0].mxu0 %v505
      %v762 = vpop.f32.mrb[0].mxu0
      %v763 = vadd.f32 %v385, %v762
      %v764 = vpop.f32.mrb[0].mxu0
      %v765 = vpop.f32.mrb[0].mxu0
      %v766 = vadd.f32 %v385, %v765
      %v767 = vpop.f32.mrb[0].mxu0
      %768 = vmatprep.mubr.bf16.mxu0 %v629
      %769 = vmatmul.mubr.bf16.gmra.mrb[0].mxu0 %v507
      %v770 = vpop.f32.mrb[0].mxu0
      %v771 = vadd.f32 %v385, %v770
      %v772 = vpop.f32.mrb[0].mxu0
      %v773 = vpop.f32.mrb[0].mxu0
      %v774 = vadd.f32 %v385, %v773
      %v775 = vpop.f32.mrb[0].mxu0
      %776 = vmatprep.mubr.bf16.mxu0 %v632
      %777 = vmatmul.mubr.bf16.gmra.mrb[0].mxu0 %v509
      %v778 = vpop.f32.mrb[0].mxu0
      %v779 = vadd.f32 %v385, %v778
      %v780 = vpop.f32.mrb[0].mxu0
      %v781 = vpop.f32.mrb[0].mxu0
      %v782 = vadd.f32 %v385, %v781
      %v783 = vpop.f32.mrb[0].mxu0
      %784 = vmatprep.mubr.bf16.mxu0 %v635
      %785 = vmatmul.mubr.bf16.gmra.mrb[0].mxu0 %v511
      %v786 = vpop.f32.mrb[0].mxu0
      %v787 = vadd.f32 %v385, %v786
      %v788 = vpop.f32.mrb[0].mxu0
      %v789 = vpop.f32.mrb[0].mxu0
      %v790 = vadd.f32 %v385, %v789
      %v791 = vpop.f32.mrb[0].mxu0
      %792 = vmatprep.mubr.bf16.mxu0 %v638
      %793 = vmatmul.mubr.bf16.gmra.mrb[0].mxu0 %v513
      %v794 = vpop.f32.mrb[0].mxu0
      %v795 = vadd.f32 %v385, %v794
      %v796 = vpop.f32.mrb[0].mxu0
      %v797 = vpop.f32.mrb[0].mxu0
      %v798 = vadd.f32 %v385, %v797
      %v799 = vpop.f32.mrb[0].mxu0
      %800 = vdwg.mxu0
      %v801 = vld [vmem:[%s316] sm:$0xff]
      %v802 = vld [vmem:[%s316 + $0x8] sm:$0xff]
      %v803 = vld [vmem:[%s316 + $0x10] sm:$0xff]
      %v804 = vld [vmem:[%s316 + $0x18] sm:$0xff]
      %v805 = vld [vmem:[%s316 + $0x20] sm:$0xff]
      %v806 = vld [vmem:[%s316 + $0x28] sm:$0xff]
      %v807 = vld [vmem:[%s316 + $0x30] sm:$0xff]
      %v808 = vld [vmem:[%s316 + $0x38] sm:$0xff]
      %v809 = vld [vmem:[%s316 + $0x40] sm:$0xff]
      %v810 = vld [vmem:[%s316 + $0x48] sm:$0xff]
      %v811 = vld [vmem:[%s316 + $0x50] sm:$0xff]
      %v812 = vld [vmem:[%s316 + $0x58] sm:$0xff]
      %v813 = vld [vmem:[%s316 + $0x60] sm:$0xff]
      %v814 = vld [vmem:[%s316 + $0x68] sm:$0xff]
      %v815 = vld [vmem:[%s316 + $0x70] sm:$0xff]
      %v816 = vld [vmem:[%s316 + $0x78] sm:$0xff]
      %v817 = vld [vmem:[%s316 + $0x80] sm:$0xff]
      %v818 = vld [vmem:[%s316 + $0x88] sm:$0xff]
      %v819 = vld [vmem:[%s316 + $0x90] sm:$0xff]
      %v820 = vld [vmem:[%s316 + $0x98] sm:$0xff]
      %v821 = vld [vmem:[%s316 + $0xa0] sm:$0xff]
      %v822 = vld [vmem:[%s316 + $0xa8] sm:$0xff]
      %v823 = vld [vmem:[%s316 + $0xb0] sm:$0xff]
      %v824 = vld [vmem:[%s316 + $0xb8] sm:$0xff]
      %v825 = vld [vmem:[%s316 + $0xc0] sm:$0xff]
      %v826 = vld [vmem:[%s316 + $0xc8] sm:$0xff]
      %v827 = vld [vmem:[%s316 + $0xd0] sm:$0xff]
      %v828 = vld [vmem:[%s316 + $0xd8] sm:$0xff]
      %v829 = vld [vmem:[%s316 + $0xe0] sm:$0xff]
      %v830 = vld [vmem:[%s316 + $0xe8] sm:$0xff]
      %v831 = vld [vmem:[%s316 + $0xf0] sm:$0xff]
      %v832 = vld [vmem:[%s316 + $0xf8] sm:$0xff]
      %v833 = vadd.f32 %v675, %v801
      %v834 = vadd.f32 %v678, %v802
      %v835 = vadd.f32 %v683, %v803
      %v836 = vadd.f32 %v686, %v804
      %v837 = vadd.f32 %v691, %v805
      %v838 = vadd.f32 %v694, %v806
      %v839 = vadd.f32 %v699, %v807
      %v840 = vadd.f32 %v702, %v808
      %v841 = vadd.f32 %v707, %v809
      %v842 = vadd.f32 %v710, %v810
      %v843 = vadd.f32 %v715, %v811
      %v844 = vadd.f32 %v718, %v812
      %v845 = vadd.f32 %v723, %v813
      %v846 = vadd.f32 %v726, %v814
      %v847 = vadd.f32 %v731, %v815
      %v848 = vadd.f32 %v734, %v816
      %v849 = vadd.f32 %v739, %v817
      %v850 = vadd.f32 %v742, %v818
      %v851 = vadd.f32 %v747, %v819
      %v852 = vadd.f32 %v750, %v820
      %v853 = vadd.f32 %v755, %v821
      %v854 = vadd.f32 %v758, %v822
      %v855 = vadd.f32 %v763, %v823
      %v856 = vadd.f32 %v766, %v824
      %v857 = vadd.f32 %v771, %v825
      %v858 = vadd.f32 %v774, %v826
      %v859 = vadd.f32 %v779, %v827
      %v860 = vadd.f32 %v782, %v828
      %v861 = vadd.f32 %v787, %v829
      %v862 = vadd.f32 %v790, %v830
      %v863 = vadd.f32 %v795, %v831
      %v864 = vadd.f32 %v798, %v832
      %v865 = vmax.f32 %v833, 0.0
      %v866 = vmax.f32 %v834, 0.0
      %v867 = vmax.f32 %v835, 0.0
      %v868 = vmax.f32 %v836, 0.0
      %v869 = vmax.f32 %v837, 0.0
      %v870 = vmax.f32 %v838, 0.0
      %v871 = vmax.f32 %v839, 0.0
      %v872 = vmax.f32 %v840, 0.0
      %v873 = vmax.f32 %v841, 0.0
      %v874 = vmax.f32 %v842, 0.0
      %v875 = vmax.f32 %v843, 0.0
      %v876 = vmax.f32 %v844, 0.0
      %v877 = vmax.f32 %v845, 0.0
      %v878 = vmax.f32 %v846, 0.0
      %v879 = vmax.f32 %v847, 0.0
      %v880 = vmax.f32 %v848, 0.0
      %v881 = vmax.f32 %v849, 0.0
      %v882 = vmax.f32 %v850, 0.0
      %v883 = vmax.f32 %v851, 0.0
      %v884 = vmax.f32 %v852, 0.0
      %v885 = vmax.f32 %v853, 0.0
      %v886 = vmax.f32 %v854, 0.0
      %v887 = vmax.f32 %v855, 0.0
      %v888 = vmax.f32 %v856, 0.0
      %v889 = vmax.f32 %v857, 0.0
      %v890 = vmax.f32 %v858, 0.0
      %v891 = vmax.f32 %v859, 0.0
      %v892 = vmax.f32 %v860, 0.0
      %v893 = vmax.f32 %v861, 0.0
      %v894 = vmax.f32 %v862, 0.0
      %v895 = vmax.f32 %v863, 0.0
      %v896 = vmax.f32 %v864, 0.0
      %897 = vst [vmem:[%s325] sm:$0xff] %v865
      %898 = vst [vmem:[%s325 + $0x8] sm:$0xff] %v866
      %899 = vst [vmem:[%s325 + $0x10] sm:$0xff] %v867
      %900 = vst [vmem:[%s325 + $0x18] sm:$0xff] %v868
      %901 = vst [vmem:[%s325 + $0x20] sm:$0xff] %v869
      %902 = vst [vmem:[%s325 + $0x28] sm:$0xff] %v870
      %903 = vst [vmem:[%s325 + $0x30] sm:$0xff] %v871
      %904 = vst [vmem:[%s325 + $0x38] sm:$0xff] %v872
      %905 = vst [vmem:[%s325 + $0x40] sm:$0xff] %v873
      %906 = vst [vmem:[%s325 + $0x48] sm:$0xff] %v874
      %907 = vst [vmem:[%s325 + $0x50] sm:$0xff] %v875
      %908 = vst [vmem:[%s325 + $0x58] sm:$0xff] %v876
      %909 = vst [vmem:[%s325 + $0x60] sm:$0xff] %v877
      %910 = vst [vmem:[%s325 + $0x68] sm:$0xff] %v878
      %911 = vst [vmem:[%s325 + $0x70] sm:$0xff] %v879
      %912 = vst [vmem:[%s325 + $0x78] sm:$0xff] %v880
      %913 = vst [vmem:[%s325 + $0x80] sm:$0xff] %v881
      %914 = vst [vmem:[%s325 + $0x88] sm:$0xff] %v882
      %915 = vst [vmem:[%s325 + $0x90] sm:$0xff] %v883
      %916 = vst [vmem:[%s325 + $0x98] sm:$0xff] %v884
      %917 = vst [vmem:[%s325 + $0xa0] sm:$0xff] %v885
      %918 = vst [vmem:[%s325 + $0xa8] sm:$0xff] %v886
      %919 = vst [vmem:[%s325 + $0xb0] sm:$0xff] %v887
      %920 = vst [vmem:[%s325 + $0xb8] sm:$0xff] %v888
      %921 = vst [vmem:[%s325 + $0xc0] sm:$0xff] %v889
      %922 = vst [vmem:[%s325 + $0xc8] sm:$0xff] %v890
      %923 = vst [vmem:[%s325 + $0xd0] sm:$0xff] %v891
      %924 = vst [vmem:[%s325 + $0xd8] sm:$0xff] %v892
      %925 = vst [vmem:[%s325 + $0xe0] sm:$0xff] %v893
      %926 = vst [vmem:[%s325 + $0xe8] sm:$0xff] %v894
      %927 = vst [vmem:[%s325 + $0xf0] sm:$0xff] %v895
      %928 = vst [vmem:[%s325 + $0xf8] sm:$0xff] %v896
      %s929 = smul.u32 32, %s20
      %p930 = scmp.lt.s32.totalorder %s929, 63
      %s931 = scalar_select %p930, %s929, 63
      %p932 = scmp.lt.s32.totalorder %s21, 0
      %s933 = scalar_select %p932, %s21, 0
      %s934 = sadd.s32 %s933, %s931
      %s935 = smul.addr %s934, 8
      %s936 = scalar_lea.vmem %s4, %s935
      // Predicated region
      $region37: #{resnet18_dense_forward.25} parent=35 // pred_check
        %p937 = pneg %p164
      $region38: #{resnet18_dense_forward.25} parent=35 // pred_check_branch
        %939 = sbr.rel (%p937) target = $region40
      $region39: #{resnet18_dense_forward.25} parent=35 // pred_region
        %s940 = smul.u32 32, %s20
      $region40: #{resnet18_dense_forward.25} parent=35 // pred_fallthru
        _
    $region36: #{resnet18_dense_forward.25} parent=5 // pred_fallthru
      _
    %p941 = scmp.le.s32.totalorder 2, %s10
    // Predicated region
    $region41: #{resnet18_dense_forward.25} parent=5 // pred_check
      %p942 = pneg %p941
    $region42: #{resnet18_dense_forward.25} parent=5 // pred_check_branch
      %944 = sbr.rel (%p942) target = $region44
    $region43: #{resnet18_dense_forward.25} parent=5 // pred_region
      %s945 = ssub.s32 %s10, 2
      // Predicated region
      $region45: #{resnet18_dense_forward.25} parent=43 // pred_check
        %p946 = pneg %p170
      $region46: #{resnet18_dense_forward.25} parent=43 // pred_check_branch
        %948 = sbr.rel (%p946) target = $region48
      $region47: #{resnet18_dense_forward.25} parent=43 // pred_region
        %s949 = smul.u32 32, %s23
        %p950 = scmp.lt.s32.totalorder %s949, 63
        %s951 = scalar_select %p950, %s949, 63
        %p952 = scmp.lt.s32.totalorder %s24, 0
        %s953 = scalar_select %p952, %s24, 0
        %s954 = sadd.s32 %s953, %s951
        %s955 = smul.addr %s954, 8
        %s956 = scalar_lea.vmem %s4, %s955
      $region48: #{resnet18_dense_forward.25} parent=43 // pred_fallthru
        _
    $region44: #{resnet18_dense_forward.25} parent=5 // pred_fallthru
      _
  $region6: #{resnet18_dense_forward.25} parent=0 // loop_footer
    %s14 = sadd.s32 1, %s10
  $region7: #{resnet18_dense_forward.25} parent=0 // loop_footer_branch
    %9 = sbr.rel target = $region3
  $region8: #{resnet18_dense_forward.25} parent=0 // loop_exit
    _

// kernel: resnet18_dense_forward.28
$region0: #{resnet18_dense_forward.28}
  #allocation0 [shape = 'u32[]', space=smem, size = 0x4, offset = 0x4, fixed_abs, tag = 'smem constant byte address 0x4 - core index']
  #allocation1 [shape = 'u32[144,128]{1,0:T(1,128)}', space=vmem, size = 0x12000, scoped, tag = 'internal scratch']
  %s0 = inlined_call_operand.vmem [shape: bf16[128,160], index: 0, kind: input, shape index: {}]
  %s1 = inlined_call_operand.vmem [shape: bf16[160,128], index: 1, kind: input, shape index: {}]
  %s2 = inlined_call_operand.vmem [shape: f32[1,128], index: 2, kind: input, shape index: {}]
  %s3 = inlined_call_operand.vmem [shape: f32[128,128], index: 3, kind: output, shape index: {}]
  %s4 = sld [smem:[#allocation0]]
  $region22: #{resnet18_dense_forward.28} parent=0
    _
  %s6 = ssub.s32 1, %s4
  %s7 = scalar_select 0, %s6, %s4
  // Predicated region
  $region2: #{resnet18_dense_forward.28} parent=0 // pred_check
    _
  $region3: #{resnet18_dense_forward.28} parent=0 // pred_check_branch
    %9 = sbr.rel (0) target = $region5
  $region4: #{resnet18_dense_forward.28} parent=0 // pred_region
    _
  $region5: #{resnet18_dense_forward.28} parent=0 // pred_fallthru
    _
  // Predicated region
  $region6: #{resnet18_dense_forward.28} parent=0 // pred_check
    _
  $region7: #{resnet18_dense_forward.28} parent=0 // pred_check_branch
    %11 = sbr.rel (0) target = $region9
  $region8: #{resnet18_dense_forward.28} parent=0 // pred_region
    _
  $region9: #{resnet18_dense_forward.28} parent=0 // pred_fallthru
    _
  // Predicated region
  $region10: #{resnet18_dense_forward.28} parent=0 // pred_check
    _
  $region11: #{resnet18_dense_forward.28} parent=0 // pred_check_branch
    %13 = sbr.rel (0) target = $region13
  $region12: #{resnet18_dense_forward.28} parent=0 // pred_region
    _
  $region13: #{resnet18_dense_forward.28} parent=0 // pred_fallthru
    _
  %v15 = vld [vmem:[%s0] sm:$0xff]
  %v16 = vld [vmem:[%s0 + $0x8] sm:$0xff]
  %v17 = vld [vmem:[%s0 + $0x10] sm:$0xff]
  %v18 = vld [vmem:[%s0 + $0x18] sm:$0xff]
  %v19 = vld [vmem:[%s0 + $0x20] sm:$0xff]
  %v20 = vld [vmem:[%s0 + $0x28] sm:$0xff]
  %v21 = vld [vmem:[%s0 + $0x30] sm:$0xff]
  %v22 = vld [vmem:[%s0 + $0x38] sm:$0xff]
  %v23 = vld [vmem:[%s0 + $0x40] sm:$0xff]
  %v24 = vld [vmem:[%s0 + $0x48] sm:$0xff]
  %v25 = vld [vmem:[%s0 + $0x50] sm:$0xff]
  %v26 = vld [vmem:[%s0 + $0x58] sm:$0xff]
  %v27 = vld [vmem:[%s0 + $0x60] sm:$0xff]
  %v28 = vld [vmem:[%s0 + $0x68] sm:$0xff]
  %v29 = vld [vmem:[%s0 + $0x70] sm:$0xff]
  %v30 = vld [vmem:[%s0 + $0x78] sm:$0xff]
  %v31 = vld [vmem:[%s1] sm:$0xf]
  %v32 = vld [vmem:[%s1 + $0x4] sm:$0xf]
  %v33 = vld [vmem:[%s1 + $0x8] sm:$0xf]
  %v34 = vld [vmem:[%s1 + $0xc] sm:$0xf]
  %v35 = vld [vmem:[%s1 + $0x10] sm:$0xf]
  %v36 = vld [vmem:[%s1 + $0x14] sm:$0xf]
  %v37 = vld [vmem:[%s1 + $0x18] sm:$0xf]
  %v38 = vld [vmem:[%s1 + $0x1c] sm:$0xf]
  %v39 = vld [vmem:[%s1 + $0x20] sm:$0xf]
  %v40 = vld [vmem:[%s1 + $0x24] sm:$0xf]
  %v41 = vld [vmem:[%s1 + $0x28] sm:$0xf]
  %v42 = vld [vmem:[%s1 + $0x2c] sm:$0xf]
  %v43 = vld [vmem:[%s1 + $0x30] sm:$0xf]
  %v44 = vld [vmem:[%s1 + $0x34] sm:$0xf]
  %v45 = vld [vmem:[%s1 + $0x38] sm:$0xf]
  %v46 = vld [vmem:[%s1 + $0x3c] sm:$0xf]
  %v47 = vld [vmem:[%s1 + $0x40] sm:$0xf]
  %v48 = vld [vmem:[%s1 + $0x44] sm:$0xf]
  %v49 = vld [vmem:[%s1 + $0x48] sm:$0xf]
  %v50 = vld [vmem:[%s1 + $0x4c] sm:$0xf]
  %v51 = vld [vmem:[%s2] sm:$0x1]
  %v53 = vlaneseq
  %v54 = vshrl.u32 %v53, 7
  %v55 = vsub.s32 0, %v54
  %v56 = vrot.slane %v51, %v55
  %v74 = vunpack.c.l.b16 %v15
  %v75 = vunpack.c.h.b16 %v15
  %v76 = vunpack.c.l.b16 %v16
  %v77 = vunpack.c.h.b16 %v16
  %v78 = vunpack.c.l.b16 %v17
  %v79 = vunpack.c.h.b16 %v17
  %v80 = vunpack.c.l.b16 %v18
  %v81 = vunpack.c.h.b16 %v18
  %v82 = vunpack.c.l.b16 %v19
  %v83 = vunpack.c.h.b16 %v19
  %v84 = vunpack.c.l.b16 %v20
  %v85 = vunpack.c.h.b16 %v20
  %v86 = vunpack.c.l.b16 %v21
  %v87 = vunpack.c.h.b16 %v21
  %v88 = vunpack.c.l.b16 %v22
  %v89 = vunpack.c.h.b16 %v22
  %v90 = vunpack.c.l.b16 %v23
  %v91 = vunpack.c.h.b16 %v23
  %v92 = vunpack.c.l.b16 %v24
  %v93 = vunpack.c.h.b16 %v24
  %v94 = vunpack.c.l.b16 %v25
  %v95 = vunpack.c.h.b16 %v25
  %v96 = vunpack.c.l.b16 %v26
  %v97 = vunpack.c.h.b16 %v26
  %v98 = vunpack.c.l.b16 %v27
  %v99 = vunpack.c.h.b16 %v27
  %v100 = vunpack.c.l.b16 %v28
  %v101 = vunpack.c.h.b16 %v28
  %v102 = vunpack.c.l.b16 %v29
  %v103 = vunpack.c.h.b16 %v29
  %v104 = vunpack.c.l.b16 %v30
  %v105 = vunpack.c.h.b16 %v30
  %v106 = vpack.c.b16 %v76, %v74
  %v107 = vpack.c.b16 %v77, %v75
  %v108 = vpack.c.b16 %v80, %v78
  %v109 = vpack.c.b16 %v81, %v79
  %v110 = vpack.c.b16 %v84, %v82
  %v111 = vpack.c.b16 %v85, %v83
  %v112 = vpack.c.b16 %v88, %v86
  %v113 = vpack.c.b16 %v89, %v87
  %v114 = vpack.c.b16 %v92, %v90
  %v115 = vpack.c.b16 %v93, %v91
  %v116 = vpack.c.b16 %v96, %v94
  %v117 = vpack.c.b16 %v97, %v95
  %v118 = vpack.c.b16 %v100, %v98
  %v119 = vpack.c.b16 %v101, %v99
  %v120 = vpack.c.b16 %v104, %v102
  %v121 = vpack.c.b16 %v105, %v103
  %v150 = vunpack.c.l.b16 %v31
  %v151 = vunpack.c.l.b16 %v32
  %v152 = vunpack.c.l.b16 %v33
  %v153 = vunpack.c.l.b16 %v34
  %v154 = vunpack.c.l.b16 %v35
  %v155 = vunpack.c.l.b16 %v36
  %v156 = vunpack.c.l.b16 %v37
  %v157 = vunpack.c.l.b16 %v38
  %v158 = vunpack.c.l.b16 %v39
  %v159 = vunpack.c.l.b16 %v40
  %v160 = vunpack.c.l.b16 %v41
  %v161 = vunpack.c.l.b16 %v42
  %v162 = vunpack.c.l.b16 %v43
  %v163 = vunpack.c.l.b16 %v44
  %v164 = vunpack.c.l.b16 %v45
  %v165 = vunpack.c.l.b16 %v46
  %v166 = vunpack.c.l.b16 %v47
  %v167 = vunpack.c.l.b16 %v48
  %v168 = vunpack.c.l.b16 %v49
  %v169 = vunpack.c.l.b16 %v50
  %v170 = vpack.c.b16 %v151, %v150
  %v171 = vpack.c.b16 %v153, %v152
  %v172 = vpack.c.b16 %v155, %v154
  %v173 = vpack.c.b16 %v157, %v156
  %v174 = vpack.c.b16 %v159, %v158
  %v175 = vpack.c.b16 %v161, %v160
  %v176 = vpack.c.b16 %v163, %v162
  %v177 = vpack.c.b16 %v165, %v164
  %v178 = vpack.c.b16 %v167, %v166
  %v179 = vpack.c.b16 %v169, %v168
  %vm190 = vcmask 261120
  %v192 = vsel %vm190, %v107, 0
  %v195 = vsel %vm190, %v109, 0
  %v198 = vsel %vm190, %v111, 0
  %v201 = vsel %vm190, %v113, 0
  %v204 = vsel %vm190, %v115, 0
  %v207 = vsel %vm190, %v117, 0
  %v210 = vsel %vm190, %v119, 0
  %v213 = vsel %vm190, %v121, 0
  %215 = vmatprep.subr.bf16.mxu0 0
  %216 = vmatpush1.bf16.msra.mxu0 %v170
  %217 = vmatprep.subr.bf16.mxu0 0
  %218 = vmatpush1.bf16.msra.mxu0 %v171
  %219 = vmatprep.subr.bf16.mxu0 0
  %220 = vmatpush1.bf16.msra.mxu0 %v172
  %221 = vmatprep.subr.bf16.mxu0 0
  %222 = vmatpush1.bf16.msra.mxu0 %v173
  %223 = vmatprep.subr.bf16.mxu0 0
  %224 = vmatpush1.bf16.msra.mxu0 %v174
  %225 = vmatprep.subr.bf16.mxu0 0
  %226 = vmatpush1.bf16.msra.mxu0 %v175
  %227 = vmatprep.subr.bf16.mxu0 0
  %228 = vmatpush1.bf16.msra.mxu0 %v176
  %229 = vmatprep.subr.bf16.mxu0 0
  %230 = vmatpush1.bf16.msra.mxu0 %v177
  %231 = vmatprep.subr.bf16.mxu0 0
  %232 = vmatpush1.bf16.msra.mxu0 %v178
  %233 = vmatprep.subr.bf16.mxu0 0
  %234 = vmatpush1.bf16.msra.mxu0 %v179
  %235 = vmatprep.subr.bf16.mxu0 0
  %236 = vmatpush1.bf16.msra.mxu0 0
  %237 = vmatprep.subr.bf16.mxu0 0
  %238 = vmatpush1.bf16.msra.mxu0 0
  %239 = vmatprep.subr.bf16.mxu0 0
  %240 = vmatpush1.bf16.msra.mxu0 0
  %241 = vmatprep.subr.bf16.mxu0 0
  %242 = vmatpush1.bf16.msra.mxu0 0
  %243 = vmatprep.subr.bf16.mxu0 0
  %244 = vmatpush1.bf16.msra.mxu0 0
  %245 = vmatprep.subr.bf16.mxu0 0
  %246 = vmatpush1.bf16.msra.mxu0 0
  %247 = vmatprep.mubr.bf16.mxu0 %v192
  %248 = vmatmul.mubr.bf16.gmra.mrb[0].mxu0 %v106
  %v249 = vpop.f32.mrb[0].mxu0
  %v250 = vadd.f32 %v56, %v249
  %v251 = vpop.f32.mrb[0].mxu0
  %v252 = vpop.f32.mrb[0].mxu0
  %v253 = vadd.f32 %v56, %v252
  %v254 = vpop.f32.mrb[0].mxu0
  %255 = vmatprep.mubr.bf16.mxu0 %v195
  %256 = vmatmul.mubr.bf16.gmra.mrb[0].mxu0 %v108
  %v257 = vpop.f32.mrb[0].mxu0
  %v258 = vadd.f32 %v56, %v257
  %v259 = vpop.f32.mrb[0].mxu0
  %v260 = vpop.f32.mrb[0].mxu0
  %v261 = vadd.f32 %v56, %v260
  %v262 = vpop.f32.mrb[0].mxu0
  %263 = vmatprep.mubr.bf16.mxu0 %v198
  %264 = vmatmul.mubr.bf16.gmra.mrb[0].mxu0 %v110
  %v265 = vpop.f32.mrb[0].mxu0
  %v266 = vadd.f32 %v56, %v265
  %v267 = vpop.f32.mrb[0].mxu0
  %v268 = vpop.f32.mrb[0].mxu0
  %v269 = vadd.f32 %v56, %v268
  %v270 = vpop.f32.mrb[0].mxu0
  %271 = vmatprep.mubr.bf16.mxu0 %v201
  %272 = vmatmul.mubr.bf16.gmra.mrb[0].mxu0 %v112
  %v273 = vpop.f32.mrb[0].mxu0
  %v274 = vadd.f32 %v56, %v273
  %v275 = vpop.f32.mrb[0].mxu0
  %v276 = vpop.f32.mrb[0].mxu0
  %v277 = vadd.f32 %v56, %v276
  %v278 = vpop.f32.mrb[0].mxu0
  %279 = vmatprep.mubr.bf16.mxu0 %v204
  %280 = vmatmul.mubr.bf16.gmra.mrb[0].mxu0 %v114
  %v281 = vpop.f32.mrb[0].mxu0
  %v282 = vadd.f32 %v56, %v281
  %v283 = vpop.f32.mrb[0].mxu0
  %v284 = vpop.f32.mrb[0].mxu0
  %v285 = vadd.f32 %v56, %v284
  %v286 = vpop.f32.mrb[0].mxu0
  %287 = vmatprep.mubr.bf16.mxu0 %v207
  %288 = vmatmul.mubr.bf16.gmra.mrb[0].mxu0 %v116
  %v289 = vpop.f32.mrb[0].mxu0
  %v290 = vadd.f32 %v56, %v289
  %v291 = vpop.f32.mrb[0].mxu0
  %v292 = vpop.f32.mrb[0].mxu0
  %v293 = vadd.f32 %v56, %v292
  %v294 = vpop.f32.mrb[0].mxu0
  %295 = vmatprep.mubr.bf16.mxu0 %v210
  %296 = vmatmul.mubr.bf16.gmra.mrb[0].mxu0 %v118
  %v297 = vpop.f32.mrb[0].mxu0
  %v298 = vadd.f32 %v56, %v297
  %v299 = vpop.f32.mrb[0].mxu0
  %v300 = vpop.f32.mrb[0].mxu0
  %v301 = vadd.f32 %v56, %v300
  %v302 = vpop.f32.mrb[0].mxu0
  %303 = vmatprep.mubr.bf16.mxu0 %v213
  %304 = vmatmul.mubr.bf16.gmra.mrb[0].mxu0 %v120
  %v305 = vpop.f32.mrb[0].mxu0
  %v306 = vadd.f32 %v56, %v305
  %v307 = vpop.f32.mrb[0].mxu0
  %v308 = vpop.f32.mrb[0].mxu0
  %v309 = vadd.f32 %v56, %v308
  %v310 = vpop.f32.mrb[0].mxu0
  %311 = vdwg.mxu0
  %v312 = vmax.f32 %v250, 0.0
  %v313 = vmax.f32 %v253, 0.0
  %v314 = vmax.f32 %v258, 0.0
  %v315 = vmax.f32 %v261, 0.0
  %v316 = vmax.f32 %v266, 0.0
  %v317 = vmax.f32 %v269, 0.0
  %v318 = vmax.f32 %v274, 0.0
  %v319 = vmax.f32 %v277, 0.0
  %v320 = vmax.f32 %v282, 0.0
  %v321 = vmax.f32 %v285, 0.0
  %v322 = vmax.f32 %v290, 0.0
  %v323 = vmax.f32 %v293, 0.0
  %v324 = vmax.f32 %v298, 0.0
  %v325 = vmax.f32 %v301, 0.0
  %v326 = vmax.f32 %v306, 0.0
  %v327 = vmax.f32 %v309, 0.0
  %328 = vst [vmem:[%s3] sm:$0xff] %v312
  %329 = vst [vmem:[%s3 + $0x8] sm:$0xff] %v313
  %330 = vst [vmem:[%s3 + $0x10] sm:$0xff] %v314
  %331 = vst [vmem:[%s3 + $0x18] sm:$0xff] %v315
  %332 = vst [vmem:[%s3 + $0x20] sm:$0xff] %v316
  %333 = vst [vmem:[%s3 + $0x28] sm:$0xff] %v317
  %334 = vst [vmem:[%s3 + $0x30] sm:$0xff] %v318
  %335 = vst [vmem:[%s3 + $0x38] sm:$0xff] %v319
  %336 = vst [vmem:[%s3 + $0x40] sm:$0xff] %v320
  %337 = vst [vmem:[%s3 + $0x48] sm:$0xff] %v321
  %338 = vst [vmem:[%s3 + $0x50] sm:$0xff] %v322
  %339 = vst [vmem:[%s3 + $0x58] sm:$0xff] %v323
  %340 = vst [vmem:[%s3 + $0x60] sm:$0xff] %v324
  %341 = vst [vmem:[%s3 + $0x68] sm:$0xff] %v325
  %342 = vst [vmem:[%s3 + $0x70] sm:$0xff] %v326
  %343 = vst [vmem:[%s3 + $0x78] sm:$0xff] %v327
  // Predicated region
  $region14: #{resnet18_dense_forward.28} parent=0 // pred_check
    _
  $region15: #{resnet18_dense_forward.28} parent=0 // pred_check_branch
    %345 = sbr.rel (0) target = $region17
  $region16: #{resnet18_dense_forward.28} parent=0 // pred_region
    _
  $region17: #{resnet18_dense_forward.28} parent=0 // pred_fallthru
    _
  // Predicated region
  $region18: #{resnet18_dense_forward.28} parent=0 // pred_check
    _
  $region19: #{resnet18_dense_forward.28} parent=0 // pred_check_branch
    %347 = sbr.rel (0) target = $region21
  $region20: #{resnet18_dense_forward.28} parent=0 // pred_region
    _
  $region21: #{resnet18_dense_forward.28} parent=0 // pred_fallthru
    _

// kernel: resnet18_dense_forward.29
$region0: #{resnet18_dense_forward.29}
  #allocation0 [shape = 'u32[]', space=smem, size = 0x4, offset = 0x4, fixed_abs, tag = 'smem constant byte address 0x4 - core index']
  #allocation1 [shape = 'u32[144,128]{1,0:T(1,128)}', space=vmem, size = 0x12000, scoped, tag = 'internal scratch']
  %s0 = inlined_call_operand.vmem [shape: bf16[128,32], index: 0, kind: input, shape index: {}]
  %s1 = inlined_call_operand.vmem [shape: bf16[32,128], index: 1, kind: input, shape index: {}]
  %s2 = inlined_call_operand.vmem [shape: f32[1,128], index: 2, kind: input, shape index: {}]
  %s3 = inlined_call_operand.vmem [shape: f32[128,128], index: 3, kind: output, shape index: {}]
  %s4 = sld [smem:[#allocation0]]
  $region22: #{resnet18_dense_forward.29} parent=0
    _
  %s6 = ssub.s32 1, %s4
  %s7 = scalar_select 0, %s6, %s4
  // Predicated region
  $region2: #{resnet18_dense_forward.29} parent=0 // pred_check
    _
  $region3: #{resnet18_dense_forward.29} parent=0 // pred_check_branch
    %9 = sbr.rel (0) target = $region5
  $region4: #{resnet18_dense_forward.29} parent=0 // pred_region
    _
  $region5: #{resnet18_dense_forward.29} parent=0 // pred_fallthru
    _
  // Predicated region
  $region6: #{resnet18_dense_forward.29} parent=0 // pred_check
    _
  $region7: #{resnet18_dense_forward.29} parent=0 // pred_check_branch
    %11 = sbr.rel (0) target = $region9
  $region8: #{resnet18_dense_forward.29} parent=0 // pred_region
    _
  $region9: #{resnet18_dense_forward.29} parent=0 // pred_fallthru
    _
  // Predicated region
  $region10: #{resnet18_dense_forward.29} parent=0 // pred_check
    _
  $region11: #{resnet18_dense_forward.29} parent=0 // pred_check_branch
    %13 = sbr.rel (0) target = $region13
  $region12: #{resnet18_dense_forward.29} parent=0 // pred_region
    _
  $region13: #{resnet18_dense_forward.29} parent=0 // pred_fallthru
    _
  %v15 = vld [vmem:[%s0] sm:$0xf]
  %v16 = vld [vmem:[%s0 + $0x4] sm:$0xf]
  %v17 = vld [vmem:[%s0 + $0x8] sm:$0xf]
  %v18 = vld [vmem:[%s0 + $0xc] sm:$0xf]
  %v19 = vld [vmem:[%s0 + $0x10] sm:$0xf]
  %v20 = vld [vmem:[%s0 + $0x14] sm:$0xf]
  %v21 = vld [vmem:[%s0 + $0x18] sm:$0xf]
  %v22 = vld [vmem:[%s0 + $0x1c] sm:$0xf]
  %v23 = vld [vmem:[%s0 + $0x20] sm:$0xf]
  %v24 = vld [vmem:[%s0 + $0x24] sm:$0xf]
  %v25 = vld [vmem:[%s0 + $0x28] sm:$0xf]
  %v26 = vld [vmem:[%s0 + $0x2c] sm:$0xf]
  %v27 = vld [vmem:[%s0 + $0x30] sm:$0xf]
  %v28 = vld [vmem:[%s0 + $0x34] sm:$0xf]
  %v29 = vld [vmem:[%s0 + $0x38] sm:$0xf]
  %v30 = vld [vmem:[%s0 + $0x3c] sm:$0xf]
  %v31 = vld [vmem:[%s1] sm:$0xf]
  %v32 = vld [vmem:[%s1 + $0x4] sm:$0xf]
  %v33 = vld [vmem:[%s1 + $0x8] sm:$0xf]
  %v34 = vld [vmem:[%s1 + $0xc] sm:$0xf]
  %v35 = vld [vmem:[%s2] sm:$0x1]
  %v37 = vlaneseq
  %v38 = vshrl.u32 %v37, 7
  %v39 = vsub.s32 0, %v38
  %v40 = vrot.slane %v35, %v39
  %v58 = vunpack.c.l.b16 %v15
  %v59 = vunpack.c.l.b16 %v16
  %v60 = vunpack.c.l.b16 %v17
  %v61 = vunpack.c.l.b16 %v18
  %v62 = vunpack.c.l.b16 %v19
  %v63 = vunpack.c.l.b16 %v20
  %v64 = vunpack.c.l.b16 %v21
  %v65 = vunpack.c.l.b16 %v22
  %v66 = vunpack.c.l.b16 %v23
  %v67 = vunpack.c.l.b16 %v24
  %v68 = vunpack.c.l.b16 %v25
  %v69 = vunpack.c.l.b16 %v26
  %v70 = vunpack.c.l.b16 %v27
  %v71 = vunpack.c.l.b16 %v28
  %v72 = vunpack.c.l.b16 %v29
  %v73 = vunpack.c.l.b16 %v30
  %v74 = vpack.c.b16 %v59, %v58
  %v75 = vpack.c.b16 %v61, %v60
  %v76 = vpack.c.b16 %v63, %v62
  %v77 = vpack.c.b16 %v65, %v64
  %v78 = vpack.c.b16 %v67, %v66
  %v79 = vpack.c.b16 %v69, %v68
  %v80 = vpack.c.b16 %v71, %v70
  %v81 = vpack.c.b16 %v73, %v72
  %v86 = vunpack.c.l.b16 %v31
  %v87 = vunpack.c.l.b16 %v32
  %v88 = vunpack.c.l.b16 %v33
  %v89 = vunpack.c.l.b16 %v34
  %v90 = vpack.c.b16 %v87, %v86
  %v91 = vpack.c.b16 %v89, %v88
  %vm94 = vcmask 261120
  %v96 = vsel %vm94, %v74, 0
  %v99 = vsel %vm94, %v75, 0
  %v102 = vsel %vm94, %v76, 0
  %v105 = vsel %vm94, %v77, 0
  %v108 = vsel %vm94, %v78, 0
  %v111 = vsel %vm94, %v79, 0
  %v114 = vsel %vm94, %v80, 0
  %v117 = vsel %vm94, %v81, 0
  %119 = vmatprep.subr.bf16.mxu0 0
  %120 = vmatpush1.bf16.msra.mxu0 %v90
  %121 = vmatprep.subr.bf16.mxu0 0
  %122 = vmatpush1.bf16.msra.mxu0 %v91
  %123 = vmatprep.subr.bf16.mxu0 0
  %124 = vmatpush1.bf16.msra.mxu0 0
  %125 = vmatprep.subr.bf16.mxu0 0
  %126 = vmatpush1.bf16.msra.mxu0 0
  %127 = vmatprep.subr.bf16.mxu0 0
  %128 = vmatpush1.bf16.msra.mxu0 0
  %129 = vmatprep.subr.bf16.mxu0 0
  %130 = vmatpush1.bf16.msra.mxu0 0
  %131 = vmatprep.subr.bf16.mxu0 0
  %132 = vmatpush1.bf16.msra.mxu0 0
  %133 = vmatprep.subr.bf16.mxu0 0
  %134 = vmatpush1.bf16.msra.mxu0 0
  %135 = vmatprep.subr.bf16.mxu0 0
  %136 = vmatpush1.bf16.msra.mxu0 0
  %137 = vmatprep.subr.bf16.mxu0 0
  %138 = vmatpush1.bf16.msra.mxu0 0
  %139 = vmatprep.subr.bf16.mxu0 0
  %140 = vmatpush1.bf16.msra.mxu0 0
  %141 = vmatprep.subr.bf16.mxu0 0
  %142 = vmatpush1.bf16.msra.mxu0 0
  %143 = vmatprep.subr.bf16.mxu0 0
  %144 = vmatpush1.bf16.msra.mxu0 0
  %145 = vmatprep.subr.bf16.mxu0 0
  %146 = vmatpush1.bf16.msra.mxu0 0
  %147 = vmatprep.subr.bf16.mxu0 0
  %148 = vmatpush1.bf16.msra.mxu0 0
  %149 = vmatprep.subr.bf16.mxu0 0
  %150 = vmatpush1.bf16.msra.mxu0 0
  %151 = vmatprep.mubr.bf16.mxu0 0
  %152 = vmatmul.mubr.bf16.gmra.mrb[0].mxu0 %v96
  %v153 = vpop.f32.mrb[0].mxu0
  %v154 = vadd.f32 %v40, %v153
  %v155 = vpop.f32.mrb[0].mxu0
  %v156 = vpop.f32.mrb[0].mxu0
  %v157 = vadd.f32 %v40, %v156
  %v158 = vpop.f32.mrb[0].mxu0
  %159 = vmatprep.mubr.bf16.mxu0 0
  %160 = vmatmul.mubr.bf16.gmra.mrb[0].mxu0 %v99
  %v161 = vpop.f32.mrb[0].mxu0
  %v162 = vadd.f32 %v40, %v161
  %v163 = vpop.f32.mrb[0].mxu0
  %v164 = vpop.f32.mrb[0].mxu0
  %v165 = vadd.f32 %v40, %v164
  %v166 = vpop.f32.mrb[0].mxu0
  %167 = vmatprep.mubr.bf16.mxu0 0
  %168 = vmatmul.mubr.bf16.gmra.mrb[0].mxu0 %v102
  %v169 = vpop.f32.mrb[0].mxu0
  %v170 = vadd.f32 %v40, %v169
  %v171 = vpop.f32.mrb[0].mxu0
  %v172 = vpop.f32.mrb[0].mxu0
  %v173 = vadd.f32 %v40, %v172
  %v174 = vpop.f32.mrb[0].mxu0
  %175 = vmatprep.mubr.bf16.mxu0 0
  %176 = vmatmul.mubr.bf16.gmra.mrb[0].mxu0 %v105
  %v177 = vpop.f32.mrb[0].mxu0
  %v178 = vadd.f32 %v40, %v177
  %v179 = vpop.f32.mrb[0].mxu0
  %v180 = vpop.f32.mrb[0].mxu0
  %v181 = vadd.f32 %v40, %v180
  %v182 = vpop.f32.mrb[0].mxu0
  %183 = vmatprep.mubr.bf16.mxu0 0
  %184 = vmatmul.mubr.bf16.gmra.mrb[0].mxu0 %v108
  %v185 = vpop.f32.mrb[0].mxu0
  %v186 = vadd.f32 %v40, %v185
  %v187 = vpop.f32.mrb[0].mxu0
  %v188 = vpop.f32.mrb[0].mxu0
  %v189 = vadd.f32 %v40, %v188
  %v190 = vpop.f32.mrb[0].mxu0
  %191 = vmatprep.mubr.bf16.mxu0 0
  %192 = vmatmul.mubr.bf16.gmra.mrb[0].mxu0 %v111
  %v193 = vpop.f32.mrb[0].mxu0
  %v194 = vadd.f32 %v40, %v193
  %v195 = vpop.f32.mrb[0].mxu0
  %v196 = vpop.f32.mrb[0].mxu0
  %v197 = vadd.f32 %v40, %v196
  %v198 = vpop.f32.mrb[0].mxu0
  %199 = vmatprep.mubr.bf16.mxu0 0
  %200 = vmatmul.mubr.bf16.gmra.mrb[0].mxu0 %v114
  %v201 = vpop.f32.mrb[0].mxu0
  %v202 = vadd.f32 %v40, %v201
  %v203 = vpop.f32.mrb[0].mxu0
  %v204 = vpop.f32.mrb[0].mxu0
  %v205 = vadd.f32 %v40, %v204
  %v206 = vpop.f32.mrb[0].mxu0
  %207 = vmatprep.mubr.bf16.mxu0 0
  %208 = vmatmul.mubr.bf16.gmra.mrb[0].mxu0 %v117
  %v209 = vpop.f32.mrb[0].mxu0
  %v210 = vadd.f32 %v40, %v209
  %v211 = vpop.f32.mrb[0].mxu0
  %v212 = vpop.f32.mrb[0].mxu0
  %v213 = vadd.f32 %v40, %v212
  %v214 = vpop.f32.mrb[0].mxu0
  %215 = vdwg.mxu0
  %216 = vst [vmem:[%s3] sm:$0xff] %v154
  %217 = vst [vmem:[%s3 + $0x8] sm:$0xff] %v157
  %218 = vst [vmem:[%s3 + $0x10] sm:$0xff] %v162
  %219 = vst [vmem:[%s3 + $0x18] sm:$0xff] %v165
  %220 = vst [vmem:[%s3 + $0x20] sm:$0xff] %v170
  %221 = vst [vmem:[%s3 + $0x28] sm:$0xff] %v173
  %222 = vst [vmem:[%s3 + $0x30] sm:$0xff] %v178
  %223 = vst [vmem:[%s3 + $0x38] sm:$0xff] %v181
  %224 = vst [vmem:[%s3 + $0x40] sm:$0xff] %v186
  %225 = vst [vmem:[%s3 + $0x48] sm:$0xff] %v189
  %226 = vst [vmem:[%s3 + $0x50] sm:$0xff] %v194
  %227 = vst [vmem:[%s3 + $0x58] sm:$0xff] %v197
  %228 = vst [vmem:[%s3 + $0x60] sm:$0xff] %v202
  %229 = vst [vmem:[%s3 + $0x68] sm:$0xff] %v205
  %230 = vst [vmem:[%s3 + $0x70] sm:$0xff] %v210
  %231 = vst [vmem:[%s3 + $0x78] sm:$0xff] %v213
  // Predicated region
  $region14: #{resnet18_dense_forward.29} parent=0 // pred_check
    _
  $region15: #{resnet18_dense_forward.29} parent=0 // pred_check_branch
    %233 = sbr.rel (0) target = $region17
  $region16: #{resnet18_dense_forward.29} parent=0 // pred_region
    _
  $region17: #{resnet18_dense_forward.29} parent=0 // pred_fallthru
    _
  // Predicated region
  $region18: #{resnet18_dense_forward.29} parent=0 // pred_check
    _
  $region19: #{resnet18_dense_forward.29} parent=0 // pred_check_branch
    %235 = sbr.rel (0) target = $region21
  $region20: #{resnet18_dense_forward.29} parent=0 // pred_region
    _
  $region21: #{resnet18_dense_forward.29} parent=0 // pred_fallthru
    _

// kernel: resnet18_dense_forward.31
$region0: #{resnet18_dense_forward.31}
  #allocation0 [shape = 'u32[]', space=smem, size = 0x4, offset = 0x4, fixed_abs, tag = 'smem constant byte address 0x4 - core index']
  #allocation1 [shape = 'u32[144,128]{1,0:T(1,128)}', space=vmem, size = 0x12000, scoped, tag = 'internal scratch']
  %s0 = inlined_call_operand.vmem [shape: bf16[128,288], index: 0, kind: input, shape index: {}]
  %s1 = inlined_call_operand.vmem [shape: bf16[288,128], index: 1, kind: input, shape index: {}]
  %s2 = inlined_call_operand.vmem [shape: f32[1,128], index: 2, kind: input, shape index: {}]
  %s3 = inlined_call_operand.vmem [shape: f32[128,128], index: 3, kind: output, shape index: {}]
  %s4 = sld [smem:[#allocation0]]
  $region22: #{resnet18_dense_forward.31} parent=0
    _
  %s6 = ssub.s32 1, %s4
  %s7 = scalar_select 0, %s6, %s4
  // Predicated region
  $region2: #{resnet18_dense_forward.31} parent=0 // pred_check
    _
  $region3: #{resnet18_dense_forward.31} parent=0 // pred_check_branch
    %9 = sbr.rel (0) target = $region5
  $region4: #{resnet18_dense_forward.31} parent=0 // pred_region
    _
  $region5: #{resnet18_dense_forward.31} parent=0 // pred_fallthru
    _
  // Predicated region
  $region6: #{resnet18_dense_forward.31} parent=0 // pred_check
    _
  $region7: #{resnet18_dense_forward.31} parent=0 // pred_check_branch
    %11 = sbr.rel (0) target = $region9
  $region8: #{resnet18_dense_forward.31} parent=0 // pred_region
    _
  $region9: #{resnet18_dense_forward.31} parent=0 // pred_fallthru
    _
  // Predicated region
  $region10: #{resnet18_dense_forward.31} parent=0 // pred_check
    _
  $region11: #{resnet18_dense_forward.31} parent=0 // pred_check_branch
    %13 = sbr.rel (0) target = $region13
  $region12: #{resnet18_dense_forward.31} parent=0 // pred_region
    _
  $region13: #{resnet18_dense_forward.31} parent=0 // pred_fallthru
    _
  %v15 = vld [vmem:[%s0] sm:$0xff]
  %v16 = vld [vmem:[%s0 + $0x8] sm:$0xf]
  %v17 = vld [vmem:[%s0 + $0xc] sm:$0xff]
  %v18 = vld [vmem:[%s0 + $0x14] sm:$0xf]
  %v19 = vld [vmem:[%s0 + $0x18] sm:$0xff]
  %v20 = vld [vmem:[%s0 + $0x20] sm:$0xf]
  %v21 = vld [vmem:[%s0 + $0x24] sm:$0xff]
  %v22 = vld [vmem:[%s0 + $0x2c] sm:$0xf]
  %v23 = vld [vmem:[%s0 + $0x30] sm:$0xff]
  %v24 = vld [vmem:[%s0 + $0x38] sm:$0xf]
  %v25 = vld [vmem:[%s0 + $0x3c] sm:$0xff]
  %v26 = vld [vmem:[%s0 + $0x44] sm:$0xf]
  %v27 = vld [vmem:[%s0 + $0x48] sm:$0xff]
  %v28 = vld [vmem:[%s0 + $0x50] sm:$0xf]
  %v29 = vld [vmem:[%s0 + $0x54] sm:$0xff]
  %v30 = vld [vmem:[%s0 + $0x5c] sm:$0xf]
  %v31 = vld [vmem:[%s0 + $0x60] sm:$0xff]
  %v32 = vld [vmem:[%s0 + $0x68] sm:$0xf]
  %v33 = vld [vmem:[%s0 + $0x6c] sm:$0xff]
  %v34 = vld [vmem:[%s0 + $0x74] sm:$0xf]
  %v35 = vld [vmem:[%s0 + $0x78] sm:$0xff]
  %v36 = vld [vmem:[%s0 + $0x80] sm:$0xf]
  %v37 = vld [vmem:[%s0 + $0x84] sm:$0xff]
  %v38 = vld [vmem:[%s0 + $0x8c] sm:$0xf]
  %v39 = vld [vmem:[%s0 + $0x90] sm:$0xff]
  %v40 = vld [vmem:[%s0 + $0x98] sm:$0xf]
  %v41 = vld [vmem:[%s0 + $0x9c] sm:$0xff]
  %v42 = vld [vmem:[%s0 + $0xa4] sm:$0xf]
  %v43 = vld [vmem:[%s0 + $0xa8] sm:$0xff]
  %v44 = vld [vmem:[%s0 + $0xb0] sm:$0xf]
  %v45 = vld [vmem:[%s0 + $0xb4] sm:$0xff]
  %v46 = vld [vmem:[%s0 + $0xbc] sm:$0xf]
  %v47 = vld [vmem:[%s1] sm:$0xf]
  %v48 = vld [vmem:[%s1 + $0x4] sm:$0xf]
  %v49 = vld [vmem:[%s1 + $0x8] sm:$0xf]
  %v50 = vld [vmem:[%s1 + $0xc] sm:$0xf]
  %v51 = vld [vmem:[%s1 + $0x10] sm:$0xf]
  %v52 = vld [vmem:[%s1 + $0x14] sm:$0xf]
  %v53 = vld [vmem:[%s1 + $0x18] sm:$0xf]
  %v54 = vld [vmem:[%s1 + $0x1c] sm:$0xf]
  %v55 = vld [vmem:[%s1 + $0x20] sm:$0xf]
  %v56 = vld [vmem:[%s1 + $0x24] sm:$0xf]
  %v57 = vld [vmem:[%s1 + $0x28] sm:$0xf]
  %v58 = vld [vmem:[%s1 + $0x2c] sm:$0xf]
  %v59 = vld [vmem:[%s1 + $0x30] sm:$0xf]
  %v60 = vld [vmem:[%s1 + $0x34] sm:$0xf]
  %v61 = vld [vmem:[%s1 + $0x38] sm:$0xf]
  %v62 = vld [vmem:[%s1 + $0x3c] sm:$0xf]
  %v63 = vld [vmem:[%s1 + $0x40] sm:$0xf]
  %v64 = vld [vmem:[%s1 + $0x44] sm:$0xf]
  %v65 = vld [vmem:[%s1 + $0x48] sm:$0xf]
  %v66 = vld [vmem:[%s1 + $0x4c] sm:$0xf]
  %v67 = vld [vmem:[%s1 + $0x50] sm:$0xf]
  %v68 = vld [vmem:[%s1 + $0x54] sm:$0xf]
  %v69 = vld [vmem:[%s1 + $0x58] sm:$0xf]
  %v70 = vld [vmem:[%s1 + $0x5c] sm:$0xf]
  %v71 = vld [vmem:[%s1 + $0x60] sm:$0xf]
  %v72 = vld [vmem:[%s1 + $0x64] sm:$0xf]
  %v73 = vld [vmem:[%s1 + $0x68] sm:$0xf]
  %v74 = vld [vmem:[%s1 + $0x6c] sm:$0xf]
  %v75 = vld [vmem:[%s1 + $0x70] sm:$0xf]
  %v76 = vld [vmem:[%s1 + $0x74] sm:$0xf]
  %v77 = vld [vmem:[%s1 + $0x78] sm:$0xf]
  %v78 = vld [vmem:[%s1 + $0x7c] sm:$0xf]
  %v79 = vld [vmem:[%s1 + $0x80] sm:$0xf]
  %v80 = vld [vmem:[%s1 + $0x84] sm:$0xf]
  %v81 = vld [vmem:[%s1 + $0x88] sm:$0xf]
  %v82 = vld [vmem:[%s1 + $0x8c] sm:$0xf]
  %v83 = vld [vmem:[%s2] sm:$0x1]
  %v85 = vlaneseq
  %v86 = vshrl.u32 %v85, 7
  %v87 = vsub.s32 0, %v86
  %v88 = vrot.slane %v83, %v87
  %v122 = vunpack.c.l.b16 %v15
  %v123 = vunpack.c.h.b16 %v15
  %v124 = vunpack.c.l.b16 %v16
  %v125 = vunpack.c.l.b16 %v17
  %v126 = vunpack.c.h.b16 %v17
  %v127 = vunpack.c.l.b16 %v18
  %v128 = vunpack.c.l.b16 %v19
  %v129 = vunpack.c.h.b16 %v19
  %v130 = vunpack.c.l.b16 %v20
  %v131 = vunpack.c.l.b16 %v21
  %v132 = vunpack.c.h.b16 %v21
  %v133 = vunpack.c.l.b16 %v22
  %v134 = vunpack.c.l.b16 %v23
  %v135 = vunpack.c.h.b16 %v23
  %v136 = vunpack.c.l.b16 %v24
  %v137 = vunpack.c.l.b16 %v25
  %v138 = vunpack.c.h.b16 %v25
  %v139 = vunpack.c.l.b16 %v26
  %v140 = vunpack.c.l.b16 %v27
  %v141 = vunpack.c.h.b16 %v27
  %v142 = vunpack.c.l.b16 %v28
  %v143 = vunpack.c.l.b16 %v29
  %v144 = vunpack.c.h.b16 %v29
  %v145 = vunpack.c.l.b16 %v30
  %v146 = vunpack.c.l.b16 %v31
  %v147 = vunpack.c.h.b16 %v31
  %v148 = vunpack.c.l.b16 %v32
  %v149 = vunpack.c.l.b16 %v33
  %v150 = vunpack.c.h.b16 %v33
  %v151 = vunpack.c.l.b16 %v34
  %v152 = vunpack.c.l.b16 %v35
  %v153 = vunpack.c.h.b16 %v35
  %v154 = vunpack.c.l.b16 %v36
  %v155 = vunpack.c.l.b16 %v37
  %v156 = vunpack.c.h.b16 %v37
  %v157 = vunpack.c.l.b16 %v38
  %v158 = vunpack.c.l.b16 %v39
  %v159 = vunpack.c.h.b16 %v39
  %v160 = vunpack.c.l.b16 %v40
  %v161 = vunpack.c.l.b16 %v41
  %v162 = vunpack.c.h.b16 %v41
  %v163 = vunpack.c.l.b16 %v42
  %v164 = vunpack.c.l.b16 %v43
  %v165 = vunpack.c.h.b16 %v43
  %v166 = vunpack.c.l.b16 %v44
  %v167 = vunpack.c.l.b16 %v45
  %v168 = vunpack.c.h.b16 %v45
  %v169 = vunpack.c.l.b16 %v46
  %v170 = vpack.c.b16 %v125, %v122
  %v171 = vpack.c.b16 %v126, %v123
  %v172 = vpack.c.b16 %v127, %v124
  %v173 = vpack.c.b16 %v131, %v128
  %v174 = vpack.c.b16 %v132, %v129
  %v175 = vpack.c.b16 %v133, %v130
  %v176 = vpack.c.b16 %v137, %v134
  %v177 = vpack.c.b16 %v138, %v135
  %v178 = vpack.c.b16 %v139, %v136
  %v179 = vpack.c.b16 %v143, %v140
  %v180 = vpack.c.b16 %v144, %v141
  %v181 = vpack.c.b16 %v145, %v142
  %v182 = vpack.c.b16 %v149, %v146
  %v183 = vpack.c.b16 %v150, %v147
  %v184 = vpack.c.b16 %v151, %v148
  %v185 = vpack.c.b16 %v155, %v152
  %v186 = vpack.c.b16 %v156, %v153
  %v187 = vpack.c.b16 %v157, %v154
  %v188 = vpack.c.b16 %v161, %v158
  %v189 = vpack.c.b16 %v162, %v159
  %v190 = vpack.c.b16 %v163, %v160
  %v191 = vpack.c.b16 %v167, %v164
  %v192 = vpack.c.b16 %v168, %v165
  %v193 = vpack.c.b16 %v169, %v166
  %v246 = vunpack.c.l.b16 %v47
  %v247 = vunpack.c.l.b16 %v48
  %v248 = vunpack.c.l.b16 %v49
  %v249 = vunpack.c.l.b16 %v50
  %v250 = vunpack.c.l.b16 %v51
  %v251 = vunpack.c.l.b16 %v52
  %v252 = vunpack.c.l.b16 %v53
  %v253 = vunpack.c.l.b16 %v54
  %v254 = vunpack.c.l.b16 %v55
  %v255 = vunpack.c.l.b16 %v56
  %v256 = vunpack.c.l.b16 %v57
  %v257 = vunpack.c.l.b16 %v58
  %v258 = vunpack.c.l.b16 %v59
  %v259 = vunpack.c.l.b16 %v60
  %v260 = vunpack.c.l.b16 %v61
  %v261 = vunpack.c.l.b16 %v62
  %v262 = vunpack.c.l.b16 %v63
  %v263 = vunpack.c.l.b16 %v64
  %v264 = vunpack.c.l.b16 %v65
  %v265 = vunpack.c.l.b16 %v66
  %v266 = vunpack.c.l.b16 %v67
  %v267 = vunpack.c.l.b16 %v68
  %v268 = vunpack.c.l.b16 %v69
  %v269 = vunpack.c.l.b16 %v70
  %v270 = vunpack.c.l.b16 %v71
  %v271 = vunpack.c.l.b16 %v72
  %v272 = vunpack.c.l.b16 %v73
  %v273 = vunpack.c.l.b16 %v74
  %v274 = vunpack.c.l.b16 %v75
  %v275 = vunpack.c.l.b16 %v76
  %v276 = vunpack.c.l.b16 %v77
  %v277 = vunpack.c.l.b16 %v78
  %v278 = vunpack.c.l.b16 %v79
  %v279 = vunpack.c.l.b16 %v80
  %v280 = vunpack.c.l.b16 %v81
  %v281 = vunpack.c.l.b16 %v82
  %v282 = vpack.c.b16 %v247, %v246
  %v283 = vpack.c.b16 %v249, %v248
  %v284 = vpack.c.b16 %v251, %v250
  %v285 = vpack.c.b16 %v253, %v252
  %v286 = vpack.c.b16 %v255, %v254
  %v287 = vpack.c.b16 %v257, %v256
  %v288 = vpack.c.b16 %v259, %v258
  %v289 = vpack.c.b16 %v261, %v260
  %v290 = vpack.c.b16 %v263, %v262
  %v291 = vpack.c.b16 %v265, %v264
  %v292 = vpack.c.b16 %v267, %v266
  %v293 = vpack.c.b16 %v269, %v268
  %v294 = vpack.c.b16 %v271, %v270
  %v295 = vpack.c.b16 %v273, %v272
  %v296 = vpack.c.b16 %v275, %v274
  %v297 = vpack.c.b16 %v277, %v276
  %v298 = vpack.c.b16 %v279, %v278
  %v299 = vpack.c.b16 %v281, %v280
  %vm318 = vcmask 261120
  %v320 = vsel %vm318, %v172, 0
  %v323 = vsel %vm318, %v175, 0
  %v326 = vsel %vm318, %v178, 0
  %v329 = vsel %vm318, %v181, 0
  %v332 = vsel %vm318, %v184, 0
  %v335 = vsel %vm318, %v187, 0
  %v338 = vsel %vm318, %v190, 0
  %v341 = vsel %vm318, %v193, 0
  %343 = vmatprep.subr.bf16.mxu0 0
  %344 = vmatpush1.bf16.msra.mxu0 %v282
  %345 = vmatprep.subr.bf16.mxu0 0
  %346 = vmatpush1.bf16.msra.mxu0 %v283
  %347 = vmatprep.subr.bf16.mxu0 0
  %348 = vmatpush1.bf16.msra.mxu0 %v284
  %349 = vmatprep.subr.bf16.mxu0 0
  %350 = vmatpush1.bf16.msra.mxu0 %v285
  %351 = vmatprep.subr.bf16.mxu0 0
  %352 = vmatpush1.bf16.msra.mxu0 %v286
  %353 = vmatprep.subr.bf16.mxu0 0
  %354 = vmatpush1.bf16.msra.mxu0 %v287
  %355 = vmatprep.subr.bf16.mxu0 0
  %356 = vmatpush1.bf16.msra.mxu0 %v288
  %357 = vmatprep.subr.bf16.mxu0 0
  %358 = vmatpush1.bf16.msra.mxu0 %v289
  %359 = vmatprep.subr.bf16.mxu0 0
  %360 = vmatpush1.bf16.msra.mxu0 %v290
  %361 = vmatprep.subr.bf16.mxu0 0
  %362 = vmatpush1.bf16.msra.mxu0 %v291
  %363 = vmatprep.subr.bf16.mxu0 0
  %364 = vmatpush1.bf16.msra.mxu0 %v292
  %365 = vmatprep.subr.bf16.mxu0 0
  %366 = vmatpush1.bf16.msra.mxu0 %v293
  %367 = vmatprep.subr.bf16.mxu0 0
  %368 = vmatpush1.bf16.msra.mxu0 %v294
  %369 = vmatprep.subr.bf16.mxu0 0
  %370 = vmatpush1.bf16.msra.mxu0 %v295
  %371 = vmatprep.subr.bf16.mxu0 0
  %372 = vmatpush1.bf16.msra.mxu0 %v296
  %373 = vmatprep.subr.bf16.mxu0 0
  %374 = vmatpush1.bf16.msra.mxu0 %v297
  %375 = vmatprep.mubr.bf16.mxu0 %v171
  %376 = vmatmul.mubr.bf16.gmra.mrb[0].mxu0 %v170
  %v377 = vpop.f32.mrb[0].mxu0
  %v378 = vadd.f32 %v88, %v377
  %v379 = vpop.f32.mrb[0].mxu0
  %v380 = vpop.f32.mrb[0].mxu0
  %v381 = vadd.f32 %v88, %v380
  %v382 = vpop.f32.mrb[0].mxu0
  %383 = vmatprep.mubr.bf16.mxu0 %v174
  %384 = vmatmul.mubr.bf16.gmra.mrb[0].mxu0 %v173
  %v385 = vpop.f32.mrb[0].mxu0
  %v386 = vadd.f32 %v88, %v385
  %v387 = vpop.f32.mrb[0].mxu0
  %v388 = vpop.f32.mrb[0].mxu0
  %v389 = vadd.f32 %v88, %v388
  %v390 = vpop.f32.mrb[0].mxu0
  %391 = vmatprep.mubr.bf16.mxu0 %v177
  %392 = vmatmul.mubr.bf16.gmra.mrb[0].mxu0 %v176
  %v393 = vpop.f32.mrb[0].mxu0
  %v394 = vadd.f32 %v88, %v393
  %v395 = vpop.f32.mrb[0].mxu0
  %v396 = vpop.f32.mrb[0].mxu0
  %v397 = vadd.f32 %v88, %v396
  %v398 = vpop.f32.mrb[0].mxu0
  %399 = vmatprep.mubr.bf16.mxu0 %v180
  %400 = vmatmul.mubr.bf16.gmra.mrb[0].mxu0 %v179
  %v401 = vpop.f32.mrb[0].mxu0
  %v402 = vadd.f32 %v88, %v401
  %v403 = vpop.f32.mrb[0].mxu0
  %v404 = vpop.f32.mrb[0].mxu0
  %v405 = vadd.f32 %v88, %v404
  %v406 = vpop.f32.mrb[0].mxu0
  %407 = vmatprep.mubr.bf16.mxu0 %v183
  %408 = vmatmul.mubr.bf16.gmra.mrb[0].mxu0 %v182
  %v409 = vpop.f32.mrb[0].mxu0
  %v410 = vadd.f32 %v88, %v409
  %v411 = vpop.f32.mrb[0].mxu0
  %v412 = vpop.f32.mrb[0].mxu0
  %v413 = vadd.f32 %v88, %v412
  %v414 = vpop.f32.mrb[0].mxu0
  %415 = vmatprep.mubr.bf16.mxu0 %v186
  %416 = vmatmul.mubr.bf16.gmra.mrb[0].mxu0 %v185
  %v417 = vpop.f32.mrb[0].mxu0
  %v418 = vadd.f32 %v88, %v417
  %v419 = vpop.f32.mrb[0].mxu0
  %v420 = vpop.f32.mrb[0].mxu0
  %v421 = vadd.f32 %v88, %v420
  %v422 = vpop.f32.mrb[0].mxu0
  %423 = vmatprep.mubr.bf16.mxu0 %v189
  %424 = vmatmul.mubr.bf16.gmra.mrb[0].mxu0 %v188
  %v425 = vpop.f32.mrb[0].mxu0
  %v426 = vadd.f32 %v88, %v425
  %v427 = vpop.f32.mrb[0].mxu0
  %v428 = vpop.f32.mrb[0].mxu0
  %v429 = vadd.f32 %v88, %v428
  %v430 = vpop.f32.mrb[0].mxu0
  %431 = vmatprep.mubr.bf16.mxu0 %v192
  %432 = vmatmul.mubr.bf16.gmra.mrb[0].mxu0 %v191
  %v433 = vpop.f32.mrb[0].mxu0
  %v434 = vadd.f32 %v88, %v433
  %v435 = vpop.f32.mrb[0].mxu0
  %v436 = vpop.f32.mrb[0].mxu0
  %v437 = vadd.f32 %v88, %v436
  %v438 = vpop.f32.mrb[0].mxu0
  %439 = vdwg.mxu0
  %440 = vmatprep.subr.bf16.mxu0 0
  %441 = vmatpush1.bf16.msra.mxu0 %v298
  %442 = vmatprep.subr.bf16.mxu0 0
  %443 = vmatpush1.bf16.msra.mxu0 %v299
  %444 = vmatprep.subr.bf16.mxu0 0
  %445 = vmatpush1.bf16.msra.mxu0 0
  %446 = vmatprep.subr.bf16.mxu0 0
  %447 = vmatpush1.bf16.msra.mxu0 0
  %448 = vmatprep.subr.bf16.mxu0 0
  %449 = vmatpush1.bf16.msra.mxu0 0
  %450 = vmatprep.subr.bf16.mxu0 0
  %451 = vmatpush1.bf16.msra.mxu0 0
  %452 = vmatprep.subr.bf16.mxu0 0
  %453 = vmatpush1.bf16.msra.mxu0 0
  %454 = vmatprep.subr.bf16.mxu0 0
  %455 = vmatpush1.bf16.msra.mxu0 0
  %456 = vmatprep.subr.bf16.mxu0 0
  %457 = vmatpush1.bf16.msra.mxu0 0
  %458 = vmatprep.subr.bf16.mxu0 0
  %459 = vmatpush1.bf16.msra.mxu0 0
  %460 = vmatprep.subr.bf16.mxu0 0
  %461 = vmatpush1.bf16.msra.mxu0 0
  %462 = vmatprep.subr.bf16.mxu0 0
  %463 = vmatpush1.bf16.msra.mxu0 0
  %464 = vmatprep.subr.bf16.mxu0 0
  %465 = vmatpush1.bf16.msra.mxu0 0
  %466 = vmatprep.subr.bf16.mxu0 0
  %467 = vmatpush1.bf16.msra.mxu0 0
  %468 = vmatprep.subr.bf16.mxu0 0
  %469 = vmatpush1.bf16.msra.mxu0 0
  %470 = vmatprep.subr.bf16.mxu0 0
  %471 = vmatpush1.bf16.msra.mxu0 0
  %472 = vmatprep.mubr.bf16.mxu0 0
  %473 = vmatmul.mubr.bf16.gmra.mrb[0].mxu0 %v320
  %v474 = vpop.f32.mrb[0].mxu0
  %v475 = vadd.f32 %v378, %v474
  %v476 = vpop.f32.mrb[0].mxu0
  %v477 = vpop.f32.mrb[0].mxu0
  %v478 = vadd.f32 %v381, %v477
  %v479 = vpop.f32.mrb[0].mxu0
  %480 = vmatprep.mubr.bf16.mxu0 0
  %481 = vmatmul.mubr.bf16.gmra.mrb[0].mxu0 %v323
  %v482 = vpop.f32.mrb[0].mxu0
  %v483 = vadd.f32 %v386, %v482
  %v484 = vpop.f32.mrb[0].mxu0
  %v485 = vpop.f32.mrb[0].mxu0
  %v486 = vadd.f32 %v389, %v485
  %v487 = vpop.f32.mrb[0].mxu0
  %488 = vmatprep.mubr.bf16.mxu0 0
  %489 = vmatmul.mubr.bf16.gmra.mrb[0].mxu0 %v326
  %v490 = vpop.f32.mrb[0].mxu0
  %v491 = vadd.f32 %v394, %v490
  %v492 = vpop.f32.mrb[0].mxu0
  %v493 = vpop.f32.mrb[0].mxu0
  %v494 = vadd.f32 %v397, %v493
  %v495 = vpop.f32.mrb[0].mxu0
  %496 = vmatprep.mubr.bf16.mxu0 0
  %497 = vmatmul.mubr.bf16.gmra.mrb[0].mxu0 %v329
  %v498 = vpop.f32.mrb[0].mxu0
  %v499 = vadd.f32 %v402, %v498
  %v500 = vpop.f32.mrb[0].mxu0
  %v501 = vpop.f32.mrb[0].mxu0
  %v502 = vadd.f32 %v405, %v501
  %v503 = vpop.f32.mrb[0].mxu0
  %504 = vmatprep.mubr.bf16.mxu0 0
  %505 = vmatmul.mubr.bf16.gmra.mrb[0].mxu0 %v332
  %v506 = vpop.f32.mrb[0].mxu0
  %v507 = vadd.f32 %v410, %v506
  %v508 = vpop.f32.mrb[0].mxu0
  %v509 = vpop.f32.mrb[0].mxu0
  %v510 = vadd.f32 %v413, %v509
  %v511 = vpop.f32.mrb[0].mxu0
  %512 = vmatprep.mubr.bf16.mxu0 0
  %513 = vmatmul.mubr.bf16.gmra.mrb[0].mxu0 %v335
  %v514 = vpop.f32.mrb[0].mxu0
  %v515 = vadd.f32 %v418, %v514
  %v516 = vpop.f32.mrb[0].mxu0
  %v517 = vpop.f32.mrb[0].mxu0
  %v518 = vadd.f32 %v421, %v517
  %v519 = vpop.f32.mrb[0].mxu0
  %520 = vmatprep.mubr.bf16.mxu0 0
  %521 = vmatmul.mubr.bf16.gmra.mrb[0].mxu0 %v338
  %v522 = vpop.f32.mrb[0].mxu0
  %v523 = vadd.f32 %v426, %v522
  %v524 = vpop.f32.mrb[0].mxu0
  %v525 = vpop.f32.mrb[0].mxu0
  %v526 = vadd.f32 %v429, %v525
  %v527 = vpop.f32.mrb[0].mxu0
  %528 = vmatprep.mubr.bf16.mxu0 0
  %529 = vmatmul.mubr.bf16.gmra.mrb[0].mxu0 %v341
  %v530 = vpop.f32.mrb[0].mxu0
  %v531 = vadd.f32 %v434, %v530
  %v532 = vpop.f32.mrb[0].mxu0
  %v533 = vpop.f32.mrb[0].mxu0
  %v534 = vadd.f32 %v437, %v533
  %v535 = vpop.f32.mrb[0].mxu0
  %536 = vdwg.mxu0
  %v537 = vmax.f32 %v475, 0.0
  %v538 = vmax.f32 %v478, 0.0
  %v539 = vmax.f32 %v483, 0.0
  %v540 = vmax.f32 %v486, 0.0
  %v541 = vmax.f32 %v491, 0.0
  %v542 = vmax.f32 %v494, 0.0
  %v543 = vmax.f32 %v499, 0.0
  %v544 = vmax.f32 %v502, 0.0
  %v545 = vmax.f32 %v507, 0.0
  %v546 = vmax.f32 %v510, 0.0
  %v547 = vmax.f32 %v515, 0.0
  %v548 = vmax.f32 %v518, 0.0
  %v549 = vmax.f32 %v523, 0.0
  %v550 = vmax.f32 %v526, 0.0
  %v551 = vmax.f32 %v531, 0.0
  %v552 = vmax.f32 %v534, 0.0
  %553 = vst [vmem:[%s3] sm:$0xff] %v537
  %554 = vst [vmem:[%s3 + $0x8] sm:$0xff] %v538
  %555 = vst [vmem:[%s3 + $0x10] sm:$0xff] %v539
  %556 = vst [vmem:[%s3 + $0x18] sm:$0xff] %v540
  %557 = vst [vmem:[%s3 + $0x20] sm:$0xff] %v541
  %558 = vst [vmem:[%s3 + $0x28] sm:$0xff] %v542
  %559 = vst [vmem:[%s3 + $0x30] sm:$0xff] %v543
  %560 = vst [vmem:[%s3 + $0x38] sm:$0xff] %v544
  %561 = vst [vmem:[%s3 + $0x40] sm:$0xff] %v545
  %562 = vst [vmem:[%s3 + $0x48] sm:$0xff] %v546
  %563 = vst [vmem:[%s3 + $0x50] sm:$0xff] %v547
  %564 = vst [vmem:[%s3 + $0x58] sm:$0xff] %v548
  %565 = vst [vmem:[%s3 + $0x60] sm:$0xff] %v549
  %566 = vst [vmem:[%s3 + $0x68] sm:$0xff] %v550
  %567 = vst [vmem:[%s3 + $0x70] sm:$0xff] %v551
  %568 = vst [vmem:[%s3 + $0x78] sm:$0xff] %v552
  // Predicated region
  $region14: #{resnet18_dense_forward.31} parent=0 // pred_check
    _
  $region15: #{resnet18_dense_forward.31} parent=0 // pred_check_branch
    %570 = sbr.rel (0) target = $region17
  $region16: #{resnet18_dense_forward.31} parent=0 // pred_region
    _
  $region17: #{resnet18_dense_forward.31} parent=0 // pred_fallthru
    _
  // Predicated region
  $region18: #{resnet18_dense_forward.31} parent=0 // pred_check
    _
  $region19: #{resnet18_dense_forward.31} parent=0 // pred_check_branch
    %572 = sbr.rel (0) target = $region21
  $region20: #{resnet18_dense_forward.31} parent=0 // pred_region
    _
  $region21: #{resnet18_dense_forward.31} parent=0 // pred_fallthru
    _

// kernel: resnet18_dense_forward.30
$region0: #{resnet18_dense_forward.30}
  #allocation0 [shape = 'u32[]', space=smem, size = 0x4, offset = 0x4, fixed_abs, tag = 'smem constant byte address 0x4 - core index']
  #allocation1 [shape = 'u32[144,128]{1,0:T(1,128)}', space=vmem, size = 0x12000, scoped, tag = 'internal scratch']
  %s0 = inlined_call_operand.vmem [shape: bf16[128,288], index: 0, kind: input, shape index: {}]
  %s1 = inlined_call_operand.vmem [shape: bf16[288,128], index: 1, kind: input, shape index: {}]
  %s2 = inlined_call_operand.vmem [shape: f32[1,128], index: 2, kind: input, shape index: {}]
  %s3 = inlined_call_operand.vmem [shape: f32[128,128], index: 3, kind: input, shape index: {}]
  %s4 = inlined_call_operand.vmem [shape: f32[128,128], index: 4, kind: output, shape index: {}]
  %s5 = sld [smem:[#allocation0]]
  $region26: #{resnet18_dense_forward.30} parent=0
    _
  %s7 = ssub.s32 1, %s5
  %s8 = scalar_select 0, %s7, %s5
  // Predicated region
  $region2: #{resnet18_dense_forward.30} parent=0 // pred_check
    _
  $region3: #{resnet18_dense_forward.30} parent=0 // pred_check_branch
    %10 = sbr.rel (0) target = $region5
  $region4: #{resnet18_dense_forward.30} parent=0 // pred_region
    _
  $region5: #{resnet18_dense_forward.30} parent=0 // pred_fallthru
    _
  // Predicated region
  $region6: #{resnet18_dense_forward.30} parent=0 // pred_check
    _
  $region7: #{resnet18_dense_forward.30} parent=0 // pred_check_branch
    %12 = sbr.rel (0) target = $region9
  $region8: #{resnet18_dense_forward.30} parent=0 // pred_region
    _
  $region9: #{resnet18_dense_forward.30} parent=0 // pred_fallthru
    _
  // Predicated region
  $region10: #{resnet18_dense_forward.30} parent=0 // pred_check
    _
  $region11: #{resnet18_dense_forward.30} parent=0 // pred_check_branch
    %14 = sbr.rel (0) target = $region13
  $region12: #{resnet18_dense_forward.30} parent=0 // pred_region
    _
  $region13: #{resnet18_dense_forward.30} parent=0 // pred_fallthru
    _
  // Predicated region
  $region14: #{resnet18_dense_forward.30} parent=0 // pred_check
    _
  $region15: #{resnet18_dense_forward.30} parent=0 // pred_check_branch
    %16 = sbr.rel (0) target = $region17
  $region16: #{resnet18_dense_forward.30} parent=0 // pred_region
    _
  $region17: #{resnet18_dense_forward.30} parent=0 // pred_fallthru
    _
  %v18 = vld [vmem:[%s0] sm:$0xff]
  %v19 = vld [vmem:[%s0 + $0x8] sm:$0xf]
  %v20 = vld [vmem:[%s0 + $0xc] sm:$0xff]
  %v21 = vld [vmem:[%s0 + $0x14] sm:$0xf]
  %v22 = vld [vmem:[%s0 + $0x18] sm:$0xff]
  %v23 = vld [vmem:[%s0 + $0x20] sm:$0xf]
  %v24 = vld [vmem:[%s0 + $0x24] sm:$0xff]
  %v25 = vld [vmem:[%s0 + $0x2c] sm:$0xf]
  %v26 = vld [vmem:[%s0 + $0x30] sm:$0xff]
  %v27 = vld [vmem:[%s0 + $0x38] sm:$0xf]
  %v28 = vld [vmem:[%s0 + $0x3c] sm:$0xff]
  %v29 = vld [vmem:[%s0 + $0x44] sm:$0xf]
  %v30 = vld [vmem:[%s0 + $0x48] sm:$0xff]
  %v31 = vld [vmem:[%s0 + $0x50] sm:$0xf]
  %v32 = vld [vmem:[%s0 + $0x54] sm:$0xff]
  %v33 = vld [vmem:[%s0 + $0x5c] sm:$0xf]
  %v34 = vld [vmem:[%s0 + $0x60] sm:$0xff]
  %v35 = vld [vmem:[%s0 + $0x68] sm:$0xf]
  %v36 = vld [vmem:[%s0 + $0x6c] sm:$0xff]
  %v37 = vld [vmem:[%s0 + $0x74] sm:$0xf]
  %v38 = vld [vmem:[%s0 + $0x78] sm:$0xff]
  %v39 = vld [vmem:[%s0 + $0x80] sm:$0xf]
  %v40 = vld [vmem:[%s0 + $0x84] sm:$0xff]
  %v41 = vld [vmem:[%s0 + $0x8c] sm:$0xf]
  %v42 = vld [vmem:[%s0 + $0x90] sm:$0xff]
  %v43 = vld [vmem:[%s0 + $0x98] sm:$0xf]
  %v44 = vld [vmem:[%s0 + $0x9c] sm:$0xff]
  %v45 = vld [vmem:[%s0 + $0xa4] sm:$0xf]
  %v46 = vld [vmem:[%s0 + $0xa8] sm:$0xff]
  %v47 = vld [vmem:[%s0 + $0xb0] sm:$0xf]
  %v48 = vld [vmem:[%s0 + $0xb4] sm:$0xff]
  %v49 = vld [vmem:[%s0 + $0xbc] sm:$0xf]
  %v50 = vld [vmem:[%s1] sm:$0xf]
  %v51 = vld [vmem:[%s1 + $0x4] sm:$0xf]
  %v52 = vld [vmem:[%s1 + $0x8] sm:$0xf]
  %v53 = vld [vmem:[%s1 + $0xc] sm:$0xf]
  %v54 = vld [vmem:[%s1 + $0x10] sm:$0xf]
  %v55 = vld [vmem:[%s1 + $0x14] sm:$0xf]
  %v56 = vld [vmem:[%s1 + $0x18] sm:$0xf]
  %v57 = vld [vmem:[%s1 + $0x1c] sm:$0xf]
  %v58 = vld [vmem:[%s1 + $0x20] sm:$0xf]
  %v59 = vld [vmem:[%s1 + $0x24] sm:$0xf]
  %v60 = vld [vmem:[%s1 + $0x28] sm:$0xf]
  %v61 = vld [vmem:[%s1 + $0x2c] sm:$0xf]
  %v62 = vld [vmem:[%s1 + $0x30] sm:$0xf]
  %v63 = vld [vmem:[%s1 + $0x34] sm:$0xf]
  %v64 = vld [vmem:[%s1 + $0x38] sm:$0xf]
  %v65 = vld [vmem:[%s1 + $0x3c] sm:$0xf]
  %v66 = vld [vmem:[%s1 + $0x40] sm:$0xf]
  %v67 = vld [vmem:[%s1 + $0x44] sm:$0xf]
  %v68 = vld [vmem:[%s1 + $0x48] sm:$0xf]
  %v69 = vld [vmem:[%s1 + $0x4c] sm:$0xf]
  %v70 = vld [vmem:[%s1 + $0x50] sm:$0xf]
  %v71 = vld [vmem:[%s1 + $0x54] sm:$0xf]
  %v72 = vld [vmem:[%s1 + $0x58] sm:$0xf]
  %v73 = vld [vmem:[%s1 + $0x5c] sm:$0xf]
  %v74 = vld [vmem:[%s1 + $0x60] sm:$0xf]
  %v75 = vld [vmem:[%s1 + $0x64] sm:$0xf]
  %v76 = vld [vmem:[%s1 + $0x68] sm:$0xf]
  %v77 = vld [vmem:[%s1 + $0x6c] sm:$0xf]
  %v78 = vld [vmem:[%s1 + $0x70] sm:$0xf]
  %v79 = vld [vmem:[%s1 + $0x74] sm:$0xf]
  %v80 = vld [vmem:[%s1 + $0x78] sm:$0xf]
  %v81 = vld [vmem:[%s1 + $0x7c] sm:$0xf]
  %v82 = vld [vmem:[%s1 + $0x80] sm:$0xf]
  %v83 = vld [vmem:[%s1 + $0x84] sm:$0xf]
  %v84 = vld [vmem:[%s1 + $0x88] sm:$0xf]
  %v85 = vld [vmem:[%s1 + $0x8c] sm:$0xf]
  %v86 = vld [vmem:[%s2] sm:$0x1]
  %v88 = vlaneseq
  %v89 = vshrl.u32 %v88, 7
  %v90 = vsub.s32 0, %v89
  %v91 = vrot.slane %v86, %v90
  %v125 = vunpack.c.l.b16 %v18
  %v126 = vunpack.c.h.b16 %v18
  %v127 = vunpack.c.l.b16 %v19
  %v128 = vunpack.c.l.b16 %v20
  %v129 = vunpack.c.h.b16 %v20
  %v130 = vunpack.c.l.b16 %v21
  %v131 = vunpack.c.l.b16 %v22
  %v132 = vunpack.c.h.b16 %v22
  %v133 = vunpack.c.l.b16 %v23
  %v134 = vunpack.c.l.b16 %v24
  %v135 = vunpack.c.h.b16 %v24
  %v136 = vunpack.c.l.b16 %v25
  %v137 = vunpack.c.l.b16 %v26
  %v138 = vunpack.c.h.b16 %v26
  %v139 = vunpack.c.l.b16 %v27
  %v140 = vunpack.c.l.b16 %v28
  %v141 = vunpack.c.h.b16 %v28
  %v142 = vunpack.c.l.b16 %v29
  %v143 = vunpack.c.l.b16 %v30
  %v144 = vunpack.c.h.b16 %v30
  %v145 = vunpack.c.l.b16 %v31
  %v146 = vunpack.c.l.b16 %v32
  %v147 = vunpack.c.h.b16 %v32
  %v148 = vunpack.c.l.b16 %v33
  %v149 = vunpack.c.l.b16 %v34
  %v150 = vunpack.c.h.b16 %v34
  %v151 = vunpack.c.l.b16 %v35
  %v152 = vunpack.c.l.b16 %v36
  %v153 = vunpack.c.h.b16 %v36
  %v154 = vunpack.c.l.b16 %v37
  %v155 = vunpack.c.l.b16 %v38
  %v156 = vunpack.c.h.b16 %v38
  %v157 = vunpack.c.l.b16 %v39
  %v158 = vunpack.c.l.b16 %v40
  %v159 = vunpack.c.h.b16 %v40
  %v160 = vunpack.c.l.b16 %v41
  %v161 = vunpack.c.l.b16 %v42
  %v162 = vunpack.c.h.b16 %v42
  %v163 = vunpack.c.l.b16 %v43
  %v164 = vunpack.c.l.b16 %v44
  %v165 = vunpack.c.h.b16 %v44
  %v166 = vunpack.c.l.b16 %v45
  %v167 = vunpack.c.l.b16 %v46
  %v168 = vunpack.c.h.b16 %v46
  %v169 = vunpack.c.l.b16 %v47
  %v170 = vunpack.c.l.b16 %v48
  %v171 = vunpack.c.h.b16 %v48
  %v172 = vunpack.c.l.b16 %v49
  %v173 = vpack.c.b16 %v128, %v125
  %v174 = vpack.c.b16 %v129, %v126
  %v175 = vpack.c.b16 %v130, %v127
  %v176 = vpack.c.b16 %v134, %v131
  %v177 = vpack.c.b16 %v135, %v132
  %v178 = vpack.c.b16 %v136, %v133
  %v179 = vpack.c.b16 %v140, %v137
  %v180 = vpack.c.b16 %v141, %v138
  %v181 = vpack.c.b16 %v142, %v139
  %v182 = vpack.c.b16 %v146, %v143
  %v183 = vpack.c.b16 %v147, %v144
  %v184 = vpack.c.b16 %v148, %v145
  %v185 = vpack.c.b16 %v152, %v149
  %v186 = vpack.c.b16 %v153, %v150
  %v187 = vpack.c.b16 %v154, %v151
  %v188 = vpack.c.b16 %v158, %v155
  %v189 = vpack.c.b16 %v159, %v156
  %v190 = vpack.c.b16 %v160, %v157
  %v191 = vpack.c.b16 %v164, %v161
  %v192 = vpack.c.b16 %v165, %v162
  %v193 = vpack.c.b16 %v166, %v163
  %v194 = vpack.c.b16 %v170, %v167
  %v195 = vpack.c.b16 %v171, %v168
  %v196 = vpack.c.b16 %v172, %v169
  %v249 = vunpack.c.l.b16 %v50
  %v250 = vunpack.c.l.b16 %v51
  %v251 = vunpack.c.l.b16 %v52
  %v252 = vunpack.c.l.b16 %v53
  %v253 = vunpack.c.l.b16 %v54
  %v254 = vunpack.c.l.b16 %v55
  %v255 = vunpack.c.l.b16 %v56
  %v256 = vunpack.c.l.b16 %v57
  %v257 = vunpack.c.l.b16 %v58
  %v258 = vunpack.c.l.b16 %v59
  %v259 = vunpack.c.l.b16 %v60
  %v260 = vunpack.c.l.b16 %v61
  %v261 = vunpack.c.l.b16 %v62
  %v262 = vunpack.c.l.b16 %v63
  %v263 = vunpack.c.l.b16 %v64
  %v264 = vunpack.c.l.b16 %v65
  %v265 = vunpack.c.l.b16 %v66
  %v266 = vunpack.c.l.b16 %v67
  %v267 = vunpack.c.l.b16 %v68
  %v268 = vunpack.c.l.b16 %v69
  %v269 = vunpack.c.l.b16 %v70
  %v270 = vunpack.c.l.b16 %v71
  %v271 = vunpack.c.l.b16 %v72
  %v272 = vunpack.c.l.b16 %v73
  %v273 = vunpack.c.l.b16 %v74
  %v274 = vunpack.c.l.b16 %v75
  %v275 = vunpack.c.l.b16 %v76
  %v276 = vunpack.c.l.b16 %v77
  %v277 = vunpack.c.l.b16 %v78
  %v278 = vunpack.c.l.b16 %v79
  %v279 = vunpack.c.l.b16 %v80
  %v280 = vunpack.c.l.b16 %v81
  %v281 = vunpack.c.l.b16 %v82
  %v282 = vunpack.c.l.b16 %v83
  %v283 = vunpack.c.l.b16 %v84
  %v284 = vunpack.c.l.b16 %v85
  %v285 = vpack.c.b16 %v250, %v249
  %v286 = vpack.c.b16 %v252, %v251
  %v287 = vpack.c.b16 %v254, %v253
  %v288 = vpack.c.b16 %v256, %v255
  %v289 = vpack.c.b16 %v258, %v257
  %v290 = vpack.c.b16 %v260, %v259
  %v291 = vpack.c.b16 %v262, %v261
  %v292 = vpack.c.b16 %v264, %v263
  %v293 = vpack.c.b16 %v266, %v265
  %v294 = vpack.c.b16 %v268, %v267
  %v295 = vpack.c.b16 %v270, %v269
  %v296 = vpack.c.b16 %v272, %v271
  %v297 = vpack.c.b16 %v274, %v273
  %v298 = vpack.c.b16 %v276, %v275
  %v299 = vpack.c.b16 %v278, %v277
  %v300 = vpack.c.b16 %v280, %v279
  %v301 = vpack.c.b16 %v282, %v281
  %v302 = vpack.c.b16 %v284, %v283
  %vm321 = vcmask 261120
  %v323 = vsel %vm321, %v175, 0
  %v326 = vsel %vm321, %v178, 0
  %v329 = vsel %vm321, %v181, 0
  %v332 = vsel %vm321, %v184, 0
  %v335 = vsel %vm321, %v187, 0
  %v338 = vsel %vm321, %v190, 0
  %v341 = vsel %vm321, %v193, 0
  %v344 = vsel %vm321, %v196, 0
  %346 = vmatprep.subr.bf16.mxu0 0
  %347 = vmatpush1.bf16.msra.mxu0 %v285
  %348 = vmatprep.subr.bf16.mxu0 0
  %349 = vmatpush1.bf16.msra.mxu0 %v286
  %350 = vmatprep.subr.bf16.mxu0 0
  %351 = vmatpush1.bf16.msra.mxu0 %v287
  %352 = vmatprep.subr.bf16.mxu0 0
  %353 = vmatpush1.bf16.msra.mxu0 %v288
  %354 = vmatprep.subr.bf16.mxu0 0
  %355 = vmatpush1.bf16.msra.mxu0 %v289
  %356 = vmatprep.subr.bf16.mxu0 0
  %357 = vmatpush1.bf16.msra.mxu0 %v290
  %358 = vmatprep.subr.bf16.mxu0 0
  %359 = vmatpush1.bf16.msra.mxu0 %v291
  %360 = vmatprep.subr.bf16.mxu0 0
  %361 = vmatpush1.bf16.msra.mxu0 %v292
  %362 = vmatprep.subr.bf16.mxu0 0
  %363 = vmatpush1.bf16.msra.mxu0 %v293
  %364 = vmatprep.subr.bf16.mxu0 0
  %365 = vmatpush1.bf16.msra.mxu0 %v294
  %366 = vmatprep.subr.bf16.mxu0 0
  %367 = vmatpush1.bf16.msra.mxu0 %v295
  %368 = vmatprep.subr.bf16.mxu0 0
  %369 = vmatpush1.bf16.msra.mxu0 %v296
  %370 = vmatprep.subr.bf16.mxu0 0
  %371 = vmatpush1.bf16.msra.mxu0 %v297
  %372 = vmatprep.subr.bf16.mxu0 0
  %373 = vmatpush1.bf16.msra.mxu0 %v298
  %374 = vmatprep.subr.bf16.mxu0 0
  %375 = vmatpush1.bf16.msra.mxu0 %v299
  %376 = vmatprep.subr.bf16.mxu0 0
  %377 = vmatpush1.bf16.msra.mxu0 %v300
  %378 = vmatprep.mubr.bf16.mxu0 %v174
  %379 = vmatmul.mubr.bf16.gmra.mrb[0].mxu0 %v173
  %v380 = vpop.f32.mrb[0].mxu0
  %v381 = vadd.f32 %v91, %v380
  %v382 = vpop.f32.mrb[0].mxu0
  %v383 = vpop.f32.mrb[0].mxu0
  %v384 = vadd.f32 %v91, %v383
  %v385 = vpop.f32.mrb[0].mxu0
  %386 = vmatprep.mubr.bf16.mxu0 %v177
  %387 = vmatmul.mubr.bf16.gmra.mrb[0].mxu0 %v176
  %v388 = vpop.f32.mrb[0].mxu0
  %v389 = vadd.f32 %v91, %v388
  %v390 = vpop.f32.mrb[0].mxu0
  %v391 = vpop.f32.mrb[0].mxu0
  %v392 = vadd.f32 %v91, %v391
  %v393 = vpop.f32.mrb[0].mxu0
  %394 = vmatprep.mubr.bf16.mxu0 %v180
  %395 = vmatmul.mubr.bf16.gmra.mrb[0].mxu0 %v179
  %v396 = vpop.f32.mrb[0].mxu0
  %v397 = vadd.f32 %v91, %v396
  %v398 = vpop.f32.mrb[0].mxu0
  %v399 = vpop.f32.mrb[0].mxu0
  %v400 = vadd.f32 %v91, %v399
  %v401 = vpop.f32.mrb[0].mxu0
  %402 = vmatprep.mubr.bf16.mxu0 %v183
  %403 = vmatmul.mubr.bf16.gmra.mrb[0].mxu0 %v182
  %v404 = vpop.f32.mrb[0].mxu0
  %v405 = vadd.f32 %v91, %v404
  %v406 = vpop.f32.mrb[0].mxu0
  %v407 = vpop.f32.mrb[0].mxu0
  %v408 = vadd.f32 %v91, %v407
  %v409 = vpop.f32.mrb[0].mxu0
  %410 = vmatprep.mubr.bf16.mxu0 %v186
  %411 = vmatmul.mubr.bf16.gmra.mrb[0].mxu0 %v185
  %v412 = vpop.f32.mrb[0].mxu0
  %v413 = vadd.f32 %v91, %v412
  %v414 = vpop.f32.mrb[0].mxu0
  %v415 = vpop.f32.mrb[0].mxu0
  %v416 = vadd.f32 %v91, %v415
  %v417 = vpop.f32.mrb[0].mxu0
  %418 = vmatprep.mubr.bf16.mxu0 %v189
  %419 = vmatmul.mubr.bf16.gmra.mrb[0].mxu0 %v188
  %v420 = vpop.f32.mrb[0].mxu0
  %v421 = vadd.f32 %v91, %v420
  %v422 = vpop.f32.mrb[0].mxu0
  %v423 = vpop.f32.mrb[0].mxu0
  %v424 = vadd.f32 %v91, %v423
  %v425 = vpop.f32.mrb[0].mxu0
  %426 = vmatprep.mubr.bf16.mxu0 %v192
  %427 = vmatmul.mubr.bf16.gmra.mrb[0].mxu0 %v191
  %v428 = vpop.f32.mrb[0].mxu0
  %v429 = vadd.f32 %v91, %v428
  %v430 = vpop.f32.mrb[0].mxu0
  %v431 = vpop.f32.mrb[0].mxu0
  %v432 = vadd.f32 %v91, %v431
  %v433 = vpop.f32.mrb[0].mxu0
  %434 = vmatprep.mubr.bf16.mxu0 %v195
  %435 = vmatmul.mubr.bf16.gmra.mrb[0].mxu0 %v194
  %v436 = vpop.f32.mrb[0].mxu0
  %v437 = vadd.f32 %v91, %v436
  %v438 = vpop.f32.mrb[0].mxu0
  %v439 = vpop.f32.mrb[0].mxu0
  %v440 = vadd.f32 %v91, %v439
  %v441 = vpop.f32.mrb[0].mxu0
  %442 = vdwg.mxu0
  %443 = vmatprep.subr.bf16.mxu0 0
  %444 = vmatpush1.bf16.msra.mxu0 %v301
  %445 = vmatprep.subr.bf16.mxu0 0
  %446 = vmatpush1.bf16.msra.mxu0 %v302
  %447 = vmatprep.subr.bf16.mxu0 0
  %448 = vmatpush1.bf16.msra.mxu0 0
  %449 = vmatprep.subr.bf16.mxu0 0
  %450 = vmatpush1.bf16.msra.mxu0 0
  %451 = vmatprep.subr.bf16.mxu0 0
  %452 = vmatpush1.bf16.msra.mxu0 0
  %453 = vmatprep.subr.bf16.mxu0 0
  %454 = vmatpush1.bf16.msra.mxu0 0
  %455 = vmatprep.subr.bf16.mxu0 0
  %456 = vmatpush1.bf16.msra.mxu0 0
  %457 = vmatprep.subr.bf16.mxu0 0
  %458 = vmatpush1.bf16.msra.mxu0 0
  %459 = vmatprep.subr.bf16.mxu0 0
  %460 = vmatpush1.bf16.msra.mxu0 0
  %461 = vmatprep.subr.bf16.mxu0 0
  %462 = vmatpush1.bf16.msra.mxu0 0
  %463 = vmatprep.subr.bf16.mxu0 0
  %464 = vmatpush1.bf16.msra.mxu0 0
  %465 = vmatprep.subr.bf16.mxu0 0
  %466 = vmatpush1.bf16.msra.mxu0 0
  %467 = vmatprep.subr.bf16.mxu0 0
  %468 = vmatpush1.bf16.msra.mxu0 0
  %469 = vmatprep.subr.bf16.mxu0 0
  %470 = vmatpush1.bf16.msra.mxu0 0
  %471 = vmatprep.subr.bf16.mxu0 0
  %472 = vmatpush1.bf16.msra.mxu0 0
  %473 = vmatprep.subr.bf16.mxu0 0
  %474 = vmatpush1.bf16.msra.mxu0 0
  %475 = vmatprep.mubr.bf16.mxu0 0
  %476 = vmatmul.mubr.bf16.gmra.mrb[0].mxu0 %v323
  %v477 = vpop.f32.mrb[0].mxu0
  %v478 = vadd.f32 %v381, %v477
  %v479 = vpop.f32.mrb[0].mxu0
  %v480 = vpop.f32.mrb[0].mxu0
  %v481 = vadd.f32 %v384, %v480
  %v482 = vpop.f32.mrb[0].mxu0
  %483 = vmatprep.mubr.bf16.mxu0 0
  %484 = vmatmul.mubr.bf16.gmra.mrb[0].mxu0 %v326
  %v485 = vpop.f32.mrb[0].mxu0
  %v486 = vadd.f32 %v389, %v485
  %v487 = vpop.f32.mrb[0].mxu0
  %v488 = vpop.f32.mrb[0].mxu0
  %v489 = vadd.f32 %v392, %v488
  %v490 = vpop.f32.mrb[0].mxu0
  %491 = vmatprep.mubr.bf16.mxu0 0
  %492 = vmatmul.mubr.bf16.gmra.mrb[0].mxu0 %v329
  %v493 = vpop.f32.mrb[0].mxu0
  %v494 = vadd.f32 %v397, %v493
  %v495 = vpop.f32.mrb[0].mxu0
  %v496 = vpop.f32.mrb[0].mxu0
  %v497 = vadd.f32 %v400, %v496
  %v498 = vpop.f32.mrb[0].mxu0
  %499 = vmatprep.mubr.bf16.mxu0 0
  %500 = vmatmul.mubr.bf16.gmra.mrb[0].mxu0 %v332
  %v501 = vpop.f32.mrb[0].mxu0
  %v502 = vadd.f32 %v405, %v501
  %v503 = vpop.f32.mrb[0].mxu0
  %v504 = vpop.f32.mrb[0].mxu0
  %v505 = vadd.f32 %v408, %v504
  %v506 = vpop.f32.mrb[0].mxu0
  %507 = vmatprep.mubr.bf16.mxu0 0
  %508 = vmatmul.mubr.bf16.gmra.mrb[0].mxu0 %v335
  %v509 = vpop.f32.mrb[0].mxu0
  %v510 = vadd.f32 %v413, %v509
  %v511 = vpop.f32.mrb[0].mxu0
  %v512 = vpop.f32.mrb[0].mxu0
  %v513 = vadd.f32 %v416, %v512
  %v514 = vpop.f32.mrb[0].mxu0
  %515 = vmatprep.mubr.bf16.mxu0 0
  %516 = vmatmul.mubr.bf16.gmra.mrb[0].mxu0 %v338
  %v517 = vpop.f32.mrb[0].mxu0
  %v518 = vadd.f32 %v421, %v517
  %v519 = vpop.f32.mrb[0].mxu0
  %v520 = vpop.f32.mrb[0].mxu0
  %v521 = vadd.f32 %v424, %v520
  %v522 = vpop.f32.mrb[0].mxu0
  %523 = vmatprep.mubr.bf16.mxu0 0
  %524 = vmatmul.mubr.bf16.gmra.mrb[0].mxu0 %v341
  %v525 = vpop.f32.mrb[0].mxu0
  %v526 = vadd.f32 %v429, %v525
  %v527 = vpop.f32.mrb[0].mxu0
  %v528 = vpop.f32.mrb[0].mxu0
  %v529 = vadd.f32 %v432, %v528
  %v530 = vpop.f32.mrb[0].mxu0
  %531 = vmatprep.mubr.bf16.mxu0 0
  %532 = vmatmul.mubr.bf16.gmra.mrb[0].mxu0 %v344
  %v533 = vpop.f32.mrb[0].mxu0
  %v534 = vadd.f32 %v437, %v533
  %v535 = vpop.f32.mrb[0].mxu0
  %v536 = vpop.f32.mrb[0].mxu0
  %v537 = vadd.f32 %v440, %v536
  %v538 = vpop.f32.mrb[0].mxu0
  %539 = vdwg.mxu0
  %v540 = vld [vmem:[%s3] sm:$0xff]
  %v541 = vld [vmem:[%s3 + $0x8] sm:$0xff]
  %v542 = vld [vmem:[%s3 + $0x10] sm:$0xff]
  %v543 = vld [vmem:[%s3 + $0x18] sm:$0xff]
  %v544 = vld [vmem:[%s3 + $0x20] sm:$0xff]
  %v545 = vld [vmem:[%s3 + $0x28] sm:$0xff]
  %v546 = vld [vmem:[%s3 + $0x30] sm:$0xff]
  %v547 = vld [vmem:[%s3 + $0x38] sm:$0xff]
  %v548 = vld [vmem:[%s3 + $0x40] sm:$0xff]
  %v549 = vld [vmem:[%s3 + $0x48] sm:$0xff]
  %v550 = vld [vmem:[%s3 + $0x50] sm:$0xff]
  %v551 = vld [vmem:[%s3 + $0x58] sm:$0xff]
  %v552 = vld [vmem:[%s3 + $0x60] sm:$0xff]
  %v553 = vld [vmem:[%s3 + $0x68] sm:$0xff]
  %v554 = vld [vmem:[%s3 + $0x70] sm:$0xff]
  %v555 = vld [vmem:[%s3 + $0x78] sm:$0xff]
  %v556 = vadd.f32 %v478, %v540
  %v557 = vadd.f32 %v481, %v541
  %v558 = vadd.f32 %v486, %v542
  %v559 = vadd.f32 %v489, %v543
  %v560 = vadd.f32 %v494, %v544
  %v561 = vadd.f32 %v497, %v545
  %v562 = vadd.f32 %v502, %v546
  %v563 = vadd.f32 %v505, %v547
  %v564 = vadd.f32 %v510, %v548
  %v565 = vadd.f32 %v513, %v549
  %v566 = vadd.f32 %v518, %v550
  %v567 = vadd.f32 %v521, %v551
  %v568 = vadd.f32 %v526, %v552
  %v569 = vadd.f32 %v529, %v553
  %v570 = vadd.f32 %v534, %v554
  %v571 = vadd.f32 %v537, %v555
  %v572 = vmax.f32 %v556, 0.0
  %v573 = vmax.f32 %v557, 0.0
  %v574 = vmax.f32 %v558, 0.0
  %v575 = vmax.f32 %v559, 0.0
  %v576 = vmax.f32 %v560, 0.0
  %v577 = vmax.f32 %v561, 0.0
  %v578 = vmax.f32 %v562, 0.0
  %v579 = vmax.f32 %v563, 0.0
  %v580 = vmax.f32 %v564, 0.0
  %v581 = vmax.f32 %v565, 0.0
  %v582 = vmax.f32 %v566, 0.0
  %v583 = vmax.f32 %v567, 0.0
  %v584 = vmax.f32 %v568, 0.0
  %v585 = vmax.f32 %v569, 0.0
  %v586 = vmax.f32 %v570, 0.0
  %v587 = vmax.f32 %v571, 0.0
  %588 = vst [vmem:[%s4] sm:$0xff] %v572
  %589 = vst [vmem:[%s4 + $0x8] sm:$0xff] %v573
  %590 = vst [vmem:[%s4 + $0x10] sm:$0xff] %v574
  %591 = vst [vmem:[%s4 + $0x18] sm:$0xff] %v575
  %592 = vst [vmem:[%s4 + $0x20] sm:$0xff] %v576
  %593 = vst [vmem:[%s4 + $0x28] sm:$0xff] %v577
  %594 = vst [vmem:[%s4 + $0x30] sm:$0xff] %v578
  %595 = vst [vmem:[%s4 + $0x38] sm:$0xff] %v579
  %596 = vst [vmem:[%s4 + $0x40] sm:$0xff] %v580
  %597 = vst [vmem:[%s4 + $0x48] sm:$0xff] %v581
  %598 = vst [vmem:[%s4 + $0x50] sm:$0xff] %v582
  %599 = vst [vmem:[%s4 + $0x58] sm:$0xff] %v583
  %600 = vst [vmem:[%s4 + $0x60] sm:$0xff] %v584
  %601 = vst [vmem:[%s4 + $0x68] sm:$0xff] %v585
  %602 = vst [vmem:[%s4 + $0x70] sm:$0xff] %v586
  %603 = vst [vmem:[%s4 + $0x78] sm:$0xff] %v587
  // Predicated region
  $region18: #{resnet18_dense_forward.30} parent=0 // pred_check
    _
  $region19: #{resnet18_dense_forward.30} parent=0 // pred_check_branch
    %605 = sbr.rel (0) target = $region21
  $region20: #{resnet18_dense_forward.30} parent=0 // pred_region
    _
  $region21: #{resnet18_dense_forward.30} parent=0 // pred_fallthru
    _
  // Predicated region
  $region22: #{resnet18_dense_forward.30} parent=0 // pred_check
    _
  $region23: #{resnet18_dense_forward.30} parent=0 // pred_check_branch
    %607 = sbr.rel (0) target = $region25
  $region24: #{resnet18_dense_forward.30} parent=0 // pred_region
    _
  $region25: #{resnet18_dense_forward.30} parent=0 // pred_fallthru
    _

// kernel: resnet18_dense_forward.34
$region0: #{resnet18_dense_forward.34}
  #allocation0 [shape = 'u32[]', space=smem, size = 0x4, offset = 0x4, fixed_abs, tag = 'smem constant byte address 0x4 - core index']
  #allocation1 [shape = 'u32[144,128]{1,0:T(1,128)}', space=vmem, size = 0x12000, scoped, tag = 'internal scratch']
  %s0 = inlined_call_operand.vmem [shape: bf16[32,32], index: 0, kind: input, shape index: {}]
  %s1 = inlined_call_operand.vmem [shape: bf16[32,128], index: 1, kind: input, shape index: {}]
  %s2 = inlined_call_operand.vmem [shape: f32[1,128], index: 2, kind: input, shape index: {}]
  %s3 = inlined_call_operand.vmem [shape: f32[32,128], index: 3, kind: output, shape index: {}]
  %s4 = sld [smem:[#allocation0]]
  $region22: #{resnet18_dense_forward.34} parent=0
    _
  %s6 = ssub.s32 1, %s4
  %s7 = scalar_select 0, %s6, %s4
  // Predicated region
  $region2: #{resnet18_dense_forward.34} parent=0 // pred_check
    _
  $region3: #{resnet18_dense_forward.34} parent=0 // pred_check_branch
    %9 = sbr.rel (0) target = $region5
  $region4: #{resnet18_dense_forward.34} parent=0 // pred_region
    _
  $region5: #{resnet18_dense_forward.34} parent=0 // pred_fallthru
    _
  // Predicated region
  $region6: #{resnet18_dense_forward.34} parent=0 // pred_check
    _
  $region7: #{resnet18_dense_forward.34} parent=0 // pred_check_branch
    %11 = sbr.rel (0) target = $region9
  $region8: #{resnet18_dense_forward.34} parent=0 // pred_region
    _
  $region9: #{resnet18_dense_forward.34} parent=0 // pred_fallthru
    _
  // Predicated region
  $region10: #{resnet18_dense_forward.34} parent=0 // pred_check
    _
  $region11: #{resnet18_dense_forward.34} parent=0 // pred_check_branch
    %13 = sbr.rel (0) target = $region13
  $region12: #{resnet18_dense_forward.34} parent=0 // pred_region
    _
  $region13: #{resnet18_dense_forward.34} parent=0 // pred_fallthru
    _
  %v15 = vld [vmem:[%s0] sm:$0xf]
  %v16 = vld [vmem:[%s0 + $0x4] sm:$0xf]
  %v17 = vld [vmem:[%s0 + $0x8] sm:$0xf]
  %v18 = vld [vmem:[%s0 + $0xc] sm:$0xf]
  %v19 = vld [vmem:[%s1] sm:$0xf]
  %v20 = vld [vmem:[%s1 + $0x4] sm:$0xf]
  %v21 = vld [vmem:[%s1 + $0x8] sm:$0xf]
  %v22 = vld [vmem:[%s1 + $0xc] sm:$0xf]
  %v23 = vld [vmem:[%s2] sm:$0x1]
  %v25 = vlaneseq
  %v26 = vshrl.u32 %v25, 7
  %v27 = vsub.s32 0, %v26
  %v28 = vrot.slane %v23, %v27
  %v34 = vunpack.c.l.b16 %v15
  %v35 = vunpack.c.l.b16 %v16
  %v36 = vunpack.c.l.b16 %v17
  %v37 = vunpack.c.l.b16 %v18
  %v38 = vpack.c.b16 %v35, %v34
  %v39 = vpack.c.b16 %v37, %v36
  %v44 = vunpack.c.l.b16 %v19
  %v45 = vunpack.c.l.b16 %v20
  %v46 = vunpack.c.l.b16 %v21
  %v47 = vunpack.c.l.b16 %v22
  %v48 = vpack.c.b16 %v45, %v44
  %v49 = vpack.c.b16 %v47, %v46
  %vm52 = vcmask 261120
  %v54 = vsel %vm52, %v38, 0
  %v57 = vsel %vm52, %v39, 0
  %59 = vmatprep.subr.bf16.mxu0 0
  %60 = vmatpush1.bf16.msra.mxu0 %v48
  %61 = vmatprep.subr.bf16.mxu0 0
  %62 = vmatpush1.bf16.msra.mxu0 %v49
  %63 = vmatprep.subr.bf16.mxu0 0
  %64 = vmatpush1.bf16.msra.mxu0 0
  %65 = vmatprep.subr.bf16.mxu0 0
  %66 = vmatpush1.bf16.msra.mxu0 0
  %67 = vmatprep.subr.bf16.mxu0 0
  %68 = vmatpush1.bf16.msra.mxu0 0
  %69 = vmatprep.subr.bf16.mxu0 0
  %70 = vmatpush1.bf16.msra.mxu0 0
  %71 = vmatprep.subr.bf16.mxu0 0
  %72 = vmatpush1.bf16.msra.mxu0 0
  %73 = vmatprep.subr.bf16.mxu0 0
  %74 = vmatpush1.bf16.msra.mxu0 0
  %75 = vmatprep.subr.bf16.mxu0 0
  %76 = vmatpush1.bf16.msra.mxu0 0
  %77 = vmatprep.subr.bf16.mxu0 0
  %78 = vmatpush1.bf16.msra.mxu0 0
  %79 = vmatprep.subr.bf16.mxu0 0
  %80 = vmatpush1.bf16.msra.mxu0 0
  %81 = vmatprep.subr.bf16.mxu0 0
  %82 = vmatpush1.bf16.msra.mxu0 0
  %83 = vmatprep.subr.bf16.mxu0 0
  %84 = vmatpush1.bf16.msra.mxu0 0
  %85 = vmatprep.subr.bf16.mxu0 0
  %86 = vmatpush1.bf16.msra.mxu0 0
  %87 = vmatprep.subr.bf16.mxu0 0
  %88 = vmatpush1.bf16.msra.mxu0 0
  %89 = vmatprep.subr.bf16.mxu0 0
  %90 = vmatpush1.bf16.msra.mxu0 0
  %91 = vmatprep.mubr.bf16.mxu0 0
  %92 = vmatmul.mubr.bf16.gmra.mrb[0].mxu0 %v54
  %v93 = vpop.f32.mrb[0].mxu0
  %v94 = vadd.f32 %v28, %v93
  %v95 = vpop.f32.mrb[0].mxu0
  %v96 = vpop.f32.mrb[0].mxu0
  %v97 = vadd.f32 %v28, %v96
  %v98 = vpop.f32.mrb[0].mxu0
  %99 = vmatprep.mubr.bf16.mxu0 0
  %100 = vmatmul.mubr.bf16.gmra.mrb[0].mxu0 %v57
  %v101 = vpop.f32.mrb[0].mxu0
  %v102 = vadd.f32 %v28, %v101
  %v103 = vpop.f32.mrb[0].mxu0
  %v104 = vpop.f32.mrb[0].mxu0
  %v105 = vadd.f32 %v28, %v104
  %v106 = vpop.f32.mrb[0].mxu0
  %107 = vdwg.mxu0
  %108 = vst [vmem:[%s3] sm:$0xff] %v94
  %109 = vst [vmem:[%s3 + $0x8] sm:$0xff] %v97
  %110 = vst [vmem:[%s3 + $0x10] sm:$0xff] %v102
  %111 = vst [vmem:[%s3 + $0x18] sm:$0xff] %v105
  // Predicated region
  $region14: #{resnet18_dense_forward.34} parent=0 // pred_check
    _
  $region15: #{resnet18_dense_forward.34} parent=0 // pred_check_branch
    %113 = sbr.rel (0) target = $region17
  $region16: #{resnet18_dense_forward.34} parent=0 // pred_region
    _
  $region17: #{resnet18_dense_forward.34} parent=0 // pred_fallthru
    _
  // Predicated region
  $region18: #{resnet18_dense_forward.34} parent=0 // pred_check
    _
  $region19: #{resnet18_dense_forward.34} parent=0 // pred_check_branch
    %115 = sbr.rel (0) target = $region21
  $region20: #{resnet18_dense_forward.34} parent=0 // pred_region
    _
  $region21: #{resnet18_dense_forward.34} parent=0 // pred_fallthru
    _

// kernel: resnet18_dense_forward.33
$region0: #{resnet18_dense_forward.33}
  #allocation0 [shape = 'u32[]', space=smem, size = 0x4, offset = 0x4, fixed_abs, tag = 'smem constant byte address 0x4 - core index']
  #allocation1 [shape = 'u32[144,128]{1,0:T(1,128)}', space=vmem, size = 0x12000, scoped, tag = 'internal scratch']
  %s0 = inlined_call_operand.vmem [shape: bf16[32,288], index: 0, kind: input, shape index: {}]
  %s1 = inlined_call_operand.vmem [shape: bf16[288,128], index: 1, kind: input, shape index: {}]
  %s2 = inlined_call_operand.vmem [shape: f32[1,128], index: 2, kind: input, shape index: {}]
  %s3 = inlined_call_operand.vmem [shape: f32[32,128], index: 3, kind: output, shape index: {}]
  %s4 = sld [smem:[#allocation0]]
  $region22: #{resnet18_dense_forward.33} parent=0
    _
  %s6 = ssub.s32 1, %s4
  %s7 = scalar_select 0, %s6, %s4
  // Predicated region
  $region2: #{resnet18_dense_forward.33} parent=0 // pred_check
    _
  $region3: #{resnet18_dense_forward.33} parent=0 // pred_check_branch
    %9 = sbr.rel (0) target = $region5
  $region4: #{resnet18_dense_forward.33} parent=0 // pred_region
    _
  $region5: #{resnet18_dense_forward.33} parent=0 // pred_fallthru
    _
  // Predicated region
  $region6: #{resnet18_dense_forward.33} parent=0 // pred_check
    _
  $region7: #{resnet18_dense_forward.33} parent=0 // pred_check_branch
    %11 = sbr.rel (0) target = $region9
  $region8: #{resnet18_dense_forward.33} parent=0 // pred_region
    _
  $region9: #{resnet18_dense_forward.33} parent=0 // pred_fallthru
    _
  // Predicated region
  $region10: #{resnet18_dense_forward.33} parent=0 // pred_check
    _
  $region11: #{resnet18_dense_forward.33} parent=0 // pred_check_branch
    %13 = sbr.rel (0) target = $region13
  $region12: #{resnet18_dense_forward.33} parent=0 // pred_region
    _
  $region13: #{resnet18_dense_forward.33} parent=0 // pred_fallthru
    _
  %v15 = vld [vmem:[%s0] sm:$0xff]
  %v16 = vld [vmem:[%s0 + $0x8] sm:$0xf]
  %v17 = vld [vmem:[%s0 + $0xc] sm:$0xff]
  %v18 = vld [vmem:[%s0 + $0x14] sm:$0xf]
  %v19 = vld [vmem:[%s0 + $0x18] sm:$0xff]
  %v20 = vld [vmem:[%s0 + $0x20] sm:$0xf]
  %v21 = vld [vmem:[%s0 + $0x24] sm:$0xff]
  %v22 = vld [vmem:[%s0 + $0x2c] sm:$0xf]
  %v23 = vld [vmem:[%s1] sm:$0xf]
  %v24 = vld [vmem:[%s1 + $0x4] sm:$0xf]
  %v25 = vld [vmem:[%s1 + $0x8] sm:$0xf]
  %v26 = vld [vmem:[%s1 + $0xc] sm:$0xf]
  %v27 = vld [vmem:[%s1 + $0x10] sm:$0xf]
  %v28 = vld [vmem:[%s1 + $0x14] sm:$0xf]
  %v29 = vld [vmem:[%s1 + $0x18] sm:$0xf]
  %v30 = vld [vmem:[%s1 + $0x1c] sm:$0xf]
  %v31 = vld [vmem:[%s1 + $0x20] sm:$0xf]
  %v32 = vld [vmem:[%s1 + $0x24] sm:$0xf]
  %v33 = vld [vmem:[%s1 + $0x28] sm:$0xf]
  %v34 = vld [vmem:[%s1 + $0x2c] sm:$0xf]
  %v35 = vld [vmem:[%s1 + $0x30] sm:$0xf]
  %v36 = vld [vmem:[%s1 + $0x34] sm:$0xf]
  %v37 = vld [vmem:[%s1 + $0x38] sm:$0xf]
  %v38 = vld [vmem:[%s1 + $0x3c] sm:$0xf]
  %v39 = vld [vmem:[%s1 + $0x40] sm:$0xf]
  %v40 = vld [vmem:[%s1 + $0x44] sm:$0xf]
  %v41 = vld [vmem:[%s1 + $0x48] sm:$0xf]
  %v42 = vld [vmem:[%s1 + $0x4c] sm:$0xf]
  %v43 = vld [vmem:[%s1 + $0x50] sm:$0xf]
  %v44 = vld [vmem:[%s1 + $0x54] sm:$0xf]
  %v45 = vld [vmem:[%s1 + $0x58] sm:$0xf]
  %v46 = vld [vmem:[%s1 + $0x5c] sm:$0xf]
  %v47 = vld [vmem:[%s1 + $0x60] sm:$0xf]
  %v48 = vld [vmem:[%s1 + $0x64] sm:$0xf]
  %v49 = vld [vmem:[%s1 + $0x68] sm:$0xf]
  %v50 = vld [vmem:[%s1 + $0x6c] sm:$0xf]
  %v51 = vld [vmem:[%s1 + $0x70] sm:$0xf]
  %v52 = vld [vmem:[%s1 + $0x74] sm:$0xf]
  %v53 = vld [vmem:[%s1 + $0x78] sm:$0xf]
  %v54 = vld [vmem:[%s1 + $0x7c] sm:$0xf]
  %v55 = vld [vmem:[%s1 + $0x80] sm:$0xf]
  %v56 = vld [vmem:[%s1 + $0x84] sm:$0xf]
  %v57 = vld [vmem:[%s1 + $0x88] sm:$0xf]
  %v58 = vld [vmem:[%s1 + $0x8c] sm:$0xf]
  %v59 = vld [vmem:[%s2] sm:$0x1]
  %v61 = vlaneseq
  %v62 = vshrl.u32 %v61, 7
  %v63 = vsub.s32 0, %v62
  %v64 = vrot.slane %v59, %v63
  %v74 = vunpack.c.l.b16 %v15
  %v75 = vunpack.c.h.b16 %v15
  %v76 = vunpack.c.l.b16 %v16
  %v77 = vunpack.c.l.b16 %v17
  %v78 = vunpack.c.h.b16 %v17
  %v79 = vunpack.c.l.b16 %v18
  %v80 = vunpack.c.l.b16 %v19
  %v81 = vunpack.c.h.b16 %v19
  %v82 = vunpack.c.l.b16 %v20
  %v83 = vunpack.c.l.b16 %v21
  %v84 = vunpack.c.h.b16 %v21
  %v85 = vunpack.c.l.b16 %v22
  %v86 = vpack.c.b16 %v77, %v74
  %v87 = vpack.c.b16 %v78, %v75
  %v88 = vpack.c.b16 %v79, %v76
  %v89 = vpack.c.b16 %v83, %v80
  %v90 = vpack.c.b16 %v84, %v81
  %v91 = vpack.c.b16 %v85, %v82
  %v132 = vunpack.c.l.b16 %v23
  %v133 = vunpack.c.l.b16 %v24
  %v134 = vunpack.c.l.b16 %v25
  %v135 = vunpack.c.l.b16 %v26
  %v136 = vunpack.c.l.b16 %v27
  %v137 = vunpack.c.l.b16 %v28
  %v138 = vunpack.c.l.b16 %v29
  %v139 = vunpack.c.l.b16 %v30
  %v140 = vunpack.c.l.b16 %v31
  %v141 = vunpack.c.l.b16 %v32
  %v142 = vunpack.c.l.b16 %v33
  %v143 = vunpack.c.l.b16 %v34
  %v144 = vunpack.c.l.b16 %v35
  %v145 = vunpack.c.l.b16 %v36
  %v146 = vunpack.c.l.b16 %v37
  %v147 = vunpack.c.l.b16 %v38
  %v148 = vunpack.c.l.b16 %v39
  %v149 = vunpack.c.l.b16 %v40
  %v150 = vunpack.c.l.b16 %v41
  %v151 = vunpack.c.l.b16 %v42
  %v152 = vunpack.c.l.b16 %v43
  %v153 = vunpack.c.l.b16 %v44
  %v154 = vunpack.c.l.b16 %v45
  %v155 = vunpack.c.l.b16 %v46
  %v156 = vunpack.c.l.b16 %v47
  %v157 = vunpack.c.l.b16 %v48
  %v158 = vunpack.c.l.b16 %v49
  %v159 = vunpack.c.l.b16 %v50
  %v160 = vunpack.c.l.b16 %v51
  %v161 = vunpack.c.l.b16 %v52
  %v162 = vunpack.c.l.b16 %v53
  %v163 = vunpack.c.l.b16 %v54
  %v164 = vunpack.c.l.b16 %v55
  %v165 = vunpack.c.l.b16 %v56
  %v166 = vunpack.c.l.b16 %v57
  %v167 = vunpack.c.l.b16 %v58
  %v168 = vpack.c.b16 %v133, %v132
  %v169 = vpack.c.b16 %v135, %v134
  %v170 = vpack.c.b16 %v137, %v136
  %v171 = vpack.c.b16 %v139, %v138
  %v172 = vpack.c.b16 %v141, %v140
  %v173 = vpack.c.b16 %v143, %v142
  %v174 = vpack.c.b16 %v145, %v144
  %v175 = vpack.c.b16 %v147, %v146
  %v176 = vpack.c.b16 %v149, %v148
  %v177 = vpack.c.b16 %v151, %v150
  %v178 = vpack.c.b16 %v153, %v152
  %v179 = vpack.c.b16 %v155, %v154
  %v180 = vpack.c.b16 %v157, %v156
  %v181 = vpack.c.b16 %v159, %v158
  %v182 = vpack.c.b16 %v161, %v160
  %v183 = vpack.c.b16 %v163, %v162
  %v184 = vpack.c.b16 %v165, %v164
  %v185 = vpack.c.b16 %v167, %v166
  %vm204 = vcmask 261120
  %v206 = vsel %vm204, %v88, 0
  %v209 = vsel %vm204, %v91, 0
  %211 = vmatprep.subr.bf16.mxu0 0
  %212 = vmatpush1.bf16.msra.mxu0 %v168
  %213 = vmatprep.subr.bf16.mxu0 0
  %214 = vmatpush1.bf16.msra.mxu0 %v169
  %215 = vmatprep.subr.bf16.mxu0 0
  %216 = vmatpush1.bf16.msra.mxu0 %v170
  %217 = vmatprep.subr.bf16.mxu0 0
  %218 = vmatpush1.bf16.msra.mxu0 %v171
  %219 = vmatprep.subr.bf16.mxu0 0
  %220 = vmatpush1.bf16.msra.mxu0 %v172
  %221 = vmatprep.subr.bf16.mxu0 0
  %222 = vmatpush1.bf16.msra.mxu0 %v173
  %223 = vmatprep.subr.bf16.mxu0 0
  %224 = vmatpush1.bf16.msra.mxu0 %v174
  %225 = vmatprep.subr.bf16.mxu0 0
  %226 = vmatpush1.bf16.msra.mxu0 %v175
  %227 = vmatprep.subr.bf16.mxu0 0
  %228 = vmatpush1.bf16.msra.mxu0 %v176
  %229 = vmatprep.subr.bf16.mxu0 0
  %230 = vmatpush1.bf16.msra.mxu0 %v177
  %231 = vmatprep.subr.bf16.mxu0 0
  %232 = vmatpush1.bf16.msra.mxu0 %v178
  %233 = vmatprep.subr.bf16.mxu0 0
  %234 = vmatpush1.bf16.msra.mxu0 %v179
  %235 = vmatprep.subr.bf16.mxu0 0
  %236 = vmatpush1.bf16.msra.mxu0 %v180
  %237 = vmatprep.subr.bf16.mxu0 0
  %238 = vmatpush1.bf16.msra.mxu0 %v181
  %239 = vmatprep.subr.bf16.mxu0 0
  %240 = vmatpush1.bf16.msra.mxu0 %v182
  %241 = vmatprep.subr.bf16.mxu0 0
  %242 = vmatpush1.bf16.msra.mxu0 %v183
  %243 = vmatprep.mubr.bf16.mxu0 %v87
  %244 = vmatmul.mubr.bf16.gmra.mrb[0].mxu0 %v86
  %v245 = vpop.f32.mrb[0].mxu0
  %v246 = vadd.f32 %v64, %v245
  %v247 = vpop.f32.mrb[0].mxu0
  %v248 = vpop.f32.mrb[0].mxu0
  %v249 = vadd.f32 %v64, %v248
  %v250 = vpop.f32.mrb[0].mxu0
  %251 = vmatprep.mubr.bf16.mxu0 %v90
  %252 = vmatmul.mubr.bf16.gmra.mrb[0].mxu0 %v89
  %v253 = vpop.f32.mrb[0].mxu0
  %v254 = vadd.f32 %v64, %v253
  %v255 = vpop.f32.mrb[0].mxu0
  %v256 = vpop.f32.mrb[0].mxu0
  %v257 = vadd.f32 %v64, %v256
  %v258 = vpop.f32.mrb[0].mxu0
  %259 = vdwg.mxu0
  %260 = vmatprep.subr.bf16.mxu0 0
  %261 = vmatpush1.bf16.msra.mxu0 %v184
  %262 = vmatprep.subr.bf16.mxu0 0
  %263 = vmatpush1.bf16.msra.mxu0 %v185
  %264 = vmatprep.subr.bf16.mxu0 0
  %265 = vmatpush1.bf16.msra.mxu0 0
  %266 = vmatprep.subr.bf16.mxu0 0
  %267 = vmatpush1.bf16.msra.mxu0 0
  %268 = vmatprep.subr.bf16.mxu0 0
  %269 = vmatpush1.bf16.msra.mxu0 0
  %270 = vmatprep.subr.bf16.mxu0 0
  %271 = vmatpush1.bf16.msra.mxu0 0
  %272 = vmatprep.subr.bf16.mxu0 0
  %273 = vmatpush1.bf16.msra.mxu0 0
  %274 = vmatprep.subr.bf16.mxu0 0
  %275 = vmatpush1.bf16.msra.mxu0 0
  %276 = vmatprep.subr.bf16.mxu0 0
  %277 = vmatpush1.bf16.msra.mxu0 0
  %278 = vmatprep.subr.bf16.mxu0 0
  %279 = vmatpush1.bf16.msra.mxu0 0
  %280 = vmatprep.subr.bf16.mxu0 0
  %281 = vmatpush1.bf16.msra.mxu0 0
  %282 = vmatprep.subr.bf16.mxu0 0
  %283 = vmatpush1.bf16.msra.mxu0 0
  %284 = vmatprep.subr.bf16.mxu0 0
  %285 = vmatpush1.bf16.msra.mxu0 0
  %286 = vmatprep.subr.bf16.mxu0 0
  %287 = vmatpush1.bf16.msra.mxu0 0
  %288 = vmatprep.subr.bf16.mxu0 0
  %289 = vmatpush1.bf16.msra.mxu0 0
  %290 = vmatprep.subr.bf16.mxu0 0
  %291 = vmatpush1.bf16.msra.mxu0 0
  %292 = vmatprep.mubr.bf16.mxu0 0
  %293 = vmatmul.mubr.bf16.gmra.mrb[0].mxu0 %v206
  %v294 = vpop.f32.mrb[0].mxu0
  %v295 = vadd.f32 %v246, %v294
  %v296 = vpop.f32.mrb[0].mxu0
  %v297 = vpop.f32.mrb[0].mxu0
  %v298 = vadd.f32 %v249, %v297
  %v299 = vpop.f32.mrb[0].mxu0
  %300 = vmatprep.mubr.bf16.mxu0 0
  %301 = vmatmul.mubr.bf16.gmra.mrb[0].mxu0 %v209
  %v302 = vpop.f32.mrb[0].mxu0
  %v303 = vadd.f32 %v254, %v302
  %v304 = vpop.f32.mrb[0].mxu0
  %v305 = vpop.f32.mrb[0].mxu0
  %v306 = vadd.f32 %v257, %v305
  %v307 = vpop.f32.mrb[0].mxu0
  %308 = vdwg.mxu0
  %v309 = vmax.f32 %v295, 0.0
  %v310 = vmax.f32 %v298, 0.0
  %v311 = vmax.f32 %v303, 0.0
  %v312 = vmax.f32 %v306, 0.0
  %313 = vst [vmem:[%s3] sm:$0xff] %v309
  %314 = vst [vmem:[%s3 + $0x8] sm:$0xff] %v310
  %315 = vst [vmem:[%s3 + $0x10] sm:$0xff] %v311
  %316 = vst [vmem:[%s3 + $0x18] sm:$0xff] %v312
  // Predicated region
  $region14: #{resnet18_dense_forward.33} parent=0 // pred_check
    _
  $region15: #{resnet18_dense_forward.33} parent=0 // pred_check_branch
    %318 = sbr.rel (0) target = $region17
  $region16: #{resnet18_dense_forward.33} parent=0 // pred_region
    _
  $region17: #{resnet18_dense_forward.33} parent=0 // pred_fallthru
    _
  // Predicated region
  $region18: #{resnet18_dense_forward.33} parent=0 // pred_check
    _
  $region19: #{resnet18_dense_forward.33} parent=0 // pred_check_branch
    %320 = sbr.rel (0) target = $region21
  $region20: #{resnet18_dense_forward.33} parent=0 // pred_region
    _
  $region21: #{resnet18_dense_forward.33} parent=0 // pred_fallthru
    _

// kernel: resnet18_dense_forward.36
$region0: #{resnet18_dense_forward.36}
  #allocation0 [shape = 'u32[]', space=smem, size = 0x4, offset = 0x4, fixed_abs, tag = 'smem constant byte address 0x4 - core index']
  #allocation1 [shape = 'u32[144,128]{1,0:T(1,128)}', space=vmem, size = 0x12000, scoped, tag = 'internal scratch']
  %s0 = inlined_call_operand.vmem [shape: bf16[32,576], index: 0, kind: input, shape index: {}]
  %s1 = inlined_call_operand.vmem [shape: bf16[576,128], index: 1, kind: input, shape index: {}]
  %s2 = inlined_call_operand.vmem [shape: f32[1,128], index: 2, kind: input, shape index: {}]
  %s3 = inlined_call_operand.vmem [shape: f32[32,128], index: 3, kind: output, shape index: {}]
  %s4 = sld [smem:[#allocation0]]
  $region22: #{resnet18_dense_forward.36} parent=0
    _
  %s6 = ssub.s32 1, %s4
  %s7 = scalar_select 0, %s6, %s4
  // Predicated region
  $region2: #{resnet18_dense_forward.36} parent=0 // pred_check
    _
  $region3: #{resnet18_dense_forward.36} parent=0 // pred_check_branch
    %9 = sbr.rel (0) target = $region5
  $region4: #{resnet18_dense_forward.36} parent=0 // pred_region
    _
  $region5: #{resnet18_dense_forward.36} parent=0 // pred_fallthru
    _
  // Predicated region
  $region6: #{resnet18_dense_forward.36} parent=0 // pred_check
    _
  $region7: #{resnet18_dense_forward.36} parent=0 // pred_check_branch
    %11 = sbr.rel (0) target = $region9
  $region8: #{resnet18_dense_forward.36} parent=0 // pred_region
    _
  $region9: #{resnet18_dense_forward.36} parent=0 // pred_fallthru
    _
  // Predicated region
  $region10: #{resnet18_dense_forward.36} parent=0 // pred_check
    _
  $region11: #{resnet18_dense_forward.36} parent=0 // pred_check_branch
    %13 = sbr.rel (0) target = $region13
  $region12: #{resnet18_dense_forward.36} parent=0 // pred_region
    _
  $region13: #{resnet18_dense_forward.36} parent=0 // pred_fallthru
    _
  %v15 = vld [vmem:[%s0] sm:$0xff]
  %v16 = vld [vmem:[%s0 + $0x8] sm:$0xff]
  %v17 = vld [vmem:[%s0 + $0x10] sm:$0xf]
  %v18 = vld [vmem:[%s0 + $0x14] sm:$0xff]
  %v19 = vld [vmem:[%s0 + $0x1c] sm:$0xff]
  %v20 = vld [vmem:[%s0 + $0x24] sm:$0xf]
  %v21 = vld [vmem:[%s0 + $0x28] sm:$0xff]
  %v22 = vld [vmem:[%s0 + $0x30] sm:$0xff]
  %v23 = vld [vmem:[%s0 + $0x38] sm:$0xf]
  %v24 = vld [vmem:[%s0 + $0x3c] sm:$0xff]
  %v25 = vld [vmem:[%s0 + $0x44] sm:$0xff]
  %v26 = vld [vmem:[%s0 + $0x4c] sm:$0xf]
  %v27 = vld [vmem:[%s1] sm:$0xf]
  %v28 = vld [vmem:[%s1 + $0x4] sm:$0xf]
  %v29 = vld [vmem:[%s1 + $0x8] sm:$0xf]
  %v30 = vld [vmem:[%s1 + $0xc] sm:$0xf]
  %v31 = vld [vmem:[%s1 + $0x10] sm:$0xf]
  %v32 = vld [vmem:[%s1 + $0x14] sm:$0xf]
  %v33 = vld [vmem:[%s1 + $0x18] sm:$0xf]
  %v34 = vld [vmem:[%s1 + $0x1c] sm:$0xf]
  %v35 = vld [vmem:[%s1 + $0x20] sm:$0xf]
  %v36 = vld [vmem:[%s1 + $0x24] sm:$0xf]
  %v37 = vld [vmem:[%s1 + $0x28] sm:$0xf]
  %v38 = vld [vmem:[%s1 + $0x2c] sm:$0xf]
  %v39 = vld [vmem:[%s1 + $0x30] sm:$0xf]
  %v40 = vld [vmem:[%s1 + $0x34] sm:$0xf]
  %v41 = vld [vmem:[%s1 + $0x38] sm:$0xf]
  %v42 = vld [vmem:[%s1 + $0x3c] sm:$0xf]
  %v43 = vld [vmem:[%s1 + $0x40] sm:$0xf]
  %v44 = vld [vmem:[%s1 + $0x44] sm:$0xf]
  %v45 = vld [vmem:[%s1 + $0x48] sm:$0xf]
  %v46 = vld [vmem:[%s1 + $0x4c] sm:$0xf]
  %v47 = vld [vmem:[%s1 + $0x50] sm:$0xf]
  %v48 = vld [vmem:[%s1 + $0x54] sm:$0xf]
  %v49 = vld [vmem:[%s1 + $0x58] sm:$0xf]
  %v50 = vld [vmem:[%s1 + $0x5c] sm:$0xf]
  %v51 = vld [vmem:[%s1 + $0x60] sm:$0xf]
  %v52 = vld [vmem:[%s1 + $0x64] sm:$0xf]
  %v53 = vld [vmem:[%s1 + $0x68] sm:$0xf]
  %v54 = vld [vmem:[%s1 + $0x6c] sm:$0xf]
  %v55 = vld [vmem:[%s1 + $0x70] sm:$0xf]
  %v56 = vld [vmem:[%s1 + $0x74] sm:$0xf]
  %v57 = vld [vmem:[%s1 + $0x78] sm:$0xf]
  %v58 = vld [vmem:[%s1 + $0x7c] sm:$0xf]
  %v59 = vld [vmem:[%s1 + $0x80] sm:$0xf]
  %v60 = vld [vmem:[%s1 + $0x84] sm:$0xf]
  %v61 = vld [vmem:[%s1 + $0x88] sm:$0xf]
  %v62 = vld [vmem:[%s1 + $0x8c] sm:$0xf]
  %v63 = vld [vmem:[%s1 + $0x90] sm:$0xf]
  %v64 = vld [vmem:[%s1 + $0x94] sm:$0xf]
  %v65 = vld [vmem:[%s1 + $0x98] sm:$0xf]
  %v66 = vld [vmem:[%s1 + $0x9c] sm:$0xf]
  %v67 = vld [vmem:[%s1 + $0xa0] sm:$0xf]
  %v68 = vld [vmem:[%s1 + $0xa4] sm:$0xf]
  %v69 = vld [vmem:[%s1 + $0xa8] sm:$0xf]
  %v70 = vld [vmem:[%s1 + $0xac] sm:$0xf]
  %v71 = vld [vmem:[%s1 + $0xb0] sm:$0xf]
  %v72 = vld [vmem:[%s1 + $0xb4] sm:$0xf]
  %v73 = vld [vmem:[%s1 + $0xb8] sm:$0xf]
  %v74 = vld [vmem:[%s1 + $0xbc] sm:$0xf]
  %v75 = vld [vmem:[%s1 + $0xc0] sm:$0xf]
  %v76 = vld [vmem:[%s1 + $0xc4] sm:$0xf]
  %v77 = vld [vmem:[%s1 + $0xc8] sm:$0xf]
  %v78 = vld [vmem:[%s1 + $0xcc] sm:$0xf]
  %v79 = vld [vmem:[%s1 + $0xd0] sm:$0xf]
  %v80 = vld [vmem:[%s1 + $0xd4] sm:$0xf]
  %v81 = vld [vmem:[%s1 + $0xd8] sm:$0xf]
  %v82 = vld [vmem:[%s1 + $0xdc] sm:$0xf]
  %v83 = vld [vmem:[%s1 + $0xe0] sm:$0xf]
  %v84 = vld [vmem:[%s1 + $0xe4] sm:$0xf]
  %v85 = vld [vmem:[%s1 + $0xe8] sm:$0xf]
  %v86 = vld [vmem:[%s1 + $0xec] sm:$0xf]
  %v87 = vld [vmem:[%s1 + $0xf0] sm:$0xf]
  %v88 = vld [vmem:[%s1 + $0xf4] sm:$0xf]
  %v89 = vld [vmem:[%s1 + $0xf8] sm:$0xf]
  %v90 = vld [vmem:[%s1 + $0xfc] sm:$0xf]
  %v91 = vld [vmem:[%s1 + $0x100] sm:$0xf]
  %v92 = vld [vmem:[%s1 + $0x104] sm:$0xf]
  %v93 = vld [vmem:[%s1 + $0x108] sm:$0xf]
  %v94 = vld [vmem:[%s1 + $0x10c] sm:$0xf]
  %v95 = vld [vmem:[%s1 + $0x110] sm:$0xf]
  %v96 = vld [vmem:[%s1 + $0x114] sm:$0xf]
  %v97 = vld [vmem:[%s1 + $0x118] sm:$0xf]
  %v98 = vld [vmem:[%s1 + $0x11c] sm:$0xf]
  %v99 = vld [vmem:[%s2] sm:$0x1]
  %v101 = vlaneseq
  %v102 = vshrl.u32 %v101, 7
  %v103 = vsub.s32 0, %v102
  %v104 = vrot.slane %v99, %v103
  %v118 = vunpack.c.l.b16 %v15
  %v119 = vunpack.c.h.b16 %v15
  %v120 = vunpack.c.l.b16 %v16
  %v121 = vunpack.c.h.b16 %v16
  %v122 = vunpack.c.l.b16 %v17
  %v123 = vunpack.c.l.b16 %v18
  %v124 = vunpack.c.h.b16 %v18
  %v125 = vunpack.c.l.b16 %v19
  %v126 = vunpack.c.h.b16 %v19
  %v127 = vunpack.c.l.b16 %v20
  %v128 = vunpack.c.l.b16 %v21
  %v129 = vunpack.c.h.b16 %v21
  %v130 = vunpack.c.l.b16 %v22
  %v131 = vunpack.c.h.b16 %v22
  %v132 = vunpack.c.l.b16 %v23
  %v133 = vunpack.c.l.b16 %v24
  %v134 = vunpack.c.h.b16 %v24
  %v135 = vunpack.c.l.b16 %v25
  %v136 = vunpack.c.h.b16 %v25
  %v137 = vunpack.c.l.b16 %v26
  %v138 = vpack.c.b16 %v123, %v118
  %v139 = vpack.c.b16 %v124, %v119
  %v140 = vpack.c.b16 %v125, %v120
  %v141 = vpack.c.b16 %v126, %v121
  %v142 = vpack.c.b16 %v127, %v122
  %v143 = vpack.c.b16 %v133, %v128
  %v144 = vpack.c.b16 %v134, %v129
  %v145 = vpack.c.b16 %v135, %v130
  %v146 = vpack.c.b16 %v136, %v131
  %v147 = vpack.c.b16 %v137, %v132
  %v228 = vunpack.c.l.b16 %v27
  %v229 = vunpack.c.l.b16 %v28
  %v230 = vunpack.c.l.b16 %v29
  %v231 = vunpack.c.l.b16 %v30
  %v232 = vunpack.c.l.b16 %v31
  %v233 = vunpack.c.l.b16 %v32
  %v234 = vunpack.c.l.b16 %v33
  %v235 = vunpack.c.l.b16 %v34
  %v236 = vunpack.c.l.b16 %v35
  %v237 = vunpack.c.l.b16 %v36
  %v238 = vunpack.c.l.b16 %v37
  %v239 = vunpack.c.l.b16 %v38
  %v240 = vunpack.c.l.b16 %v39
  %v241 = vunpack.c.l.b16 %v40
  %v242 = vunpack.c.l.b16 %v41
  %v243 = vunpack.c.l.b16 %v42
  %v244 = vunpack.c.l.b16 %v43
  %v245 = vunpack.c.l.b16 %v44
  %v246 = vunpack.c.l.b16 %v45
  %v247 = vunpack.c.l.b16 %v46
  %v248 = vunpack.c.l.b16 %v47
  %v249 = vunpack.c.l.b16 %v48
  %v250 = vunpack.c.l.b16 %v49
  %v251 = vunpack.c.l.b16 %v50
  %v252 = vunpack.c.l.b16 %v51
  %v253 = vunpack.c.l.b16 %v52
  %v254 = vunpack.c.l.b16 %v53
  %v255 = vunpack.c.l.b16 %v54
  %v256 = vunpack.c.l.b16 %v55
  %v257 = vunpack.c.l.b16 %v56
  %v258 = vunpack.c.l.b16 %v57
  %v259 = vunpack.c.l.b16 %v58
  %v260 = vunpack.c.l.b16 %v59
  %v261 = vunpack.c.l.b16 %v60
  %v262 = vunpack.c.l.b16 %v61
  %v263 = vunpack.c.l.b16 %v62
  %v264 = vunpack.c.l.b16 %v63
  %v265 = vunpack.c.l.b16 %v64
  %v266 = vunpack.c.l.b16 %v65
  %v267 = vunpack.c.l.b16 %v66
  %v268 = vunpack.c.l.b16 %v67
  %v269 = vunpack.c.l.b16 %v68
  %v270 = vunpack.c.l.b16 %v69
  %v271 = vunpack.c.l.b16 %v70
  %v272 = vunpack.c.l.b16 %v71
  %v273 = vunpack.c.l.b16 %v72
  %v274 = vunpack.c.l.b16 %v73
  %v275 = vunpack.c.l.b16 %v74
  %v276 = vunpack.c.l.b16 %v75
  %v277 = vunpack.c.l.b16 %v76
  %v278 = vunpack.c.l.b16 %v77
  %v279 = vunpack.c.l.b16 %v78
  %v280 = vunpack.c.l.b16 %v79
  %v281 = vunpack.c.l.b16 %v80
  %v282 = vunpack.c.l.b16 %v81
  %v283 = vunpack.c.l.b16 %v82
  %v284 = vunpack.c.l.b16 %v83
  %v285 = vunpack.c.l.b16 %v84
  %v286 = vunpack.c.l.b16 %v85
  %v287 = vunpack.c.l.b16 %v86
  %v288 = vunpack.c.l.b16 %v87
  %v289 = vunpack.c.l.b16 %v88
  %v290 = vunpack.c.l.b16 %v89
  %v291 = vunpack.c.l.b16 %v90
  %v292 = vunpack.c.l.b16 %v91
  %v293 = vunpack.c.l.b16 %v92
  %v294 = vunpack.c.l.b16 %v93
  %v295 = vunpack.c.l.b16 %v94
  %v296 = vunpack.c.l.b16 %v95
  %v297 = vunpack.c.l.b16 %v96
  %v298 = vunpack.c.l.b16 %v97
  %v299 = vunpack.c.l.b16 %v98
  %v300 = vpack.c.b16 %v229, %v228
  %v301 = vpack.c.b16 %v231, %v230
  %v302 = vpack.c.b16 %v233, %v232
  %v303 = vpack.c.b16 %v235, %v234
  %v304 = vpack.c.b16 %v237, %v236
  %v305 = vpack.c.b16 %v239, %v238
  %v306 = vpack.c.b16 %v241, %v240
  %v307 = vpack.c.b16 %v243, %v242
  %v308 = vpack.c.b16 %v245, %v244
  %v309 = vpack.c.b16 %v247, %v246
  %v310 = vpack.c.b16 %v249, %v248
  %v311 = vpack.c.b16 %v251, %v250
  %v312 = vpack.c.b16 %v253, %v252
  %v313 = vpack.c.b16 %v255, %v254
  %v314 = vpack.c.b16 %v257, %v256
  %v315 = vpack.c.b16 %v259, %v258
  %v316 = vpack.c.b16 %v261, %v260
  %v317 = vpack.c.b16 %v263, %v262
  %v318 = vpack.c.b16 %v265, %v264
  %v319 = vpack.c.b16 %v267, %v266
  %v320 = vpack.c.b16 %v269, %v268
  %v321 = vpack.c.b16 %v271, %v270
  %v322 = vpack.c.b16 %v273, %v272
  %v323 = vpack.c.b16 %v275, %v274
  %v324 = vpack.c.b16 %v277, %v276
  %v325 = vpack.c.b16 %v279, %v278
  %v326 = vpack.c.b16 %v281, %v280
  %v327 = vpack.c.b16 %v283, %v282
  %v328 = vpack.c.b16 %v285, %v284
  %v329 = vpack.c.b16 %v287, %v286
  %v330 = vpack.c.b16 %v289, %v288
  %v331 = vpack.c.b16 %v291, %v290
  %v332 = vpack.c.b16 %v293, %v292
  %v333 = vpack.c.b16 %v295, %v294
  %v334 = vpack.c.b16 %v297, %v296
  %v335 = vpack.c.b16 %v299, %v298
  %vm372 = vcmask 523264
  %v374 = vsel %vm372, %v142, 0
  %v377 = vsel %vm372, %v147, 0
  %379 = vmatprep.subr.bf16.mxu0 0
  %380 = vmatpush1.bf16.msra.mxu0 %v300
  %381 = vmatprep.subr.bf16.mxu0 0
  %382 = vmatpush1.bf16.msra.mxu0 %v301
  %383 = vmatprep.subr.bf16.mxu0 0
  %384 = vmatpush1.bf16.msra.mxu0 %v302
  %385 = vmatprep.subr.bf16.mxu0 0
  %386 = vmatpush1.bf16.msra.mxu0 %v303
  %387 = vmatprep.subr.bf16.mxu0 0
  %388 = vmatpush1.bf16.msra.mxu0 %v304
  %389 = vmatprep.subr.bf16.mxu0 0
  %390 = vmatpush1.bf16.msra.mxu0 %v305
  %391 = vmatprep.subr.bf16.mxu0 0
  %392 = vmatpush1.bf16.msra.mxu0 %v306
  %393 = vmatprep.subr.bf16.mxu0 0
  %394 = vmatpush1.bf16.msra.mxu0 %v307
  %395 = vmatprep.subr.bf16.mxu0 0
  %396 = vmatpush1.bf16.msra.mxu0 %v308
  %397 = vmatprep.subr.bf16.mxu0 0
  %398 = vmatpush1.bf16.msra.mxu0 %v309
  %399 = vmatprep.subr.bf16.mxu0 0
  %400 = vmatpush1.bf16.msra.mxu0 %v310
  %401 = vmatprep.subr.bf16.mxu0 0
  %402 = vmatpush1.bf16.msra.mxu0 %v311
  %403 = vmatprep.subr.bf16.mxu0 0
  %404 = vmatpush1.bf16.msra.mxu0 %v312
  %405 = vmatprep.subr.bf16.mxu0 0
  %406 = vmatpush1.bf16.msra.mxu0 %v313
  %407 = vmatprep.subr.bf16.mxu0 0
  %408 = vmatpush1.bf16.msra.mxu0 %v314
  %409 = vmatprep.subr.bf16.mxu0 0
  %410 = vmatpush1.bf16.msra.mxu0 %v315
  %411 = vmatprep.mubr.bf16.mxu0 %v139
  %412 = vmatmul.mubr.bf16.gmra.mrb[0].mxu0 %v138
  %v413 = vpop.f32.mrb[0].mxu0
  %v414 = vadd.f32 %v104, %v413
  %v415 = vpop.f32.mrb[0].mxu0
  %v416 = vpop.f32.mrb[0].mxu0
  %v417 = vadd.f32 %v104, %v416
  %v418 = vpop.f32.mrb[0].mxu0
  %419 = vmatprep.mubr.bf16.mxu0 %v144
  %420 = vmatmul.mubr.bf16.gmra.mrb[0].mxu0 %v143
  %v421 = vpop.f32.mrb[0].mxu0
  %v422 = vadd.f32 %v104, %v421
  %v423 = vpop.f32.mrb[0].mxu0
  %v424 = vpop.f32.mrb[0].mxu0
  %v425 = vadd.f32 %v104, %v424
  %v426 = vpop.f32.mrb[0].mxu0
  %427 = vdwg.mxu0
  %428 = vmatprep.subr.bf16.mxu0 0
  %429 = vmatpush1.bf16.msra.mxu0 %v316
  %430 = vmatprep.subr.bf16.mxu0 0
  %431 = vmatpush1.bf16.msra.mxu0 %v317
  %432 = vmatprep.subr.bf16.mxu0 0
  %433 = vmatpush1.bf16.msra.mxu0 %v318
  %434 = vmatprep.subr.bf16.mxu0 0
  %435 = vmatpush1.bf16.msra.mxu0 %v319
  %436 = vmatprep.subr.bf16.mxu0 0
  %437 = vmatpush1.bf16.msra.mxu0 %v320
  %438 = vmatprep.subr.bf16.mxu0 0
  %439 = vmatpush1.bf16.msra.mxu0 %v321
  %440 = vmatprep.subr.bf16.mxu0 0
  %441 = vmatpush1.bf16.msra.mxu0 %v322
  %442 = vmatprep.subr.bf16.mxu0 0
  %443 = vmatpush1.bf16.msra.mxu0 %v323
  %444 = vmatprep.subr.bf16.mxu0 0
  %445 = vmatpush1.bf16.msra.mxu0 %v324
  %446 = vmatprep.subr.bf16.mxu0 0
  %447 = vmatpush1.bf16.msra.mxu0 %v325
  %448 = vmatprep.subr.bf16.mxu0 0
  %449 = vmatpush1.bf16.msra.mxu0 %v326
  %450 = vmatprep.subr.bf16.mxu0 0
  %451 = vmatpush1.bf16.msra.mxu0 %v327
  %452 = vmatprep.subr.bf16.mxu0 0
  %453 = vmatpush1.bf16.msra.mxu0 %v328
  %454 = vmatprep.subr.bf16.mxu0 0
  %455 = vmatpush1.bf16.msra.mxu0 %v329
  %456 = vmatprep.subr.bf16.mxu0 0
  %457 = vmatpush1.bf16.msra.mxu0 %v330
  %458 = vmatprep.subr.bf16.mxu0 0
  %459 = vmatpush1.bf16.msra.mxu0 %v331
  %460 = vmatprep.mubr.bf16.mxu0 %v141
  %461 = vmatmul.mubr.bf16.gmra.mrb[0].mxu0 %v140
  %v462 = vpop.f32.mrb[0].mxu0
  %v463 = vadd.f32 %v414, %v462
  %v464 = vpop.f32.mrb[0].mxu0
  %v465 = vpop.f32.mrb[0].mxu0
  %v466 = vadd.f32 %v417, %v465
  %v467 = vpop.f32.mrb[0].mxu0
  %468 = vmatprep.mubr.bf16.mxu0 %v146
  %469 = vmatmul.mubr.bf16.gmra.mrb[0].mxu0 %v145
  %v470 = vpop.f32.mrb[0].mxu0
  %v471 = vadd.f32 %v422, %v470
  %v472 = vpop.f32.mrb[0].mxu0
  %v473 = vpop.f32.mrb[0].mxu0
  %v474 = vadd.f32 %v425, %v473
  %v475 = vpop.f32.mrb[0].mxu0
  %476 = vdwg.mxu0
  %477 = vmatprep.subr.bf16.mxu0 0
  %478 = vmatpush1.bf16.msra.mxu0 %v332
  %479 = vmatprep.subr.bf16.mxu0 0
  %480 = vmatpush1.bf16.msra.mxu0 %v333
  %481 = vmatprep.subr.bf16.mxu0 0
  %482 = vmatpush1.bf16.msra.mxu0 %v334
  %483 = vmatprep.subr.bf16.mxu0 0
  %484 = vmatpush1.bf16.msra.mxu0 %v335
  %485 = vmatprep.subr.bf16.mxu0 0
  %486 = vmatpush1.bf16.msra.mxu0 0
  %487 = vmatprep.subr.bf16.mxu0 0
  %488 = vmatpush1.bf16.msra.mxu0 0
  %489 = vmatprep.subr.bf16.mxu0 0
  %490 = vmatpush1.bf16.msra.mxu0 0
  %491 = vmatprep.subr.bf16.mxu0 0
  %492 = vmatpush1.bf16.msra.mxu0 0
  %493 = vmatprep.subr.bf16.mxu0 0
  %494 = vmatpush1.bf16.msra.mxu0 0
  %495 = vmatprep.subr.bf16.mxu0 0
  %496 = vmatpush1.bf16.msra.mxu0 0
  %497 = vmatprep.subr.bf16.mxu0 0
  %498 = vmatpush1.bf16.msra.mxu0 0
  %499 = vmatprep.subr.bf16.mxu0 0
  %500 = vmatpush1.bf16.msra.mxu0 0
  %501 = vmatprep.subr.bf16.mxu0 0
  %502 = vmatpush1.bf16.msra.mxu0 0
  %503 = vmatprep.subr.bf16.mxu0 0
  %504 = vmatpush1.bf16.msra.mxu0 0
  %505 = vmatprep.subr.bf16.mxu0 0
  %506 = vmatpush1.bf16.msra.mxu0 0
  %507 = vmatprep.subr.bf16.mxu0 0
  %508 = vmatpush1.bf16.msra.mxu0 0
  %509 = vmatprep.mubr.bf16.mxu0 0
  %510 = vmatmul.mubr.bf16.gmra.mrb[0].mxu0 %v374
  %v511 = vpop.f32.mrb[0].mxu0
  %v512 = vadd.f32 %v463, %v511
  %v513 = vpop.f32.mrb[0].mxu0
  %v514 = vpop.f32.mrb[0].mxu0
  %v515 = vadd.f32 %v466, %v514
  %v516 = vpop.f32.mrb[0].mxu0
  %517 = vmatprep.mubr.bf16.mxu0 0
  %518 = vmatmul.mubr.bf16.gmra.mrb[0].mxu0 %v377
  %v519 = vpop.f32.mrb[0].mxu0
  %v520 = vadd.f32 %v471, %v519
  %v521 = vpop.f32.mrb[0].mxu0
  %v522 = vpop.f32.mrb[0].mxu0
  %v523 = vadd.f32 %v474, %v522
  %v524 = vpop.f32.mrb[0].mxu0
  %525 = vdwg.mxu0
  %v526 = vmax.f32 %v512, 0.0
  %v527 = vmax.f32 %v515, 0.0
  %v528 = vmax.f32 %v520, 0.0
  %v529 = vmax.f32 %v523, 0.0
  %530 = vst [vmem:[%s3] sm:$0xff] %v526
  %531 = vst [vmem:[%s3 + $0x8] sm:$0xff] %v527
  %532 = vst [vmem:[%s3 + $0x10] sm:$0xff] %v528
  %533 = vst [vmem:[%s3 + $0x18] sm:$0xff] %v529
  // Predicated region
  $region14: #{resnet18_dense_forward.36} parent=0 // pred_check
    _
  $region15: #{resnet18_dense_forward.36} parent=0 // pred_check_branch
    %535 = sbr.rel (0) target = $region17
  $region16: #{resnet18_dense_forward.36} parent=0 // pred_region
    _
  $region17: #{resnet18_dense_forward.36} parent=0 // pred_fallthru
    _
  // Predicated region
  $region18: #{resnet18_dense_forward.36} parent=0 // pred_check
    _
  $region19: #{resnet18_dense_forward.36} parent=0 // pred_check_branch
    %537 = sbr.rel (0) target = $region21
  $region20: #{resnet18_dense_forward.36} parent=0 // pred_region
    _
  $region21: #{resnet18_dense_forward.36} parent=0 // pred_fallthru
    _

// kernel: resnet18_dense_forward.35
$region0: #{resnet18_dense_forward.35}
  #allocation0 [shape = 'u32[]', space=smem, size = 0x4, offset = 0x4, fixed_abs, tag = 'smem constant byte address 0x4 - core index']
  #allocation1 [shape = 'u32[144,128]{1,0:T(1,128)}', space=vmem, size = 0x12000, scoped, tag = 'internal scratch']
  %s0 = inlined_call_operand.vmem [shape: bf16[32,576], index: 0, kind: input, shape index: {}]
  %s1 = inlined_call_operand.vmem [shape: bf16[576,128], index: 1, kind: input, shape index: {}]
  %s2 = inlined_call_operand.vmem [shape: f32[1,128], index: 2, kind: input, shape index: {}]
  %s3 = inlined_call_operand.vmem [shape: f32[32,128], index: 3, kind: input, shape index: {}]
  %s4 = inlined_call_operand.vmem [shape: f32[32,128], index: 4, kind: output, shape index: {}]
  %s5 = sld [smem:[#allocation0]]
  $region26: #{resnet18_dense_forward.35} parent=0
    _
  %s7 = ssub.s32 1, %s5
  %s8 = scalar_select 0, %s7, %s5
  // Predicated region
  $region2: #{resnet18_dense_forward.35} parent=0 // pred_check
    _
  $region3: #{resnet18_dense_forward.35} parent=0 // pred_check_branch
    %10 = sbr.rel (0) target = $region5
  $region4: #{resnet18_dense_forward.35} parent=0 // pred_region
    _
  $region5: #{resnet18_dense_forward.35} parent=0 // pred_fallthru
    _
  // Predicated region
  $region6: #{resnet18_dense_forward.35} parent=0 // pred_check
    _
  $region7: #{resnet18_dense_forward.35} parent=0 // pred_check_branch
    %12 = sbr.rel (0) target = $region9
  $region8: #{resnet18_dense_forward.35} parent=0 // pred_region
    _
  $region9: #{resnet18_dense_forward.35} parent=0 // pred_fallthru
    _
  // Predicated region
  $region10: #{resnet18_dense_forward.35} parent=0 // pred_check
    _
  $region11: #{resnet18_dense_forward.35} parent=0 // pred_check_branch
    %14 = sbr.rel (0) target = $region13
  $region12: #{resnet18_dense_forward.35} parent=0 // pred_region
    _
  $region13: #{resnet18_dense_forward.35} parent=0 // pred_fallthru
    _
  // Predicated region
  $region14: #{resnet18_dense_forward.35} parent=0 // pred_check
    _
  $region15: #{resnet18_dense_forward.35} parent=0 // pred_check_branch
    %16 = sbr.rel (0) target = $region17
  $region16: #{resnet18_dense_forward.35} parent=0 // pred_region
    _
  $region17: #{resnet18_dense_forward.35} parent=0 // pred_fallthru
    _
  %v18 = vld [vmem:[%s0] sm:$0xff]
  %v19 = vld [vmem:[%s0 + $0x8] sm:$0xff]
  %v20 = vld [vmem:[%s0 + $0x10] sm:$0xf]
  %v21 = vld [vmem:[%s0 + $0x14] sm:$0xff]
  %v22 = vld [vmem:[%s0 + $0x1c] sm:$0xff]
  %v23 = vld [vmem:[%s0 + $0x24] sm:$0xf]
  %v24 = vld [vmem:[%s0 + $0x28] sm:$0xff]
  %v25 = vld [vmem:[%s0 + $0x30] sm:$0xff]
  %v26 = vld [vmem:[%s0 + $0x38] sm:$0xf]
  %v27 = vld [vmem:[%s0 + $0x3c] sm:$0xff]
  %v28 = vld [vmem:[%s0 + $0x44] sm:$0xff]
  %v29 = vld [vmem:[%s0 + $0x4c] sm:$0xf]
  %v30 = vld [vmem:[%s1] sm:$0xf]
  %v31 = vld [vmem:[%s1 + $0x4] sm:$0xf]
  %v32 = vld [vmem:[%s1 + $0x8] sm:$0xf]
  %v33 = vld [vmem:[%s1 + $0xc] sm:$0xf]
  %v34 = vld [vmem:[%s1 + $0x10] sm:$0xf]
  %v35 = vld [vmem:[%s1 + $0x14] sm:$0xf]
  %v36 = vld [vmem:[%s1 + $0x18] sm:$0xf]
  %v37 = vld [vmem:[%s1 + $0x1c] sm:$0xf]
  %v38 = vld [vmem:[%s1 + $0x20] sm:$0xf]
  %v39 = vld [vmem:[%s1 + $0x24] sm:$0xf]
  %v40 = vld [vmem:[%s1 + $0x28] sm:$0xf]
  %v41 = vld [vmem:[%s1 + $0x2c] sm:$0xf]
  %v42 = vld [vmem:[%s1 + $0x30] sm:$0xf]
  %v43 = vld [vmem:[%s1 + $0x34] sm:$0xf]
  %v44 = vld [vmem:[%s1 + $0x38] sm:$0xf]
  %v45 = vld [vmem:[%s1 + $0x3c] sm:$0xf]
  %v46 = vld [vmem:[%s1 + $0x40] sm:$0xf]
  %v47 = vld [vmem:[%s1 + $0x44] sm:$0xf]
  %v48 = vld [vmem:[%s1 + $0x48] sm:$0xf]
  %v49 = vld [vmem:[%s1 + $0x4c] sm:$0xf]
  %v50 = vld [vmem:[%s1 + $0x50] sm:$0xf]
  %v51 = vld [vmem:[%s1 + $0x54] sm:$0xf]
  %v52 = vld [vmem:[%s1 + $0x58] sm:$0xf]
  %v53 = vld [vmem:[%s1 + $0x5c] sm:$0xf]
  %v54 = vld [vmem:[%s1 + $0x60] sm:$0xf]
  %v55 = vld [vmem:[%s1 + $0x64] sm:$0xf]
  %v56 = vld [vmem:[%s1 + $0x68] sm:$0xf]
  %v57 = vld [vmem:[%s1 + $0x6c] sm:$0xf]
  %v58 = vld [vmem:[%s1 + $0x70] sm:$0xf]
  %v59 = vld [vmem:[%s1 + $0x74] sm:$0xf]
  %v60 = vld [vmem:[%s1 + $0x78] sm:$0xf]
  %v61 = vld [vmem:[%s1 + $0x7c] sm:$0xf]
  %v62 = vld [vmem:[%s1 + $0x80] sm:$0xf]
  %v63 = vld [vmem:[%s1 + $0x84] sm:$0xf]
  %v64 = vld [vmem:[%s1 + $0x88] sm:$0xf]
  %v65 = vld [vmem:[%s1 + $0x8c] sm:$0xf]
  %v66 = vld [vmem:[%s1 + $0x90] sm:$0xf]
  %v67 = vld [vmem:[%s1 + $0x94] sm:$0xf]
  %v68 = vld [vmem:[%s1 + $0x98] sm:$0xf]
  %v69 = vld [vmem:[%s1 + $0x9c] sm:$0xf]
  %v70 = vld [vmem:[%s1 + $0xa0] sm:$0xf]
  %v71 = vld [vmem:[%s1 + $0xa4] sm:$0xf]
  %v72 = vld [vmem:[%s1 + $0xa8] sm:$0xf]
  %v73 = vld [vmem:[%s1 + $0xac] sm:$0xf]
  %v74 = vld [vmem:[%s1 + $0xb0] sm:$0xf]
  %v75 = vld [vmem:[%s1 + $0xb4] sm:$0xf]
  %v76 = vld [vmem:[%s1 + $0xb8] sm:$0xf]
  %v77 = vld [vmem:[%s1 + $0xbc] sm:$0xf]
  %v78 = vld [vmem:[%s1 + $0xc0] sm:$0xf]
  %v79 = vld [vmem:[%s1 + $0xc4] sm:$0xf]
  %v80 = vld [vmem:[%s1 + $0xc8] sm:$0xf]
  %v81 = vld [vmem:[%s1 + $0xcc] sm:$0xf]
  %v82 = vld [vmem:[%s1 + $0xd0] sm:$0xf]
  %v83 = vld [vmem:[%s1 + $0xd4] sm:$0xf]
  %v84 = vld [vmem:[%s1 + $0xd8] sm:$0xf]
  %v85 = vld [vmem:[%s1 + $0xdc] sm:$0xf]
  %v86 = vld [vmem:[%s1 + $0xe0] sm:$0xf]
  %v87 = vld [vmem:[%s1 + $0xe4] sm:$0xf]
  %v88 = vld [vmem:[%s1 + $0xe8] sm:$0xf]
  %v89 = vld [vmem:[%s1 + $0xec] sm:$0xf]
  %v90 = vld [vmem:[%s1 + $0xf0] sm:$0xf]
  %v91 = vld [vmem:[%s1 + $0xf4] sm:$0xf]
  %v92 = vld [vmem:[%s1 + $0xf8] sm:$0xf]
  %v93 = vld [vmem:[%s1 + $0xfc] sm:$0xf]
  %v94 = vld [vmem:[%s1 + $0x100] sm:$0xf]
  %v95 = vld [vmem:[%s1 + $0x104] sm:$0xf]
  %v96 = vld [vmem:[%s1 + $0x108] sm:$0xf]
  %v97 = vld [vmem:[%s1 + $0x10c] sm:$0xf]
  %v98 = vld [vmem:[%s1 + $0x110] sm:$0xf]
  %v99 = vld [vmem:[%s1 + $0x114] sm:$0xf]
  %v100 = vld [vmem:[%s1 + $0x118] sm:$0xf]
  %v101 = vld [vmem:[%s1 + $0x11c] sm:$0xf]
  %v102 = vld [vmem:[%s2] sm:$0x1]
  %v104 = vlaneseq
  %v105 = vshrl.u32 %v104, 7
  %v106 = vsub.s32 0, %v105
  %v107 = vrot.slane %v102, %v106
  %v121 = vunpack.c.l.b16 %v18
  %v122 = vunpack.c.h.b16 %v18
  %v123 = vunpack.c.l.b16 %v19
  %v124 = vunpack.c.h.b16 %v19
  %v125 = vunpack.c.l.b16 %v20
  %v126 = vunpack.c.l.b16 %v21
  %v127 = vunpack.c.h.b16 %v21
  %v128 = vunpack.c.l.b16 %v22
  %v129 = vunpack.c.h.b16 %v22
  %v130 = vunpack.c.l.b16 %v23
  %v131 = vunpack.c.l.b16 %v24
  %v132 = vunpack.c.h.b16 %v24
  %v133 = vunpack.c.l.b16 %v25
  %v134 = vunpack.c.h.b16 %v25
  %v135 = vunpack.c.l.b16 %v26
  %v136 = vunpack.c.l.b16 %v27
  %v137 = vunpack.c.h.b16 %v27
  %v138 = vunpack.c.l.b16 %v28
  %v139 = vunpack.c.h.b16 %v28
  %v140 = vunpack.c.l.b16 %v29
  %v141 = vpack.c.b16 %v126, %v121
  %v142 = vpack.c.b16 %v127, %v122
  %v143 = vpack.c.b16 %v128, %v123
  %v144 = vpack.c.b16 %v129, %v124
  %v145 = vpack.c.b16 %v130, %v125
  %v146 = vpack.c.b16 %v136, %v131
  %v147 = vpack.c.b16 %v137, %v132
  %v148 = vpack.c.b16 %v138, %v133
  %v149 = vpack.c.b16 %v139, %v134
  %v150 = vpack.c.b16 %v140, %v135
  %v231 = vunpack.c.l.b16 %v30
  %v232 = vunpack.c.l.b16 %v31
  %v233 = vunpack.c.l.b16 %v32
  %v234 = vunpack.c.l.b16 %v33
  %v235 = vunpack.c.l.b16 %v34
  %v236 = vunpack.c.l.b16 %v35
  %v237 = vunpack.c.l.b16 %v36
  %v238 = vunpack.c.l.b16 %v37
  %v239 = vunpack.c.l.b16 %v38
  %v240 = vunpack.c.l.b16 %v39
  %v241 = vunpack.c.l.b16 %v40
  %v242 = vunpack.c.l.b16 %v41
  %v243 = vunpack.c.l.b16 %v42
  %v244 = vunpack.c.l.b16 %v43
  %v245 = vunpack.c.l.b16 %v44
  %v246 = vunpack.c.l.b16 %v45
  %v247 = vunpack.c.l.b16 %v46
  %v248 = vunpack.c.l.b16 %v47
  %v249 = vunpack.c.l.b16 %v48
  %v250 = vunpack.c.l.b16 %v49
  %v251 = vunpack.c.l.b16 %v50
  %v252 = vunpack.c.l.b16 %v51
  %v253 = vunpack.c.l.b16 %v52
  %v254 = vunpack.c.l.b16 %v53
  %v255 = vunpack.c.l.b16 %v54
  %v256 = vunpack.c.l.b16 %v55
  %v257 = vunpack.c.l.b16 %v56
  %v258 = vunpack.c.l.b16 %v57
  %v259 = vunpack.c.l.b16 %v58
  %v260 = vunpack.c.l.b16 %v59
  %v261 = vunpack.c.l.b16 %v60
  %v262 = vunpack.c.l.b16 %v61
  %v263 = vunpack.c.l.b16 %v62
  %v264 = vunpack.c.l.b16 %v63
  %v265 = vunpack.c.l.b16 %v64
  %v266 = vunpack.c.l.b16 %v65
  %v267 = vunpack.c.l.b16 %v66
  %v268 = vunpack.c.l.b16 %v67
  %v269 = vunpack.c.l.b16 %v68
  %v270 = vunpack.c.l.b16 %v69
  %v271 = vunpack.c.l.b16 %v70
  %v272 = vunpack.c.l.b16 %v71
  %v273 = vunpack.c.l.b16 %v72
  %v274 = vunpack.c.l.b16 %v73
  %v275 = vunpack.c.l.b16 %v74
  %v276 = vunpack.c.l.b16 %v75
  %v277 = vunpack.c.l.b16 %v76
  %v278 = vunpack.c.l.b16 %v77
  %v279 = vunpack.c.l.b16 %v78
  %v280 = vunpack.c.l.b16 %v79
  %v281 = vunpack.c.l.b16 %v80
  %v282 = vunpack.c.l.b16 %v81
  %v283 = vunpack.c.l.b16 %v82
  %v284 = vunpack.c.l.b16 %v83
  %v285 = vunpack.c.l.b16 %v84
  %v286 = vunpack.c.l.b16 %v85
  %v287 = vunpack.c.l.b16 %v86
  %v288 = vunpack.c.l.b16 %v87
  %v289 = vunpack.c.l.b16 %v88
  %v290 = vunpack.c.l.b16 %v89
  %v291 = vunpack.c.l.b16 %v90
  %v292 = vunpack.c.l.b16 %v91
  %v293 = vunpack.c.l.b16 %v92
  %v294 = vunpack.c.l.b16 %v93
  %v295 = vunpack.c.l.b16 %v94
  %v296 = vunpack.c.l.b16 %v95
  %v297 = vunpack.c.l.b16 %v96
  %v298 = vunpack.c.l.b16 %v97
  %v299 = vunpack.c.l.b16 %v98
  %v300 = vunpack.c.l.b16 %v99
  %v301 = vunpack.c.l.b16 %v100
  %v302 = vunpack.c.l.b16 %v101
  %v303 = vpack.c.b16 %v232, %v231
  %v304 = vpack.c.b16 %v234, %v233
  %v305 = vpack.c.b16 %v236, %v235
  %v306 = vpack.c.b16 %v238, %v237
  %v307 = vpack.c.b16 %v240, %v239
  %v308 = vpack.c.b16 %v242, %v241
  %v309 = vpack.c.b16 %v244, %v243
  %v310 = vpack.c.b16 %v246, %v245
  %v311 = vpack.c.b16 %v248, %v247
  %v312 = vpack.c.b16 %v250, %v249
  %v313 = vpack.c.b16 %v252, %v251
  %v314 = vpack.c.b16 %v254, %v253
  %v315 = vpack.c.b16 %v256, %v255
  %v316 = vpack.c.b16 %v258, %v257
  %v317 = vpack.c.b16 %v260, %v259
  %v318 = vpack.c.b16 %v262, %v261
  %v319 = vpack.c.b16 %v264, %v263
  %v320 = vpack.c.b16 %v266, %v265
  %v321 = vpack.c.b16 %v268, %v267
  %v322 = vpack.c.b16 %v270, %v269
  %v323 = vpack.c.b16 %v272, %v271
  %v324 = vpack.c.b16 %v274, %v273
  %v325 = vpack.c.b16 %v276, %v275
  %v326 = vpack.c.b16 %v278, %v277
  %v327 = vpack.c.b16 %v280, %v279
  %v328 = vpack.c.b16 %v282, %v281
  %v329 = vpack.c.b16 %v284, %v283
  %v330 = vpack.c.b16 %v286, %v285
  %v331 = vpack.c.b16 %v288, %v287
  %v332 = vpack.c.b16 %v290, %v289
  %v333 = vpack.c.b16 %v292, %v291
  %v334 = vpack.c.b16 %v294, %v293
  %v335 = vpack.c.b16 %v296, %v295
  %v336 = vpack.c.b16 %v298, %v297
  %v337 = vpack.c.b16 %v300, %v299
  %v338 = vpack.c.b16 %v302, %v301
  %vm375 = vcmask 523264
  %v377 = vsel %vm375, %v145, 0
  %v380 = vsel %vm375, %v150, 0
  %382 = vmatprep.subr.bf16.mxu0 0
  %383 = vmatpush1.bf16.msra.mxu0 %v303
  %384 = vmatprep.subr.bf16.mxu0 0
  %385 = vmatpush1.bf16.msra.mxu0 %v304
  %386 = vmatprep.subr.bf16.mxu0 0
  %387 = vmatpush1.bf16.msra.mxu0 %v305
  %388 = vmatprep.subr.bf16.mxu0 0
  %389 = vmatpush1.bf16.msra.mxu0 %v306
  %390 = vmatprep.subr.bf16.mxu0 0
  %391 = vmatpush1.bf16.msra.mxu0 %v307
  %392 = vmatprep.subr.bf16.mxu0 0
  %393 = vmatpush1.bf16.msra.mxu0 %v308
  %394 = vmatprep.subr.bf16.mxu0 0
  %395 = vmatpush1.bf16.msra.mxu0 %v309
  %396 = vmatprep.subr.bf16.mxu0 0
  %397 = vmatpush1.bf16.msra.mxu0 %v310
  %398 = vmatprep.subr.bf16.mxu0 0
  %399 = vmatpush1.bf16.msra.mxu0 %v311
  %400 = vmatprep.subr.bf16.mxu0 0
  %401 = vmatpush1.bf16.msra.mxu0 %v312
  %402 = vmatprep.subr.bf16.mxu0 0
  %403 = vmatpush1.bf16.msra.mxu0 %v313
  %404 = vmatprep.subr.bf16.mxu0 0
  %405 = vmatpush1.bf16.msra.mxu0 %v314
  %406 = vmatprep.subr.bf16.mxu0 0
  %407 = vmatpush1.bf16.msra.mxu0 %v315
  %408 = vmatprep.subr.bf16.mxu0 0
  %409 = vmatpush1.bf16.msra.mxu0 %v316
  %410 = vmatprep.subr.bf16.mxu0 0
  %411 = vmatpush1.bf16.msra.mxu0 %v317
  %412 = vmatprep.subr.bf16.mxu0 0
  %413 = vmatpush1.bf16.msra.mxu0 %v318
  %414 = vmatprep.mubr.bf16.mxu0 %v142
  %415 = vmatmul.mubr.bf16.gmra.mrb[0].mxu0 %v141
  %v416 = vpop.f32.mrb[0].mxu0
  %v417 = vadd.f32 %v107, %v416
  %v418 = vpop.f32.mrb[0].mxu0
  %v419 = vpop.f32.mrb[0].mxu0
  %v420 = vadd.f32 %v107, %v419
  %v421 = vpop.f32.mrb[0].mxu0
  %422 = vmatprep.mubr.bf16.mxu0 %v147
  %423 = vmatmul.mubr.bf16.gmra.mrb[0].mxu0 %v146
  %v424 = vpop.f32.mrb[0].mxu0
  %v425 = vadd.f32 %v107, %v424
  %v426 = vpop.f32.mrb[0].mxu0
  %v427 = vpop.f32.mrb[0].mxu0
  %v428 = vadd.f32 %v107, %v427
  %v429 = vpop.f32.mrb[0].mxu0
  %430 = vdwg.mxu0
  %431 = vmatprep.subr.bf16.mxu0 0
  %432 = vmatpush1.bf16.msra.mxu0 %v319
  %433 = vmatprep.subr.bf16.mxu0 0
  %434 = vmatpush1.bf16.msra.mxu0 %v320
  %435 = vmatprep.subr.bf16.mxu0 0
  %436 = vmatpush1.bf16.msra.mxu0 %v321
  %437 = vmatprep.subr.bf16.mxu0 0
  %438 = vmatpush1.bf16.msra.mxu0 %v322
  %439 = vmatprep.subr.bf16.mxu0 0
  %440 = vmatpush1.bf16.msra.mxu0 %v323
  %441 = vmatprep.subr.bf16.mxu0 0
  %442 = vmatpush1.bf16.msra.mxu0 %v324
  %443 = vmatprep.subr.bf16.mxu0 0
  %444 = vmatpush1.bf16.msra.mxu0 %v325
  %445 = vmatprep.subr.bf16.mxu0 0
  %446 = vmatpush1.bf16.msra.mxu0 %v326
  %447 = vmatprep.subr.bf16.mxu0 0
  %448 = vmatpush1.bf16.msra.mxu0 %v327
  %449 = vmatprep.subr.bf16.mxu0 0
  %450 = vmatpush1.bf16.msra.mxu0 %v328
  %451 = vmatprep.subr.bf16.mxu0 0
  %452 = vmatpush1.bf16.msra.mxu0 %v329
  %453 = vmatprep.subr.bf16.mxu0 0
  %454 = vmatpush1.bf16.msra.mxu0 %v330
  %455 = vmatprep.subr.bf16.mxu0 0
  %456 = vmatpush1.bf16.msra.mxu0 %v331
  %457 = vmatprep.subr.bf16.mxu0 0
  %458 = vmatpush1.bf16.msra.mxu0 %v332
  %459 = vmatprep.subr.bf16.mxu0 0
  %460 = vmatpush1.bf16.msra.mxu0 %v333
  %461 = vmatprep.subr.bf16.mxu0 0
  %462 = vmatpush1.bf16.msra.mxu0 %v334
  %463 = vmatprep.mubr.bf16.mxu0 %v144
  %464 = vmatmul.mubr.bf16.gmra.mrb[0].mxu0 %v143
  %v465 = vpop.f32.mrb[0].mxu0
  %v466 = vadd.f32 %v417, %v465
  %v467 = vpop.f32.mrb[0].mxu0
  %v468 = vpop.f32.mrb[0].mxu0
  %v469 = vadd.f32 %v420, %v468
  %v470 = vpop.f32.mrb[0].mxu0
  %471 = vmatprep.mubr.bf16.mxu0 %v149
  %472 = vmatmul.mubr.bf16.gmra.mrb[0].mxu0 %v148
  %v473 = vpop.f32.mrb[0].mxu0
  %v474 = vadd.f32 %v425, %v473
  %v475 = vpop.f32.mrb[0].mxu0
  %v476 = vpop.f32.mrb[0].mxu0
  %v477 = vadd.f32 %v428, %v476
  %v478 = vpop.f32.mrb[0].mxu0
  %479 = vdwg.mxu0
  %480 = vmatprep.subr.bf16.mxu0 0
  %481 = vmatpush1.bf16.msra.mxu0 %v335
  %482 = vmatprep.subr.bf16.mxu0 0
  %483 = vmatpush1.bf16.msra.mxu0 %v336
  %484 = vmatprep.subr.bf16.mxu0 0
  %485 = vmatpush1.bf16.msra.mxu0 %v337
  %486 = vmatprep.subr.bf16.mxu0 0
  %487 = vmatpush1.bf16.msra.mxu0 %v338
  %488 = vmatprep.subr.bf16.mxu0 0
  %489 = vmatpush1.bf16.msra.mxu0 0
  %490 = vmatprep.subr.bf16.mxu0 0
  %491 = vmatpush1.bf16.msra.mxu0 0
  %492 = vmatprep.subr.bf16.mxu0 0
  %493 = vmatpush1.bf16.msra.mxu0 0
  %494 = vmatprep.subr.bf16.mxu0 0
  %495 = vmatpush1.bf16.msra.mxu0 0
  %496 = vmatprep.subr.bf16.mxu0 0
  %497 = vmatpush1.bf16.msra.mxu0 0
  %498 = vmatprep.subr.bf16.mxu0 0
  %499 = vmatpush1.bf16.msra.mxu0 0
  %500 = vmatprep.subr.bf16.mxu0 0
  %501 = vmatpush1.bf16.msra.mxu0 0
  %502 = vmatprep.subr.bf16.mxu0 0
  %503 = vmatpush1.bf16.msra.mxu0 0
  %504 = vmatprep.subr.bf16.mxu0 0
  %505 = vmatpush1.bf16.msra.mxu0 0
  %506 = vmatprep.subr.bf16.mxu0 0
  %507 = vmatpush1.bf16.msra.mxu0 0
  %508 = vmatprep.subr.bf16.mxu0 0
  %509 = vmatpush1.bf16.msra.mxu0 0
  %510 = vmatprep.subr.bf16.mxu0 0
  %511 = vmatpush1.bf16.msra.mxu0 0
  %512 = vmatprep.mubr.bf16.mxu0 0
  %513 = vmatmul.mubr.bf16.gmra.mrb[0].mxu0 %v377
  %v514 = vpop.f32.mrb[0].mxu0
  %v515 = vadd.f32 %v466, %v514
  %v516 = vpop.f32.mrb[0].mxu0
  %v517 = vpop.f32.mrb[0].mxu0
  %v518 = vadd.f32 %v469, %v517
  %v519 = vpop.f32.mrb[0].mxu0
  %520 = vmatprep.mubr.bf16.mxu0 0
  %521 = vmatmul.mubr.bf16.gmra.mrb[0].mxu0 %v380
  %v522 = vpop.f32.mrb[0].mxu0
  %v523 = vadd.f32 %v474, %v522
  %v524 = vpop.f32.mrb[0].mxu0
  %v525 = vpop.f32.mrb[0].mxu0
  %v526 = vadd.f32 %v477, %v525
  %v527 = vpop.f32.mrb[0].mxu0
  %528 = vdwg.mxu0
  %v529 = vld [vmem:[%s3] sm:$0xff]
  %v530 = vld [vmem:[%s3 + $0x8] sm:$0xff]
  %v531 = vld [vmem:[%s3 + $0x10] sm:$0xff]
  %v532 = vld [vmem:[%s3 + $0x18] sm:$0xff]
  %v533 = vadd.f32 %v515, %v529
  %v534 = vadd.f32 %v518, %v530
  %v535 = vadd.f32 %v523, %v531
  %v536 = vadd.f32 %v526, %v532
  %v537 = vmax.f32 %v533, 0.0
  %v538 = vmax.f32 %v534, 0.0
  %v539 = vmax.f32 %v535, 0.0
  %v540 = vmax.f32 %v536, 0.0
  %541 = vst [vmem:[%s4] sm:$0xff] %v537
  %542 = vst [vmem:[%s4 + $0x8] sm:$0xff] %v538
  %543 = vst [vmem:[%s4 + $0x10] sm:$0xff] %v539
  %544 = vst [vmem:[%s4 + $0x18] sm:$0xff] %v540
  // Predicated region
  $region18: #{resnet18_dense_forward.35} parent=0 // pred_check
    _
  $region19: #{resnet18_dense_forward.35} parent=0 // pred_check_branch
    %546 = sbr.rel (0) target = $region21
  $region20: #{resnet18_dense_forward.35} parent=0 // pred_region
    _
  $region21: #{resnet18_dense_forward.35} parent=0 // pred_fallthru
    _
  // Predicated region
  $region22: #{resnet18_dense_forward.35} parent=0 // pred_check
    _
  $region23: #{resnet18_dense_forward.35} parent=0 // pred_check_branch
    %548 = sbr.rel (0) target = $region25
  $region24: #{resnet18_dense_forward.35} parent=0 // pred_region
    _
  $region25: #{resnet18_dense_forward.35} parent=0 // pred_fallthru
    _

// kernel: resnet18_dense_forward.39
$region0: #{resnet18_dense_forward.39}
  #allocation0 [shape = 'u32[]', space=smem, size = 0x4, offset = 0x4, fixed_abs, tag = 'smem constant byte address 0x4 - core index']
  #allocation1 [shape = 'u32[144,128]{1,0:T(1,128)}', space=vmem, size = 0x12000, scoped, tag = 'internal scratch']
  %s0 = inlined_call_operand.vmem [shape: bf16[8,64], index: 0, kind: input, shape index: {}]
  %s1 = inlined_call_operand.vmem [shape: bf16[64,128], index: 1, kind: input, shape index: {}]
  %s2 = inlined_call_operand.vmem [shape: f32[1,128], index: 2, kind: input, shape index: {}]
  %s3 = inlined_call_operand.vmem [shape: f32[8,128], index: 3, kind: output, shape index: {}]
  %s4 = sld [smem:[#allocation0]]
  $region22: #{resnet18_dense_forward.39} parent=0
    _
  %s6 = ssub.s32 1, %s4
  %s7 = scalar_select 0, %s6, %s4
  // Predicated region
  $region2: #{resnet18_dense_forward.39} parent=0 // pred_check
    _
  $region3: #{resnet18_dense_forward.39} parent=0 // pred_check_branch
    %9 = sbr.rel (0) target = $region5
  $region4: #{resnet18_dense_forward.39} parent=0 // pred_region
    _
  $region5: #{resnet18_dense_forward.39} parent=0 // pred_fallthru
    _
  // Predicated region
  $region6: #{resnet18_dense_forward.39} parent=0 // pred_check
    _
  $region7: #{resnet18_dense_forward.39} parent=0 // pred_check_branch
    %11 = sbr.rel (0) target = $region9
  $region8: #{resnet18_dense_forward.39} parent=0 // pred_region
    _
  $region9: #{resnet18_dense_forward.39} parent=0 // pred_fallthru
    _
  // Predicated region
  $region10: #{resnet18_dense_forward.39} parent=0 // pred_check
    _
  $region11: #{resnet18_dense_forward.39} parent=0 // pred_check_branch
    %13 = sbr.rel (0) target = $region13
  $region12: #{resnet18_dense_forward.39} parent=0 // pred_region
    _
  $region13: #{resnet18_dense_forward.39} parent=0 // pred_fallthru
    _
  %v15 = vld [vmem:[%s0] sm:$0xf]
  %v16 = vld [vmem:[%s1] sm:$0xf]
  %v17 = vld [vmem:[%s1 + $0x4] sm:$0xf]
  %v18 = vld [vmem:[%s1 + $0x8] sm:$0xf]
  %v19 = vld [vmem:[%s1 + $0xc] sm:$0xf]
  %v20 = vld [vmem:[%s1 + $0x10] sm:$0xf]
  %v21 = vld [vmem:[%s1 + $0x14] sm:$0xf]
  %v22 = vld [vmem:[%s1 + $0x18] sm:$0xf]
  %v23 = vld [vmem:[%s1 + $0x1c] sm:$0xf]
  %v24 = vld [vmem:[%s2] sm:$0x1]
  %v26 = vlaneseq
  %v27 = vshrl.u32 %v26, 7
  %v28 = vsub.s32 0, %v27
  %v29 = vrot.slane %v24, %v28
  %v39 = vunpack.c.l.b16 %v16
  %v40 = vunpack.c.l.b16 %v17
  %v41 = vunpack.c.l.b16 %v18
  %v42 = vunpack.c.l.b16 %v19
  %v43 = vunpack.c.l.b16 %v20
  %v44 = vunpack.c.l.b16 %v21
  %v45 = vunpack.c.l.b16 %v22
  %v46 = vunpack.c.l.b16 %v23
  %v47 = vpack.c.b16 %v40, %v39
  %v48 = vpack.c.b16 %v42, %v41
  %v49 = vpack.c.b16 %v44, %v43
  %v50 = vpack.c.b16 %v46, %v45
  %vm55 = vcmask 523264
  %v57 = vsel %vm55, %v15, 0
  %59 = vmatprep.subr.bf16.mxu0 0
  %60 = vmatpush1.bf16.msra.mxu0 %v47
  %61 = vmatprep.subr.bf16.mxu0 0
  %62 = vmatpush1.bf16.msra.mxu0 %v48
  %63 = vmatprep.subr.bf16.mxu0 0
  %64 = vmatpush1.bf16.msra.mxu0 %v49
  %65 = vmatprep.subr.bf16.mxu0 0
  %66 = vmatpush1.bf16.msra.mxu0 %v50
  %67 = vmatprep.subr.bf16.mxu0 0
  %68 = vmatpush1.bf16.msra.mxu0 0
  %69 = vmatprep.subr.bf16.mxu0 0
  %70 = vmatpush1.bf16.msra.mxu0 0
  %71 = vmatprep.subr.bf16.mxu0 0
  %72 = vmatpush1.bf16.msra.mxu0 0
  %73 = vmatprep.subr.bf16.mxu0 0
  %74 = vmatpush1.bf16.msra.mxu0 0
  %75 = vmatprep.subr.bf16.mxu0 0
  %76 = vmatpush1.bf16.msra.mxu0 0
  %77 = vmatprep.subr.bf16.mxu0 0
  %78 = vmatpush1.bf16.msra.mxu0 0
  %79 = vmatprep.subr.bf16.mxu0 0
  %80 = vmatpush1.bf16.msra.mxu0 0
  %81 = vmatprep.subr.bf16.mxu0 0
  %82 = vmatpush1.bf16.msra.mxu0 0
  %83 = vmatprep.subr.bf16.mxu0 0
  %84 = vmatpush1.bf16.msra.mxu0 0
  %85 = vmatprep.subr.bf16.mxu0 0
  %86 = vmatpush1.bf16.msra.mxu0 0
  %87 = vmatprep.subr.bf16.mxu0 0
  %88 = vmatpush1.bf16.msra.mxu0 0
  %89 = vmatprep.subr.bf16.mxu0 0
  %90 = vmatpush1.bf16.msra.mxu0 0
  %91 = vmatprep.mubr.bf16.mxu0 0
  %92 = vmatmul.mubr.bf16.gmra.mrb[0].mxu0 %v57
  %v93 = vpop.f32.mrb[0].mxu0
  %v94 = vadd.f32 %v29, %v93
  %v95 = vpop.f32.mrb[0].mxu0
  %v96 = vpop.f32.mrb[0].mxu0
  %v97 = vpop.f32.mrb[0].mxu0
  %98 = vdwg.mxu0
  %99 = vst [vmem:[%s3] sm:$0xff] %v94
  // Predicated region
  $region14: #{resnet18_dense_forward.39} parent=0 // pred_check
    _
  $region15: #{resnet18_dense_forward.39} parent=0 // pred_check_branch
    %101 = sbr.rel (0) target = $region17
  $region16: #{resnet18_dense_forward.39} parent=0 // pred_region
    _
  $region17: #{resnet18_dense_forward.39} parent=0 // pred_fallthru
    _
  // Predicated region
  $region18: #{resnet18_dense_forward.39} parent=0 // pred_check
    _
  $region19: #{resnet18_dense_forward.39} parent=0 // pred_check_branch
    %103 = sbr.rel (0) target = $region21
  $region20: #{resnet18_dense_forward.39} parent=0 // pred_region
    _
  $region21: #{resnet18_dense_forward.39} parent=0 // pred_fallthru
    _

// kernel: resnet18_dense_forward.38
$region0: #{resnet18_dense_forward.38}
  #allocation0 [shape = 'u32[]', space=smem, size = 0x4, offset = 0x4, fixed_abs, tag = 'smem constant byte address 0x4 - core index']
  #allocation1 [shape = 'u32[144,128]{1,0:T(1,128)}', space=vmem, size = 0x12000, scoped, tag = 'internal scratch']
  %s0 = inlined_call_operand.vmem [shape: bf16[8,576], index: 0, kind: input, shape index: {}]
  %s1 = inlined_call_operand.vmem [shape: bf16[576,128], index: 1, kind: input, shape index: {}]
  %s2 = inlined_call_operand.vmem [shape: f32[1,128], index: 2, kind: input, shape index: {}]
  %s3 = inlined_call_operand.vmem [shape: f32[8,128], index: 3, kind: output, shape index: {}]
  %s4 = sld [smem:[#allocation0]]
  $region22: #{resnet18_dense_forward.38} parent=0
    _
  %s6 = ssub.s32 1, %s4
  %s7 = scalar_select 0, %s6, %s4
  // Predicated region
  $region2: #{resnet18_dense_forward.38} parent=0 // pred_check
    _
  $region3: #{resnet18_dense_forward.38} parent=0 // pred_check_branch
    %9 = sbr.rel (0) target = $region5
  $region4: #{resnet18_dense_forward.38} parent=0 // pred_region
    _
  $region5: #{resnet18_dense_forward.38} parent=0 // pred_fallthru
    _
  // Predicated region
  $region6: #{resnet18_dense_forward.38} parent=0 // pred_check
    _
  $region7: #{resnet18_dense_forward.38} parent=0 // pred_check_branch
    %11 = sbr.rel (0) target = $region9
  $region8: #{resnet18_dense_forward.38} parent=0 // pred_region
    _
  $region9: #{resnet18_dense_forward.38} parent=0 // pred_fallthru
    _
  // Predicated region
  $region10: #{resnet18_dense_forward.38} parent=0 // pred_check
    _
  $region11: #{resnet18_dense_forward.38} parent=0 // pred_check_branch
    %13 = sbr.rel (0) target = $region13
  $region12: #{resnet18_dense_forward.38} parent=0 // pred_region
    _
  $region13: #{resnet18_dense_forward.38} parent=0 // pred_fallthru
    _
  %v15 = vld [vmem:[%s0] sm:$0xff]
  %v16 = vld [vmem:[%s0 + $0x8] sm:$0xff]
  %v17 = vld [vmem:[%s0 + $0x10] sm:$0xf]
  %v18 = vld [vmem:[%s1] sm:$0xf]
  %v19 = vld [vmem:[%s1 + $0x4] sm:$0xf]
  %v20 = vld [vmem:[%s1 + $0x8] sm:$0xf]
  %v21 = vld [vmem:[%s1 + $0xc] sm:$0xf]
  %v22 = vld [vmem:[%s1 + $0x10] sm:$0xf]
  %v23 = vld [vmem:[%s1 + $0x14] sm:$0xf]
  %v24 = vld [vmem:[%s1 + $0x18] sm:$0xf]
  %v25 = vld [vmem:[%s1 + $0x1c] sm:$0xf]
  %v26 = vld [vmem:[%s1 + $0x20] sm:$0xf]
  %v27 = vld [vmem:[%s1 + $0x24] sm:$0xf]
  %v28 = vld [vmem:[%s1 + $0x28] sm:$0xf]
  %v29 = vld [vmem:[%s1 + $0x2c] sm:$0xf]
  %v30 = vld [vmem:[%s1 + $0x30] sm:$0xf]
  %v31 = vld [vmem:[%s1 + $0x34] sm:$0xf]
  %v32 = vld [vmem:[%s1 + $0x38] sm:$0xf]
  %v33 = vld [vmem:[%s1 + $0x3c] sm:$0xf]
  %v34 = vld [vmem:[%s1 + $0x40] sm:$0xf]
  %v35 = vld [vmem:[%s1 + $0x44] sm:$0xf]
  %v36 = vld [vmem:[%s1 + $0x48] sm:$0xf]
  %v37 = vld [vmem:[%s1 + $0x4c] sm:$0xf]
  %v38 = vld [vmem:[%s1 + $0x50] sm:$0xf]
  %v39 = vld [vmem:[%s1 + $0x54] sm:$0xf]
  %v40 = vld [vmem:[%s1 + $0x58] sm:$0xf]
  %v41 = vld [vmem:[%s1 + $0x5c] sm:$0xf]
  %v42 = vld [vmem:[%s1 + $0x60] sm:$0xf]
  %v43 = vld [vmem:[%s1 + $0x64] sm:$0xf]
  %v44 = vld [vmem:[%s1 + $0x68] sm:$0xf]
  %v45 = vld [vmem:[%s1 + $0x6c] sm:$0xf]
  %v46 = vld [vmem:[%s1 + $0x70] sm:$0xf]
  %v47 = vld [vmem:[%s1 + $0x74] sm:$0xf]
  %v48 = vld [vmem:[%s1 + $0x78] sm:$0xf]
  %v49 = vld [vmem:[%s1 + $0x7c] sm:$0xf]
  %v50 = vld [vmem:[%s1 + $0x80] sm:$0xf]
  %v51 = vld [vmem:[%s1 + $0x84] sm:$0xf]
  %v52 = vld [vmem:[%s1 + $0x88] sm:$0xf]
  %v53 = vld [vmem:[%s1 + $0x8c] sm:$0xf]
  %v54 = vld [vmem:[%s1 + $0x90] sm:$0xf]
  %v55 = vld [vmem:[%s1 + $0x94] sm:$0xf]
  %v56 = vld [vmem:[%s1 + $0x98] sm:$0xf]
  %v57 = vld [vmem:[%s1 + $0x9c] sm:$0xf]
  %v58 = vld [vmem:[%s1 + $0xa0] sm:$0xf]
  %v59 = vld [vmem:[%s1 + $0xa4] sm:$0xf]
  %v60 = vld [vmem:[%s1 + $0xa8] sm:$0xf]
  %v61 = vld [vmem:[%s1 + $0xac] sm:$0xf]
  %v62 = vld [vmem:[%s1 + $0xb0] sm:$0xf]
  %v63 = vld [vmem:[%s1 + $0xb4] sm:$0xf]
  %v64 = vld [vmem:[%s1 + $0xb8] sm:$0xf]
  %v65 = vld [vmem:[%s1 + $0xbc] sm:$0xf]
  %v66 = vld [vmem:[%s1 + $0xc0] sm:$0xf]
  %v67 = vld [vmem:[%s1 + $0xc4] sm:$0xf]
  %v68 = vld [vmem:[%s1 + $0xc8] sm:$0xf]
  %v69 = vld [vmem:[%s1 + $0xcc] sm:$0xf]
  %v70 = vld [vmem:[%s1 + $0xd0] sm:$0xf]
  %v71 = vld [vmem:[%s1 + $0xd4] sm:$0xf]
  %v72 = vld [vmem:[%s1 + $0xd8] sm:$0xf]
  %v73 = vld [vmem:[%s1 + $0xdc] sm:$0xf]
  %v74 = vld [vmem:[%s1 + $0xe0] sm:$0xf]
  %v75 = vld [vmem:[%s1 + $0xe4] sm:$0xf]
  %v76 = vld [vmem:[%s1 + $0xe8] sm:$0xf]
  %v77 = vld [vmem:[%s1 + $0xec] sm:$0xf]
  %v78 = vld [vmem:[%s1 + $0xf0] sm:$0xf]
  %v79 = vld [vmem:[%s1 + $0xf4] sm:$0xf]
  %v80 = vld [vmem:[%s1 + $0xf8] sm:$0xf]
  %v81 = vld [vmem:[%s1 + $0xfc] sm:$0xf]
  %v82 = vld [vmem:[%s1 + $0x100] sm:$0xf]
  %v83 = vld [vmem:[%s1 + $0x104] sm:$0xf]
  %v84 = vld [vmem:[%s1 + $0x108] sm:$0xf]
  %v85 = vld [vmem:[%s1 + $0x10c] sm:$0xf]
  %v86 = vld [vmem:[%s1 + $0x110] sm:$0xf]
  %v87 = vld [vmem:[%s1 + $0x114] sm:$0xf]
  %v88 = vld [vmem:[%s1 + $0x118] sm:$0xf]
  %v89 = vld [vmem:[%s1 + $0x11c] sm:$0xf]
  %v90 = vld [vmem:[%s2] sm:$0x1]
  %v92 = vlaneseq
  %v93 = vshrl.u32 %v92, 7
  %v94 = vsub.s32 0, %v93
  %v95 = vrot.slane %v90, %v94
  %v100 = vunpack.c.l.b16 %v15
  %v101 = vunpack.c.h.b16 %v15
  %v102 = vunpack.c.l.b16 %v16
  %v103 = vunpack.c.h.b16 %v16
  %v104 = vunpack.c.l.b16 %v17
  %v105 = vpack.c.b16 %v100, %v100
  %v106 = vpack.c.b16 %v101, %v101
  %v107 = vpack.c.b16 %v102, %v102
  %v108 = vpack.c.b16 %v103, %v103
  %v109 = vpack.c.b16 %v104, %v104
  %v186 = vunpack.c.l.b16 %v18
  %v187 = vunpack.c.l.b16 %v19
  %v188 = vunpack.c.l.b16 %v20
  %v189 = vunpack.c.l.b16 %v21
  %v190 = vunpack.c.l.b16 %v22
  %v191 = vunpack.c.l.b16 %v23
  %v192 = vunpack.c.l.b16 %v24
  %v193 = vunpack.c.l.b16 %v25
  %v194 = vunpack.c.l.b16 %v26
  %v195 = vunpack.c.l.b16 %v27
  %v196 = vunpack.c.l.b16 %v28
  %v197 = vunpack.c.l.b16 %v29
  %v198 = vunpack.c.l.b16 %v30
  %v199 = vunpack.c.l.b16 %v31
  %v200 = vunpack.c.l.b16 %v32
  %v201 = vunpack.c.l.b16 %v33
  %v202 = vunpack.c.l.b16 %v34
  %v203 = vunpack.c.l.b16 %v35
  %v204 = vunpack.c.l.b16 %v36
  %v205 = vunpack.c.l.b16 %v37
  %v206 = vunpack.c.l.b16 %v38
  %v207 = vunpack.c.l.b16 %v39
  %v208 = vunpack.c.l.b16 %v40
  %v209 = vunpack.c.l.b16 %v41
  %v210 = vunpack.c.l.b16 %v42
  %v211 = vunpack.c.l.b16 %v43
  %v212 = vunpack.c.l.b16 %v44
  %v213 = vunpack.c.l.b16 %v45
  %v214 = vunpack.c.l.b16 %v46
  %v215 = vunpack.c.l.b16 %v47
  %v216 = vunpack.c.l.b16 %v48
  %v217 = vunpack.c.l.b16 %v49
  %v218 = vunpack.c.l.b16 %v50
  %v219 = vunpack.c.l.b16 %v51
  %v220 = vunpack.c.l.b16 %v52
  %v221 = vunpack.c.l.b16 %v53
  %v222 = vunpack.c.l.b16 %v54
  %v223 = vunpack.c.l.b16 %v55
  %v224 = vunpack.c.l.b16 %v56
  %v225 = vunpack.c.l.b16 %v57
  %v226 = vunpack.c.l.b16 %v58
  %v227 = vunpack.c.l.b16 %v59
  %v228 = vunpack.c.l.b16 %v60
  %v229 = vunpack.c.l.b16 %v61
  %v230 = vunpack.c.l.b16 %v62
  %v231 = vunpack.c.l.b16 %v63
  %v232 = vunpack.c.l.b16 %v64
  %v233 = vunpack.c.l.b16 %v65
  %v234 = vunpack.c.l.b16 %v66
  %v235 = vunpack.c.l.b16 %v67
  %v236 = vunpack.c.l.b16 %v68
  %v237 = vunpack.c.l.b16 %v69
  %v238 = vunpack.c.l.b16 %v70
  %v239 = vunpack.c.l.b16 %v71
  %v240 = vunpack.c.l.b16 %v72
  %v241 = vunpack.c.l.b16 %v73
  %v242 = vunpack.c.l.b16 %v74
  %v243 = vunpack.c.l.b16 %v75
  %v244 = vunpack.c.l.b16 %v76
  %v245 = vunpack.c.l.b16 %v77
  %v246 = vunpack.c.l.b16 %v78
  %v247 = vunpack.c.l.b16 %v79
  %v248 = vunpack.c.l.b16 %v80
  %v249 = vunpack.c.l.b16 %v81
  %v250 = vunpack.c.l.b16 %v82
  %v251 = vunpack.c.l.b16 %v83
  %v252 = vunpack.c.l.b16 %v84
  %v253 = vunpack.c.l.b16 %v85
  %v254 = vunpack.c.l.b16 %v86
  %v255 = vunpack.c.l.b16 %v87
  %v256 = vunpack.c.l.b16 %v88
  %v257 = vunpack.c.l.b16 %v89
  %v258 = vpack.c.b16 %v187, %v186
  %v259 = vpack.c.b16 %v189, %v188
  %v260 = vpack.c.b16 %v191, %v190
  %v261 = vpack.c.b16 %v193, %v192
  %v262 = vpack.c.b16 %v195, %v194
  %v263 = vpack.c.b16 %v197, %v196
  %v264 = vpack.c.b16 %v199, %v198
  %v265 = vpack.c.b16 %v201, %v200
  %v266 = vpack.c.b16 %v203, %v202
  %v267 = vpack.c.b16 %v205, %v204
  %v268 = vpack.c.b16 %v207, %v206
  %v269 = vpack.c.b16 %v209, %v208
  %v270 = vpack.c.b16 %v211, %v210
  %v271 = vpack.c.b16 %v213, %v212
  %v272 = vpack.c.b16 %v215, %v214
  %v273 = vpack.c.b16 %v217, %v216
  %v274 = vpack.c.b16 %v219, %v218
  %v275 = vpack.c.b16 %v221, %v220
  %v276 = vpack.c.b16 %v223, %v222
  %v277 = vpack.c.b16 %v225, %v224
  %v278 = vpack.c.b16 %v227, %v226
  %v279 = vpack.c.b16 %v229, %v228
  %v280 = vpack.c.b16 %v231, %v230
  %v281 = vpack.c.b16 %v233, %v232
  %v282 = vpack.c.b16 %v235, %v234
  %v283 = vpack.c.b16 %v237, %v236
  %v284 = vpack.c.b16 %v239, %v238
  %v285 = vpack.c.b16 %v241, %v240
  %v286 = vpack.c.b16 %v243, %v242
  %v287 = vpack.c.b16 %v245, %v244
  %v288 = vpack.c.b16 %v247, %v246
  %v289 = vpack.c.b16 %v249, %v248
  %v290 = vpack.c.b16 %v251, %v250
  %v291 = vpack.c.b16 %v253, %v252
  %v292 = vpack.c.b16 %v255, %v254
  %v293 = vpack.c.b16 %v257, %v256
  %vm330 = vcmask 523264
  %v332 = vsel %vm330, %v109, 0
  %334 = vmatprep.subr.bf16.mxu0 0
  %335 = vmatpush1.bf16.msra.mxu0 %v258
  %336 = vmatprep.subr.bf16.mxu0 0
  %337 = vmatpush1.bf16.msra.mxu0 %v259
  %338 = vmatprep.subr.bf16.mxu0 0
  %339 = vmatpush1.bf16.msra.mxu0 %v260
  %340 = vmatprep.subr.bf16.mxu0 0
  %341 = vmatpush1.bf16.msra.mxu0 %v261
  %342 = vmatprep.subr.bf16.mxu0 0
  %343 = vmatpush1.bf16.msra.mxu0 %v262
  %344 = vmatprep.subr.bf16.mxu0 0
  %345 = vmatpush1.bf16.msra.mxu0 %v263
  %346 = vmatprep.subr.bf16.mxu0 0
  %347 = vmatpush1.bf16.msra.mxu0 %v264
  %348 = vmatprep.subr.bf16.mxu0 0
  %349 = vmatpush1.bf16.msra.mxu0 %v265
  %350 = vmatprep.subr.bf16.mxu0 0
  %351 = vmatpush1.bf16.msra.mxu0 %v266
  %352 = vmatprep.subr.bf16.mxu0 0
  %353 = vmatpush1.bf16.msra.mxu0 %v267
  %354 = vmatprep.subr.bf16.mxu0 0
  %355 = vmatpush1.bf16.msra.mxu0 %v268
  %356 = vmatprep.subr.bf16.mxu0 0
  %357 = vmatpush1.bf16.msra.mxu0 %v269
  %358 = vmatprep.subr.bf16.mxu0 0
  %359 = vmatpush1.bf16.msra.mxu0 %v270
  %360 = vmatprep.subr.bf16.mxu0 0
  %361 = vmatpush1.bf16.msra.mxu0 %v271
  %362 = vmatprep.subr.bf16.mxu0 0
  %363 = vmatpush1.bf16.msra.mxu0 %v272
  %364 = vmatprep.subr.bf16.mxu0 0
  %365 = vmatpush1.bf16.msra.mxu0 %v273
  %366 = vmatprep.mubr.bf16.mxu0 %v106
  %367 = vmatmul.mubr.bf16.gmra.mrb[0].mxu0 %v105
  %v368 = vpop.f32.mrb[0].mxu0
  %v369 = vadd.f32 %v95, %v368
  %v370 = vpop.f32.mrb[0].mxu0
  %v371 = vpop.f32.mrb[0].mxu0
  %v372 = vpop.f32.mrb[0].mxu0
  %373 = vdwg.mxu0
  %374 = vmatprep.subr.bf16.mxu0 0
  %375 = vmatpush1.bf16.msra.mxu0 %v274
  %376 = vmatprep.subr.bf16.mxu0 0
  %377 = vmatpush1.bf16.msra.mxu0 %v275
  %378 = vmatprep.subr.bf16.mxu0 0
  %379 = vmatpush1.bf16.msra.mxu0 %v276
  %380 = vmatprep.subr.bf16.mxu0 0
  %381 = vmatpush1.bf16.msra.mxu0 %v277
  %382 = vmatprep.subr.bf16.mxu0 0
  %383 = vmatpush1.bf16.msra.mxu0 %v278
  %384 = vmatprep.subr.bf16.mxu0 0
  %385 = vmatpush1.bf16.msra.mxu0 %v279
  %386 = vmatprep.subr.bf16.mxu0 0
  %387 = vmatpush1.bf16.msra.mxu0 %v280
  %388 = vmatprep.subr.bf16.mxu0 0
  %389 = vmatpush1.bf16.msra.mxu0 %v281
  %390 = vmatprep.subr.bf16.mxu0 0
  %391 = vmatpush1.bf16.msra.mxu0 %v282
  %392 = vmatprep.subr.bf16.mxu0 0
  %393 = vmatpush1.bf16.msra.mxu0 %v283
  %394 = vmatprep.subr.bf16.mxu0 0
  %395 = vmatpush1.bf16.msra.mxu0 %v284
  %396 = vmatprep.subr.bf16.mxu0 0
  %397 = vmatpush1.bf16.msra.mxu0 %v285
  %398 = vmatprep.subr.bf16.mxu0 0
  %399 = vmatpush1.bf16.msra.mxu0 %v286
  %400 = vmatprep.subr.bf16.mxu0 0
  %401 = vmatpush1.bf16.msra.mxu0 %v287
  %402 = vmatprep.subr.bf16.mxu0 0
  %403 = vmatpush1.bf16.msra.mxu0 %v288
  %404 = vmatprep.subr.bf16.mxu0 0
  %405 = vmatpush1.bf16.msra.mxu0 %v289
  %406 = vmatprep.mubr.bf16.mxu0 %v108
  %407 = vmatmul.mubr.bf16.gmra.mrb[0].mxu0 %v107
  %v408 = vpop.f32.mrb[0].mxu0
  %v409 = vadd.f32 %v369, %v408
  %v410 = vpop.f32.mrb[0].mxu0
  %v411 = vpop.f32.mrb[0].mxu0
  %v412 = vpop.f32.mrb[0].mxu0
  %413 = vdwg.mxu0
  %414 = vmatprep.subr.bf16.mxu0 0
  %415 = vmatpush1.bf16.msra.mxu0 %v290
  %416 = vmatprep.subr.bf16.mxu0 0
  %417 = vmatpush1.bf16.msra.mxu0 %v291
  %418 = vmatprep.subr.bf16.mxu0 0
  %419 = vmatpush1.bf16.msra.mxu0 %v292
  %420 = vmatprep.subr.bf16.mxu0 0
  %421 = vmatpush1.bf16.msra.mxu0 %v293
  %422 = vmatprep.subr.bf16.mxu0 0
  %423 = vmatpush1.bf16.msra.mxu0 0
  %424 = vmatprep.subr.bf16.mxu0 0
  %425 = vmatpush1.bf16.msra.mxu0 0
  %426 = vmatprep.subr.bf16.mxu0 0
  %427 = vmatpush1.bf16.msra.mxu0 0
  %428 = vmatprep.subr.bf16.mxu0 0
  %429 = vmatpush1.bf16.msra.mxu0 0
  %430 = vmatprep.subr.bf16.mxu0 0
  %431 = vmatpush1.bf16.msra.mxu0 0
  %432 = vmatprep.subr.bf16.mxu0 0
  %433 = vmatpush1.bf16.msra.mxu0 0
  %434 = vmatprep.subr.bf16.mxu0 0
  %435 = vmatpush1.bf16.msra.mxu0 0
  %436 = vmatprep.subr.bf16.mxu0 0
  %437 = vmatpush1.bf16.msra.mxu0 0
  %438 = vmatprep.subr.bf16.mxu0 0
  %439 = vmatpush1.bf16.msra.mxu0 0
  %440 = vmatprep.subr.bf16.mxu0 0
  %441 = vmatpush1.bf16.msra.mxu0 0
  %442 = vmatprep.subr.bf16.mxu0 0
  %443 = vmatpush1.bf16.msra.mxu0 0
  %444 = vmatprep.subr.bf16.mxu0 0
  %445 = vmatpush1.bf16.msra.mxu0 0
  %446 = vmatprep.mubr.bf16.mxu0 0
  %447 = vmatmul.mubr.bf16.gmra.mrb[0].mxu0 %v332
  %v448 = vpop.f32.mrb[0].mxu0
  %v449 = vadd.f32 %v409, %v448
  %v450 = vpop.f32.mrb[0].mxu0
  %v451 = vpop.f32.mrb[0].mxu0
  %v452 = vpop.f32.mrb[0].mxu0
  %453 = vdwg.mxu0
  %v454 = vmax.f32 %v449, 0.0
  %455 = vst [vmem:[%s3] sm:$0xff] %v454
  // Predicated region
  $region14: #{resnet18_dense_forward.38} parent=0 // pred_check
    _
  $region15: #{resnet18_dense_forward.38} parent=0 // pred_check_branch
    %457 = sbr.rel (0) target = $region17
  $region16: #{resnet18_dense_forward.38} parent=0 // pred_region
    _
  $region17: #{resnet18_dense_forward.38} parent=0 // pred_fallthru
    _
  // Predicated region
  $region18: #{resnet18_dense_forward.38} parent=0 // pred_check
    _
  $region19: #{resnet18_dense_forward.38} parent=0 // pred_check_branch
    %459 = sbr.rel (0) target = $region21
  $region20: #{resnet18_dense_forward.38} parent=0 // pred_region
    _
  $region21: #{resnet18_dense_forward.38} parent=0 // pred_fallthru
    _

// kernel: resnet18_dense_forward.43
$region0: #{resnet18_dense_forward.43}
  #allocation0 [shape = 'u32[]', space=smem, size = 0x4, offset = 0x4, fixed_abs, tag = 'smem constant byte address 0x4 - core index']
  #allocation1 [shape = 'u32[144,128]{1,0:T(1,128)}', space=vmem, size = 0x12000, scoped, tag = 'internal scratch']
  %s0 = inlined_call_operand.vmem [shape: bf16[8,128], index: 0, kind: input, shape index: {}]
  %s1 = inlined_call_operand.vmem [shape: bf16[128,1024], index: 1, kind: input, shape index: {}]
  %s2 = inlined_call_operand.vmem [shape: f32[1,1024], index: 2, kind: input, shape index: {}]
  %s3 = inlined_call_operand.vmem [shape: f32[8,1024], index: 3, kind: output, shape index: {}]
  %s4 = sld [smem:[#allocation0]]
  $region83: #{resnet18_dense_forward.43} parent=0
    _
  %s6 = ssub.s32 1, %s4
  %s7 = scalar_select 0, %s6, %s4
  $region1: #{resnet18_dense_forward.43} parent=0
    #allocation2 [shape = 'u8[131072]{0}', space=vmem, size = 0x20000, scoped, tag = 'input window, operand 1']
    loop: start=0, step=1, limit=6
    $region2: #{resnet18_dense_forward.43} parent=1 // loop_pre_header
      _
    $region3: #{resnet18_dense_forward.43} parent=1 // loop_header
      %s9 = sphi 0, %s13
      %p10 = scmp.ge.s32.totalorder %s9, 6
      %s16 = sphi 0, %s35
      %s17 = sphi 0, %s31
      %s18 = sphi 0, %s27
      %s19 = sphi 0, %s16
      %s20 = sphi 0, %s17
      %s21 = sphi 0, %s18
      %s22 = sphi 0, %s19
      %s23 = sphi 0, %s20
      %s24 = sphi 0, %s21
      %s40 = sphi 0, %s42
      %s43 = sphi 0, %s40
      %s44 = sphi 0, %s43
      %s60 = sphi 0, %s44
      %s68 = sphi 0, %s70
      %s71 = sphi 0, %s68
      %s72 = sphi 0, %s71
      %s88 = sphi 0, %s72
      %s94 = sphi 0, %s96
      %s97 = sphi 0, %s94
      %s98 = sphi 0, %s97
      %s114 = sphi 0, %s98
      %s122 = sphi 0, %s124
      %s125 = sphi 0, %s122
      %s126 = sphi 0, %s125
      %s142 = sphi 0, %s126
    $region4: #{resnet18_dense_forward.43} parent=1 // loop_header_branch
      %12 = sbr.rel (%p10) target = $region8
    $region5: #{resnet18_dense_forward.43} parent=1 // loop_body
      %s14 = ssub.s32 %s9, 1
      %s15 = ssub.s32 %s9, 2
      %s25 = sadd.s32 1, %s18
      %p26 = scmp.ge.s32.totalorder %s25, 1
      %s27 = scalar_select %p26, 0, %s25
      %s28 = sadd.s32 1, %s17
      %s29 = scalar_select %p26, %s28, %s17
      %p30 = scmp.ge.s32.totalorder %s29, 4
      %s31 = scalar_select %p30, 0, %s29
      %s32 = sadd.s32 1, %s16
      %s33 = scalar_select %p30, %s32, %s16
      %p34 = scmp.ge.s32.totalorder %s33, 1
      %s35 = scalar_select %p34, 0, %s33
      %s36 = ssub.s32 %s16, %s35
      %s37 = ssub.s32 %s18, %s27
      %s38 = sor.u32 %s36, %s37
      %p39 = scmp.eq.s32.totalorder %s38, 0
      %s41 = sadd.s32 %s40, 1
      %s42 = scalar_select %p39, %s40, %s41
      %p45 = pneg %p39
      %p46 = scmp.eq.s32.totalorder %s9, 3
      %p47 = por %p45, %p46
      %p48 = scmp.ne.s32.totalorder %s40, %s43
      %p49 = scmp.eq.s32.totalorder %s9, 0
      %p50 = por %p48, %p49
      %p51 = scmp.ne.s32.totalorder %s40, %s43
      %p52 = scmp.eq.s32.totalorder %s14, 3
      %p53 = por %p51, %p52
      %p54 = scmp.ne.s32.totalorder %s43, %s44
      %p55 = scmp.eq.s32.totalorder %s14, 0
      %p56 = por %p54, %p55
      %p57 = scmp.ne.s32.totalorder %s43, %s44
      %p58 = scmp.eq.s32.totalorder %s15, 3
      %p59 = por %p57, %p58
      %p61 = scmp.ne.s32.totalorder %s44, %s60
      %p62 = scmp.eq.s32.totalorder %s15, 0
      %p63 = por %p61, %p62
      %s64 = ssub.s32 %s18, %s27
      %s65 = ssub.s32 %s17, %s31
      %s66 = sor.u32 %s64, %s65
      %p67 = scmp.eq.s32.totalorder %s66, 0
      %s69 = sadd.s32 %s68, 1
      %s70 = scalar_select %p67, %s68, %s69
      %p73 = pneg %p67
      %p74 = scmp.eq.s32.totalorder %s9, 3
      %p75 = por %p73, %p74
      %p76 = scmp.ne.s32.totalorder %s68, %s71
      %p77 = scmp.eq.s32.totalorder %s9, 0
      %p78 = por %p76, %p77
      %p79 = scmp.ne.s32.totalorder %s68, %s71
      %p80 = scmp.eq.s32.totalorder %s14, 3
      %p81 = por %p79, %p80
      %p82 = scmp.ne.s32.totalorder %s71, %s72
      %p83 = scmp.eq.s32.totalorder %s14, 0
      %p84 = por %p82, %p83
      %p85 = scmp.ne.s32.totalorder %s71, %s72
      %p86 = scmp.eq.s32.totalorder %s15, 3
      %p87 = por %p85, %p86
      %p89 = scmp.ne.s32.totalorder %s72, %s88
      %p90 = scmp.eq.s32.totalorder %s15, 0
      %p91 = por %p89, %p90
      %s92 = ssub.s32 %s17, %s31
      %p93 = scmp.eq.s32.totalorder %s92, 0
      %s95 = sadd.s32 %s94, 1
      %s96 = scalar_select %p93, %s94, %s95
      %p99 = pneg %p93
      %p100 = scmp.eq.s32.totalorder %s9, 3
      %p101 = por %p99, %p100
      %p102 = scmp.ne.s32.totalorder %s94, %s97
      %p103 = scmp.eq.s32.totalorder %s9, 0
      %p104 = por %p102, %p103
      %p105 = scmp.ne.s32.totalorder %s94, %s97
      %p106 = scmp.eq.s32.totalorder %s14, 3
      %p107 = por %p105, %p106
      %p108 = scmp.ne.s32.totalorder %s97, %s98
      %p109 = scmp.eq.s32.totalorder %s14, 0
      %p110 = por %p108, %p109
      %p111 = scmp.ne.s32.totalorder %s97, %s98
      %p112 = scmp.eq.s32.totalorder %s15, 3
      %p113 = por %p111, %p112
      %p115 = scmp.ne.s32.totalorder %s98, %s114
      %p116 = scmp.eq.s32.totalorder %s15, 0
      %p117 = por %p115, %p116
      %s118 = ssub.s32 %s16, %s35
      %s119 = ssub.s32 %s17, %s31
      %s120 = sor.u32 %s118, %s119
      %p121 = scmp.eq.s32.totalorder %s120, 0
      %s123 = sadd.s32 %s122, 1
      %s124 = scalar_select %p121, %s122, %s123
      %p127 = pneg %p121
      %p128 = scmp.eq.s32.totalorder %s9, 3
      %p129 = por %p127, %p128
      %p130 = scmp.ne.s32.totalorder %s122, %s125
      %p131 = scmp.eq.s32.totalorder %s9, 0
      %p132 = por %p130, %p131
      %p133 = scmp.ne.s32.totalorder %s122, %s125
      %p134 = scmp.eq.s32.totalorder %s14, 3
      %p135 = por %p133, %p134
      %p136 = scmp.ne.s32.totalorder %s125, %s126
      %p137 = scmp.eq.s32.totalorder %s14, 0
      %p138 = por %p136, %p137
      %p139 = scmp.ne.s32.totalorder %s125, %s126
      %p140 = scmp.eq.s32.totalorder %s15, 3
      %p141 = por %p139, %p140
      %p143 = scmp.ne.s32.totalorder %s126, %s142
      %p144 = scmp.eq.s32.totalorder %s15, 0
      %p145 = por %p143, %p144
      %p146 = scmp.le.s32.totalorder 1, %s9
      %p147 = scmp.lt.s32.totalorder %s9, 5
      %p148 = pnand %p146, %p147
      %p149 = pneg %p148
      // Predicated region
      $region9: #{resnet18_dense_forward.43} parent=5 // pred_check
        _
      $region10: #{resnet18_dense_forward.43} parent=5 // pred_check_branch
        %151 = sbr.rel (%p148) target = $region12
      $region11: #{resnet18_dense_forward.43} parent=5 // pred_region
        %s152 = ssub.s32 %s9, 1
        // Predicated region
        $region13: #{resnet18_dense_forward.43} parent=11 // pred_check
          %p153 = pneg %p56
        $region14: #{resnet18_dense_forward.43} parent=11 // pred_check_branch
          %155 = sbr.rel (%p153) target = $region16
        $region15: #{resnet18_dense_forward.43} parent=11 // pred_region
          %p156 = scmp.lt.s32.totalorder %s19, 0
          %s157 = scalar_select %p156, %s19, 0
          %p158 = scmp.lt.s32.totalorder %s21, 0
          %s159 = scalar_select %p158, %s21, 0
          %s160 = sadd.s32 %s159, %s157
          %s161 = smul.addr %s160, 4
          %s162 = scalar_lea.vmem %s0, %s161
        $region16: #{resnet18_dense_forward.43} parent=11 // pred_fallthru
          _
      $region12: #{resnet18_dense_forward.43} parent=5 // pred_fallthru
        _
      %p163 = scmp.lt.s32.totalorder %s9, 4
      // Predicated region
      $region17: #{resnet18_dense_forward.43} parent=5 // pred_check
        %p164 = pneg %p163
      $region18: #{resnet18_dense_forward.43} parent=5 // pred_check_branch
        %166 = sbr.rel (%p164) target = $region20
      $region19: #{resnet18_dense_forward.43} parent=5 // pred_region
        // Predicated region
        $region21: #{resnet18_dense_forward.43} parent=19 // pred_check
          %p167 = pneg %p78
        $region22: #{resnet18_dense_forward.43} parent=19 // pred_check_branch
          %169 = sbr.rel (%p167) target = $region24
        $region23: #{resnet18_dense_forward.43} parent=19 // pred_region
          %s170 = sand.u32 %s68, 1
          %s171 = sand.u32 %s68, 1
          %s172 = smul.addr %s171, 128
          %s173 = scalar_lea.vmem [#allocation2], %s172
          %s174 = smul.u32 16, %s18
          %s175 = smul.u32 2, %s17
          %s176 = smul.addr %s174, 8
          %s177 = sadd.s32 %s175, %s176
          %s178 = smul.addr %s177, 4
          %s179 = scalar_lea.vmem %s1, %s178
          // Predicated region
          $region25: #{resnet18_dense_forward.43} parent=23 // pred_check
            _
          $region26: #{resnet18_dense_forward.43} parent=23 // pred_check_branch
            %181 = sbr.rel (0) target = $region28
          $region27: #{resnet18_dense_forward.43} parent=23 // pred_region
            // Predicated region
            $region29: #{resnet18_dense_forward.43} parent=27 // pred_check
              _
            $region30: #{resnet18_dense_forward.43} parent=27 // pred_check_branch
              %183 = sbr.rel (0) target = $region32
            $region31: #{resnet18_dense_forward.43} parent=27 // pred_region
              // Predicated region
              $region44: #{resnet18_dense_forward.43} parent=31 // pred_check
                _
              $region45: #{resnet18_dense_forward.43} parent=31 // pred_check_branch
                %228 = sbr.rel (0) target = $region47
              $region46: #{resnet18_dense_forward.43} parent=31 // pred_region
                loop: start=0, step=1, limit=1
                $region48: #{resnet18_dense_forward.43} parent=46 // loop_pre_header
                  _
                $region49: #{resnet18_dense_forward.43} parent=46 // loop_header
                  %s230 = sphi 0, %s234
                  %p231 = scmp.ge.s32.totalorder %s230, 1
                  %s235 = sphi %s179, %s179
                  %s236 = sphi %s173, %s173
                $region50: #{resnet18_dense_forward.43} parent=46 // loop_header_branch
                  %233 = sbr.rel (%p231) target = $region54
                $region51: #{resnet18_dense_forward.43} parent=46 // loop_body
                  %v237 = vld [vmem:[%s235] sm:$0xff]
                  %238 = vst [vmem:[%s236] sm:$0xff] %v237
                  %v239 = vld [vmem:[%s235 + $0x20] sm:$0xff]
                  %240 = vst [vmem:[%s236 + $0x8] sm:$0xff] %v239
                  %v241 = vld [vmem:[%s235 + $0x40] sm:$0xff]
                  %242 = vst [vmem:[%s236 + $0x10] sm:$0xff] %v241
                  %v243 = vld [vmem:[%s235 + $0x60] sm:$0xff]
                  %244 = vst [vmem:[%s236 + $0x18] sm:$0xff] %v243
                  %v245 = vld [vmem:[%s235 + $0x80] sm:$0xff]
                  %246 = vst [vmem:[%s236 + $0x20] sm:$0xff] %v245
                  %v247 = vld [vmem:[%s235 + $0xa0] sm:$0xff]
                  %248 = vst [vmem:[%s236 + $0x28] sm:$0xff] %v247
                  %v249 = vld [vmem:[%s235 + $0xc0] sm:$0xff]
                  %250 = vst [vmem:[%s236 + $0x30] sm:$0xff] %v249
                  %v251 = vld [vmem:[%s235 + $0xe0] sm:$0xff]
                  %252 = vst [vmem:[%s236 + $0x38] sm:$0xff] %v251
                  %v253 = vld [vmem:[%s235 + $0x100] sm:$0xff]
                  %254 = vst [vmem:[%s236 + $0x40] sm:$0xff] %v253
                  %v255 = vld [vmem:[%s235 + $0x120] sm:$0xff]
                  %256 = vst [vmem:[%s236 + $0x48] sm:$0xff] %v255
                  %v257 = vld [vmem:[%s235 + $0x140] sm:$0xff]
                  %258 = vst [vmem:[%s236 + $0x50] sm:$0xff] %v257
                  %v259 = vld [vmem:[%s235 + $0x160] sm:$0xff]
                  %260 = vst [vmem:[%s236 + $0x58] sm:$0xff] %v259
                  %v261 = vld [vmem:[%s235 + $0x180] sm:$0xff]
                  %262 = vst [vmem:[%s236 + $0x60] sm:$0xff] %v261
                  %v263 = vld [vmem:[%s235 + $0x1a0] sm:$0xff]
                  %264 = vst [vmem:[%s236 + $0x68] sm:$0xff] %v263
                  %v265 = vld [vmem:[%s235 + $0x1c0] sm:$0xff]
                  %266 = vst [vmem:[%s236 + $0x70] sm:$0xff] %v265
                  %v267 = vld [vmem:[%s235 + $0x1e0] sm:$0xff]
                  %268 = vst [vmem:[%s236 + $0x78] sm:$0xff] %v267
                $region52: #{resnet18_dense_forward.43} parent=46 // loop_footer
                  %s234 = sadd.s32 1, %s230
                $region53: #{resnet18_dense_forward.43} parent=46 // loop_footer_branch
                  %229 = sbr.rel target = $region49
                $region54: #{resnet18_dense_forward.43} parent=46 // loop_exit
                  _
              $region47: #{resnet18_dense_forward.43} parent=31 // pred_fallthru
                _
              // Predicated region
              $region55: #{resnet18_dense_forward.43} parent=31 // pred_check
                _
              $region56: #{resnet18_dense_forward.43} parent=31 // pred_check_branch
                %270 = sbr.rel target = $region58
              $region57: #{resnet18_dense_forward.43} parent=31 // pred_region
                _
              $region58: #{resnet18_dense_forward.43} parent=31 // pred_fallthru
                _
            $region32: #{resnet18_dense_forward.43} parent=27 // pred_fallthru
              _
            // Predicated region
            $region33: #{resnet18_dense_forward.43} parent=27 // pred_check
              _
            $region34: #{resnet18_dense_forward.43} parent=27 // pred_check_branch
              %185 = sbr.rel target = $region36
            $region35: #{resnet18_dense_forward.43} parent=27 // pred_region
              loop: start=0, step=1, limit=1
              $region37: #{resnet18_dense_forward.43} parent=35 // loop_pre_header
                _
              $region38: #{resnet18_dense_forward.43} parent=35 // loop_header
                %s188 = sphi 0, %s192
                %p189 = scmp.ge.s32.totalorder %s188, 1
                %s193 = sphi %s179, %s179
                %s194 = sphi %s173, %s173
              $region39: #{resnet18_dense_forward.43} parent=35 // loop_header_branch
                %191 = sbr.rel (%p189) target = $region43
              $region40: #{resnet18_dense_forward.43} parent=35 // loop_body
                %v195 = vld [vmem:[%s193] sm:$0xff]
                %196 = vst [vmem:[%s194] sm:$0xff] %v195
                %v197 = vld [vmem:[%s193 + $0x20] sm:$0xff]
                %198 = vst [vmem:[%s194 + $0x8] sm:$0xff] %v197
                %v199 = vld [vmem:[%s193 + $0x40] sm:$0xff]
                %200 = vst [vmem:[%s194 + $0x10] sm:$0xff] %v199
                %v201 = vld [vmem:[%s193 + $0x60] sm:$0xff]
                %202 = vst [vmem:[%s194 + $0x18] sm:$0xff] %v201
                %v203 = vld [vmem:[%s193 + $0x80] sm:$0xff]
                %204 = vst [vmem:[%s194 + $0x20] sm:$0xff] %v203
                %v205 = vld [vmem:[%s193 + $0xa0] sm:$0xff]
                %206 = vst [vmem:[%s194 + $0x28] sm:$0xff] %v205
                %v207 = vld [vmem:[%s193 + $0xc0] sm:$0xff]
                %208 = vst [vmem:[%s194 + $0x30] sm:$0xff] %v207
                %v209 = vld [vmem:[%s193 + $0xe0] sm:$0xff]
                %210 = vst [vmem:[%s194 + $0x38] sm:$0xff] %v209
                %v211 = vld [vmem:[%s193 + $0x100] sm:$0xff]
                %212 = vst [vmem:[%s194 + $0x40] sm:$0xff] %v211
                %v213 = vld [vmem:[%s193 + $0x120] sm:$0xff]
                %214 = vst [vmem:[%s194 + $0x48] sm:$0xff] %v213
                %v215 = vld [vmem:[%s193 + $0x140] sm:$0xff]
                %216 = vst [vmem:[%s194 + $0x50] sm:$0xff] %v215
                %v217 = vld [vmem:[%s193 + $0x160] sm:$0xff]
                %218 = vst [vmem:[%s194 + $0x58] sm:$0xff] %v217
                %v219 = vld [vmem:[%s193 + $0x180] sm:$0xff]
                %220 = vst [vmem:[%s194 + $0x60] sm:$0xff] %v219
                %v221 = vld [vmem:[%s193 + $0x1a0] sm:$0xff]
                %222 = vst [vmem:[%s194 + $0x68] sm:$0xff] %v221
                %v223 = vld [vmem:[%s193 + $0x1c0] sm:$0xff]
                %224 = vst [vmem:[%s194 + $0x70] sm:$0xff] %v223
                %v225 = vld [vmem:[%s193 + $0x1e0] sm:$0xff]
                %226 = vst [vmem:[%s194 + $0x78] sm:$0xff] %v225
              $region41: #{resnet18_dense_forward.43} parent=35 // loop_footer
                %s192 = sadd.s32 1, %s188
              $region42: #{resnet18_dense_forward.43} parent=35 // loop_footer_branch
                %187 = sbr.rel target = $region38
              $region43: #{resnet18_dense_forward.43} parent=35 // loop_exit
                _
            $region36: #{resnet18_dense_forward.43} parent=27 // pred_fallthru
              _
          $region28: #{resnet18_dense_forward.43} parent=23 // pred_fallthru
            _
          %271 = vnop
        $region24: #{resnet18_dense_forward.43} parent=19 // pred_fallthru
          _
        // Predicated region
        $region59: #{resnet18_dense_forward.43} parent=19 // pred_check
          %p272 = pneg %p104
        $region60: #{resnet18_dense_forward.43} parent=19 // pred_check_branch
          %274 = sbr.rel (%p272) target = $region62
        $region61: #{resnet18_dense_forward.43} parent=19 // pred_region
          %s275 = smul.u32 2, %s17
          %p276 = scmp.lt.s32.totalorder %s275, 7
          %s277 = scalar_select %p276, %s275, 7
          %s278 = scalar_lea.vmem %s2, %s277
          %s279 = smul.u32 2, %s17
        $region62: #{resnet18_dense_forward.43} parent=19 // pred_fallthru
          _
      $region20: #{resnet18_dense_forward.43} parent=5 // pred_fallthru
        _
      %p280 = scmp.le.s32.totalorder 1, %s9
      %p281 = scmp.lt.s32.totalorder %s9, 5
      %p282 = pnand %p280, %p281
      %p283 = pneg %p282
      // Predicated region
      $region63: #{resnet18_dense_forward.43} parent=5 // pred_check
        _
      $region64: #{resnet18_dense_forward.43} parent=5 // pred_check_branch
        %285 = sbr.rel (%p282) target = $region66
      $region65: #{resnet18_dense_forward.43} parent=5 // pred_region
        %s286 = ssub.s32 %s9, 1
        %s287 = sand.u32 %s71, 1
        %s288 = sand.u32 %s71, 1
        %s289 = smul.addr %s288, 128
        %s290 = scalar_lea.vmem [#allocation2], %s289
        // Predicated region
        $region67: #{resnet18_dense_forward.43} parent=65 // pred_check
          %p291 = pneg %p84
        $region68: #{resnet18_dense_forward.43} parent=65 // pred_check_branch
          %293 = sbr.rel (%p291) target = $region70
        $region69: #{resnet18_dense_forward.43} parent=65 // pred_region
          _
        $region70: #{resnet18_dense_forward.43} parent=65 // pred_fallthru
          _
        %p294 = scmp.lt.s32.totalorder %s19, 0
        %s295 = scalar_select %p294, %s19, 0
        %p296 = scmp.lt.s32.totalorder %s21, 0
        %s297 = scalar_select %p296, %s21, 0
        %s298 = sadd.s32 %s297, %s295
        %s299 = smul.addr %s298, 4
        %s300 = scalar_lea.vmem %s0, %s299
        %p301 = pneg %p56
        %p302 = pneg %p53
        %s303 = sand.u32 %s71, 1
        %s304 = sand.u32 %s71, 1
        %s305 = smul.addr %s304, 128
        %s306 = scalar_lea.vmem [#allocation2], %s305
        %p307 = pneg %p84
        %p308 = pneg %p81
        %s309 = smul.u32 2, %s20
        %p310 = scmp.lt.s32.totalorder %s309, 7
        %s311 = scalar_select %p310, %s309, 7
        %s312 = scalar_lea.vmem %s2, %s311
        %p313 = pneg %p110
        %p314 = pneg %p107
        %p315 = pneg %p138
        %p316 = pneg %p135
        %s317 = smul.u32 2, %s20
        %p318 = scmp.lt.s32.totalorder %s19, 0
        %s319 = scalar_select %p318, %s19, 0
        %p320 = scmp.lt.s32.totalorder %s317, 7
        %s321 = scalar_select %p320, %s317, 7
        %s322 = smul.addr %s319, 8
        %s323 = sadd.s32 %s321, %s322
        %s324 = smul.addr %s323, 8
        %s325 = scalar_lea.vmem %s3, %s324
        %p326 = scmp.lt.s32.totalorder %s19, 0
        %s327 = scalar_select %p326, %s19, 0
        %p328 = scmp.lt.s32.totalorder %s21, 0
        %s329 = scalar_select %p328, %s21, 0
        %s330 = sadd.s32 %s329, %s327
        %s331 = smul.addr %s330, 4
        %s332 = scalar_lea.vmem %s0, %s331
        %s333 = smul.u32 16, %s21
        %s334 = smul.u32 2, %s20
        %s335 = smul.u32 2, %s20
        %p336 = scmp.lt.s32.totalorder %s335, 7
        %s337 = scalar_select %p336, %s335, 7
        %s338 = scalar_lea.vmem %s2, %s337
        %s339 = smul.u32 2, %s20
        %s340 = smul.u32 2, %s20
        %p341 = scmp.lt.s32.totalorder %s19, 0
        %s342 = scalar_select %p341, %s19, 0
        %p343 = scmp.lt.s32.totalorder %s340, 7
        %s344 = scalar_select %p343, %s340, 7
        %s345 = smul.addr %s342, 8
        %s346 = sadd.s32 %s344, %s345
        %s347 = smul.addr %s346, 8
        %s348 = scalar_lea.vmem %s3, %s347
        %s349 = smul.u32 2, %s20
        %v351 = vld [vmem:[%s332] sm:$0xf]
        %v352 = vld [vmem:[%s290] sm:$0xff]
        %v353 = vld [vmem:[%s290 + $0x8] sm:$0xff]
        %v354 = vld [vmem:[%s290 + $0x10] sm:$0xff]
        %v355 = vld [vmem:[%s290 + $0x18] sm:$0xff]
        %v356 = vld [vmem:[%s290 + $0x20] sm:$0xff]
        %v357 = vld [vmem:[%s290 + $0x28] sm:$0xff]
        %v358 = vld [vmem:[%s290 + $0x30] sm:$0xff]
        %v359 = vld [vmem:[%s290 + $0x38] sm:$0xff]
        %v360 = vld [vmem:[%s290 + $0x40] sm:$0xff]
        %v361 = vld [vmem:[%s290 + $0x48] sm:$0xff]
        %v362 = vld [vmem:[%s290 + $0x50] sm:$0xff]
        %v363 = vld [vmem:[%s290 + $0x58] sm:$0xff]
        %v364 = vld [vmem:[%s290 + $0x60] sm:$0xff]
        %v365 = vld [vmem:[%s290 + $0x68] sm:$0xff]
        %v366 = vld [vmem:[%s290 + $0x70] sm:$0xff]
        %v367 = vld [vmem:[%s290 + $0x78] sm:$0xff]
        %v368 = vld [vmem:[%s338] sm:$0x3]
        %v370 = vlaneseq
        %v371 = vshrl.u32 %v370, 7
        %v372 = vsub.s32 0, %v371
        %v373 = vrot.slane %v368, %v372
        %v374 = vlaneseq
        %v375 = vshrl.u32 %v374, 7
        %v376 = vsub.s32 1, %v375
        %v377 = vrot.slane %v368, %v376
        %v396 = vunpack.c.l.b16 %v352
        %v397 = vunpack.c.h.b16 %v352
        %v398 = vunpack.c.l.b16 %v353
        %v399 = vunpack.c.h.b16 %v353
        %v400 = vunpack.c.l.b16 %v354
        %v401 = vunpack.c.h.b16 %v354
        %v402 = vunpack.c.l.b16 %v355
        %v403 = vunpack.c.h.b16 %v355
        %v404 = vunpack.c.l.b16 %v356
        %v405 = vunpack.c.h.b16 %v356
        %v406 = vunpack.c.l.b16 %v357
        %v407 = vunpack.c.h.b16 %v357
        %v408 = vunpack.c.l.b16 %v358
        %v409 = vunpack.c.h.b16 %v358
        %v410 = vunpack.c.l.b16 %v359
        %v411 = vunpack.c.h.b16 %v359
        %v412 = vunpack.c.l.b16 %v360
        %v413 = vunpack.c.h.b16 %v360
        %v414 = vunpack.c.l.b16 %v361
        %v415 = vunpack.c.h.b16 %v361
        %v416 = vunpack.c.l.b16 %v362
        %v417 = vunpack.c.h.b16 %v362
        %v418 = vunpack.c.l.b16 %v363
        %v419 = vunpack.c.h.b16 %v363
        %v420 = vunpack.c.l.b16 %v364
        %v421 = vunpack.c.h.b16 %v364
        %v422 = vunpack.c.l.b16 %v365
        %v423 = vunpack.c.h.b16 %v365
        %v424 = vunpack.c.l.b16 %v366
        %v425 = vunpack.c.h.b16 %v366
        %v426 = vunpack.c.l.b16 %v367
        %v427 = vunpack.c.h.b16 %v367
        %v428 = vpack.c.b16 %v398, %v396
        %v429 = vpack.c.b16 %v399, %v397
        %v430 = vpack.c.b16 %v402, %v400
        %v431 = vpack.c.b16 %v403, %v401
        %v432 = vpack.c.b16 %v406, %v404
        %v433 = vpack.c.b16 %v407, %v405
        %v434 = vpack.c.b16 %v410, %v408
        %v435 = vpack.c.b16 %v411, %v409
        %v436 = vpack.c.b16 %v414, %v412
        %v437 = vpack.c.b16 %v415, %v413
        %v438 = vpack.c.b16 %v418, %v416
        %v439 = vpack.c.b16 %v419, %v417
        %v440 = vpack.c.b16 %v422, %v420
        %v441 = vpack.c.b16 %v423, %v421
        %v442 = vpack.c.b16 %v426, %v424
        %v443 = vpack.c.b16 %v427, %v425
        %460 = vmatprep.subr.bf16.mxu0 %v429
        %461 = vmatpush1.bf16.msra.mxu0 %v428
        %462 = vmatprep.subr.bf16.mxu0 %v431
        %463 = vmatpush1.bf16.msra.mxu0 %v430
        %464 = vmatprep.subr.bf16.mxu0 %v433
        %465 = vmatpush1.bf16.msra.mxu0 %v432
        %466 = vmatprep.subr.bf16.mxu0 %v435
        %467 = vmatpush1.bf16.msra.mxu0 %v434
        %468 = vmatprep.subr.bf16.mxu0 %v437
        %469 = vmatpush1.bf16.msra.mxu0 %v436
        %470 = vmatprep.subr.bf16.mxu0 %v439
        %471 = vmatpush1.bf16.msra.mxu0 %v438
        %472 = vmatprep.subr.bf16.mxu0 %v441
        %473 = vmatpush1.bf16.msra.mxu0 %v440
        %474 = vmatprep.subr.bf16.mxu0 %v443
        %475 = vmatpush1.bf16.msra.mxu0 %v442
        %476 = vmatprep.subr.bf16.mxu0 0
        %477 = vmatpush1.bf16.msra.mxu0 0
        %478 = vmatprep.subr.bf16.mxu0 0
        %479 = vmatpush1.bf16.msra.mxu0 0
        %480 = vmatprep.subr.bf16.mxu0 0
        %481 = vmatpush1.bf16.msra.mxu0 0
        %482 = vmatprep.subr.bf16.mxu0 0
        %483 = vmatpush1.bf16.msra.mxu0 0
        %484 = vmatprep.subr.bf16.mxu0 0
        %485 = vmatpush1.bf16.msra.mxu0 0
        %486 = vmatprep.subr.bf16.mxu0 0
        %487 = vmatpush1.bf16.msra.mxu0 0
        %488 = vmatprep.subr.bf16.mxu0 0
        %489 = vmatpush1.bf16.msra.mxu0 0
        %490 = vmatprep.subr.bf16.mxu0 0
        %491 = vmatpush1.bf16.msra.mxu0 0
        %492 = vmatprep.mubr.bf16.mxu0 0
        %493 = vmatmul.mubr.bf16.gmra.mrb[0].mxu0 %v351
        %v494 = vpop.f32.mrb[0].mxu0
        %v495 = vadd.f32 %v373, %v494
        %v496 = vpop.f32.mrb[0].mxu0
        %v497 = vadd.f32 %v377, %v496
        %v498 = vpop.f32.mrb[0].mxu0
        %v499 = vpop.f32.mrb[0].mxu0
        %500 = vdwg.mxu0
        %501 = vst [vmem:[%s348] sm:$0xff] %v495
        %502 = vst [vmem:[%s348 + $0x8] sm:$0xff] %v497
        %s503 = smul.u32 2, %s20
        %p504 = scmp.lt.s32.totalorder %s19, 0
        %s505 = scalar_select %p504, %s19, 0
        %p506 = scmp.lt.s32.totalorder %s503, 7
        %s507 = scalar_select %p506, %s503, 7
        %s508 = smul.addr %s505, 8
        %s509 = sadd.s32 %s507, %s508
        %s510 = smul.addr %s509, 8
        %s511 = scalar_lea.vmem %s3, %s510
        // Predicated region
        $region71: #{resnet18_dense_forward.43} parent=65 // pred_check
          %p512 = pneg %p135
        $region72: #{resnet18_dense_forward.43} parent=65 // pred_check_branch
          %514 = sbr.rel (%p512) target = $region74
        $region73: #{resnet18_dense_forward.43} parent=65 // pred_region
          %s515 = smul.u32 2, %s20
        $region74: #{resnet18_dense_forward.43} parent=65 // pred_fallthru
          _
      $region66: #{resnet18_dense_forward.43} parent=5 // pred_fallthru
        _
      %p516 = scmp.le.s32.totalorder 2, %s9
      // Predicated region
      $region75: #{resnet18_dense_forward.43} parent=5 // pred_check
        %p517 = pneg %p516
      $region76: #{resnet18_dense_forward.43} parent=5 // pred_check_branch
        %519 = sbr.rel (%p517) target = $region78
      $region77: #{resnet18_dense_forward.43} parent=5 // pred_region
        %s520 = ssub.s32 %s9, 2
        // Predicated region
        $region79: #{resnet18_dense_forward.43} parent=77 // pred_check
          %p521 = pneg %p141
        $region80: #{resnet18_dense_forward.43} parent=77 // pred_check_branch
          %523 = sbr.rel (%p521) target = $region82
        $region81: #{resnet18_dense_forward.43} parent=77 // pred_region
          %s524 = smul.u32 2, %s23
          %p525 = scmp.lt.s32.totalorder %s22, 0
          %s526 = scalar_select %p525, %s22, 0
          %p527 = scmp.lt.s32.totalorder %s524, 7
          %s528 = scalar_select %p527, %s524, 7
          %s529 = smul.addr %s526, 8
          %s530 = sadd.s32 %s528, %s529
          %s531 = smul.addr %s530, 8
          %s532 = scalar_lea.vmem %s3, %s531
        $region82: #{resnet18_dense_forward.43} parent=77 // pred_fallthru
          _
      $region78: #{resnet18_dense_forward.43} parent=5 // pred_fallthru
        _
    $region6: #{resnet18_dense_forward.43} parent=1 // loop_footer
      %s13 = sadd.s32 1, %s9
    $region7: #{resnet18_dense_forward.43} parent=1 // loop_footer_branch
      %8 = sbr.rel target = $region3
    $region8: #{resnet18_dense_forward.43} parent=1 // loop_exit
      _

// kernel: resnet18_dense_forward.40
$region0: #{resnet18_dense_forward.40}
  #allocation0 [shape = 'u32[]', space=smem, size = 0x4, offset = 0x4, fixed_abs, tag = 'smem constant byte address 0x4 - core index']
  #allocation1 [shape = 'u32[144,128]{1,0:T(1,128)}', space=vmem, size = 0x12000, scoped, tag = 'internal scratch']
  #allocation2 [shape = 'f32[8,128]{1,0:T(8,128)}', space=vmem, size = 0x1000, scoped, tag = 'scratch operand']
  %s0 = inlined_call_operand.vmem [shape: bf16[8,1152], index: 0, kind: input, shape index: {}]
  %s1 = inlined_call_operand.vmem [shape: bf16[1152,128], index: 1, kind: input, shape index: {}]
  %s2 = inlined_call_operand.vmem [shape: f32[1,128], index: 2, kind: input, shape index: {}]
  %s3 = inlined_call_operand.vmem [shape: f32[8,128], index: 3, kind: input, shape index: {}]
  %s4 = inlined_call_operand.vmem [shape: f32[8,128], index: 4, kind: output, shape index: {}]
  %s5 = sld [smem:[#allocation0]]
  $region57: #{resnet18_dense_forward.40} parent=0
    _
  %s7 = ssub.s32 1, %s5
  %s8 = scalar_select 0, %s7, %s5
  loop: start=0, step=1, limit=5
  $region2: #{resnet18_dense_forward.40} parent=0 // loop_pre_header
    _
  $region3: #{resnet18_dense_forward.40} parent=0 // loop_header
    %s10 = sphi 0, %s14
    %p11 = scmp.ge.s32.totalorder %s10, 5
    %s17 = sphi 0, %s36
    %s18 = sphi 0, %s32
    %s19 = sphi 0, %s28
    %s20 = sphi 0, %s17
    %s21 = sphi 0, %s18
    %s22 = sphi 0, %s19
    %s23 = sphi 0, %s20
    %s24 = sphi 0, %s21
    %s25 = sphi 0, %s22
    %s41 = sphi 0, %s43
    %s44 = sphi 0, %s41
    %s45 = sphi 0, %s44
    %s61 = sphi 0, %s45
    %s69 = sphi 0, %s71
    %s72 = sphi 0, %s69
    %s73 = sphi 0, %s72
    %s89 = sphi 0, %s73
    %s95 = sphi 0, %s97
    %s98 = sphi 0, %s95
    %s99 = sphi 0, %s98
    %s115 = sphi 0, %s99
    %s123 = sphi 0, %s125
    %s126 = sphi 0, %s123
    %s127 = sphi 0, %s126
    %s143 = sphi 0, %s127
    %s151 = sphi 0, %s153
    %s154 = sphi 0, %s151
    %s155 = sphi 0, %s154
    %s171 = sphi 0, %s155
  $region4: #{resnet18_dense_forward.40} parent=0 // loop_header_branch
    %13 = sbr.rel (%p11) target = $region8
  $region5: #{resnet18_dense_forward.40} parent=0 // loop_body
    %s15 = ssub.s32 %s10, 1
    %s16 = ssub.s32 %s10, 2
    %s26 = sadd.s32 1, %s19
    %p27 = scmp.ge.s32.totalorder %s26, 3
    %s28 = scalar_select %p27, 0, %s26
    %s29 = sadd.s32 1, %s18
    %s30 = scalar_select %p27, %s29, %s18
    %p31 = scmp.ge.s32.totalorder %s30, 1
    %s32 = scalar_select %p31, 0, %s30
    %s33 = sadd.s32 1, %s17
    %s34 = scalar_select %p31, %s33, %s17
    %p35 = scmp.ge.s32.totalorder %s34, 1
    %s36 = scalar_select %p35, 0, %s34
    %s37 = ssub.s32 %s17, %s36
    %s38 = ssub.s32 %s19, %s28
    %s39 = sor.u32 %s37, %s38
    %p40 = scmp.eq.s32.totalorder %s39, 0
    %s42 = sadd.s32 %s41, 1
    %s43 = scalar_select %p40, %s41, %s42
    %p46 = pneg %p40
    %p47 = scmp.eq.s32.totalorder %s10, 2
    %p48 = por %p46, %p47
    %p49 = scmp.ne.s32.totalorder %s41, %s44
    %p50 = scmp.eq.s32.totalorder %s10, 0
    %p51 = por %p49, %p50
    %p52 = scmp.ne.s32.totalorder %s41, %s44
    %p53 = scmp.eq.s32.totalorder %s15, 2
    %p54 = por %p52, %p53
    %p55 = scmp.ne.s32.totalorder %s44, %s45
    %p56 = scmp.eq.s32.totalorder %s15, 0
    %p57 = por %p55, %p56
    %p58 = scmp.ne.s32.totalorder %s44, %s45
    %p59 = scmp.eq.s32.totalorder %s16, 2
    %p60 = por %p58, %p59
    %p62 = scmp.ne.s32.totalorder %s45, %s61
    %p63 = scmp.eq.s32.totalorder %s16, 0
    %p64 = por %p62, %p63
    %s65 = ssub.s32 %s19, %s28
    %s66 = ssub.s32 %s18, %s32
    %s67 = sor.u32 %s65, %s66
    %p68 = scmp.eq.s32.totalorder %s67, 0
    %s70 = sadd.s32 %s69, 1
    %s71 = scalar_select %p68, %s69, %s70
    %p74 = pneg %p68
    %p75 = scmp.eq.s32.totalorder %s10, 2
    %p76 = por %p74, %p75
    %p77 = scmp.ne.s32.totalorder %s69, %s72
    %p78 = scmp.eq.s32.totalorder %s10, 0
    %p79 = por %p77, %p78
    %p80 = scmp.ne.s32.totalorder %s69, %s72
    %p81 = scmp.eq.s32.totalorder %s15, 2
    %p82 = por %p80, %p81
    %p83 = scmp.ne.s32.totalorder %s72, %s73
    %p84 = scmp.eq.s32.totalorder %s15, 0
    %p85 = por %p83, %p84
    %p86 = scmp.ne.s32.totalorder %s72, %s73
    %p87 = scmp.eq.s32.totalorder %s16, 2
    %p88 = por %p86, %p87
    %p90 = scmp.ne.s32.totalorder %s73, %s89
    %p91 = scmp.eq.s32.totalorder %s16, 0
    %p92 = por %p90, %p91
    %s93 = ssub.s32 %s18, %s32
    %p94 = scmp.eq.s32.totalorder %s93, 0
    %s96 = sadd.s32 %s95, 1
    %s97 = scalar_select %p94, %s95, %s96
    %p100 = pneg %p94
    %p101 = scmp.eq.s32.totalorder %s10, 2
    %p102 = por %p100, %p101
    %p103 = scmp.ne.s32.totalorder %s95, %s98
    %p104 = scmp.eq.s32.totalorder %s10, 0
    %p105 = por %p103, %p104
    %p106 = scmp.ne.s32.totalorder %s95, %s98
    %p107 = scmp.eq.s32.totalorder %s15, 2
    %p108 = por %p106, %p107
    %p109 = scmp.ne.s32.totalorder %s98, %s99
    %p110 = scmp.eq.s32.totalorder %s15, 0
    %p111 = por %p109, %p110
    %p112 = scmp.ne.s32.totalorder %s98, %s99
    %p113 = scmp.eq.s32.totalorder %s16, 2
    %p114 = por %p112, %p113
    %p116 = scmp.ne.s32.totalorder %s99, %s115
    %p117 = scmp.eq.s32.totalorder %s16, 0
    %p118 = por %p116, %p117
    %s119 = ssub.s32 %s17, %s36
    %s120 = ssub.s32 %s18, %s32
    %s121 = sor.u32 %s119, %s120
    %p122 = scmp.eq.s32.totalorder %s121, 0
    %s124 = sadd.s32 %s123, 1
    %s125 = scalar_select %p122, %s123, %s124
    %p128 = pneg %p122
    %p129 = scmp.eq.s32.totalorder %s10, 2
    %p130 = por %p128, %p129
    %p131 = scmp.ne.s32.totalorder %s123, %s126
    %p132 = scmp.eq.s32.totalorder %s10, 0
    %p133 = por %p131, %p132
    %p134 = scmp.ne.s32.totalorder %s123, %s126
    %p135 = scmp.eq.s32.totalorder %s15, 2
    %p136 = por %p134, %p135
    %p137 = scmp.ne.s32.totalorder %s126, %s127
    %p138 = scmp.eq.s32.totalorder %s15, 0
    %p139 = por %p137, %p138
    %p140 = scmp.ne.s32.totalorder %s126, %s127
    %p141 = scmp.eq.s32.totalorder %s16, 2
    %p142 = por %p140, %p141
    %p144 = scmp.ne.s32.totalorder %s127, %s143
    %p145 = scmp.eq.s32.totalorder %s16, 0
    %p146 = por %p144, %p145
    %s147 = ssub.s32 %s17, %s36
    %s148 = ssub.s32 %s18, %s32
    %s149 = sor.u32 %s147, %s148
    %p150 = scmp.eq.s32.totalorder %s149, 0
    %s152 = sadd.s32 %s151, 1
    %s153 = scalar_select %p150, %s151, %s152
    %p156 = pneg %p150
    %p157 = scmp.eq.s32.totalorder %s10, 2
    %p158 = por %p156, %p157
    %p159 = scmp.ne.s32.totalorder %s151, %s154
    %p160 = scmp.eq.s32.totalorder %s10, 0
    %p161 = por %p159, %p160
    %p162 = scmp.ne.s32.totalorder %s151, %s154
    %p163 = scmp.eq.s32.totalorder %s15, 2
    %p164 = por %p162, %p163
    %p165 = scmp.ne.s32.totalorder %s154, %s155
    %p166 = scmp.eq.s32.totalorder %s15, 0
    %p167 = por %p165, %p166
    %p168 = scmp.ne.s32.totalorder %s154, %s155
    %p169 = scmp.eq.s32.totalorder %s16, 2
    %p170 = por %p168, %p169
    %p172 = scmp.ne.s32.totalorder %s155, %s171
    %p173 = scmp.eq.s32.totalorder %s16, 0
    %p174 = por %p172, %p173
    %p175 = scmp.le.s32.totalorder 1, %s10
    %p176 = scmp.lt.s32.totalorder %s10, 4
    %p177 = pnand %p175, %p176
    %p178 = pneg %p177
    // Predicated region
    $region9: #{resnet18_dense_forward.40} parent=5 // pred_check
      _
    $region10: #{resnet18_dense_forward.40} parent=5 // pred_check_branch
      %180 = sbr.rel (%p177) target = $region12
    $region11: #{resnet18_dense_forward.40} parent=5 // pred_region
      %s181 = ssub.s32 %s10, 1
      // Predicated region
      $region13: #{resnet18_dense_forward.40} parent=11 // pred_check
        %p182 = pneg %p111
      $region14: #{resnet18_dense_forward.40} parent=11 // pred_check_branch
        %184 = sbr.rel (%p182) target = $region16
      $region15: #{resnet18_dense_forward.40} parent=11 // pred_region
        %p185 = scmp.lt.s32.totalorder %s21, 0
        %s186 = scalar_select %p185, %s21, 0
        %s187 = scalar_lea.vmem %s2, %s186
      $region16: #{resnet18_dense_forward.40} parent=11 // pred_fallthru
        _
      // Predicated region
      $region17: #{resnet18_dense_forward.40} parent=11 // pred_check
        %p188 = pneg %p139
      $region18: #{resnet18_dense_forward.40} parent=11 // pred_check_branch
        %190 = sbr.rel (%p188) target = $region20
      $region19: #{resnet18_dense_forward.40} parent=11 // pred_region
        %p191 = scmp.lt.s32.totalorder %s20, 0
        %s192 = scalar_select %p191, %s20, 0
        %p193 = scmp.lt.s32.totalorder %s21, 0
        %s194 = scalar_select %p193, %s21, 0
        %s195 = sadd.s32 %s194, %s192
        %s196 = smul.addr %s195, 8
        %s197 = scalar_lea.vmem %s3, %s196
      $region20: #{resnet18_dense_forward.40} parent=11 // pred_fallthru
        _
    $region12: #{resnet18_dense_forward.40} parent=5 // pred_fallthru
      _
    %p198 = scmp.lt.s32.totalorder %s10, 3
    // Predicated region
    $region21: #{resnet18_dense_forward.40} parent=5 // pred_check
      %p199 = pneg %p198
    $region22: #{resnet18_dense_forward.40} parent=5 // pred_check_branch
      %201 = sbr.rel (%p199) target = $region24
    $region23: #{resnet18_dense_forward.40} parent=5 // pred_region
      // Predicated region
      $region25: #{resnet18_dense_forward.40} parent=23 // pred_check
        %p202 = pneg %p51
      $region26: #{resnet18_dense_forward.40} parent=23 // pred_check_branch
        %204 = sbr.rel (%p202) target = $region28
      $region27: #{resnet18_dense_forward.40} parent=23 // pred_region
        %s205 = smul.u32 3, %s19
        %p206 = scmp.lt.s32.totalorder %s17, 0
        %s207 = scalar_select %p206, %s17, 0
        %p208 = scmp.lt.s32.totalorder %s205, 8
        %s209 = scalar_select %p208, %s205, 8
        %s210 = smul.addr %s207, 9
        %s211 = sadd.s32 %s209, %s210
        %s212 = smul.addr %s211, 4
        %s213 = scalar_lea.vmem %s0, %s212
        %s214 = smul.u32 3, %s19
      $region28: #{resnet18_dense_forward.40} parent=23 // pred_fallthru
        _
      // Predicated region
      $region29: #{resnet18_dense_forward.40} parent=23 // pred_check
        %p215 = pneg %p79
      $region30: #{resnet18_dense_forward.40} parent=23 // pred_check_branch
        %217 = sbr.rel (%p215) target = $region32
      $region31: #{resnet18_dense_forward.40} parent=23 // pred_region
        %s218 = smul.u32 48, %s19
        %p219 = scmp.lt.s32.totalorder %s218, 143
        %s220 = scalar_select %p219, %s218, 143
        %p221 = scmp.lt.s32.totalorder %s18, 0
        %s222 = scalar_select %p221, %s18, 0
        %s223 = sadd.s32 %s222, %s220
        %s224 = smul.addr %s223, 4
        %s225 = scalar_lea.vmem %s1, %s224
        %s226 = smul.u32 48, %s19
      $region32: #{resnet18_dense_forward.40} parent=23 // pred_fallthru
        _
    $region24: #{resnet18_dense_forward.40} parent=5 // pred_fallthru
      _
    %p227 = scmp.le.s32.totalorder 1, %s10
    %p228 = scmp.lt.s32.totalorder %s10, 4
    %p229 = pnand %p227, %p228
    %p230 = pneg %p229
    // Predicated region
    $region33: #{resnet18_dense_forward.40} parent=5 // pred_check
      _
    $region34: #{resnet18_dense_forward.40} parent=5 // pred_check_branch
      %232 = sbr.rel (%p229) target = $region36
    $region35: #{resnet18_dense_forward.40} parent=5 // pred_region
      %s233 = ssub.s32 %s10, 1
      %s234 = smul.u32 3, %s22
      %p235 = scmp.lt.s32.totalorder %s20, 0
      %s236 = scalar_select %p235, %s20, 0
      %p237 = scmp.lt.s32.totalorder %s234, 8
      %s238 = scalar_select %p237, %s234, 8
      %s239 = smul.addr %s236, 9
      %s240 = sadd.s32 %s238, %s239
      %s241 = smul.addr %s240, 4
      %s242 = scalar_lea.vmem %s0, %s241
      %p243 = pneg %p57
      %p244 = pneg %p54
      %s245 = smul.u32 48, %s22
      %p246 = scmp.lt.s32.totalorder %s245, 143
      %s247 = scalar_select %p246, %s245, 143
      %p248 = scmp.lt.s32.totalorder %s21, 0
      %s249 = scalar_select %p248, %s21, 0
      %s250 = sadd.s32 %s249, %s247
      %s251 = smul.addr %s250, 4
      %s252 = scalar_lea.vmem %s1, %s251
      %p253 = pneg %p85
      %p254 = pneg %p82
      %p255 = scmp.lt.s32.totalorder %s21, 0
      %s256 = scalar_select %p255, %s21, 0
      %s257 = scalar_lea.vmem %s2, %s256
      %p258 = pneg %p111
      %p259 = pneg %p108
      %p260 = scmp.lt.s32.totalorder %s20, 0
      %s261 = scalar_select %p260, %s20, 0
      %p262 = scmp.lt.s32.totalorder %s21, 0
      %s263 = scalar_select %p262, %s21, 0
      %s264 = sadd.s32 %s263, %s261
      %s265 = smul.addr %s264, 8
      %s266 = scalar_lea.vmem %s3, %s265
      %p267 = pneg %p139
      %p268 = pneg %p136
      %p269 = pneg %p167
      %p270 = pneg %p164
      %p271 = scmp.lt.s32.totalorder %s20, 0
      %s272 = scalar_select %p271, %s20, 0
      %p273 = scmp.lt.s32.totalorder %s21, 0
      %s274 = scalar_select %p273, %s21, 0
      %s275 = sadd.s32 %s274, %s272
      %s276 = smul.addr %s275, 8
      %s277 = scalar_lea.vmem %s4, %s276
      %s278 = smul.u32 3, %s22
      %p279 = scmp.lt.s32.totalorder %s20, 0
      %s280 = scalar_select %p279, %s20, 0
      %p281 = scmp.lt.s32.totalorder %s278, 8
      %s282 = scalar_select %p281, %s278, 8
      %s283 = smul.addr %s280, 9
      %s284 = sadd.s32 %s282, %s283
      %s285 = smul.addr %s284, 4
      %s286 = scalar_lea.vmem %s0, %s285
      %s287 = smul.u32 3, %s22
      %s288 = smul.u32 48, %s22
      %p289 = scmp.lt.s32.totalorder %s288, 143
      %s290 = scalar_select %p289, %s288, 143
      %p291 = scmp.lt.s32.totalorder %s21, 0
      %s292 = scalar_select %p291, %s21, 0
      %s293 = sadd.s32 %s292, %s290
      %s294 = smul.addr %s293, 4
      %s295 = scalar_lea.vmem %s1, %s294
      %s296 = smul.u32 48, %s22
      %p297 = scmp.lt.s32.totalorder %s21, 0
      %s298 = scalar_select %p297, %s21, 0
      %s299 = scalar_lea.vmem %s2, %s298
      %p300 = scmp.lt.s32.totalorder %s20, 0
      %s301 = scalar_select %p300, %s20, 0
      %p302 = scmp.lt.s32.totalorder %s21, 0
      %s303 = scalar_select %p302, %s21, 0
      %s304 = sadd.s32 %s303, %s301
      %s305 = smul.addr %s304, 8
      %s306 = scalar_lea.vmem %s3, %s305
      %p307 = scmp.lt.s32.totalorder %s20, 0
      %s308 = scalar_select %p307, %s20, 0
      %p309 = scmp.lt.s32.totalorder %s21, 0
      %s310 = scalar_select %p309, %s21, 0
      %s311 = sadd.s32 %s310, %s308
      %s312 = smul.addr %s311, 8
      %s313 = scalar_lea.vmem %s4, %s312
      %p315 = scmp.eq.s32.totalorder %s22, 0
      // Predicated region
      $region37: #{resnet18_dense_forward.40} parent=35 // pred_check
        %p316 = pneg %p315
      $region38: #{resnet18_dense_forward.40} parent=35 // pred_check_branch
        %318 = sbr.rel (%p316) target = $region40
      $region39: #{resnet18_dense_forward.40} parent=35 // pred_region
        %319 = vst [vmem:[#allocation2] sm:$0xff] 0.0
      $region40: #{resnet18_dense_forward.40} parent=35 // pred_fallthru
        _
      %v320 = vld [vmem:[#allocation2] sm:$0xff]
      %v321 = vld [vmem:[%s286] sm:$0xff]
      %v322 = vld [vmem:[%s286 + $0x8] sm:$0xf]
      %v323 = vld [vmem:[%s295] sm:$0xf]
      %v324 = vld [vmem:[%s295 + $0x4] sm:$0xf]
      %v325 = vld [vmem:[%s295 + $0x8] sm:$0xf]
      %v326 = vld [vmem:[%s295 + $0xc] sm:$0xf]
      %v327 = vld [vmem:[%s295 + $0x10] sm:$0xf]
      %v328 = vld [vmem:[%s295 + $0x14] sm:$0xf]
      %v329 = vld [vmem:[%s295 + $0x18] sm:$0xf]
      %v330 = vld [vmem:[%s295 + $0x1c] sm:$0xf]
      %v331 = vld [vmem:[%s295 + $0x20] sm:$0xf]
      %v332 = vld [vmem:[%s295 + $0x24] sm:$0xf]
      %v333 = vld [vmem:[%s295 + $0x28] sm:$0xf]
      %v334 = vld [vmem:[%s295 + $0x2c] sm:$0xf]
      %v335 = vld [vmem:[%s295 + $0x30] sm:$0xf]
      %v336 = vld [vmem:[%s295 + $0x34] sm:$0xf]
      %v337 = vld [vmem:[%s295 + $0x38] sm:$0xf]
      %v338 = vld [vmem:[%s295 + $0x3c] sm:$0xf]
      %v339 = vld [vmem:[%s295 + $0x40] sm:$0xf]
      %v340 = vld [vmem:[%s295 + $0x44] sm:$0xf]
      %v341 = vld [vmem:[%s295 + $0x48] sm:$0xf]
      %v342 = vld [vmem:[%s295 + $0x4c] sm:$0xf]
      %v343 = vld [vmem:[%s295 + $0x50] sm:$0xf]
      %v344 = vld [vmem:[%s295 + $0x54] sm:$0xf]
      %v345 = vld [vmem:[%s295 + $0x58] sm:$0xf]
      %v346 = vld [vmem:[%s295 + $0x5c] sm:$0xf]
      %v347 = vld [vmem:[%s295 + $0x60] sm:$0xf]
      %v348 = vld [vmem:[%s295 + $0x64] sm:$0xf]
      %v349 = vld [vmem:[%s295 + $0x68] sm:$0xf]
      %v350 = vld [vmem:[%s295 + $0x6c] sm:$0xf]
      %v351 = vld [vmem:[%s295 + $0x70] sm:$0xf]
      %v352 = vld [vmem:[%s295 + $0x74] sm:$0xf]
      %v353 = vld [vmem:[%s295 + $0x78] sm:$0xf]
      %v354 = vld [vmem:[%s295 + $0x7c] sm:$0xf]
      %v355 = vld [vmem:[%s295 + $0x80] sm:$0xf]
      %v356 = vld [vmem:[%s295 + $0x84] sm:$0xf]
      %v357 = vld [vmem:[%s295 + $0x88] sm:$0xf]
      %v358 = vld [vmem:[%s295 + $0x8c] sm:$0xf]
      %v359 = vld [vmem:[%s295 + $0x90] sm:$0xf]
      %v360 = vld [vmem:[%s295 + $0x94] sm:$0xf]
      %v361 = vld [vmem:[%s295 + $0x98] sm:$0xf]
      %v362 = vld [vmem:[%s295 + $0x9c] sm:$0xf]
      %v363 = vld [vmem:[%s295 + $0xa0] sm:$0xf]
      %v364 = vld [vmem:[%s295 + $0xa4] sm:$0xf]
      %v365 = vld [vmem:[%s295 + $0xa8] sm:$0xf]
      %v366 = vld [vmem:[%s295 + $0xac] sm:$0xf]
      %v367 = vld [vmem:[%s295 + $0xb0] sm:$0xf]
      %v368 = vld [vmem:[%s295 + $0xb4] sm:$0xf]
      %v369 = vld [vmem:[%s295 + $0xb8] sm:$0xf]
      %v370 = vld [vmem:[%s295 + $0xbc] sm:$0xf]
      %v373 = vunpack.c.l.b16 %v321
      %v374 = vunpack.c.h.b16 %v321
      %v375 = vunpack.c.l.b16 %v322
      %v376 = vpack.c.b16 %v373, %v373
      %v377 = vpack.c.b16 %v374, %v374
      %v378 = vpack.c.b16 %v375, %v375
      %v430 = vunpack.c.l.b16 %v323
      %v431 = vunpack.c.l.b16 %v324
      %v432 = vunpack.c.l.b16 %v325
      %v433 = vunpack.c.l.b16 %v326
      %v434 = vunpack.c.l.b16 %v327
      %v435 = vunpack.c.l.b16 %v328
      %v436 = vunpack.c.l.b16 %v329
      %v437 = vunpack.c.l.b16 %v330
      %v438 = vunpack.c.l.b16 %v331
      %v439 = vunpack.c.l.b16 %v332
      %v440 = vunpack.c.l.b16 %v333
      %v441 = vunpack.c.l.b16 %v334
      %v442 = vunpack.c.l.b16 %v335
      %v443 = vunpack.c.l.b16 %v336
      %v444 = vunpack.c.l.b16 %v337
      %v445 = vunpack.c.l.b16 %v338
      %v446 = vunpack.c.l.b16 %v339
      %v447 = vunpack.c.l.b16 %v340
      %v448 = vunpack.c.l.b16 %v341
      %v449 = vunpack.c.l.b16 %v342
      %v450 = vunpack.c.l.b16 %v343
      %v451 = vunpack.c.l.b16 %v344
      %v452 = vunpack.c.l.b16 %v345
      %v453 = vunpack.c.l.b16 %v346
      %v454 = vunpack.c.l.b16 %v347
      %v455 = vunpack.c.l.b16 %v348
      %v456 = vunpack.c.l.b16 %v349
      %v457 = vunpack.c.l.b16 %v350
      %v458 = vunpack.c.l.b16 %v351
      %v459 = vunpack.c.l.b16 %v352
      %v460 = vunpack.c.l.b16 %v353
      %v461 = vunpack.c.l.b16 %v354
      %v462 = vunpack.c.l.b16 %v355
      %v463 = vunpack.c.l.b16 %v356
      %v464 = vunpack.c.l.b16 %v357
      %v465 = vunpack.c.l.b16 %v358
      %v466 = vunpack.c.l.b16 %v359
      %v467 = vunpack.c.l.b16 %v360
      %v468 = vunpack.c.l.b16 %v361
      %v469 = vunpack.c.l.b16 %v362
      %v470 = vunpack.c.l.b16 %v363
      %v471 = vunpack.c.l.b16 %v364
      %v472 = vunpack.c.l.b16 %v365
      %v473 = vunpack.c.l.b16 %v366
      %v474 = vunpack.c.l.b16 %v367
      %v475 = vunpack.c.l.b16 %v368
      %v476 = vunpack.c.l.b16 %v369
      %v477 = vunpack.c.l.b16 %v370
      %v478 = vpack.c.b16 %v431, %v430
      %v479 = vpack.c.b16 %v433, %v432
      %v480 = vpack.c.b16 %v435, %v434
      %v481 = vpack.c.b16 %v437, %v436
      %v482 = vpack.c.b16 %v439, %v438
      %v483 = vpack.c.b16 %v441, %v440
      %v484 = vpack.c.b16 %v443, %v442
      %v485 = vpack.c.b16 %v445, %v444
      %v486 = vpack.c.b16 %v447, %v446
      %v487 = vpack.c.b16 %v449, %v448
      %v488 = vpack.c.b16 %v451, %v450
      %v489 = vpack.c.b16 %v453, %v452
      %v490 = vpack.c.b16 %v455, %v454
      %v491 = vpack.c.b16 %v457, %v456
      %v492 = vpack.c.b16 %v459, %v458
      %v493 = vpack.c.b16 %v461, %v460
      %v494 = vpack.c.b16 %v463, %v462
      %v495 = vpack.c.b16 %v465, %v464
      %v496 = vpack.c.b16 %v467, %v466
      %v497 = vpack.c.b16 %v469, %v468
      %v498 = vpack.c.b16 %v471, %v470
      %v499 = vpack.c.b16 %v473, %v472
      %v500 = vpack.c.b16 %v475, %v474
      %v501 = vpack.c.b16 %v477, %v476
      %526 = vmatprep.subr.bf16.mxu0 0
      %527 = vmatpush1.bf16.msra.mxu0 %v478
      %528 = vmatprep.subr.bf16.mxu0 0
      %529 = vmatpush1.bf16.msra.mxu0 %v479
      %530 = vmatprep.subr.bf16.mxu0 0
      %531 = vmatpush1.bf16.msra.mxu0 %v480
      %532 = vmatprep.subr.bf16.mxu0 0
      %533 = vmatpush1.bf16.msra.mxu0 %v481
      %534 = vmatprep.subr.bf16.mxu0 0
      %535 = vmatpush1.bf16.msra.mxu0 %v482
      %536 = vmatprep.subr.bf16.mxu0 0
      %537 = vmatpush1.bf16.msra.mxu0 %v483
      %538 = vmatprep.subr.bf16.mxu0 0
      %539 = vmatpush1.bf16.msra.mxu0 %v484
      %540 = vmatprep.subr.bf16.mxu0 0
      %541 = vmatpush1.bf16.msra.mxu0 %v485
      %542 = vmatprep.subr.bf16.mxu0 0
      %543 = vmatpush1.bf16.msra.mxu0 %v486
      %544 = vmatprep.subr.bf16.mxu0 0
      %545 = vmatpush1.bf16.msra.mxu0 %v487
      %546 = vmatprep.subr.bf16.mxu0 0
      %547 = vmatpush1.bf16.msra.mxu0 %v488
      %548 = vmatprep.subr.bf16.mxu0 0
      %549 = vmatpush1.bf16.msra.mxu0 %v489
      %550 = vmatprep.subr.bf16.mxu0 0
      %551 = vmatpush1.bf16.msra.mxu0 %v490
      %552 = vmatprep.subr.bf16.mxu0 0
      %553 = vmatpush1.bf16.msra.mxu0 %v491
      %554 = vmatprep.subr.bf16.mxu0 0
      %555 = vmatpush1.bf16.msra.mxu0 %v492
      %556 = vmatprep.subr.bf16.mxu0 0
      %557 = vmatpush1.bf16.msra.mxu0 %v493
      %558 = vmatprep.mubr.bf16.mxu0 %v377
      %559 = vmatmul.mubr.bf16.gmra.mrb[0].mxu0 %v376
      %v560 = vpop.f32.mrb[0].mxu0
      %v561 = vadd.f32 0.0, %v560
      %v562 = vpop.f32.mrb[0].mxu0
      %v563 = vpop.f32.mrb[0].mxu0
      %v564 = vpop.f32.mrb[0].mxu0
      %565 = vdwg.mxu0
      %566 = vmatprep.subr.bf16.mxu0 0
      %567 = vmatpush1.bf16.msra.mxu0 %v494
      %568 = vmatprep.subr.bf16.mxu0 0
      %569 = vmatpush1.bf16.msra.mxu0 %v495
      %570 = vmatprep.subr.bf16.mxu0 0
      %571 = vmatpush1.bf16.msra.mxu0 %v496
      %572 = vmatprep.subr.bf16.mxu0 0
      %573 = vmatpush1.bf16.msra.mxu0 %v497
      %574 = vmatprep.subr.bf16.mxu0 0
      %575 = vmatpush1.bf16.msra.mxu0 %v498
      %576 = vmatprep.subr.bf16.mxu0 0
      %577 = vmatpush1.bf16.msra.mxu0 %v499
      %578 = vmatprep.subr.bf16.mxu0 0
      %579 = vmatpush1.bf16.msra.mxu0 %v500
      %580 = vmatprep.subr.bf16.mxu0 0
      %581 = vmatpush1.bf16.msra.mxu0 %v501
      %582 = vmatprep.subr.bf16.mxu0 0
      %583 = vmatpush1.bf16.msra.mxu0 0
      %584 = vmatprep.subr.bf16.mxu0 0
      %585 = vmatpush1.bf16.msra.mxu0 0
      %586 = vmatprep.subr.bf16.mxu0 0
      %587 = vmatpush1.bf16.msra.mxu0 0
      %588 = vmatprep.subr.bf16.mxu0 0
      %589 = vmatpush1.bf16.msra.mxu0 0
      %590 = vmatprep.subr.bf16.mxu0 0
      %591 = vmatpush1.bf16.msra.mxu0 0
      %592 = vmatprep.subr.bf16.mxu0 0
      %593 = vmatpush1.bf16.msra.mxu0 0
      %594 = vmatprep.subr.bf16.mxu0 0
      %595 = vmatpush1.bf16.msra.mxu0 0
      %596 = vmatprep.subr.bf16.mxu0 0
      %597 = vmatpush1.bf16.msra.mxu0 0
      %598 = vmatprep.mubr.bf16.mxu0 0
      %599 = vmatmul.mubr.bf16.gmra.mrb[0].mxu0 %v378
      %v600 = vpop.f32.mrb[0].mxu0
      %v601 = vadd.f32 %v561, %v600
      %v602 = vpop.f32.mrb[0].mxu0
      %v603 = vpop.f32.mrb[0].mxu0
      %v604 = vpop.f32.mrb[0].mxu0
      %605 = vdwg.mxu0
      %v606 = vadd.f32 %v320, %v601
      %607 = vst [vmem:[#allocation2] sm:$0xff] %v606
      %p608 = scmp.eq.s32.totalorder %s22, 2
      // Predicated region
      $region41: #{resnet18_dense_forward.40} parent=35 // pred_check
        %p609 = pneg %p608
      $region42: #{resnet18_dense_forward.40} parent=35 // pred_check_branch
        %611 = sbr.rel (%p609) target = $region44
      $region43: #{resnet18_dense_forward.40} parent=35 // pred_region
        %v612 = vld [vmem:[#allocation2] sm:$0xff]
        %v613 = vld [vmem:[%s299] sm:$0x1]
        %v615 = vlaneseq
        %v616 = vshrl.u32 %v615, 7
        %v617 = vsub.s32 0, %v616
        %v618 = vrot.slane %v613, %v617
        %v620 = vadd.f32 %v612, %v618
        %v621 = vld [vmem:[%s306] sm:$0xff]
        %v622 = vadd.f32 %v620, %v621
        %v623 = vmax.f32 %v622, 0.0
        %624 = vst [vmem:[%s313] sm:$0xff] %v623
      $region44: #{resnet18_dense_forward.40} parent=35 // pred_fallthru
        _
      %p625 = scmp.lt.s32.totalorder %s20, 0
      %s626 = scalar_select %p625, %s20, 0
      %p627 = scmp.lt.s32.totalorder %s21, 0
      %s628 = scalar_select %p627, %s21, 0
      %s629 = sadd.s32 %s628, %s626
      %s630 = smul.addr %s629, 8
      %s631 = scalar_lea.vmem %s4, %s630
      // Predicated region
      $region45: #{resnet18_dense_forward.40} parent=35 // pred_check
        %p632 = pneg %p164
      $region46: #{resnet18_dense_forward.40} parent=35 // pred_check_branch
        %634 = sbr.rel (%p632) target = $region48
      $region47: #{resnet18_dense_forward.40} parent=35 // pred_region
        _
      $region48: #{resnet18_dense_forward.40} parent=35 // pred_fallthru
        _
      // Predicated region
      $region49: #{resnet18_dense_forward.40} parent=35 // pred_check
        %p635 = pneg %p164
      $region50: #{resnet18_dense_forward.40} parent=35 // pred_check_branch
        %637 = sbr.rel (%p635) target = $region52
      $region51: #{resnet18_dense_forward.40} parent=35 // pred_region
        %p638 = scmp.lt.s32.totalorder %s20, 0
        %s639 = scalar_select %p638, %s20, 0
        %p640 = scmp.lt.s32.totalorder %s21, 0
        %s641 = scalar_select %p640, %s21, 0
        %s642 = sadd.s32 %s641, %s639
        %s643 = smul.addr %s642, 8
        %s644 = scalar_lea.vmem %s4, %s643
      $region52: #{resnet18_dense_forward.40} parent=35 // pred_fallthru
        _
    $region36: #{resnet18_dense_forward.40} parent=5 // pred_fallthru
      _
    %p645 = scmp.le.s32.totalorder 2, %s10
    // Predicated region
    $region53: #{resnet18_dense_forward.40} parent=5 // pred_check
      %p646 = pneg %p645
    $region54: #{resnet18_dense_forward.40} parent=5 // pred_check_branch
      %648 = sbr.rel (%p646) target = $region56
    $region55: #{resnet18_dense_forward.40} parent=5 // pred_region
      %s649 = ssub.s32 %s10, 2
    $region56: #{resnet18_dense_forward.40} parent=5 // pred_fallthru
      _
  $region6: #{resnet18_dense_forward.40} parent=0 // loop_footer
    %s14 = sadd.s32 1, %s10
  $region7: #{resnet18_dense_forward.40} parent=0 // loop_footer_branch
    %9 = sbr.rel target = $region3
  $region8: #{resnet18_dense_forward.40} parent=0 // loop_exit
    _

// kernel: resnet18_dense_forward.41
$region0: #{resnet18_dense_forward.41}
  #allocation0 [shape = 'u32[]', space=smem, size = 0x4, offset = 0x4, fixed_abs, tag = 'smem constant byte address 0x4 - core index']
  #allocation1 [shape = 'u32[144,128]{1,0:T(1,128)}', space=vmem, size = 0x12000, scoped, tag = 'internal scratch']
  #allocation2 [shape = 'f32[8,128]{1,0:T(8,128)}', space=vmem, size = 0x1000, scoped, tag = 'scratch operand']
  %s0 = inlined_call_operand.vmem [shape: bf16[8,1152], index: 0, kind: input, shape index: {}]
  %s1 = inlined_call_operand.vmem [shape: bf16[1152,128], index: 1, kind: input, shape index: {}]
  %s2 = inlined_call_operand.vmem [shape: f32[1,128], index: 2, kind: input, shape index: {}]
  %s3 = inlined_call_operand.vmem [shape: f32[8,128], index: 3, kind: output, shape index: {}]
  %s4 = sld [smem:[#allocation0]]
  $region53: #{resnet18_dense_forward.41} parent=0
    _
  %s6 = ssub.s32 1, %s4
  %s7 = scalar_select 0, %s6, %s4
  loop: start=0, step=1, limit=5
  $region2: #{resnet18_dense_forward.41} parent=0 // loop_pre_header
    _
  $region3: #{resnet18_dense_forward.41} parent=0 // loop_header
    %s9 = sphi 0, %s13
    %p10 = scmp.ge.s32.totalorder %s9, 5
    %s16 = sphi 0, %s35
    %s17 = sphi 0, %s31
    %s18 = sphi 0, %s27
    %s19 = sphi 0, %s16
    %s20 = sphi 0, %s17
    %s21 = sphi 0, %s18
    %s22 = sphi 0, %s19
    %s23 = sphi 0, %s20
    %s24 = sphi 0, %s21
    %s40 = sphi 0, %s42
    %s43 = sphi 0, %s40
    %s44 = sphi 0, %s43
    %s60 = sphi 0, %s44
    %s68 = sphi 0, %s70
    %s71 = sphi 0, %s68
    %s72 = sphi 0, %s71
    %s88 = sphi 0, %s72
    %s94 = sphi 0, %s96
    %s97 = sphi 0, %s94
    %s98 = sphi 0, %s97
    %s114 = sphi 0, %s98
    %s122 = sphi 0, %s124
    %s125 = sphi 0, %s122
    %s126 = sphi 0, %s125
    %s142 = sphi 0, %s126
  $region4: #{resnet18_dense_forward.41} parent=0 // loop_header_branch
    %12 = sbr.rel (%p10) target = $region8
  $region5: #{resnet18_dense_forward.41} parent=0 // loop_body
    %s14 = ssub.s32 %s9, 1
    %s15 = ssub.s32 %s9, 2
    %s25 = sadd.s32 1, %s18
    %p26 = scmp.ge.s32.totalorder %s25, 3
    %s27 = scalar_select %p26, 0, %s25
    %s28 = sadd.s32 1, %s17
    %s29 = scalar_select %p26, %s28, %s17
    %p30 = scmp.ge.s32.totalorder %s29, 1
    %s31 = scalar_select %p30, 0, %s29
    %s32 = sadd.s32 1, %s16
    %s33 = scalar_select %p30, %s32, %s16
    %p34 = scmp.ge.s32.totalorder %s33, 1
    %s35 = scalar_select %p34, 0, %s33
    %s36 = ssub.s32 %s16, %s35
    %s37 = ssub.s32 %s18, %s27
    %s38 = sor.u32 %s36, %s37
    %p39 = scmp.eq.s32.totalorder %s38, 0
    %s41 = sadd.s32 %s40, 1
    %s42 = scalar_select %p39, %s40, %s41
    %p45 = pneg %p39
    %p46 = scmp.eq.s32.totalorder %s9, 2
    %p47 = por %p45, %p46
    %p48 = scmp.ne.s32.totalorder %s40, %s43
    %p49 = scmp.eq.s32.totalorder %s9, 0
    %p50 = por %p48, %p49
    %p51 = scmp.ne.s32.totalorder %s40, %s43
    %p52 = scmp.eq.s32.totalorder %s14, 2
    %p53 = por %p51, %p52
    %p54 = scmp.ne.s32.totalorder %s43, %s44
    %p55 = scmp.eq.s32.totalorder %s14, 0
    %p56 = por %p54, %p55
    %p57 = scmp.ne.s32.totalorder %s43, %s44
    %p58 = scmp.eq.s32.totalorder %s15, 2
    %p59 = por %p57, %p58
    %p61 = scmp.ne.s32.totalorder %s44, %s60
    %p62 = scmp.eq.s32.totalorder %s15, 0
    %p63 = por %p61, %p62
    %s64 = ssub.s32 %s18, %s27
    %s65 = ssub.s32 %s17, %s31
    %s66 = sor.u32 %s64, %s65
    %p67 = scmp.eq.s32.totalorder %s66, 0
    %s69 = sadd.s32 %s68, 1
    %s70 = scalar_select %p67, %s68, %s69
    %p73 = pneg %p67
    %p74 = scmp.eq.s32.totalorder %s9, 2
    %p75 = por %p73, %p74
    %p76 = scmp.ne.s32.totalorder %s68, %s71
    %p77 = scmp.eq.s32.totalorder %s9, 0
    %p78 = por %p76, %p77
    %p79 = scmp.ne.s32.totalorder %s68, %s71
    %p80 = scmp.eq.s32.totalorder %s14, 2
    %p81 = por %p79, %p80
    %p82 = scmp.ne.s32.totalorder %s71, %s72
    %p83 = scmp.eq.s32.totalorder %s14, 0
    %p84 = por %p82, %p83
    %p85 = scmp.ne.s32.totalorder %s71, %s72
    %p86 = scmp.eq.s32.totalorder %s15, 2
    %p87 = por %p85, %p86
    %p89 = scmp.ne.s32.totalorder %s72, %s88
    %p90 = scmp.eq.s32.totalorder %s15, 0
    %p91 = por %p89, %p90
    %s92 = ssub.s32 %s17, %s31
    %p93 = scmp.eq.s32.totalorder %s92, 0
    %s95 = sadd.s32 %s94, 1
    %s96 = scalar_select %p93, %s94, %s95
    %p99 = pneg %p93
    %p100 = scmp.eq.s32.totalorder %s9, 2
    %p101 = por %p99, %p100
    %p102 = scmp.ne.s32.totalorder %s94, %s97
    %p103 = scmp.eq.s32.totalorder %s9, 0
    %p104 = por %p102, %p103
    %p105 = scmp.ne.s32.totalorder %s94, %s97
    %p106 = scmp.eq.s32.totalorder %s14, 2
    %p107 = por %p105, %p106
    %p108 = scmp.ne.s32.totalorder %s97, %s98
    %p109 = scmp.eq.s32.totalorder %s14, 0
    %p110 = por %p108, %p109
    %p111 = scmp.ne.s32.totalorder %s97, %s98
    %p112 = scmp.eq.s32.totalorder %s15, 2
    %p113 = por %p111, %p112
    %p115 = scmp.ne.s32.totalorder %s98, %s114
    %p116 = scmp.eq.s32.totalorder %s15, 0
    %p117 = por %p115, %p116
    %s118 = ssub.s32 %s16, %s35
    %s119 = ssub.s32 %s17, %s31
    %s120 = sor.u32 %s118, %s119
    %p121 = scmp.eq.s32.totalorder %s120, 0
    %s123 = sadd.s32 %s122, 1
    %s124 = scalar_select %p121, %s122, %s123
    %p127 = pneg %p121
    %p128 = scmp.eq.s32.totalorder %s9, 2
    %p129 = por %p127, %p128
    %p130 = scmp.ne.s32.totalorder %s122, %s125
    %p131 = scmp.eq.s32.totalorder %s9, 0
    %p132 = por %p130, %p131
    %p133 = scmp.ne.s32.totalorder %s122, %s125
    %p134 = scmp.eq.s32.totalorder %s14, 2
    %p135 = por %p133, %p134
    %p136 = scmp.ne.s32.totalorder %s125, %s126
    %p137 = scmp.eq.s32.totalorder %s14, 0
    %p138 = por %p136, %p137
    %p139 = scmp.ne.s32.totalorder %s125, %s126
    %p140 = scmp.eq.s32.totalorder %s15, 2
    %p141 = por %p139, %p140
    %p143 = scmp.ne.s32.totalorder %s126, %s142
    %p144 = scmp.eq.s32.totalorder %s15, 0
    %p145 = por %p143, %p144
    %p146 = scmp.le.s32.totalorder 1, %s9
    %p147 = scmp.lt.s32.totalorder %s9, 4
    %p148 = pnand %p146, %p147
    %p149 = pneg %p148
    // Predicated region
    $region9: #{resnet18_dense_forward.41} parent=5 // pred_check
      _
    $region10: #{resnet18_dense_forward.41} parent=5 // pred_check_branch
      %151 = sbr.rel (%p148) target = $region12
    $region11: #{resnet18_dense_forward.41} parent=5 // pred_region
      %s152 = ssub.s32 %s9, 1
      // Predicated region
      $region13: #{resnet18_dense_forward.41} parent=11 // pred_check
        %p153 = pneg %p110
      $region14: #{resnet18_dense_forward.41} parent=11 // pred_check_branch
        %155 = sbr.rel (%p153) target = $region16
      $region15: #{resnet18_dense_forward.41} parent=11 // pred_region
        %p156 = scmp.lt.s32.totalorder %s20, 0
        %s157 = scalar_select %p156, %s20, 0
        %s158 = scalar_lea.vmem %s2, %s157
      $region16: #{resnet18_dense_forward.41} parent=11 // pred_fallthru
        _
    $region12: #{resnet18_dense_forward.41} parent=5 // pred_fallthru
      _
    %p159 = scmp.lt.s32.totalorder %s9, 3
    // Predicated region
    $region17: #{resnet18_dense_forward.41} parent=5 // pred_check
      %p160 = pneg %p159
    $region18: #{resnet18_dense_forward.41} parent=5 // pred_check_branch
      %162 = sbr.rel (%p160) target = $region20
    $region19: #{resnet18_dense_forward.41} parent=5 // pred_region
      // Predicated region
      $region21: #{resnet18_dense_forward.41} parent=19 // pred_check
        %p163 = pneg %p50
      $region22: #{resnet18_dense_forward.41} parent=19 // pred_check_branch
        %165 = sbr.rel (%p163) target = $region24
      $region23: #{resnet18_dense_forward.41} parent=19 // pred_region
        %s166 = smul.u32 3, %s18
        %p167 = scmp.lt.s32.totalorder %s16, 0
        %s168 = scalar_select %p167, %s16, 0
        %p169 = scmp.lt.s32.totalorder %s166, 8
        %s170 = scalar_select %p169, %s166, 8
        %s171 = smul.addr %s168, 9
        %s172 = sadd.s32 %s170, %s171
        %s173 = smul.addr %s172, 4
        %s174 = scalar_lea.vmem %s0, %s173
        %s175 = smul.u32 3, %s18
      $region24: #{resnet18_dense_forward.41} parent=19 // pred_fallthru
        _
      // Predicated region
      $region25: #{resnet18_dense_forward.41} parent=19 // pred_check
        %p176 = pneg %p78
      $region26: #{resnet18_dense_forward.41} parent=19 // pred_check_branch
        %178 = sbr.rel (%p176) target = $region28
      $region27: #{resnet18_dense_forward.41} parent=19 // pred_region
        %s179 = smul.u32 48, %s18
        %p180 = scmp.lt.s32.totalorder %s179, 143
        %s181 = scalar_select %p180, %s179, 143
        %p182 = scmp.lt.s32.totalorder %s17, 0
        %s183 = scalar_select %p182, %s17, 0
        %s184 = sadd.s32 %s183, %s181
        %s185 = smul.addr %s184, 4
        %s186 = scalar_lea.vmem %s1, %s185
        %s187 = smul.u32 48, %s18
      $region28: #{resnet18_dense_forward.41} parent=19 // pred_fallthru
        _
    $region20: #{resnet18_dense_forward.41} parent=5 // pred_fallthru
      _
    %p188 = scmp.le.s32.totalorder 1, %s9
    %p189 = scmp.lt.s32.totalorder %s9, 4
    %p190 = pnand %p188, %p189
    %p191 = pneg %p190
    // Predicated region
    $region29: #{resnet18_dense_forward.41} parent=5 // pred_check
      _
    $region30: #{resnet18_dense_forward.41} parent=5 // pred_check_branch
      %193 = sbr.rel (%p190) target = $region32
    $region31: #{resnet18_dense_forward.41} parent=5 // pred_region
      %s194 = ssub.s32 %s9, 1
      %s195 = smul.u32 3, %s21
      %p196 = scmp.lt.s32.totalorder %s19, 0
      %s197 = scalar_select %p196, %s19, 0
      %p198 = scmp.lt.s32.totalorder %s195, 8
      %s199 = scalar_select %p198, %s195, 8
      %s200 = smul.addr %s197, 9
      %s201 = sadd.s32 %s199, %s200
      %s202 = smul.addr %s201, 4
      %s203 = scalar_lea.vmem %s0, %s202
      %p204 = pneg %p56
      %p205 = pneg %p53
      %s206 = smul.u32 48, %s21
      %p207 = scmp.lt.s32.totalorder %s206, 143
      %s208 = scalar_select %p207, %s206, 143
      %p209 = scmp.lt.s32.totalorder %s20, 0
      %s210 = scalar_select %p209, %s20, 0
      %s211 = sadd.s32 %s210, %s208
      %s212 = smul.addr %s211, 4
      %s213 = scalar_lea.vmem %s1, %s212
      %p214 = pneg %p84
      %p215 = pneg %p81
      %p216 = scmp.lt.s32.totalorder %s20, 0
      %s217 = scalar_select %p216, %s20, 0
      %s218 = scalar_lea.vmem %s2, %s217
      %p219 = pneg %p110
      %p220 = pneg %p107
      %p221 = pneg %p138
      %p222 = pneg %p135
      %p223 = scmp.lt.s32.totalorder %s19, 0
      %s224 = scalar_select %p223, %s19, 0
      %p225 = scmp.lt.s32.totalorder %s20, 0
      %s226 = scalar_select %p225, %s20, 0
      %s227 = sadd.s32 %s226, %s224
      %s228 = smul.addr %s227, 8
      %s229 = scalar_lea.vmem %s3, %s228
      %s230 = smul.u32 3, %s21
      %p231 = scmp.lt.s32.totalorder %s19, 0
      %s232 = scalar_select %p231, %s19, 0
      %p233 = scmp.lt.s32.totalorder %s230, 8
      %s234 = scalar_select %p233, %s230, 8
      %s235 = smul.addr %s232, 9
      %s236 = sadd.s32 %s234, %s235
      %s237 = smul.addr %s236, 4
      %s238 = scalar_lea.vmem %s0, %s237
      %s239 = smul.u32 3, %s21
      %s240 = smul.u32 48, %s21
      %p241 = scmp.lt.s32.totalorder %s240, 143
      %s242 = scalar_select %p241, %s240, 143
      %p243 = scmp.lt.s32.totalorder %s20, 0
      %s244 = scalar_select %p243, %s20, 0
      %s245 = sadd.s32 %s244, %s242
      %s246 = smul.addr %s245, 4
      %s247 = scalar_lea.vmem %s1, %s246
      %s248 = smul.u32 48, %s21
      %p249 = scmp.lt.s32.totalorder %s20, 0
      %s250 = scalar_select %p249, %s20, 0
      %s251 = scalar_lea.vmem %s2, %s250
      %p252 = scmp.lt.s32.totalorder %s19, 0
      %s253 = scalar_select %p252, %s19, 0
      %p254 = scmp.lt.s32.totalorder %s20, 0
      %s255 = scalar_select %p254, %s20, 0
      %s256 = sadd.s32 %s255, %s253
      %s257 = smul.addr %s256, 8
      %s258 = scalar_lea.vmem %s3, %s257
      %p260 = scmp.eq.s32.totalorder %s21, 0
      // Predicated region
      $region33: #{resnet18_dense_forward.41} parent=31 // pred_check
        %p261 = pneg %p260
      $region34: #{resnet18_dense_forward.41} parent=31 // pred_check_branch
        %263 = sbr.rel (%p261) target = $region36
      $region35: #{resnet18_dense_forward.41} parent=31 // pred_region
        %264 = vst [vmem:[#allocation2] sm:$0xff] 0.0
      $region36: #{resnet18_dense_forward.41} parent=31 // pred_fallthru
        _
      %v265 = vld [vmem:[#allocation2] sm:$0xff]
      %v266 = vld [vmem:[%s238] sm:$0xff]
      %v267 = vld [vmem:[%s238 + $0x8] sm:$0xf]
      %v268 = vld [vmem:[%s247] sm:$0xf]
      %v269 = vld [vmem:[%s247 + $0x4] sm:$0xf]
      %v270 = vld [vmem:[%s247 + $0x8] sm:$0xf]
      %v271 = vld [vmem:[%s247 + $0xc] sm:$0xf]
      %v272 = vld [vmem:[%s247 + $0x10] sm:$0xf]
      %v273 = vld [vmem:[%s247 + $0x14] sm:$0xf]
      %v274 = vld [vmem:[%s247 + $0x18] sm:$0xf]
      %v275 = vld [vmem:[%s247 + $0x1c] sm:$0xf]
      %v276 = vld [vmem:[%s247 + $0x20] sm:$0xf]
      %v277 = vld [vmem:[%s247 + $0x24] sm:$0xf]
      %v278 = vld [vmem:[%s247 + $0x28] sm:$0xf]
      %v279 = vld [vmem:[%s247 + $0x2c] sm:$0xf]
      %v280 = vld [vmem:[%s247 + $0x30] sm:$0xf]
      %v281 = vld [vmem:[%s247 + $0x34] sm:$0xf]
      %v282 = vld [vmem:[%s247 + $0x38] sm:$0xf]
      %v283 = vld [vmem:[%s247 + $0x3c] sm:$0xf]
      %v284 = vld [vmem:[%s247 + $0x40] sm:$0xf]
      %v285 = vld [vmem:[%s247 + $0x44] sm:$0xf]
      %v286 = vld [vmem:[%s247 + $0x48] sm:$0xf]
      %v287 = vld [vmem:[%s247 + $0x4c] sm:$0xf]
      %v288 = vld [vmem:[%s247 + $0x50] sm:$0xf]
      %v289 = vld [vmem:[%s247 + $0x54] sm:$0xf]
      %v290 = vld [vmem:[%s247 + $0x58] sm:$0xf]
      %v291 = vld [vmem:[%s247 + $0x5c] sm:$0xf]
      %v292 = vld [vmem:[%s247 + $0x60] sm:$0xf]
      %v293 = vld [vmem:[%s247 + $0x64] sm:$0xf]
      %v294 = vld [vmem:[%s247 + $0x68] sm:$0xf]
      %v295 = vld [vmem:[%s247 + $0x6c] sm:$0xf]
      %v296 = vld [vmem:[%s247 + $0x70] sm:$0xf]
      %v297 = vld [vmem:[%s247 + $0x74] sm:$0xf]
      %v298 = vld [vmem:[%s247 + $0x78] sm:$0xf]
      %v299 = vld [vmem:[%s247 + $0x7c] sm:$0xf]
      %v300 = vld [vmem:[%s247 + $0x80] sm:$0xf]
      %v301 = vld [vmem:[%s247 + $0x84] sm:$0xf]
      %v302 = vld [vmem:[%s247 + $0x88] sm:$0xf]
      %v303 = vld [vmem:[%s247 + $0x8c] sm:$0xf]
      %v304 = vld [vmem:[%s247 + $0x90] sm:$0xf]
      %v305 = vld [vmem:[%s247 + $0x94] sm:$0xf]
      %v306 = vld [vmem:[%s247 + $0x98] sm:$0xf]
      %v307 = vld [vmem:[%s247 + $0x9c] sm:$0xf]
      %v308 = vld [vmem:[%s247 + $0xa0] sm:$0xf]
      %v309 = vld [vmem:[%s247 + $0xa4] sm:$0xf]
      %v310 = vld [vmem:[%s247 + $0xa8] sm:$0xf]
      %v311 = vld [vmem:[%s247 + $0xac] sm:$0xf]
      %v312 = vld [vmem:[%s247 + $0xb0] sm:$0xf]
      %v313 = vld [vmem:[%s247 + $0xb4] sm:$0xf]
      %v314 = vld [vmem:[%s247 + $0xb8] sm:$0xf]
      %v315 = vld [vmem:[%s247 + $0xbc] sm:$0xf]
      %v318 = vunpack.c.l.b16 %v266
      %v319 = vunpack.c.h.b16 %v266
      %v320 = vunpack.c.l.b16 %v267
      %v321 = vpack.c.b16 %v318, %v318
      %v322 = vpack.c.b16 %v319, %v319
      %v323 = vpack.c.b16 %v320, %v320
      %v375 = vunpack.c.l.b16 %v268
      %v376 = vunpack.c.l.b16 %v269
      %v377 = vunpack.c.l.b16 %v270
      %v378 = vunpack.c.l.b16 %v271
      %v379 = vunpack.c.l.b16 %v272
      %v380 = vunpack.c.l.b16 %v273
      %v381 = vunpack.c.l.b16 %v274
      %v382 = vunpack.c.l.b16 %v275
      %v383 = vunpack.c.l.b16 %v276
      %v384 = vunpack.c.l.b16 %v277
      %v385 = vunpack.c.l.b16 %v278
      %v386 = vunpack.c.l.b16 %v279
      %v387 = vunpack.c.l.b16 %v280
      %v388 = vunpack.c.l.b16 %v281
      %v389 = vunpack.c.l.b16 %v282
      %v390 = vunpack.c.l.b16 %v283
      %v391 = vunpack.c.l.b16 %v284
      %v392 = vunpack.c.l.b16 %v285
      %v393 = vunpack.c.l.b16 %v286
      %v394 = vunpack.c.l.b16 %v287
      %v395 = vunpack.c.l.b16 %v288
      %v396 = vunpack.c.l.b16 %v289
      %v397 = vunpack.c.l.b16 %v290
      %v398 = vunpack.c.l.b16 %v291
      %v399 = vunpack.c.l.b16 %v292
      %v400 = vunpack.c.l.b16 %v293
      %v401 = vunpack.c.l.b16 %v294
      %v402 = vunpack.c.l.b16 %v295
      %v403 = vunpack.c.l.b16 %v296
      %v404 = vunpack.c.l.b16 %v297
      %v405 = vunpack.c.l.b16 %v298
      %v406 = vunpack.c.l.b16 %v299
      %v407 = vunpack.c.l.b16 %v300
      %v408 = vunpack.c.l.b16 %v301
      %v409 = vunpack.c.l.b16 %v302
      %v410 = vunpack.c.l.b16 %v303
      %v411 = vunpack.c.l.b16 %v304
      %v412 = vunpack.c.l.b16 %v305
      %v413 = vunpack.c.l.b16 %v306
      %v414 = vunpack.c.l.b16 %v307
      %v415 = vunpack.c.l.b16 %v308
      %v416 = vunpack.c.l.b16 %v309
      %v417 = vunpack.c.l.b16 %v310
      %v418 = vunpack.c.l.b16 %v311
      %v419 = vunpack.c.l.b16 %v312
      %v420 = vunpack.c.l.b16 %v313
      %v421 = vunpack.c.l.b16 %v314
      %v422 = vunpack.c.l.b16 %v315
      %v423 = vpack.c.b16 %v376, %v375
      %v424 = vpack.c.b16 %v378, %v377
      %v425 = vpack.c.b16 %v380, %v379
      %v426 = vpack.c.b16 %v382, %v381
      %v427 = vpack.c.b16 %v384, %v383
      %v428 = vpack.c.b16 %v386, %v385
      %v429 = vpack.c.b16 %v388, %v387
      %v430 = vpack.c.b16 %v390, %v389
      %v431 = vpack.c.b16 %v392, %v391
      %v432 = vpack.c.b16 %v394, %v393
      %v433 = vpack.c.b16 %v396, %v395
      %v434 = vpack.c.b16 %v398, %v397
      %v435 = vpack.c.b16 %v400, %v399
      %v436 = vpack.c.b16 %v402, %v401
      %v437 = vpack.c.b16 %v404, %v403
      %v438 = vpack.c.b16 %v406, %v405
      %v439 = vpack.c.b16 %v408, %v407
      %v440 = vpack.c.b16 %v410, %v409
      %v441 = vpack.c.b16 %v412, %v411
      %v442 = vpack.c.b16 %v414, %v413
      %v443 = vpack.c.b16 %v416, %v415
      %v444 = vpack.c.b16 %v418, %v417
      %v445 = vpack.c.b16 %v420, %v419
      %v446 = vpack.c.b16 %v422, %v421
      %471 = vmatprep.subr.bf16.mxu0 0
      %472 = vmatpush1.bf16.msra.mxu0 %v423
      %473 = vmatprep.subr.bf16.mxu0 0
      %474 = vmatpush1.bf16.msra.mxu0 %v424
      %475 = vmatprep.subr.bf16.mxu0 0
      %476 = vmatpush1.bf16.msra.mxu0 %v425
      %477 = vmatprep.subr.bf16.mxu0 0
      %478 = vmatpush1.bf16.msra.mxu0 %v426
      %479 = vmatprep.subr.bf16.mxu0 0
      %480 = vmatpush1.bf16.msra.mxu0 %v427
      %481 = vmatprep.subr.bf16.mxu0 0
      %482 = vmatpush1.bf16.msra.mxu0 %v428
      %483 = vmatprep.subr.bf16.mxu0 0
      %484 = vmatpush1.bf16.msra.mxu0 %v429
      %485 = vmatprep.subr.bf16.mxu0 0
      %486 = vmatpush1.bf16.msra.mxu0 %v430
      %487 = vmatprep.subr.bf16.mxu0 0
      %488 = vmatpush1.bf16.msra.mxu0 %v431
      %489 = vmatprep.subr.bf16.mxu0 0
      %490 = vmatpush1.bf16.msra.mxu0 %v432
      %491 = vmatprep.subr.bf16.mxu0 0
      %492 = vmatpush1.bf16.msra.mxu0 %v433
      %493 = vmatprep.subr.bf16.mxu0 0
      %494 = vmatpush1.bf16.msra.mxu0 %v434
      %495 = vmatprep.subr.bf16.mxu0 0
      %496 = vmatpush1.bf16.msra.mxu0 %v435
      %497 = vmatprep.subr.bf16.mxu0 0
      %498 = vmatpush1.bf16.msra.mxu0 %v436
      %499 = vmatprep.subr.bf16.mxu0 0
      %500 = vmatpush1.bf16.msra.mxu0 %v437
      %501 = vmatprep.subr.bf16.mxu0 0
      %502 = vmatpush1.bf16.msra.mxu0 %v438
      %503 = vmatprep.mubr.bf16.mxu0 %v322
      %504 = vmatmul.mubr.bf16.gmra.mrb[0].mxu0 %v321
      %v505 = vpop.f32.mrb[0].mxu0
      %v506 = vadd.f32 0.0, %v505
      %v507 = vpop.f32.mrb[0].mxu0
      %v508 = vpop.f32.mrb[0].mxu0
      %v509 = vpop.f32.mrb[0].mxu0
      %510 = vdwg.mxu0
      %511 = vmatprep.subr.bf16.mxu0 0
      %512 = vmatpush1.bf16.msra.mxu0 %v439
      %513 = vmatprep.subr.bf16.mxu0 0
      %514 = vmatpush1.bf16.msra.mxu0 %v440
      %515 = vmatprep.subr.bf16.mxu0 0
      %516 = vmatpush1.bf16.msra.mxu0 %v441
      %517 = vmatprep.subr.bf16.mxu0 0
      %518 = vmatpush1.bf16.msra.mxu0 %v442
      %519 = vmatprep.subr.bf16.mxu0 0
      %520 = vmatpush1.bf16.msra.mxu0 %v443
      %521 = vmatprep.subr.bf16.mxu0 0
      %522 = vmatpush1.bf16.msra.mxu0 %v444
      %523 = vmatprep.subr.bf16.mxu0 0
      %524 = vmatpush1.bf16.msra.mxu0 %v445
      %525 = vmatprep.subr.bf16.mxu0 0
      %526 = vmatpush1.bf16.msra.mxu0 %v446
      %527 = vmatprep.subr.bf16.mxu0 0
      %528 = vmatpush1.bf16.msra.mxu0 0
      %529 = vmatprep.subr.bf16.mxu0 0
      %530 = vmatpush1.bf16.msra.mxu0 0
      %531 = vmatprep.subr.bf16.mxu0 0
      %532 = vmatpush1.bf16.msra.mxu0 0
      %533 = vmatprep.subr.bf16.mxu0 0
      %534 = vmatpush1.bf16.msra.mxu0 0
      %535 = vmatprep.subr.bf16.mxu0 0
      %536 = vmatpush1.bf16.msra.mxu0 0
      %537 = vmatprep.subr.bf16.mxu0 0
      %538 = vmatpush1.bf16.msra.mxu0 0
      %539 = vmatprep.subr.bf16.mxu0 0
      %540 = vmatpush1.bf16.msra.mxu0 0
      %541 = vmatprep.subr.bf16.mxu0 0
      %542 = vmatpush1.bf16.msra.mxu0 0
      %543 = vmatprep.mubr.bf16.mxu0 0
      %544 = vmatmul.mubr.bf16.gmra.mrb[0].mxu0 %v323
      %v545 = vpop.f32.mrb[0].mxu0
      %v546 = vadd.f32 %v506, %v545
      %v547 = vpop.f32.mrb[0].mxu0
      %v548 = vpop.f32.mrb[0].mxu0
      %v549 = vpop.f32.mrb[0].mxu0
      %550 = vdwg.mxu0
      %v551 = vadd.f32 %v265, %v546
      %552 = vst [vmem:[#allocation2] sm:$0xff] %v551
      %p553 = scmp.eq.s32.totalorder %s21, 2
      // Predicated region
      $region37: #{resnet18_dense_forward.41} parent=31 // pred_check
        %p554 = pneg %p553
      $region38: #{resnet18_dense_forward.41} parent=31 // pred_check_branch
        %556 = sbr.rel (%p554) target = $region40
      $region39: #{resnet18_dense_forward.41} parent=31 // pred_region
        %v557 = vld [vmem:[#allocation2] sm:$0xff]
        %v558 = vld [vmem:[%s251] sm:$0x1]
        %v560 = vlaneseq
        %v561 = vshrl.u32 %v560, 7
        %v562 = vsub.s32 0, %v561
        %v563 = vrot.slane %v558, %v562
        %v565 = vadd.f32 %v557, %v563
        %v566 = vmax.f32 %v565, 0.0
        %567 = vst [vmem:[%s258] sm:$0xff] %v566
      $region40: #{resnet18_dense_forward.41} parent=31 // pred_fallthru
        _
      %p568 = scmp.lt.s32.totalorder %s19, 0
      %s569 = scalar_select %p568, %s19, 0
      %p570 = scmp.lt.s32.totalorder %s20, 0
      %s571 = scalar_select %p570, %s20, 0
      %s572 = sadd.s32 %s571, %s569
      %s573 = smul.addr %s572, 8
      %s574 = scalar_lea.vmem %s3, %s573
      // Predicated region
      $region41: #{resnet18_dense_forward.41} parent=31 // pred_check
        %p575 = pneg %p135
      $region42: #{resnet18_dense_forward.41} parent=31 // pred_check_branch
        %577 = sbr.rel (%p575) target = $region44
      $region43: #{resnet18_dense_forward.41} parent=31 // pred_region
        _
      $region44: #{resnet18_dense_forward.41} parent=31 // pred_fallthru
        _
      // Predicated region
      $region45: #{resnet18_dense_forward.41} parent=31 // pred_check
        %p578 = pneg %p135
      $region46: #{resnet18_dense_forward.41} parent=31 // pred_check_branch
        %580 = sbr.rel (%p578) target = $region48
      $region47: #{resnet18_dense_forward.41} parent=31 // pred_region
        %p581 = scmp.lt.s32.totalorder %s19, 0
        %s582 = scalar_select %p581, %s19, 0
        %p583 = scmp.lt.s32.totalorder %s20, 0
        %s584 = scalar_select %p583, %s20, 0
        %s585 = sadd.s32 %s584, %s582
        %s586 = smul.addr %s585, 8
        %s587 = scalar_lea.vmem %s3, %s586
      $region48: #{resnet18_dense_forward.41} parent=31 // pred_fallthru
        _
    $region32: #{resnet18_dense_forward.41} parent=5 // pred_fallthru
      _
    %p588 = scmp.le.s32.totalorder 2, %s9
    // Predicated region
    $region49: #{resnet18_dense_forward.41} parent=5 // pred_check
      %p589 = pneg %p588
    $region50: #{resnet18_dense_forward.41} parent=5 // pred_check_branch
      %591 = sbr.rel (%p589) target = $region52
    $region51: #{resnet18_dense_forward.41} parent=5 // pred_region
      %s592 = ssub.s32 %s9, 2
    $region52: #{resnet18_dense_forward.41} parent=5 // pred_fallthru
      _
  $region6: #{resnet18_dense_forward.41} parent=0 // loop_footer
    %s13 = sadd.s32 1, %s9
  $region7: #{resnet18_dense_forward.41} parent=0 // loop_footer_branch
    %8 = sbr.rel target = $region3
  $region8: #{resnet18_dense_forward.41} parent=0 // loop_exit
    _

// kernel: resnet18_dense_forward.45
$region0: #{resnet18_dense_forward.45}
  #allocation0 [shape = 'u32[]', space=smem, size = 0x4, offset = 0x4, fixed_abs, tag = 'smem constant byte address 0x4 - core index']
  #allocation1 [shape = 'u32[144,128]{1,0:T(1,128)}', space=vmem, size = 0x12000, scoped, tag = 'internal scratch']
  %s0 = inlined_call_operand.vmem [shape: bf16[8,1024], index: 0, kind: input, shape index: {}]
  %s1 = inlined_call_operand.vmem [shape: bf16[1024,128], index: 1, kind: input, shape index: {}]
  %s2 = inlined_call_operand.vmem [shape: f32[1,128], index: 2, kind: input, shape index: {}]
  %s3 = inlined_call_operand.vmem [shape: f32[8,128], index: 3, kind: output, shape index: {}]
  %s4 = sld [smem:[#allocation0]]
  $region22: #{resnet18_dense_forward.45} parent=0
    _
  %s6 = ssub.s32 1, %s4
  %s7 = scalar_select 0, %s6, %s4
  // Predicated region
  $region2: #{resnet18_dense_forward.45} parent=0 // pred_check
    _
  $region3: #{resnet18_dense_forward.45} parent=0 // pred_check_branch
    %9 = sbr.rel (0) target = $region5
  $region4: #{resnet18_dense_forward.45} parent=0 // pred_region
    _
  $region5: #{resnet18_dense_forward.45} parent=0 // pred_fallthru
    _
  // Predicated region
  $region6: #{resnet18_dense_forward.45} parent=0 // pred_check
    _
  $region7: #{resnet18_dense_forward.45} parent=0 // pred_check_branch
    %11 = sbr.rel (0) target = $region9
  $region8: #{resnet18_dense_forward.45} parent=0 // pred_region
    _
  $region9: #{resnet18_dense_forward.45} parent=0 // pred_fallthru
    _
  // Predicated region
  $region10: #{resnet18_dense_forward.45} parent=0 // pred_check
    _
  $region11: #{resnet18_dense_forward.45} parent=0 // pred_check_branch
    %13 = sbr.rel (0) target = $region13
  $region12: #{resnet18_dense_forward.45} parent=0 // pred_region
    _
  $region13: #{resnet18_dense_forward.45} parent=0 // pred_fallthru
    _
  %v15 = vld [vmem:[%s0] sm:$0xff]
  %v16 = vld [vmem:[%s0 + $0x8] sm:$0xff]
  %v17 = vld [vmem:[%s0 + $0x10] sm:$0xff]
  %v18 = vld [vmem:[%s0 + $0x18] sm:$0xff]
  %v19 = vld [vmem:[%s1] sm:$0xf]
  %v20 = vld [vmem:[%s1 + $0x4] sm:$0xf]
  %v21 = vld [vmem:[%s1 + $0x8] sm:$0xf]
  %v22 = vld [vmem:[%s1 + $0xc] sm:$0xf]
  %v23 = vld [vmem:[%s1 + $0x10] sm:$0xf]
  %v24 = vld [vmem:[%s1 + $0x14] sm:$0xf]
  %v25 = vld [vmem:[%s1 + $0x18] sm:$0xf]
  %v26 = vld [vmem:[%s1 + $0x1c] sm:$0xf]
  %v27 = vld [vmem:[%s1 + $0x20] sm:$0xf]
  %v28 = vld [vmem:[%s1 + $0x24] sm:$0xf]
  %v29 = vld [vmem:[%s1 + $0x28] sm:$0xf]
  %v30 = vld [vmem:[%s1 + $0x2c] sm:$0xf]
  %v31 = vld [vmem:[%s1 + $0x30] sm:$0xf]
  %v32 = vld [vmem:[%s1 + $0x34] sm:$0xf]
  %v33 = vld [vmem:[%s1 + $0x38] sm:$0xf]
  %v34 = vld [vmem:[%s1 + $0x3c] sm:$0xf]
  %v35 = vld [vmem:[%s1 + $0x40] sm:$0xf]
  %v36 = vld [vmem:[%s1 + $0x44] sm:$0xf]
  %v37 = vld [vmem:[%s1 + $0x48] sm:$0xf]
  %v38 = vld [vmem:[%s1 + $0x4c] sm:$0xf]
  %v39 = vld [vmem:[%s1 + $0x50] sm:$0xf]
  %v40 = vld [vmem:[%s1 + $0x54] sm:$0xf]
  %v41 = vld [vmem:[%s1 + $0x58] sm:$0xf]
  %v42 = vld [vmem:[%s1 + $0x5c] sm:$0xf]
  %v43 = vld [vmem:[%s1 + $0x60] sm:$0xf]
  %v44 = vld [vmem:[%s1 + $0x64] sm:$0xf]
  %v45 = vld [vmem:[%s1 + $0x68] sm:$0xf]
  %v46 = vld [vmem:[%s1 + $0x6c] sm:$0xf]
  %v47 = vld [vmem:[%s1 + $0x70] sm:$0xf]
  %v48 = vld [vmem:[%s1 + $0x74] sm:$0xf]
  %v49 = vld [vmem:[%s1 + $0x78] sm:$0xf]
  %v50 = vld [vmem:[%s1 + $0x7c] sm:$0xf]
  %v51 = vld [vmem:[%s1 + $0x80] sm:$0xf]
  %v52 = vld [vmem:[%s1 + $0x84] sm:$0xf]
  %v53 = vld [vmem:[%s1 + $0x88] sm:$0xf]
  %v54 = vld [vmem:[%s1 + $0x8c] sm:$0xf]
  %v55 = vld [vmem:[%s1 + $0x90] sm:$0xf]
  %v56 = vld [vmem:[%s1 + $0x94] sm:$0xf]
  %v57 = vld [vmem:[%s1 + $0x98] sm:$0xf]
  %v58 = vld [vmem:[%s1 + $0x9c] sm:$0xf]
  %v59 = vld [vmem:[%s1 + $0xa0] sm:$0xf]
  %v60 = vld [vmem:[%s1 + $0xa4] sm:$0xf]
  %v61 = vld [vmem:[%s1 + $0xa8] sm:$0xf]
  %v62 = vld [vmem:[%s1 + $0xac] sm:$0xf]
  %v63 = vld [vmem:[%s1 + $0xb0] sm:$0xf]
  %v64 = vld [vmem:[%s1 + $0xb4] sm:$0xf]
  %v65 = vld [vmem:[%s1 + $0xb8] sm:$0xf]
  %v66 = vld [vmem:[%s1 + $0xbc] sm:$0xf]
  %v67 = vld [vmem:[%s1 + $0xc0] sm:$0xf]
  %v68 = vld [vmem:[%s1 + $0xc4] sm:$0xf]
  %v69 = vld [vmem:[%s1 + $0xc8] sm:$0xf]
  %v70 = vld [vmem:[%s1 + $0xcc] sm:$0xf]
  %v71 = vld [vmem:[%s1 + $0xd0] sm:$0xf]
  %v72 = vld [vmem:[%s1 + $0xd4] sm:$0xf]
  %v73 = vld [vmem:[%s1 + $0xd8] sm:$0xf]
  %v74 = vld [vmem:[%s1 + $0xdc] sm:$0xf]
  %v75 = vld [vmem:[%s1 + $0xe0] sm:$0xf]
  %v76 = vld [vmem:[%s1 + $0xe4] sm:$0xf]
  %v77 = vld [vmem:[%s1 + $0xe8] sm:$0xf]
  %v78 = vld [vmem:[%s1 + $0xec] sm:$0xf]
  %v79 = vld [vmem:[%s1 + $0xf0] sm:$0xf]
  %v80 = vld [vmem:[%s1 + $0xf4] sm:$0xf]
  %v81 = vld [vmem:[%s1 + $0xf8] sm:$0xf]
  %v82 = vld [vmem:[%s1 + $0xfc] sm:$0xf]
  %v83 = vld [vmem:[%s1 + $0x100] sm:$0xf]
  %v84 = vld [vmem:[%s1 + $0x104] sm:$0xf]
  %v85 = vld [vmem:[%s1 + $0x108] sm:$0xf]
  %v86 = vld [vmem:[%s1 + $0x10c] sm:$0xf]
  %v87 = vld [vmem:[%s1 + $0x110] sm:$0xf]
  %v88 = vld [vmem:[%s1 + $0x114] sm:$0xf]
  %v89 = vld [vmem:[%s1 + $0x118] sm:$0xf]
  %v90 = vld [vmem:[%s1 + $0x11c] sm:$0xf]
  %v91 = vld [vmem:[%s1 + $0x120] sm:$0xf]
  %v92 = vld [vmem:[%s1 + $0x124] sm:$0xf]
  %v93 = vld [vmem:[%s1 + $0x128] sm:$0xf]
  %v94 = vld [vmem:[%s1 + $0x12c] sm:$0xf]
  %v95 = vld [vmem:[%s1 + $0x130] sm:$0xf]
  %v96 = vld [vmem:[%s1 + $0x134] sm:$0xf]
  %v97 = vld [vmem:[%s1 + $0x138] sm:$0xf]
  %v98 = vld [vmem:[%s1 + $0x13c] sm:$0xf]
  %v99 = vld [vmem:[%s1 + $0x140] sm:$0xf]
  %v100 = vld [vmem:[%s1 + $0x144] sm:$0xf]
  %v101 = vld [vmem:[%s1 + $0x148] sm:$0xf]
  %v102 = vld [vmem:[%s1 + $0x14c] sm:$0xf]
  %v103 = vld [vmem:[%s1 + $0x150] sm:$0xf]
  %v104 = vld [vmem:[%s1 + $0x154] sm:$0xf]
  %v105 = vld [vmem:[%s1 + $0x158] sm:$0xf]
  %v106 = vld [vmem:[%s1 + $0x15c] sm:$0xf]
  %v107 = vld [vmem:[%s1 + $0x160] sm:$0xf]
  %v108 = vld [vmem:[%s1 + $0x164] sm:$0xf]
  %v109 = vld [vmem:[%s1 + $0x168] sm:$0xf]
  %v110 = vld [vmem:[%s1 + $0x16c] sm:$0xf]
  %v111 = vld [vmem:[%s1 + $0x170] sm:$0xf]
  %v112 = vld [vmem:[%s1 + $0x174] sm:$0xf]
  %v113 = vld [vmem:[%s1 + $0x178] sm:$0xf]
  %v114 = vld [vmem:[%s1 + $0x17c] sm:$0xf]
  %v115 = vld [vmem:[%s1 + $0x180] sm:$0xf]
  %v116 = vld [vmem:[%s1 + $0x184] sm:$0xf]
  %v117 = vld [vmem:[%s1 + $0x188] sm:$0xf]
  %v118 = vld [vmem:[%s1 + $0x18c] sm:$0xf]
  %v119 = vld [vmem:[%s1 + $0x190] sm:$0xf]
  %v120 = vld [vmem:[%s1 + $0x194] sm:$0xf]
  %v121 = vld [vmem:[%s1 + $0x198] sm:$0xf]
  %v122 = vld [vmem:[%s1 + $0x19c] sm:$0xf]
  %v123 = vld [vmem:[%s1 + $0x1a0] sm:$0xf]
  %v124 = vld [vmem:[%s1 + $0x1a4] sm:$0xf]
  %v125 = vld [vmem:[%s1 + $0x1a8] sm:$0xf]
  %v126 = vld [vmem:[%s1 + $0x1ac] sm:$0xf]
  %v127 = vld [vmem:[%s1 + $0x1b0] sm:$0xf]
  %v128 = vld [vmem:[%s1 + $0x1b4] sm:$0xf]
  %v129 = vld [vmem:[%s1 + $0x1b8] sm:$0xf]
  %v130 = vld [vmem:[%s1 + $0x1bc] sm:$0xf]
  %v131 = vld [vmem:[%s1 + $0x1c0] sm:$0xf]
  %v132 = vld [vmem:[%s1 + $0x1c4] sm:$0xf]
  %v133 = vld [vmem:[%s1 + $0x1c8] sm:$0xf]
  %v134 = vld [vmem:[%s1 + $0x1cc] sm:$0xf]
  %v135 = vld [vmem:[%s1 + $0x1d0] sm:$0xf]
  %v136 = vld [vmem:[%s1 + $0x1d4] sm:$0xf]
  %v137 = vld [vmem:[%s1 + $0x1d8] sm:$0xf]
  %v138 = vld [vmem:[%s1 + $0x1dc] sm:$0xf]
  %v139 = vld [vmem:[%s1 + $0x1e0] sm:$0xf]
  %v140 = vld [vmem:[%s1 + $0x1e4] sm:$0xf]
  %v141 = vld [vmem:[%s1 + $0x1e8] sm:$0xf]
  %v142 = vld [vmem:[%s1 + $0x1ec] sm:$0xf]
  %v143 = vld [vmem:[%s1 + $0x1f0] sm:$0xf]
  %v144 = vld [vmem:[%s1 + $0x1f4] sm:$0xf]
  %v145 = vld [vmem:[%s1 + $0x1f8] sm:$0xf]
  %v146 = vld [vmem:[%s1 + $0x1fc] sm:$0xf]
  %v147 = vld [vmem:[%s2] sm:$0x1]
  %v149 = vlaneseq
  %v150 = vshrl.u32 %v149, 7
  %v151 = vsub.s32 0, %v150
  %v152 = vrot.slane %v147, %v151
  %v158 = vunpack.c.l.b16 %v15
  %v159 = vunpack.c.h.b16 %v15
  %v160 = vunpack.c.l.b16 %v16
  %v161 = vunpack.c.h.b16 %v16
  %v162 = vunpack.c.l.b16 %v17
  %v163 = vunpack.c.h.b16 %v17
  %v164 = vunpack.c.l.b16 %v18
  %v165 = vunpack.c.h.b16 %v18
  %v166 = vpack.c.b16 %v158, %v158
  %v167 = vpack.c.b16 %v159, %v159
  %v168 = vpack.c.b16 %v160, %v160
  %v169 = vpack.c.b16 %v161, %v161
  %v170 = vpack.c.b16 %v162, %v162
  %v171 = vpack.c.b16 %v163, %v163
  %v172 = vpack.c.b16 %v164, %v164
  %v173 = vpack.c.b16 %v165, %v165
  %v310 = vunpack.c.l.b16 %v19
  %v311 = vunpack.c.l.b16 %v20
  %v312 = vunpack.c.l.b16 %v21
  %v313 = vunpack.c.l.b16 %v22
  %v314 = vunpack.c.l.b16 %v23
  %v315 = vunpack.c.l.b16 %v24
  %v316 = vunpack.c.l.b16 %v25
  %v317 = vunpack.c.l.b16 %v26
  %v318 = vunpack.c.l.b16 %v27
  %v319 = vunpack.c.l.b16 %v28
  %v320 = vunpack.c.l.b16 %v29
  %v321 = vunpack.c.l.b16 %v30
  %v322 = vunpack.c.l.b16 %v31
  %v323 = vunpack.c.l.b16 %v32
  %v324 = vunpack.c.l.b16 %v33
  %v325 = vunpack.c.l.b16 %v34
  %v326 = vunpack.c.l.b16 %v35
  %v327 = vunpack.c.l.b16 %v36
  %v328 = vunpack.c.l.b16 %v37
  %v329 = vunpack.c.l.b16 %v38
  %v330 = vunpack.c.l.b16 %v39
  %v331 = vunpack.c.l.b16 %v40
  %v332 = vunpack.c.l.b16 %v41
  %v333 = vunpack.c.l.b16 %v42
  %v334 = vunpack.c.l.b16 %v43
  %v335 = vunpack.c.l.b16 %v44
  %v336 = vunpack.c.l.b16 %v45
  %v337 = vunpack.c.l.b16 %v46
  %v338 = vunpack.c.l.b16 %v47
  %v339 = vunpack.c.l.b16 %v48
  %v340 = vunpack.c.l.b16 %v49
  %v341 = vunpack.c.l.b16 %v50
  %v342 = vunpack.c.l.b16 %v51
  %v343 = vunpack.c.l.b16 %v52
  %v344 = vunpack.c.l.b16 %v53
  %v345 = vunpack.c.l.b16 %v54
  %v346 = vunpack.c.l.b16 %v55
  %v347 = vunpack.c.l.b16 %v56
  %v348 = vunpack.c.l.b16 %v57
  %v349 = vunpack.c.l.b16 %v58
  %v350 = vunpack.c.l.b16 %v59
  %v351 = vunpack.c.l.b16 %v60
  %v352 = vunpack.c.l.b16 %v61
  %v353 = vunpack.c.l.b16 %v62
  %v354 = vunpack.c.l.b16 %v63
  %v355 = vunpack.c.l.b16 %v64
  %v356 = vunpack.c.l.b16 %v65
  %v357 = vunpack.c.l.b16 %v66
  %v358 = vunpack.c.l.b16 %v67
  %v359 = vunpack.c.l.b16 %v68
  %v360 = vunpack.c.l.b16 %v69
  %v361 = vunpack.c.l.b16 %v70
  %v362 = vunpack.c.l.b16 %v71
  %v363 = vunpack.c.l.b16 %v72
  %v364 = vunpack.c.l.b16 %v73
  %v365 = vunpack.c.l.b16 %v74
  %v366 = vunpack.c.l.b16 %v75
  %v367 = vunpack.c.l.b16 %v76
  %v368 = vunpack.c.l.b16 %v77
  %v369 = vunpack.c.l.b16 %v78
  %v370 = vunpack.c.l.b16 %v79
  %v371 = vunpack.c.l.b16 %v80
  %v372 = vunpack.c.l.b16 %v81
  %v373 = vunpack.c.l.b16 %v82
  %v374 = vunpack.c.l.b16 %v83
  %v375 = vunpack.c.l.b16 %v84
  %v376 = vunpack.c.l.b16 %v85
  %v377 = vunpack.c.l.b16 %v86
  %v378 = vunpack.c.l.b16 %v87
  %v379 = vunpack.c.l.b16 %v88
  %v380 = vunpack.c.l.b16 %v89
  %v381 = vunpack.c.l.b16 %v90
  %v382 = vunpack.c.l.b16 %v91
  %v383 = vunpack.c.l.b16 %v92
  %v384 = vunpack.c.l.b16 %v93
  %v385 = vunpack.c.l.b16 %v94
  %v386 = vunpack.c.l.b16 %v95
  %v387 = vunpack.c.l.b16 %v96
  %v388 = vunpack.c.l.b16 %v97
  %v389 = vunpack.c.l.b16 %v98
  %v390 = vunpack.c.l.b16 %v99
  %v391 = vunpack.c.l.b16 %v100
  %v392 = vunpack.c.l.b16 %v101
  %v393 = vunpack.c.l.b16 %v102
  %v394 = vunpack.c.l.b16 %v103
  %v395 = vunpack.c.l.b16 %v104
  %v396 = vunpack.c.l.b16 %v105
  %v397 = vunpack.c.l.b16 %v106
  %v398 = vunpack.c.l.b16 %v107
  %v399 = vunpack.c.l.b16 %v108
  %v400 = vunpack.c.l.b16 %v109
  %v401 = vunpack.c.l.b16 %v110
  %v402 = vunpack.c.l.b16 %v111
  %v403 = vunpack.c.l.b16 %v112
  %v404 = vunpack.c.l.b16 %v113
  %v405 = vunpack.c.l.b16 %v114
  %v406 = vunpack.c.l.b16 %v115
  %v407 = vunpack.c.l.b16 %v116
  %v408 = vunpack.c.l.b16 %v117
  %v409 = vunpack.c.l.b16 %v118
  %v410 = vunpack.c.l.b16 %v119
  %v411 = vunpack.c.l.b16 %v120
  %v412 = vunpack.c.l.b16 %v121
  %v413 = vunpack.c.l.b16 %v122
  %v414 = vunpack.c.l.b16 %v123
  %v415 = vunpack.c.l.b16 %v124
  %v416 = vunpack.c.l.b16 %v125
  %v417 = vunpack.c.l.b16 %v126
  %v418 = vunpack.c.l.b16 %v127
  %v419 = vunpack.c.l.b16 %v128
  %v420 = vunpack.c.l.b16 %v129
  %v421 = vunpack.c.l.b16 %v130
  %v422 = vunpack.c.l.b16 %v131
  %v423 = vunpack.c.l.b16 %v132
  %v424 = vunpack.c.l.b16 %v133
  %v425 = vunpack.c.l.b16 %v134
  %v426 = vunpack.c.l.b16 %v135
  %v427 = vunpack.c.l.b16 %v136
  %v428 = vunpack.c.l.b16 %v137
  %v429 = vunpack.c.l.b16 %v138
  %v430 = vunpack.c.l.b16 %v139
  %v431 = vunpack.c.l.b16 %v140
  %v432 = vunpack.c.l.b16 %v141
  %v433 = vunpack.c.l.b16 %v142
  %v434 = vunpack.c.l.b16 %v143
  %v435 = vunpack.c.l.b16 %v144
  %v436 = vunpack.c.l.b16 %v145
  %v437 = vunpack.c.l.b16 %v146
  %v438 = vpack.c.b16 %v311, %v310
  %v439 = vpack.c.b16 %v313, %v312
  %v440 = vpack.c.b16 %v315, %v314
  %v441 = vpack.c.b16 %v317, %v316
  %v442 = vpack.c.b16 %v319, %v318
  %v443 = vpack.c.b16 %v321, %v320
  %v444 = vpack.c.b16 %v323, %v322
  %v445 = vpack.c.b16 %v325, %v324
  %v446 = vpack.c.b16 %v327, %v326
  %v447 = vpack.c.b16 %v329, %v328
  %v448 = vpack.c.b16 %v331, %v330
  %v449 = vpack.c.b16 %v333, %v332
  %v450 = vpack.c.b16 %v335, %v334
  %v451 = vpack.c.b16 %v337, %v336
  %v452 = vpack.c.b16 %v339, %v338
  %v453 = vpack.c.b16 %v341, %v340
  %v454 = vpack.c.b16 %v343, %v342
  %v455 = vpack.c.b16 %v345, %v344
  %v456 = vpack.c.b16 %v347, %v346
  %v457 = vpack.c.b16 %v349, %v348
  %v458 = vpack.c.b16 %v351, %v350
  %v459 = vpack.c.b16 %v353, %v352
  %v460 = vpack.c.b16 %v355, %v354
  %v461 = vpack.c.b16 %v357, %v356
  %v462 = vpack.c.b16 %v359, %v358
  %v463 = vpack.c.b16 %v361, %v360
  %v464 = vpack.c.b16 %v363, %v362
  %v465 = vpack.c.b16 %v365, %v364
  %v466 = vpack.c.b16 %v367, %v366
  %v467 = vpack.c.b16 %v369, %v368
  %v468 = vpack.c.b16 %v371, %v370
  %v469 = vpack.c.b16 %v373, %v372
  %v470 = vpack.c.b16 %v375, %v374
  %v471 = vpack.c.b16 %v377, %v376
  %v472 = vpack.c.b16 %v379, %v378
  %v473 = vpack.c.b16 %v381, %v380
  %v474 = vpack.c.b16 %v383, %v382
  %v475 = vpack.c.b16 %v385, %v384
  %v476 = vpack.c.b16 %v387, %v386
  %v477 = vpack.c.b16 %v389, %v388
  %v478 = vpack.c.b16 %v391, %v390
  %v479 = vpack.c.b16 %v393, %v392
  %v480 = vpack.c.b16 %v395, %v394
  %v481 = vpack.c.b16 %v397, %v396
  %v482 = vpack.c.b16 %v399, %v398
  %v483 = vpack.c.b16 %v401, %v400
  %v484 = vpack.c.b16 %v403, %v402
  %v485 = vpack.c.b16 %v405, %v404
  %v486 = vpack.c.b16 %v407, %v406
  %v487 = vpack.c.b16 %v409, %v408
  %v488 = vpack.c.b16 %v411, %v410
  %v489 = vpack.c.b16 %v413, %v412
  %v490 = vpack.c.b16 %v415, %v414
  %v491 = vpack.c.b16 %v417, %v416
  %v492 = vpack.c.b16 %v419, %v418
  %v493 = vpack.c.b16 %v421, %v420
  %v494 = vpack.c.b16 %v423, %v422
  %v495 = vpack.c.b16 %v425, %v424
  %v496 = vpack.c.b16 %v427, %v426
  %v497 = vpack.c.b16 %v429, %v428
  %v498 = vpack.c.b16 %v431, %v430
  %v499 = vpack.c.b16 %v433, %v432
  %v500 = vpack.c.b16 %v435, %v434
  %v501 = vpack.c.b16 %v437, %v436
  %566 = vmatprep.subr.bf16.mxu0 0
  %567 = vmatpush1.bf16.msra.mxu0 %v438
  %568 = vmatprep.subr.bf16.mxu0 0
  %569 = vmatpush1.bf16.msra.mxu0 %v439
  %570 = vmatprep.subr.bf16.mxu0 0
  %571 = vmatpush1.bf16.msra.mxu0 %v440
  %572 = vmatprep.subr.bf16.mxu0 0
  %573 = vmatpush1.bf16.msra.mxu0 %v441
  %574 = vmatprep.subr.bf16.mxu0 0
  %575 = vmatpush1.bf16.msra.mxu0 %v442
  %576 = vmatprep.subr.bf16.mxu0 0
  %577 = vmatpush1.bf16.msra.mxu0 %v443
  %578 = vmatprep.subr.bf16.mxu0 0
  %579 = vmatpush1.bf16.msra.mxu0 %v444
  %580 = vmatprep.subr.bf16.mxu0 0
  %581 = vmatpush1.bf16.msra.mxu0 %v445
  %582 = vmatprep.subr.bf16.mxu0 0
  %583 = vmatpush1.bf16.msra.mxu0 %v446
  %584 = vmatprep.subr.bf16.mxu0 0
  %585 = vmatpush1.bf16.msra.mxu0 %v447
  %586 = vmatprep.subr.bf16.mxu0 0
  %587 = vmatpush1.bf16.msra.mxu0 %v448
  %588 = vmatprep.subr.bf16.mxu0 0
  %589 = vmatpush1.bf16.msra.mxu0 %v449
  %590 = vmatprep.subr.bf16.mxu0 0
  %591 = vmatpush1.bf16.msra.mxu0 %v450
  %592 = vmatprep.subr.bf16.mxu0 0
  %593 = vmatpush1.bf16.msra.mxu0 %v451
  %594 = vmatprep.subr.bf16.mxu0 0
  %595 = vmatpush1.bf16.msra.mxu0 %v452
  %596 = vmatprep.subr.bf16.mxu0 0
  %597 = vmatpush1.bf16.msra.mxu0 %v453
  %598 = vmatprep.mubr.bf16.mxu0 %v167
  %599 = vmatmul.mubr.bf16.gmra.mrb[0].mxu0 %v166
  %v600 = vpop.f32.mrb[0].mxu0
  %v601 = vadd.f32 %v152, %v600
  %v602 = vpop.f32.mrb[0].mxu0
  %v603 = vpop.f32.mrb[0].mxu0
  %v604 = vpop.f32.mrb[0].mxu0
  %605 = vdwg.mxu0
  %606 = vmatprep.subr.bf16.mxu0 0
  %607 = vmatpush1.bf16.msra.mxu0 %v454
  %608 = vmatprep.subr.bf16.mxu0 0
  %609 = vmatpush1.bf16.msra.mxu0 %v455
  %610 = vmatprep.subr.bf16.mxu0 0
  %611 = vmatpush1.bf16.msra.mxu0 %v456
  %612 = vmatprep.subr.bf16.mxu0 0
  %613 = vmatpush1.bf16.msra.mxu0 %v457
  %614 = vmatprep.subr.bf16.mxu0 0
  %615 = vmatpush1.bf16.msra.mxu0 %v458
  %616 = vmatprep.subr.bf16.mxu0 0
  %617 = vmatpush1.bf16.msra.mxu0 %v459
  %618 = vmatprep.subr.bf16.mxu0 0
  %619 = vmatpush1.bf16.msra.mxu0 %v460
  %620 = vmatprep.subr.bf16.mxu0 0
  %621 = vmatpush1.bf16.msra.mxu0 %v461
  %622 = vmatprep.subr.bf16.mxu0 0
  %623 = vmatpush1.bf16.msra.mxu0 %v462
  %624 = vmatprep.subr.bf16.mxu0 0
  %625 = vmatpush1.bf16.msra.mxu0 %v463
  %626 = vmatprep.subr.bf16.mxu0 0
  %627 = vmatpush1.bf16.msra.mxu0 %v464
  %628 = vmatprep.subr.bf16.mxu0 0
  %629 = vmatpush1.bf16.msra.mxu0 %v465
  %630 = vmatprep.subr.bf16.mxu0 0
  %631 = vmatpush1.bf16.msra.mxu0 %v466
  %632 = vmatprep.subr.bf16.mxu0 0
  %633 = vmatpush1.bf16.msra.mxu0 %v467
  %634 = vmatprep.subr.bf16.mxu0 0
  %635 = vmatpush1.bf16.msra.mxu0 %v468
  %636 = vmatprep.subr.bf16.mxu0 0
  %637 = vmatpush1.bf16.msra.mxu0 %v469
  %638 = vmatprep.mubr.bf16.mxu0 %v169
  %639 = vmatmul.mubr.bf16.gmra.mrb[0].mxu0 %v168
  %v640 = vpop.f32.mrb[0].mxu0
  %v641 = vadd.f32 %v601, %v640
  %v642 = vpop.f32.mrb[0].mxu0
  %v643 = vpop.f32.mrb[0].mxu0
  %v644 = vpop.f32.mrb[0].mxu0
  %645 = vdwg.mxu0
  %646 = vmatprep.subr.bf16.mxu0 0
  %647 = vmatpush1.bf16.msra.mxu0 %v470
  %648 = vmatprep.subr.bf16.mxu0 0
  %649 = vmatpush1.bf16.msra.mxu0 %v471
  %650 = vmatprep.subr.bf16.mxu0 0
  %651 = vmatpush1.bf16.msra.mxu0 %v472
  %652 = vmatprep.subr.bf16.mxu0 0
  %653 = vmatpush1.bf16.msra.mxu0 %v473
  %654 = vmatprep.subr.bf16.mxu0 0
  %655 = vmatpush1.bf16.msra.mxu0 %v474
  %656 = vmatprep.subr.bf16.mxu0 0
  %657 = vmatpush1.bf16.msra.mxu0 %v475
  %658 = vmatprep.subr.bf16.mxu0 0
  %659 = vmatpush1.bf16.msra.mxu0 %v476
  %660 = vmatprep.subr.bf16.mxu0 0
  %661 = vmatpush1.bf16.msra.mxu0 %v477
  %662 = vmatprep.subr.bf16.mxu0 0
  %663 = vmatpush1.bf16.msra.mxu0 %v478
  %664 = vmatprep.subr.bf16.mxu0 0
  %665 = vmatpush1.bf16.msra.mxu0 %v479
  %666 = vmatprep.subr.bf16.mxu0 0
  %667 = vmatpush1.bf16.msra.mxu0 %v480
  %668 = vmatprep.subr.bf16.mxu0 0
  %669 = vmatpush1.bf16.msra.mxu0 %v481
  %670 = vmatprep.subr.bf16.mxu0 0
  %671 = vmatpush1.bf16.msra.mxu0 %v482
  %672 = vmatprep.subr.bf16.mxu0 0
  %673 = vmatpush1.bf16.msra.mxu0 %v483
  %674 = vmatprep.subr.bf16.mxu0 0
  %675 = vmatpush1.bf16.msra.mxu0 %v484
  %676 = vmatprep.subr.bf16.mxu0 0
  %677 = vmatpush1.bf16.msra.mxu0 %v485
  %678 = vmatprep.mubr.bf16.mxu0 %v171
  %679 = vmatmul.mubr.bf16.gmra.mrb[0].mxu0 %v170
  %v680 = vpop.f32.mrb[0].mxu0
  %v681 = vadd.f32 %v641, %v680
  %v682 = vpop.f32.mrb[0].mxu0
  %v683 = vpop.f32.mrb[0].mxu0
  %v684 = vpop.f32.mrb[0].mxu0
  %685 = vdwg.mxu0
  %686 = vmatprep.subr.bf16.mxu0 0
  %687 = vmatpush1.bf16.msra.mxu0 %v486
  %688 = vmatprep.subr.bf16.mxu0 0
  %689 = vmatpush1.bf16.msra.mxu0 %v487
  %690 = vmatprep.subr.bf16.mxu0 0
  %691 = vmatpush1.bf16.msra.mxu0 %v488
  %692 = vmatprep.subr.bf16.mxu0 0
  %693 = vmatpush1.bf16.msra.mxu0 %v489
  %694 = vmatprep.subr.bf16.mxu0 0
  %695 = vmatpush1.bf16.msra.mxu0 %v490
  %696 = vmatprep.subr.bf16.mxu0 0
  %697 = vmatpush1.bf16.msra.mxu0 %v491
  %698 = vmatprep.subr.bf16.mxu0 0
  %699 = vmatpush1.bf16.msra.mxu0 %v492
  %700 = vmatprep.subr.bf16.mxu0 0
  %701 = vmatpush1.bf16.msra.mxu0 %v493
  %702 = vmatprep.subr.bf16.mxu0 0
  %703 = vmatpush1.bf16.msra.mxu0 %v494
  %704 = vmatprep.subr.bf16.mxu0 0
  %705 = vmatpush1.bf16.msra.mxu0 %v495
  %706 = vmatprep.subr.bf16.mxu0 0
  %707 = vmatpush1.bf16.msra.mxu0 %v496
  %708 = vmatprep.subr.bf16.mxu0 0
  %709 = vmatpush1.bf16.msra.mxu0 %v497
  %710 = vmatprep.subr.bf16.mxu0 0
  %711 = vmatpush1.bf16.msra.mxu0 %v498
  %712 = vmatprep.subr.bf16.mxu0 0
  %713 = vmatpush1.bf16.msra.mxu0 %v499
  %714 = vmatprep.subr.bf16.mxu0 0
  %715 = vmatpush1.bf16.msra.mxu0 %v500
  %716 = vmatprep.subr.bf16.mxu0 0
  %717 = vmatpush1.bf16.msra.mxu0 %v501
  %718 = vmatprep.mubr.bf16.mxu0 %v173
  %719 = vmatmul.mubr.bf16.gmra.mrb[0].mxu0 %v172
  %v720 = vpop.f32.mrb[0].mxu0
  %v721 = vadd.f32 %v681, %v720
  %v722 = vpop.f32.mrb[0].mxu0
  %v723 = vpop.f32.mrb[0].mxu0
  %v724 = vpop.f32.mrb[0].mxu0
  %725 = vdwg.mxu0
  %726 = vst [vmem:[%s3] sm:$0xff] %v721
  // Predicated region
  $region14: #{resnet18_dense_forward.45} parent=0 // pred_check
    _
  $region15: #{resnet18_dense_forward.45} parent=0 // pred_check_branch
    %728 = sbr.rel (0) target = $region17
  $region16: #{resnet18_dense_forward.45} parent=0 // pred_region
    _
  $region17: #{resnet18_dense_forward.45} parent=0 // pred_fallthru
    _
  // Predicated region
  $region18: #{resnet18_dense_forward.45} parent=0 // pred_check
    _
  $region19: #{resnet18_dense_forward.45} parent=0 // pred_check_branch
    %730 = sbr.rel (0) target = $region21
  $region20: #{resnet18_dense_forward.45} parent=0 // pred_region
    _
  $region21: #{resnet18_dense_forward.45} parent=0 // pred_fallthru
    _

// kernel: resnet18_dense_forward.44
$region0: #{resnet18_dense_forward.44}
  #allocation0 [shape = 'u32[]', space=smem, size = 0x4, offset = 0x4, fixed_abs, tag = 'smem constant byte address 0x4 - core index']
  #allocation1 [shape = 'u32[144,128]{1,0:T(1,128)}', space=vmem, size = 0x12000, scoped, tag = 'internal scratch']
  %s0 = inlined_call_operand.vmem [shape: bf16[8,1024], index: 0, kind: input, shape index: {}]
  %s1 = inlined_call_operand.vmem [shape: bf16[1024,1024], index: 1, kind: input, shape index: {}]
  %s2 = inlined_call_operand.vmem [shape: f32[1,1024], index: 2, kind: input, shape index: {}]
  %s3 = inlined_call_operand.vmem [shape: f32[8,1024], index: 3, kind: output, shape index: {}]
  %s4 = sld [smem:[#allocation0]]
  $region83: #{resnet18_dense_forward.44} parent=0
    _
  %s6 = ssub.s32 1, %s4
  %s7 = scalar_select 0, %s6, %s4
  $region1: #{resnet18_dense_forward.44} parent=0
    #allocation2 [shape = 'u8[1048576]{0}', space=vmem, size = 0x100000, scoped, tag = 'input window, operand 1']
    loop: start=0, step=1, limit=6
    $region2: #{resnet18_dense_forward.44} parent=1 // loop_pre_header
      _
    $region3: #{resnet18_dense_forward.44} parent=1 // loop_header
      %s9 = sphi 0, %s13
      %p10 = scmp.ge.s32.totalorder %s9, 6
      %s16 = sphi 0, %s35
      %s17 = sphi 0, %s31
      %s18 = sphi 0, %s27
      %s19 = sphi 0, %s16
      %s20 = sphi 0, %s17
      %s21 = sphi 0, %s18
      %s22 = sphi 0, %s19
      %s23 = sphi 0, %s20
      %s24 = sphi 0, %s21
      %s40 = sphi 0, %s42
      %s43 = sphi 0, %s40
      %s44 = sphi 0, %s43
      %s60 = sphi 0, %s44
      %s68 = sphi 0, %s70
      %s71 = sphi 0, %s68
      %s72 = sphi 0, %s71
      %s88 = sphi 0, %s72
      %s94 = sphi 0, %s96
      %s97 = sphi 0, %s94
      %s98 = sphi 0, %s97
      %s114 = sphi 0, %s98
      %s122 = sphi 0, %s124
      %s125 = sphi 0, %s122
      %s126 = sphi 0, %s125
      %s142 = sphi 0, %s126
    $region4: #{resnet18_dense_forward.44} parent=1 // loop_header_branch
      %12 = sbr.rel (%p10) target = $region8
    $region5: #{resnet18_dense_forward.44} parent=1 // loop_body
      %s14 = ssub.s32 %s9, 1
      %s15 = ssub.s32 %s9, 2
      %s25 = sadd.s32 1, %s18
      %p26 = scmp.ge.s32.totalorder %s25, 1
      %s27 = scalar_select %p26, 0, %s25
      %s28 = sadd.s32 1, %s17
      %s29 = scalar_select %p26, %s28, %s17
      %p30 = scmp.ge.s32.totalorder %s29, 4
      %s31 = scalar_select %p30, 0, %s29
      %s32 = sadd.s32 1, %s16
      %s33 = scalar_select %p30, %s32, %s16
      %p34 = scmp.ge.s32.totalorder %s33, 1
      %s35 = scalar_select %p34, 0, %s33
      %s36 = ssub.s32 %s16, %s35
      %s37 = ssub.s32 %s18, %s27
      %s38 = sor.u32 %s36, %s37
      %p39 = scmp.eq.s32.totalorder %s38, 0
      %s41 = sadd.s32 %s40, 1
      %s42 = scalar_select %p39, %s40, %s41
      %p45 = pneg %p39
      %p46 = scmp.eq.s32.totalorder %s9, 3
      %p47 = por %p45, %p46
      %p48 = scmp.ne.s32.totalorder %s40, %s43
      %p49 = scmp.eq.s32.totalorder %s9, 0
      %p50 = por %p48, %p49
      %p51 = scmp.ne.s32.totalorder %s40, %s43
      %p52 = scmp.eq.s32.totalorder %s14, 3
      %p53 = por %p51, %p52
      %p54 = scmp.ne.s32.totalorder %s43, %s44
      %p55 = scmp.eq.s32.totalorder %s14, 0
      %p56 = por %p54, %p55
      %p57 = scmp.ne.s32.totalorder %s43, %s44
      %p58 = scmp.eq.s32.totalorder %s15, 3
      %p59 = por %p57, %p58
      %p61 = scmp.ne.s32.totalorder %s44, %s60
      %p62 = scmp.eq.s32.totalorder %s15, 0
      %p63 = por %p61, %p62
      %s64 = ssub.s32 %s18, %s27
      %s65 = ssub.s32 %s17, %s31
      %s66 = sor.u32 %s64, %s65
      %p67 = scmp.eq.s32.totalorder %s66, 0
      %s69 = sadd.s32 %s68, 1
      %s70 = scalar_select %p67, %s68, %s69
      %p73 = pneg %p67
      %p74 = scmp.eq.s32.totalorder %s9, 3
      %p75 = por %p73, %p74
      %p76 = scmp.ne.s32.totalorder %s68, %s71
      %p77 = scmp.eq.s32.totalorder %s9, 0
      %p78 = por %p76, %p77
      %p79 = scmp.ne.s32.totalorder %s68, %s71
      %p80 = scmp.eq.s32.totalorder %s14, 3
      %p81 = por %p79, %p80
      %p82 = scmp.ne.s32.totalorder %s71, %s72
      %p83 = scmp.eq.s32.totalorder %s14, 0
      %p84 = por %p82, %p83
      %p85 = scmp.ne.s32.totalorder %s71, %s72
      %p86 = scmp.eq.s32.totalorder %s15, 3
      %p87 = por %p85, %p86
      %p89 = scmp.ne.s32.totalorder %s72, %s88
      %p90 = scmp.eq.s32.totalorder %s15, 0
      %p91 = por %p89, %p90
      %s92 = ssub.s32 %s17, %s31
      %p93 = scmp.eq.s32.totalorder %s92, 0
      %s95 = sadd.s32 %s94, 1
      %s96 = scalar_select %p93, %s94, %s95
      %p99 = pneg %p93
      %p100 = scmp.eq.s32.totalorder %s9, 3
      %p101 = por %p99, %p100
      %p102 = scmp.ne.s32.totalorder %s94, %s97
      %p103 = scmp.eq.s32.totalorder %s9, 0
      %p104 = por %p102, %p103
      %p105 = scmp.ne.s32.totalorder %s94, %s97
      %p106 = scmp.eq.s32.totalorder %s14, 3
      %p107 = por %p105, %p106
      %p108 = scmp.ne.s32.totalorder %s97, %s98
      %p109 = scmp.eq.s32.totalorder %s14, 0
      %p110 = por %p108, %p109
      %p111 = scmp.ne.s32.totalorder %s97, %s98
      %p112 = scmp.eq.s32.totalorder %s15, 3
      %p113 = por %p111, %p112
      %p115 = scmp.ne.s32.totalorder %s98, %s114
      %p116 = scmp.eq.s32.totalorder %s15, 0
      %p117 = por %p115, %p116
      %s118 = ssub.s32 %s16, %s35
      %s119 = ssub.s32 %s17, %s31
      %s120 = sor.u32 %s118, %s119
      %p121 = scmp.eq.s32.totalorder %s120, 0
      %s123 = sadd.s32 %s122, 1
      %s124 = scalar_select %p121, %s122, %s123
      %p127 = pneg %p121
      %p128 = scmp.eq.s32.totalorder %s9, 3
      %p129 = por %p127, %p128
      %p130 = scmp.ne.s32.totalorder %s122, %s125
      %p131 = scmp.eq.s32.totalorder %s9, 0
      %p132 = por %p130, %p131
      %p133 = scmp.ne.s32.totalorder %s122, %s125
      %p134 = scmp.eq.s32.totalorder %s14, 3
      %p135 = por %p133, %p134
      %p136 = scmp.ne.s32.totalorder %s125, %s126
      %p137 = scmp.eq.s32.totalorder %s14, 0
      %p138 = por %p136, %p137
      %p139 = scmp.ne.s32.totalorder %s125, %s126
      %p140 = scmp.eq.s32.totalorder %s15, 3
      %p141 = por %p139, %p140
      %p143 = scmp.ne.s32.totalorder %s126, %s142
      %p144 = scmp.eq.s32.totalorder %s15, 0
      %p145 = por %p143, %p144
      %p146 = scmp.le.s32.totalorder 1, %s9
      %p147 = scmp.lt.s32.totalorder %s9, 5
      %p148 = pnand %p146, %p147
      %p149 = pneg %p148
      // Predicated region
      $region9: #{resnet18_dense_forward.44} parent=5 // pred_check
        _
      $region10: #{resnet18_dense_forward.44} parent=5 // pred_check_branch
        %151 = sbr.rel (%p148) target = $region12
      $region11: #{resnet18_dense_forward.44} parent=5 // pred_region
        %s152 = ssub.s32 %s9, 1
        // Predicated region
        $region13: #{resnet18_dense_forward.44} parent=11 // pred_check
          %p153 = pneg %p56
        $region14: #{resnet18_dense_forward.44} parent=11 // pred_check_branch
          %155 = sbr.rel (%p153) target = $region16
        $region15: #{resnet18_dense_forward.44} parent=11 // pred_region
          %s156 = smul.u32 8, %s21
          %p157 = scmp.lt.s32.totalorder %s19, 0
          %s158 = scalar_select %p157, %s19, 0
          %p159 = scmp.lt.s32.totalorder %s156, 7
          %s160 = scalar_select %p159, %s156, 7
          %s161 = smul.addr %s158, 8
          %s162 = sadd.s32 %s160, %s161
          %s163 = smul.addr %s162, 4
          %s164 = scalar_lea.vmem %s0, %s163
          %s165 = smul.u32 8, %s21
        $region16: #{resnet18_dense_forward.44} parent=11 // pred_fallthru
          _
      $region12: #{resnet18_dense_forward.44} parent=5 // pred_fallthru
        _
      %p166 = scmp.lt.s32.totalorder %s9, 4
      // Predicated region
      $region17: #{resnet18_dense_forward.44} parent=5 // pred_check
        %p167 = pneg %p166
      $region18: #{resnet18_dense_forward.44} parent=5 // pred_check_branch
        %169 = sbr.rel (%p167) target = $region20
      $region19: #{resnet18_dense_forward.44} parent=5 // pred_region
        // Predicated region
        $region21: #{resnet18_dense_forward.44} parent=19 // pred_check
          %p170 = pneg %p78
        $region22: #{resnet18_dense_forward.44} parent=19 // pred_check_branch
          %172 = sbr.rel (%p170) target = $region24
        $region23: #{resnet18_dense_forward.44} parent=19 // pred_region
          %s173 = sand.u32 %s68, 1
          %s174 = sand.u32 %s68, 1
          %s175 = smul.addr %s174, 1024
          %s176 = scalar_lea.vmem [#allocation2], %s175
          %s177 = smul.u32 128, %s18
          %s178 = smul.u32 2, %s17
          %s179 = smul.addr %s177, 8
          %s180 = sadd.s32 %s178, %s179
          %s181 = smul.addr %s180, 4
          %s182 = scalar_lea.vmem %s1, %s181
          // Predicated region
          $region25: #{resnet18_dense_forward.44} parent=23 // pred_check
            _
          $region26: #{resnet18_dense_forward.44} parent=23 // pred_check_branch
            %184 = sbr.rel (0) target = $region28
          $region27: #{resnet18_dense_forward.44} parent=23 // pred_region
            // Predicated region
            $region29: #{resnet18_dense_forward.44} parent=27 // pred_check
              _
            $region30: #{resnet18_dense_forward.44} parent=27 // pred_check_branch
              %186 = sbr.rel (0) target = $region32
            $region31: #{resnet18_dense_forward.44} parent=27 // pred_region
              // Predicated region
              $region44: #{resnet18_dense_forward.44} parent=31 // pred_check
                _
              $region45: #{resnet18_dense_forward.44} parent=31 // pred_check_branch
                %455 = sbr.rel (0) target = $region47
              $region46: #{resnet18_dense_forward.44} parent=31 // pred_region
                loop: start=0, step=1, limit=1
                $region48: #{resnet18_dense_forward.44} parent=46 // loop_pre_header
                  _
                $region49: #{resnet18_dense_forward.44} parent=46 // loop_header
                  %s457 = sphi 0, %s461
                  %p458 = scmp.ge.s32.totalorder %s457, 1
                  %s462 = sphi %s182, %s182
                  %s463 = sphi %s176, %s176
                $region50: #{resnet18_dense_forward.44} parent=46 // loop_header_branch
                  %460 = sbr.rel (%p458) target = $region54
                $region51: #{resnet18_dense_forward.44} parent=46 // loop_body
                  %v464 = vld [vmem:[%s462] sm:$0xff]
                  %465 = vst [vmem:[%s463] sm:$0xff] %v464
                  %v466 = vld [vmem:[%s462 + $0x20] sm:$0xff]
                  %467 = vst [vmem:[%s463 + $0x8] sm:$0xff] %v466
                  %v468 = vld [vmem:[%s462 + $0x40] sm:$0xff]
                  %469 = vst [vmem:[%s463 + $0x10] sm:$0xff] %v468
                  %v470 = vld [vmem:[%s462 + $0x60] sm:$0xff]
                  %471 = vst [vmem:[%s463 + $0x18] sm:$0xff] %v470
                  %v472 = vld [vmem:[%s462 + $0x80] sm:$0xff]
                  %473 = vst [vmem:[%s463 + $0x20] sm:$0xff] %v472
                  %v474 = vld [vmem:[%s462 + $0xa0] sm:$0xff]
                  %475 = vst [vmem:[%s463 + $0x28] sm:$0xff] %v474
                  %v476 = vld [vmem:[%s462 + $0xc0] sm:$0xff]
                  %477 = vst [vmem:[%s463 + $0x30] sm:$0xff] %v476
                  %v478 = vld [vmem:[%s462 + $0xe0] sm:$0xff]
                  %479 = vst [vmem:[%s463 + $0x38] sm:$0xff] %v478
                  %v480 = vld [vmem:[%s462 + $0x100] sm:$0xff]
                  %481 = vst [vmem:[%s463 + $0x40] sm:$0xff] %v480
                  %v482 = vld [vmem:[%s462 + $0x120] sm:$0xff]
                  %483 = vst [vmem:[%s463 + $0x48] sm:$0xff] %v482
                  %v484 = vld [vmem:[%s462 + $0x140] sm:$0xff]
                  %485 = vst [vmem:[%s463 + $0x50] sm:$0xff] %v484
                  %v486 = vld [vmem:[%s462 + $0x160] sm:$0xff]
                  %487 = vst [vmem:[%s463 + $0x58] sm:$0xff] %v486
                  %v488 = vld [vmem:[%s462 + $0x180] sm:$0xff]
                  %489 = vst [vmem:[%s463 + $0x60] sm:$0xff] %v488
                  %v490 = vld [vmem:[%s462 + $0x1a0] sm:$0xff]
                  %491 = vst [vmem:[%s463 + $0x68] sm:$0xff] %v490
                  %v492 = vld [vmem:[%s462 + $0x1c0] sm:$0xff]
                  %493 = vst [vmem:[%s463 + $0x70] sm:$0xff] %v492
                  %v494 = vld [vmem:[%s462 + $0x1e0] sm:$0xff]
                  %495 = vst [vmem:[%s463 + $0x78] sm:$0xff] %v494
                  %v496 = vld [vmem:[%s462 + $0x200] sm:$0xff]
                  %497 = vst [vmem:[%s463 + $0x80] sm:$0xff] %v496
                  %v498 = vld [vmem:[%s462 + $0x220] sm:$0xff]
                  %499 = vst [vmem:[%s463 + $0x88] sm:$0xff] %v498
                  %v500 = vld [vmem:[%s462 + $0x240] sm:$0xff]
                  %501 = vst [vmem:[%s463 + $0x90] sm:$0xff] %v500
                  %v502 = vld [vmem:[%s462 + $0x260] sm:$0xff]
                  %503 = vst [vmem:[%s463 + $0x98] sm:$0xff] %v502
                  %v504 = vld [vmem:[%s462 + $0x280] sm:$0xff]
                  %505 = vst [vmem:[%s463 + $0xa0] sm:$0xff] %v504
                  %v506 = vld [vmem:[%s462 + $0x2a0] sm:$0xff]
                  %507 = vst [vmem:[%s463 + $0xa8] sm:$0xff] %v506
                  %v508 = vld [vmem:[%s462 + $0x2c0] sm:$0xff]
                  %509 = vst [vmem:[%s463 + $0xb0] sm:$0xff] %v508
                  %v510 = vld [vmem:[%s462 + $0x2e0] sm:$0xff]
                  %511 = vst [vmem:[%s463 + $0xb8] sm:$0xff] %v510
                  %v512 = vld [vmem:[%s462 + $0x300] sm:$0xff]
                  %513 = vst [vmem:[%s463 + $0xc0] sm:$0xff] %v512
                  %v514 = vld [vmem:[%s462 + $0x320] sm:$0xff]
                  %515 = vst [vmem:[%s463 + $0xc8] sm:$0xff] %v514
                  %v516 = vld [vmem:[%s462 + $0x340] sm:$0xff]
                  %517 = vst [vmem:[%s463 + $0xd0] sm:$0xff] %v516
                  %v518 = vld [vmem:[%s462 + $0x360] sm:$0xff]
                  %519 = vst [vmem:[%s463 + $0xd8] sm:$0xff] %v518
                  %v520 = vld [vmem:[%s462 + $0x380] sm:$0xff]
                  %521 = vst [vmem:[%s463 + $0xe0] sm:$0xff] %v520
                  %v522 = vld [vmem:[%s462 + $0x3a0] sm:$0xff]
                  %523 = vst [vmem:[%s463 + $0xe8] sm:$0xff] %v522
                  %v524 = vld [vmem:[%s462 + $0x3c0] sm:$0xff]
                  %525 = vst [vmem:[%s463 + $0xf0] sm:$0xff] %v524
                  %v526 = vld [vmem:[%s462 + $0x3e0] sm:$0xff]
                  %527 = vst [vmem:[%s463 + $0xf8] sm:$0xff] %v526
                  %v528 = vld [vmem:[%s462 + $0x400] sm:$0xff]
                  %529 = vst [vmem:[%s463 + $0x100] sm:$0xff] %v528
                  %v530 = vld [vmem:[%s462 + $0x420] sm:$0xff]
                  %531 = vst [vmem:[%s463 + $0x108] sm:$0xff] %v530
                  %v532 = vld [vmem:[%s462 + $0x440] sm:$0xff]
                  %533 = vst [vmem:[%s463 + $0x110] sm:$0xff] %v532
                  %v534 = vld [vmem:[%s462 + $0x460] sm:$0xff]
                  %535 = vst [vmem:[%s463 + $0x118] sm:$0xff] %v534
                  %v536 = vld [vmem:[%s462 + $0x480] sm:$0xff]
                  %537 = vst [vmem:[%s463 + $0x120] sm:$0xff] %v536
                  %v538 = vld [vmem:[%s462 + $0x4a0] sm:$0xff]
                  %539 = vst [vmem:[%s463 + $0x128] sm:$0xff] %v538
                  %v540 = vld [vmem:[%s462 + $0x4c0] sm:$0xff]
                  %541 = vst [vmem:[%s463 + $0x130] sm:$0xff] %v540
                  %v542 = vld [vmem:[%s462 + $0x4e0] sm:$0xff]
                  %543 = vst [vmem:[%s463 + $0x138] sm:$0xff] %v542
                  %v544 = vld [vmem:[%s462 + $0x500] sm:$0xff]
                  %545 = vst [vmem:[%s463 + $0x140] sm:$0xff] %v544
                  %v546 = vld [vmem:[%s462 + $0x520] sm:$0xff]
                  %547 = vst [vmem:[%s463 + $0x148] sm:$0xff] %v546
                  %v548 = vld [vmem:[%s462 + $0x540] sm:$0xff]
                  %549 = vst [vmem:[%s463 + $0x150] sm:$0xff] %v548
                  %v550 = vld [vmem:[%s462 + $0x560] sm:$0xff]
                  %551 = vst [vmem:[%s463 + $0x158] sm:$0xff] %v550
                  %v552 = vld [vmem:[%s462 + $0x580] sm:$0xff]
                  %553 = vst [vmem:[%s463 + $0x160] sm:$0xff] %v552
                  %v554 = vld [vmem:[%s462 + $0x5a0] sm:$0xff]
                  %555 = vst [vmem:[%s463 + $0x168] sm:$0xff] %v554
                  %v556 = vld [vmem:[%s462 + $0x5c0] sm:$0xff]
                  %557 = vst [vmem:[%s463 + $0x170] sm:$0xff] %v556
                  %v558 = vld [vmem:[%s462 + $0x5e0] sm:$0xff]
                  %559 = vst [vmem:[%s463 + $0x178] sm:$0xff] %v558
                  %v560 = vld [vmem:[%s462 + $0x600] sm:$0xff]
                  %561 = vst [vmem:[%s463 + $0x180] sm:$0xff] %v560
                  %v562 = vld [vmem:[%s462 + $0x620] sm:$0xff]
                  %563 = vst [vmem:[%s463 + $0x188] sm:$0xff] %v562
                  %v564 = vld [vmem:[%s462 + $0x640] sm:$0xff]
                  %565 = vst [vmem:[%s463 + $0x190] sm:$0xff] %v564
                  %v566 = vld [vmem:[%s462 + $0x660] sm:$0xff]
                  %567 = vst [vmem:[%s463 + $0x198] sm:$0xff] %v566
                  %v568 = vld [vmem:[%s462 + $0x680] sm:$0xff]
                  %569 = vst [vmem:[%s463 + $0x1a0] sm:$0xff] %v568
                  %v570 = vld [vmem:[%s462 + $0x6a0] sm:$0xff]
                  %571 = vst [vmem:[%s463 + $0x1a8] sm:$0xff] %v570
                  %v572 = vld [vmem:[%s462 + $0x6c0] sm:$0xff]
                  %573 = vst [vmem:[%s463 + $0x1b0] sm:$0xff] %v572
                  %v574 = vld [vmem:[%s462 + $0x6e0] sm:$0xff]
                  %575 = vst [vmem:[%s463 + $0x1b8] sm:$0xff] %v574
                  %v576 = vld [vmem:[%s462 + $0x700] sm:$0xff]
                  %577 = vst [vmem:[%s463 + $0x1c0] sm:$0xff] %v576
                  %v578 = vld [vmem:[%s462 + $0x720] sm:$0xff]
                  %579 = vst [vmem:[%s463 + $0x1c8] sm:$0xff] %v578
                  %v580 = vld [vmem:[%s462 + $0x740] sm:$0xff]
                  %581 = vst [vmem:[%s463 + $0x1d0] sm:$0xff] %v580
                  %v582 = vld [vmem:[%s462 + $0x760] sm:$0xff]
                  %583 = vst [vmem:[%s463 + $0x1d8] sm:$0xff] %v582
                  %v584 = vld [vmem:[%s462 + $0x780] sm:$0xff]
                  %585 = vst [vmem:[%s463 + $0x1e0] sm:$0xff] %v584
                  %v586 = vld [vmem:[%s462 + $0x7a0] sm:$0xff]
                  %587 = vst [vmem:[%s463 + $0x1e8] sm:$0xff] %v586
                  %v588 = vld [vmem:[%s462 + $0x7c0] sm:$0xff]
                  %589 = vst [vmem:[%s463 + $0x1f0] sm:$0xff] %v588
                  %v590 = vld [vmem:[%s462 + $0x7e0] sm:$0xff]
                  %591 = vst [vmem:[%s463 + $0x1f8] sm:$0xff] %v590
                  %v592 = vld [vmem:[%s462 + $0x800] sm:$0xff]
                  %593 = vst [vmem:[%s463 + $0x200] sm:$0xff] %v592
                  %v594 = vld [vmem:[%s462 + $0x820] sm:$0xff]
                  %595 = vst [vmem:[%s463 + $0x208] sm:$0xff] %v594
                  %v596 = vld [vmem:[%s462 + $0x840] sm:$0xff]
                  %597 = vst [vmem:[%s463 + $0x210] sm:$0xff] %v596
                  %v598 = vld [vmem:[%s462 + $0x860] sm:$0xff]
                  %599 = vst [vmem:[%s463 + $0x218] sm:$0xff] %v598
                  %v600 = vld [vmem:[%s462 + $0x880] sm:$0xff]
                  %601 = vst [vmem:[%s463 + $0x220] sm:$0xff] %v600
                  %v602 = vld [vmem:[%s462 + $0x8a0] sm:$0xff]
                  %603 = vst [vmem:[%s463 + $0x228] sm:$0xff] %v602
                  %v604 = vld [vmem:[%s462 + $0x8c0] sm:$0xff]
                  %605 = vst [vmem:[%s463 + $0x230] sm:$0xff] %v604
                  %v606 = vld [vmem:[%s462 + $0x8e0] sm:$0xff]
                  %607 = vst [vmem:[%s463 + $0x238] sm:$0xff] %v606
                  %v608 = vld [vmem:[%s462 + $0x900] sm:$0xff]
                  %609 = vst [vmem:[%s463 + $0x240] sm:$0xff] %v608
                  %v610 = vld [vmem:[%s462 + $0x920] sm:$0xff]
                  %611 = vst [vmem:[%s463 + $0x248] sm:$0xff] %v610
                  %v612 = vld [vmem:[%s462 + $0x940] sm:$0xff]
                  %613 = vst [vmem:[%s463 + $0x250] sm:$0xff] %v612
                  %v614 = vld [vmem:[%s462 + $0x960] sm:$0xff]
                  %615 = vst [vmem:[%s463 + $0x258] sm:$0xff] %v614
                  %v616 = vld [vmem:[%s462 + $0x980] sm:$0xff]
                  %617 = vst [vmem:[%s463 + $0x260] sm:$0xff] %v616
                  %v618 = vld [vmem:[%s462 + $0x9a0] sm:$0xff]
                  %619 = vst [vmem:[%s463 + $0x268] sm:$0xff] %v618
                  %v620 = vld [vmem:[%s462 + $0x9c0] sm:$0xff]
                  %621 = vst [vmem:[%s463 + $0x270] sm:$0xff] %v620
                  %v622 = vld [vmem:[%s462 + $0x9e0] sm:$0xff]
                  %623 = vst [vmem:[%s463 + $0x278] sm:$0xff] %v622
                  %v624 = vld [vmem:[%s462 + $0xa00] sm:$0xff]
                  %625 = vst [vmem:[%s463 + $0x280] sm:$0xff] %v624
                  %v626 = vld [vmem:[%s462 + $0xa20] sm:$0xff]
                  %627 = vst [vmem:[%s463 + $0x288] sm:$0xff] %v626
                  %v628 = vld [vmem:[%s462 + $0xa40] sm:$0xff]
                  %629 = vst [vmem:[%s463 + $0x290] sm:$0xff] %v628
                  %v630 = vld [vmem:[%s462 + $0xa60] sm:$0xff]
                  %631 = vst [vmem:[%s463 + $0x298] sm:$0xff] %v630
                  %v632 = vld [vmem:[%s462 + $0xa80] sm:$0xff]
                  %633 = vst [vmem:[%s463 + $0x2a0] sm:$0xff] %v632
                  %v634 = vld [vmem:[%s462 + $0xaa0] sm:$0xff]
                  %635 = vst [vmem:[%s463 + $0x2a8] sm:$0xff] %v634
                  %v636 = vld [vmem:[%s462 + $0xac0] sm:$0xff]
                  %637 = vst [vmem:[%s463 + $0x2b0] sm:$0xff] %v636
                  %v638 = vld [vmem:[%s462 + $0xae0] sm:$0xff]
                  %639 = vst [vmem:[%s463 + $0x2b8] sm:$0xff] %v638
                  %v640 = vld [vmem:[%s462 + $0xb00] sm:$0xff]
                  %641 = vst [vmem:[%s463 + $0x2c0] sm:$0xff] %v640
                  %v642 = vld [vmem:[%s462 + $0xb20] sm:$0xff]
                  %643 = vst [vmem:[%s463 + $0x2c8] sm:$0xff] %v642
                  %v644 = vld [vmem:[%s462 + $0xb40] sm:$0xff]
                  %645 = vst [vmem:[%s463 + $0x2d0] sm:$0xff] %v644
                  %v646 = vld [vmem:[%s462 + $0xb60] sm:$0xff]
                  %647 = vst [vmem:[%s463 + $0x2d8] sm:$0xff] %v646
                  %v648 = vld [vmem:[%s462 + $0xb80] sm:$0xff]
                  %649 = vst [vmem:[%s463 + $0x2e0] sm:$0xff] %v648
                  %v650 = vld [vmem:[%s462 + $0xba0] sm:$0xff]
                  %651 = vst [vmem:[%s463 + $0x2e8] sm:$0xff] %v650
                  %v652 = vld [vmem:[%s462 + $0xbc0] sm:$0xff]
                  %653 = vst [vmem:[%s463 + $0x2f0] sm:$0xff] %v652
                  %v654 = vld [vmem:[%s462 + $0xbe0] sm:$0xff]
                  %655 = vst [vmem:[%s463 + $0x2f8] sm:$0xff] %v654
                  %v656 = vld [vmem:[%s462 + $0xc00] sm:$0xff]
                  %657 = vst [vmem:[%s463 + $0x300] sm:$0xff] %v656
                  %v658 = vld [vmem:[%s462 + $0xc20] sm:$0xff]
                  %659 = vst [vmem:[%s463 + $0x308] sm:$0xff] %v658
                  %v660 = vld [vmem:[%s462 + $0xc40] sm:$0xff]
                  %661 = vst [vmem:[%s463 + $0x310] sm:$0xff] %v660
                  %v662 = vld [vmem:[%s462 + $0xc60] sm:$0xff]
                  %663 = vst [vmem:[%s463 + $0x318] sm:$0xff] %v662
                  %v664 = vld [vmem:[%s462 + $0xc80] sm:$0xff]
                  %665 = vst [vmem:[%s463 + $0x320] sm:$0xff] %v664
                  %v666 = vld [vmem:[%s462 + $0xca0] sm:$0xff]
                  %667 = vst [vmem:[%s463 + $0x328] sm:$0xff] %v666
                  %v668 = vld [vmem:[%s462 + $0xcc0] sm:$0xff]
                  %669 = vst [vmem:[%s463 + $0x330] sm:$0xff] %v668
                  %v670 = vld [vmem:[%s462 + $0xce0] sm:$0xff]
                  %671 = vst [vmem:[%s463 + $0x338] sm:$0xff] %v670
                  %v672 = vld [vmem:[%s462 + $0xd00] sm:$0xff]
                  %673 = vst [vmem:[%s463 + $0x340] sm:$0xff] %v672
                  %v674 = vld [vmem:[%s462 + $0xd20] sm:$0xff]
                  %675 = vst [vmem:[%s463 + $0x348] sm:$0xff] %v674
                  %v676 = vld [vmem:[%s462 + $0xd40] sm:$0xff]
                  %677 = vst [vmem:[%s463 + $0x350] sm:$0xff] %v676
                  %v678 = vld [vmem:[%s462 + $0xd60] sm:$0xff]
                  %679 = vst [vmem:[%s463 + $0x358] sm:$0xff] %v678
                  %v680 = vld [vmem:[%s462 + $0xd80] sm:$0xff]
                  %681 = vst [vmem:[%s463 + $0x360] sm:$0xff] %v680
                  %v682 = vld [vmem:[%s462 + $0xda0] sm:$0xff]
                  %683 = vst [vmem:[%s463 + $0x368] sm:$0xff] %v682
                  %v684 = vld [vmem:[%s462 + $0xdc0] sm:$0xff]
                  %685 = vst [vmem:[%s463 + $0x370] sm:$0xff] %v684
                  %v686 = vld [vmem:[%s462 + $0xde0] sm:$0xff]
                  %687 = vst [vmem:[%s463 + $0x378] sm:$0xff] %v686
                  %v688 = vld [vmem:[%s462 + $0xe00] sm:$0xff]
                  %689 = vst [vmem:[%s463 + $0x380] sm:$0xff] %v688
                  %v690 = vld [vmem:[%s462 + $0xe20] sm:$0xff]
                  %691 = vst [vmem:[%s463 + $0x388] sm:$0xff] %v690
                  %v692 = vld [vmem:[%s462 + $0xe40] sm:$0xff]
                  %693 = vst [vmem:[%s463 + $0x390] sm:$0xff] %v692
                  %v694 = vld [vmem:[%s462 + $0xe60] sm:$0xff]
                  %695 = vst [vmem:[%s463 + $0x398] sm:$0xff] %v694
                  %v696 = vld [vmem:[%s462 + $0xe80] sm:$0xff]
                  %697 = vst [vmem:[%s463 + $0x3a0] sm:$0xff] %v696
                  %v698 = vld [vmem:[%s462 + $0xea0] sm:$0xff]
                  %699 = vst [vmem:[%s463 + $0x3a8] sm:$0xff] %v698
                  %v700 = vld [vmem:[%s462 + $0xec0] sm:$0xff]
                  %701 = vst [vmem:[%s463 + $0x3b0] sm:$0xff] %v700
                  %v702 = vld [vmem:[%s462 + $0xee0] sm:$0xff]
                  %703 = vst [vmem:[%s463 + $0x3b8] sm:$0xff] %v702
                  %v704 = vld [vmem:[%s462 + $0xf00] sm:$0xff]
                  %705 = vst [vmem:[%s463 + $0x3c0] sm:$0xff] %v704
                  %v706 = vld [vmem:[%s462 + $0xf20] sm:$0xff]
                  %707 = vst [vmem:[%s463 + $0x3c8] sm:$0xff] %v706
                  %v708 = vld [vmem:[%s462 + $0xf40] sm:$0xff]
                  %709 = vst [vmem:[%s463 + $0x3d0] sm:$0xff] %v708
                  %v710 = vld [vmem:[%s462 + $0xf60] sm:$0xff]
                  %711 = vst [vmem:[%s463 + $0x3d8] sm:$0xff] %v710
                  %v712 = vld [vmem:[%s462 + $0xf80] sm:$0xff]
                  %713 = vst [vmem:[%s463 + $0x3e0] sm:$0xff] %v712
                  %v714 = vld [vmem:[%s462 + $0xfa0] sm:$0xff]
                  %715 = vst [vmem:[%s463 + $0x3e8] sm:$0xff] %v714
                  %v716 = vld [vmem:[%s462 + $0xfc0] sm:$0xff]
                  %717 = vst [vmem:[%s463 + $0x3f0] sm:$0xff] %v716
                  %v718 = vld [vmem:[%s462 + $0xfe0] sm:$0xff]
                  %719 = vst [vmem:[%s463 + $0x3f8] sm:$0xff] %v718
                $region52: #{resnet18_dense_forward.44} parent=46 // loop_footer
                  %s461 = sadd.s32 1, %s457
                $region53: #{resnet18_dense_forward.44} parent=46 // loop_footer_branch
                  %456 = sbr.rel target = $region49
                $region54: #{resnet18_dense_forward.44} parent=46 // loop_exit
                  _
              $region47: #{resnet18_dense_forward.44} parent=31 // pred_fallthru
                _
              // Predicated region
              $region55: #{resnet18_dense_forward.44} parent=31 // pred_check
                _
              $region56: #{resnet18_dense_forward.44} parent=31 // pred_check_branch
                %721 = sbr.rel target = $region58
              $region57: #{resnet18_dense_forward.44} parent=31 // pred_region
                _
              $region58: #{resnet18_dense_forward.44} parent=31 // pred_fallthru
                _
            $region32: #{resnet18_dense_forward.44} parent=27 // pred_fallthru
              _
            // Predicated region
            $region33: #{resnet18_dense_forward.44} parent=27 // pred_check
              _
            $region34: #{resnet18_dense_forward.44} parent=27 // pred_check_branch
              %188 = sbr.rel target = $region36
            $region35: #{resnet18_dense_forward.44} parent=27 // pred_region
              loop: start=0, step=1, limit=1
              $region37: #{resnet18_dense_forward.44} parent=35 // loop_pre_header
                _
              $region38: #{resnet18_dense_forward.44} parent=35 // loop_header
                %s191 = sphi 0, %s195
                %p192 = scmp.ge.s32.totalorder %s191, 1
                %s196 = sphi %s182, %s182
                %s197 = sphi %s176, %s176
              $region39: #{resnet18_dense_forward.44} parent=35 // loop_header_branch
                %194 = sbr.rel (%p192) target = $region43
              $region40: #{resnet18_dense_forward.44} parent=35 // loop_body
                %v198 = vld [vmem:[%s196] sm:$0xff]
                %199 = vst [vmem:[%s197] sm:$0xff] %v198
                %v200 = vld [vmem:[%s196 + $0x20] sm:$0xff]
                %201 = vst [vmem:[%s197 + $0x8] sm:$0xff] %v200
                %v202 = vld [vmem:[%s196 + $0x40] sm:$0xff]
                %203 = vst [vmem:[%s197 + $0x10] sm:$0xff] %v202
                %v204 = vld [vmem:[%s196 + $0x60] sm:$0xff]
                %205 = vst [vmem:[%s197 + $0x18] sm:$0xff] %v204
                %v206 = vld [vmem:[%s196 + $0x80] sm:$0xff]
                %207 = vst [vmem:[%s197 + $0x20] sm:$0xff] %v206
                %v208 = vld [vmem:[%s196 + $0xa0] sm:$0xff]
                %209 = vst [vmem:[%s197 + $0x28] sm:$0xff] %v208
                %v210 = vld [vmem:[%s196 + $0xc0] sm:$0xff]
                %211 = vst [vmem:[%s197 + $0x30] sm:$0xff] %v210
                %v212 = vld [vmem:[%s196 + $0xe0] sm:$0xff]
                %213 = vst [vmem:[%s197 + $0x38] sm:$0xff] %v212
                %v214 = vld [vmem:[%s196 + $0x100] sm:$0xff]
                %215 = vst [vmem:[%s197 + $0x40] sm:$0xff] %v214
                %v216 = vld [vmem:[%s196 + $0x120] sm:$0xff]
                %217 = vst [vmem:[%s197 + $0x48] sm:$0xff] %v216
                %v218 = vld [vmem:[%s196 + $0x140] sm:$0xff]
                %219 = vst [vmem:[%s197 + $0x50] sm:$0xff] %v218
                %v220 = vld [vmem:[%s196 + $0x160] sm:$0xff]
                %221 = vst [vmem:[%s197 + $0x58] sm:$0xff] %v220
                %v222 = vld [vmem:[%s196 + $0x180] sm:$0xff]
                %223 = vst [vmem:[%s197 + $0x60] sm:$0xff] %v222
                %v224 = vld [vmem:[%s196 + $0x1a0] sm:$0xff]
                %225 = vst [vmem:[%s197 + $0x68] sm:$0xff] %v224
                %v226 = vld [vmem:[%s196 + $0x1c0] sm:$0xff]
                %227 = vst [vmem:[%s197 + $0x70] sm:$0xff] %v226
                %v228 = vld [vmem:[%s196 + $0x1e0] sm:$0xff]
                %229 = vst [vmem:[%s197 + $0x78] sm:$0xff] %v228
                %v230 = vld [vmem:[%s196 + $0x200] sm:$0xff]
                %231 = vst [vmem:[%s197 + $0x80] sm:$0xff] %v230
                %v232 = vld [vmem:[%s196 + $0x220] sm:$0xff]
                %233 = vst [vmem:[%s197 + $0x88] sm:$0xff] %v232
                %v234 = vld [vmem:[%s196 + $0x240] sm:$0xff]
                %235 = vst [vmem:[%s197 + $0x90] sm:$0xff] %v234
                %v236 = vld [vmem:[%s196 + $0x260] sm:$0xff]
                %237 = vst [vmem:[%s197 + $0x98] sm:$0xff] %v236
                %v238 = vld [vmem:[%s196 + $0x280] sm:$0xff]
                %239 = vst [vmem:[%s197 + $0xa0] sm:$0xff] %v238
                %v240 = vld [vmem:[%s196 + $0x2a0] sm:$0xff]
                %241 = vst [vmem:[%s197 + $0xa8] sm:$0xff] %v240
                %v242 = vld [vmem:[%s196 + $0x2c0] sm:$0xff]
                %243 = vst [vmem:[%s197 + $0xb0] sm:$0xff] %v242
                %v244 = vld [vmem:[%s196 + $0x2e0] sm:$0xff]
                %245 = vst [vmem:[%s197 + $0xb8] sm:$0xff] %v244
                %v246 = vld [vmem:[%s196 + $0x300] sm:$0xff]
                %247 = vst [vmem:[%s197 + $0xc0] sm:$0xff] %v246
                %v248 = vld [vmem:[%s196 + $0x320] sm:$0xff]
                %249 = vst [vmem:[%s197 + $0xc8] sm:$0xff] %v248
                %v250 = vld [vmem:[%s196 + $0x340] sm:$0xff]
                %251 = vst [vmem:[%s197 + $0xd0] sm:$0xff] %v250
                %v252 = vld [vmem:[%s196 + $0x360] sm:$0xff]
                %253 = vst [vmem:[%s197 + $0xd8] sm:$0xff] %v252
                %v254 = vld [vmem:[%s196 + $0x380] sm:$0xff]
                %255 = vst [vmem:[%s197 + $0xe0] sm:$0xff] %v254
                %v256 = vld [vmem:[%s196 + $0x3a0] sm:$0xff]
                %257 = vst [vmem:[%s197 + $0xe8] sm:$0xff] %v256
                %v258 = vld [vmem:[%s196 + $0x3c0] sm:$0xff]
                %259 = vst [vmem:[%s197 + $0xf0] sm:$0xff] %v258
                %v260 = vld [vmem:[%s196 + $0x3e0] sm:$0xff]
                %261 = vst [vmem:[%s197 + $0xf8] sm:$0xff] %v260
                %v262 = vld [vmem:[%s196 + $0x400] sm:$0xff]
                %263 = vst [vmem:[%s197 + $0x100] sm:$0xff] %v262
                %v264 = vld [vmem:[%s196 + $0x420] sm:$0xff]
                %265 = vst [vmem:[%s197 + $0x108] sm:$0xff] %v264
                %v266 = vld [vmem:[%s196 + $0x440] sm:$0xff]
                %267 = vst [vmem:[%s197 + $0x110] sm:$0xff] %v266
                %v268 = vld [vmem:[%s196 + $0x460] sm:$0xff]
                %269 = vst [vmem:[%s197 + $0x118] sm:$0xff] %v268
                %v270 = vld [vmem:[%s196 + $0x480] sm:$0xff]
                %271 = vst [vmem:[%s197 + $0x120] sm:$0xff] %v270
                %v272 = vld [vmem:[%s196 + $0x4a0] sm:$0xff]
                %273 = vst [vmem:[%s197 + $0x128] sm:$0xff] %v272
                %v274 = vld [vmem:[%s196 + $0x4c0] sm:$0xff]
                %275 = vst [vmem:[%s197 + $0x130] sm:$0xff] %v274
                %v276 = vld [vmem:[%s196 + $0x4e0] sm:$0xff]
                %277 = vst [vmem:[%s197 + $0x138] sm:$0xff] %v276
                %v278 = vld [vmem:[%s196 + $0x500] sm:$0xff]
                %279 = vst [vmem:[%s197 + $0x140] sm:$0xff] %v278
                %v280 = vld [vmem:[%s196 + $0x520] sm:$0xff]
                %281 = vst [vmem:[%s197 + $0x148] sm:$0xff] %v280
                %v282 = vld [vmem:[%s196 + $0x540] sm:$0xff]
                %283 = vst [vmem:[%s197 + $0x150] sm:$0xff] %v282
                %v284 = vld [vmem:[%s196 + $0x560] sm:$0xff]
                %285 = vst [vmem:[%s197 + $0x158] sm:$0xff] %v284
                %v286 = vld [vmem:[%s196 + $0x580] sm:$0xff]
                %287 = vst [vmem:[%s197 + $0x160] sm:$0xff] %v286
                %v288 = vld [vmem:[%s196 + $0x5a0] sm:$0xff]
                %289 = vst [vmem:[%s197 + $0x168] sm:$0xff] %v288
                %v290 = vld [vmem:[%s196 + $0x5c0] sm:$0xff]
                %291 = vst [vmem:[%s197 + $0x170] sm:$0xff] %v290
                %v292 = vld [vmem:[%s196 + $0x5e0] sm:$0xff]
                %293 = vst [vmem:[%s197 + $0x178] sm:$0xff] %v292
                %v294 = vld [vmem:[%s196 + $0x600] sm:$0xff]
                %295 = vst [vmem:[%s197 + $0x180] sm:$0xff] %v294
                %v296 = vld [vmem:[%s196 + $0x620] sm:$0xff]
                %297 = vst [vmem:[%s197 + $0x188] sm:$0xff] %v296
                %v298 = vld [vmem:[%s196 + $0x640] sm:$0xff]
                %299 = vst [vmem:[%s197 + $0x190] sm:$0xff] %v298
                %v300 = vld [vmem:[%s196 + $0x660] sm:$0xff]
                %301 = vst [vmem:[%s197 + $0x198] sm:$0xff] %v300
                %v302 = vld [vmem:[%s196 + $0x680] sm:$0xff]
                %303 = vst [vmem:[%s197 + $0x1a0] sm:$0xff] %v302
                %v304 = vld [vmem:[%s196 + $0x6a0] sm:$0xff]
                %305 = vst [vmem:[%s197 + $0x1a8] sm:$0xff] %v304
                %v306 = vld [vmem:[%s196 + $0x6c0] sm:$0xff]
                %307 = vst [vmem:[%s197 + $0x1b0] sm:$0xff] %v306
                %v308 = vld [vmem:[%s196 + $0x6e0] sm:$0xff]
                %309 = vst [vmem:[%s197 + $0x1b8] sm:$0xff] %v308
                %v310 = vld [vmem:[%s196 + $0x700] sm:$0xff]
                %311 = vst [vmem:[%s197 + $0x1c0] sm:$0xff] %v310
                %v312 = vld [vmem:[%s196 + $0x720] sm:$0xff]
                %313 = vst [vmem:[%s197 + $0x1c8] sm:$0xff] %v312
                %v314 = vld [vmem:[%s196 + $0x740] sm:$0xff]
                %315 = vst [vmem:[%s197 + $0x1d0] sm:$0xff] %v314
                %v316 = vld [vmem:[%s196 + $0x760] sm:$0xff]
                %317 = vst [vmem:[%s197 + $0x1d8] sm:$0xff] %v316
                %v318 = vld [vmem:[%s196 + $0x780] sm:$0xff]
                %319 = vst [vmem:[%s197 + $0x1e0] sm:$0xff] %v318
                %v320 = vld [vmem:[%s196 + $0x7a0] sm:$0xff]
                %321 = vst [vmem:[%s197 + $0x1e8] sm:$0xff] %v320
                %v322 = vld [vmem:[%s196 + $0x7c0] sm:$0xff]
                %323 = vst [vmem:[%s197 + $0x1f0] sm:$0xff] %v322
                %v324 = vld [vmem:[%s196 + $0x7e0] sm:$0xff]
                %325 = vst [vmem:[%s197 + $0x1f8] sm:$0xff] %v324
                %v326 = vld [vmem:[%s196 + $0x800] sm:$0xff]
                %327 = vst [vmem:[%s197 + $0x200] sm:$0xff] %v326
                %v328 = vld [vmem:[%s196 + $0x820] sm:$0xff]
                %329 = vst [vmem:[%s197 + $0x208] sm:$0xff] %v328
                %v330 = vld [vmem:[%s196 + $0x840] sm:$0xff]
                %331 = vst [vmem:[%s197 + $0x210] sm:$0xff] %v330
                %v332 = vld [vmem:[%s196 + $0x860] sm:$0xff]
                %333 = vst [vmem:[%s197 + $0x218] sm:$0xff] %v332
                %v334 = vld [vmem:[%s196 + $0x880] sm:$0xff]
                %335 = vst [vmem:[%s197 + $0x220] sm:$0xff] %v334
                %v336 = vld [vmem:[%s196 + $0x8a0] sm:$0xff]
                %337 = vst [vmem:[%s197 + $0x228] sm:$0xff] %v336
                %v338 = vld [vmem:[%s196 + $0x8c0] sm:$0xff]
                %339 = vst [vmem:[%s197 + $0x230] sm:$0xff] %v338
                %v340 = vld [vmem:[%s196 + $0x8e0] sm:$0xff]
                %341 = vst [vmem:[%s197 + $0x238] sm:$0xff] %v340
                %v342 = vld [vmem:[%s196 + $0x900] sm:$0xff]
                %343 = vst [vmem:[%s197 + $0x240] sm:$0xff] %v342
                %v344 = vld [vmem:[%s196 + $0x920] sm:$0xff]
                %345 = vst [vmem:[%s197 + $0x248] sm:$0xff] %v344
                %v346 = vld [vmem:[%s196 + $0x940] sm:$0xff]
                %347 = vst [vmem:[%s197 + $0x250] sm:$0xff] %v346
                %v348 = vld [vmem:[%s196 + $0x960] sm:$0xff]
                %349 = vst [vmem:[%s197 + $0x258] sm:$0xff] %v348
                %v350 = vld [vmem:[%s196 + $0x980] sm:$0xff]
                %351 = vst [vmem:[%s197 + $0x260] sm:$0xff] %v350
                %v352 = vld [vmem:[%s196 + $0x9a0] sm:$0xff]
                %353 = vst [vmem:[%s197 + $0x268] sm:$0xff] %v352
                %v354 = vld [vmem:[%s196 + $0x9c0] sm:$0xff]
                %355 = vst [vmem:[%s197 + $0x270] sm:$0xff] %v354
                %v356 = vld [vmem:[%s196 + $0x9e0] sm:$0xff]
                %357 = vst [vmem:[%s197 + $0x278] sm:$0xff] %v356
                %v358 = vld [vmem:[%s196 + $0xa00] sm:$0xff]
                %359 = vst [vmem:[%s197 + $0x280] sm:$0xff] %v358
                %v360 = vld [vmem:[%s196 + $0xa20] sm:$0xff]
                %361 = vst [vmem:[%s197 + $0x288] sm:$0xff] %v360
                %v362 = vld [vmem:[%s196 + $0xa40] sm:$0xff]
                %363 = vst [vmem:[%s197 + $0x290] sm:$0xff] %v362
                %v364 = vld [vmem:[%s196 + $0xa60] sm:$0xff]
                %365 = vst [vmem:[%s197 + $0x298] sm:$0xff] %v364
                %v366 = vld [vmem:[%s196 + $0xa80] sm:$0xff]
                %367 = vst [vmem:[%s197 + $0x2a0] sm:$0xff] %v366
                %v368 = vld [vmem:[%s196 + $0xaa0] sm:$0xff]
                %369 = vst [vmem:[%s197 + $0x2a8] sm:$0xff] %v368
                %v370 = vld [vmem:[%s196 + $0xac0] sm:$0xff]
                %371 = vst [vmem:[%s197 + $0x2b0] sm:$0xff] %v370
                %v372 = vld [vmem:[%s196 + $0xae0] sm:$0xff]
                %373 = vst [vmem:[%s197 + $0x2b8] sm:$0xff] %v372
                %v374 = vld [vmem:[%s196 + $0xb00] sm:$0xff]
                %375 = vst [vmem:[%s197 + $0x2c0] sm:$0xff] %v374
                %v376 = vld [vmem:[%s196 + $0xb20] sm:$0xff]
                %377 = vst [vmem:[%s197 + $0x2c8] sm:$0xff] %v376
                %v378 = vld [vmem:[%s196 + $0xb40] sm:$0xff]
                %379 = vst [vmem:[%s197 + $0x2d0] sm:$0xff] %v378
                %v380 = vld [vmem:[%s196 + $0xb60] sm:$0xff]
                %381 = vst [vmem:[%s197 + $0x2d8] sm:$0xff] %v380
                %v382 = vld [vmem:[%s196 + $0xb80] sm:$0xff]
                %383 = vst [vmem:[%s197 + $0x2e0] sm:$0xff] %v382
                %v384 = vld [vmem:[%s196 + $0xba0] sm:$0xff]
                %385 = vst [vmem:[%s197 + $0x2e8] sm:$0xff] %v384
                %v386 = vld [vmem:[%s196 + $0xbc0] sm:$0xff]
                %387 = vst [vmem:[%s197 + $0x2f0] sm:$0xff] %v386
                %v388 = vld [vmem:[%s196 + $0xbe0] sm:$0xff]
                %389 = vst [vmem:[%s197 + $0x2f8] sm:$0xff] %v388
                %v390 = vld [vmem:[%s196 + $0xc00] sm:$0xff]
                %391 = vst [vmem:[%s197 + $0x300] sm:$0xff] %v390
                %v392 = vld [vmem:[%s196 + $0xc20] sm:$0xff]
                %393 = vst [vmem:[%s197 + $0x308] sm:$0xff] %v392
                %v394 = vld [vmem:[%s196 + $0xc40] sm:$0xff]
                %395 = vst [vmem:[%s197 + $0x310] sm:$0xff] %v394
                %v396 = vld [vmem:[%s196 + $0xc60] sm:$0xff]
                %397 = vst [vmem:[%s197 + $0x318] sm:$0xff] %v396
                %v398 = vld [vmem:[%s196 + $0xc80] sm:$0xff]
                %399 = vst [vmem:[%s197 + $0x320] sm:$0xff] %v398
                %v400 = vld [vmem:[%s196 + $0xca0] sm:$0xff]
                %401 = vst [vmem:[%s197 + $0x328] sm:$0xff] %v400
                %v402 = vld [vmem:[%s196 + $0xcc0] sm:$0xff]
                %403 = vst [vmem:[%s197 + $0x330] sm:$0xff] %v402
                %v404 = vld [vmem:[%s196 + $0xce0] sm:$0xff]
                %405 = vst [vmem:[%s197 + $0x338] sm:$0xff] %v404
                %v406 = vld [vmem:[%s196 + $0xd00] sm:$0xff]
                %407 = vst [vmem:[%s197 + $0x340] sm:$0xff] %v406
                %v408 = vld [vmem:[%s196 + $0xd20] sm:$0xff]
                %409 = vst [vmem:[%s197 + $0x348] sm:$0xff] %v408
                %v410 = vld [vmem:[%s196 + $0xd40] sm:$0xff]
                %411 = vst [vmem:[%s197 + $0x350] sm:$0xff] %v410
                %v412 = vld [vmem:[%s196 + $0xd60] sm:$0xff]
                %413 = vst [vmem:[%s197 + $0x358] sm:$0xff] %v412
                %v414 = vld [vmem:[%s196 + $0xd80] sm:$0xff]
                %415 = vst [vmem:[%s197 + $0x360] sm:$0xff] %v414
                %v416 = vld [vmem:[%s196 + $0xda0] sm:$0xff]
                %417 = vst [vmem:[%s197 + $0x368] sm:$0xff] %v416
                %v418 = vld [vmem:[%s196 + $0xdc0] sm:$0xff]
                %419 = vst [vmem:[%s197 + $0x370] sm:$0xff] %v418
                %v420 = vld [vmem:[%s196 + $0xde0] sm:$0xff]
                %421 = vst [vmem:[%s197 + $0x378] sm:$0xff] %v420
                %v422 = vld [vmem:[%s196 + $0xe00] sm:$0xff]
                %423 = vst [vmem:[%s197 + $0x380] sm:$0xff] %v422
                %v424 = vld [vmem:[%s196 + $0xe20] sm:$0xff]
                %425 = vst [vmem:[%s197 + $0x388] sm:$0xff] %v424
                %v426 = vld [vmem:[%s196 + $0xe40] sm:$0xff]
                %427 = vst [vmem:[%s197 + $0x390] sm:$0xff] %v426
                %v428 = vld [vmem:[%s196 + $0xe60] sm:$0xff]
                %429 = vst [vmem:[%s197 + $0x398] sm:$0xff] %v428
                %v430 = vld [vmem:[%s196 + $0xe80] sm:$0xff]
                %431 = vst [vmem:[%s197 + $0x3a0] sm:$0xff] %v430
                %v432 = vld [vmem:[%s196 + $0xea0] sm:$0xff]
                %433 = vst [vmem:[%s197 + $0x3a8] sm:$0xff] %v432
                %v434 = vld [vmem:[%s196 + $0xec0] sm:$0xff]
                %435 = vst [vmem:[%s197 + $0x3b0] sm:$0xff] %v434
                %v436 = vld [vmem:[%s196 + $0xee0] sm:$0xff]
                %437 = vst [vmem:[%s197 + $0x3b8] sm:$0xff] %v436
                %v438 = vld [vmem:[%s196 + $0xf00] sm:$0xff]
                %439 = vst [vmem:[%s197 + $0x3c0] sm:$0xff] %v438
                %v440 = vld [vmem:[%s196 + $0xf20] sm:$0xff]
                %441 = vst [vmem:[%s197 + $0x3c8] sm:$0xff] %v440
                %v442 = vld [vmem:[%s196 + $0xf40] sm:$0xff]
                %443 = vst [vmem:[%s197 + $0x3d0] sm:$0xff] %v442
                %v444 = vld [vmem:[%s196 + $0xf60] sm:$0xff]
                %445 = vst [vmem:[%s197 + $0x3d8] sm:$0xff] %v444
                %v446 = vld [vmem:[%s196 + $0xf80] sm:$0xff]
                %447 = vst [vmem:[%s197 + $0x3e0] sm:$0xff] %v446
                %v448 = vld [vmem:[%s196 + $0xfa0] sm:$0xff]
                %449 = vst [vmem:[%s197 + $0x3e8] sm:$0xff] %v448
                %v450 = vld [vmem:[%s196 + $0xfc0] sm:$0xff]
                %451 = vst [vmem:[%s197 + $0x3f0] sm:$0xff] %v450
                %v452 = vld [vmem:[%s196 + $0xfe0] sm:$0xff]
                %453 = vst [vmem:[%s197 + $0x3f8] sm:$0xff] %v452
              $region41: #{resnet18_dense_forward.44} parent=35 // loop_footer
                %s195 = sadd.s32 1, %s191
              $region42: #{resnet18_dense_forward.44} parent=35 // loop_footer_branch
                %190 = sbr.rel target = $region38
              $region43: #{resnet18_dense_forward.44} parent=35 // loop_exit
                _
            $region36: #{resnet18_dense_forward.44} parent=27 // pred_fallthru
              _
          $region28: #{resnet18_dense_forward.44} parent=23 // pred_fallthru
            _
          %722 = vnop
        $region24: #{resnet18_dense_forward.44} parent=19 // pred_fallthru
          _
        // Predicated region
        $region59: #{resnet18_dense_forward.44} parent=19 // pred_check
          %p723 = pneg %p104
        $region60: #{resnet18_dense_forward.44} parent=19 // pred_check_branch
          %725 = sbr.rel (%p723) target = $region62
        $region61: #{resnet18_dense_forward.44} parent=19 // pred_region
          %s726 = smul.u32 2, %s17
          %p727 = scmp.lt.s32.totalorder %s726, 7
          %s728 = scalar_select %p727, %s726, 7
          %s729 = scalar_lea.vmem %s2, %s728
          %s730 = smul.u32 2, %s17
        $region62: #{resnet18_dense_forward.44} parent=19 // pred_fallthru
          _
      $region20: #{resnet18_dense_forward.44} parent=5 // pred_fallthru
        _
      %p731 = scmp.le.s32.totalorder 1, %s9
      %p732 = scmp.lt.s32.totalorder %s9, 5
      %p733 = pnand %p731, %p732
      %p734 = pneg %p733
      // Predicated region
      $region63: #{resnet18_dense_forward.44} parent=5 // pred_check
        _
      $region64: #{resnet18_dense_forward.44} parent=5 // pred_check_branch
        %736 = sbr.rel (%p733) target = $region66
      $region65: #{resnet18_dense_forward.44} parent=5 // pred_region
        %s737 = ssub.s32 %s9, 1
        %s738 = sand.u32 %s71, 1
        %s739 = sand.u32 %s71, 1
        %s740 = smul.addr %s739, 1024
        %s741 = scalar_lea.vmem [#allocation2], %s740
        // Predicated region
        $region67: #{resnet18_dense_forward.44} parent=65 // pred_check
          %p742 = pneg %p84
        $region68: #{resnet18_dense_forward.44} parent=65 // pred_check_branch
          %744 = sbr.rel (%p742) target = $region70
        $region69: #{resnet18_dense_forward.44} parent=65 // pred_region
          _
        $region70: #{resnet18_dense_forward.44} parent=65 // pred_fallthru
          _
        %s745 = smul.u32 8, %s21
        %p746 = scmp.lt.s32.totalorder %s19, 0
        %s747 = scalar_select %p746, %s19, 0
        %p748 = scmp.lt.s32.totalorder %s745, 7
        %s749 = scalar_select %p748, %s745, 7
        %s750 = smul.addr %s747, 8
        %s751 = sadd.s32 %s749, %s750
        %s752 = smul.addr %s751, 4
        %s753 = scalar_lea.vmem %s0, %s752
        %p754 = pneg %p56
        %p755 = pneg %p53
        %s756 = sand.u32 %s71, 1
        %s757 = sand.u32 %s71, 1
        %s758 = smul.addr %s757, 1024
        %s759 = scalar_lea.vmem [#allocation2], %s758
        %p760 = pneg %p84
        %p761 = pneg %p81
        %s762 = smul.u32 2, %s20
        %p763 = scmp.lt.s32.totalorder %s762, 7
        %s764 = scalar_select %p763, %s762, 7
        %s765 = scalar_lea.vmem %s2, %s764
        %p766 = pneg %p110
        %p767 = pneg %p107
        %p768 = pneg %p138
        %p769 = pneg %p135
        %s770 = smul.u32 2, %s20
        %p771 = scmp.lt.s32.totalorder %s19, 0
        %s772 = scalar_select %p771, %s19, 0
        %p773 = scmp.lt.s32.totalorder %s770, 7
        %s774 = scalar_select %p773, %s770, 7
        %s775 = smul.addr %s772, 8
        %s776 = sadd.s32 %s774, %s775
        %s777 = smul.addr %s776, 8
        %s778 = scalar_lea.vmem %s3, %s777
        %s779 = smul.u32 8, %s21
        %p780 = scmp.lt.s32.totalorder %s19, 0
        %s781 = scalar_select %p780, %s19, 0
        %p782 = scmp.lt.s32.totalorder %s779, 7
        %s783 = scalar_select %p782, %s779, 7
        %s784 = smul.addr %s781, 8
        %s785 = sadd.s32 %s783, %s784
        %s786 = smul.addr %s785, 4
        %s787 = scalar_lea.vmem %s0, %s786
        %s788 = smul.u32 8, %s21
        %s789 = smul.u32 128, %s21
        %s790 = smul.u32 2, %s20
        %s791 = smul.u32 2, %s20
        %p792 = scmp.lt.s32.totalorder %s791, 7
        %s793 = scalar_select %p792, %s791, 7
        %s794 = scalar_lea.vmem %s2, %s793
        %s795 = smul.u32 2, %s20
        %s796 = smul.u32 2, %s20
        %p797 = scmp.lt.s32.totalorder %s19, 0
        %s798 = scalar_select %p797, %s19, 0
        %p799 = scmp.lt.s32.totalorder %s796, 7
        %s800 = scalar_select %p799, %s796, 7
        %s801 = smul.addr %s798, 8
        %s802 = sadd.s32 %s800, %s801
        %s803 = smul.addr %s802, 8
        %s804 = scalar_lea.vmem %s3, %s803
        %s805 = smul.u32 2, %s20
        %v806 = vld [vmem:[%s787] sm:$0xff]
        %v807 = vld [vmem:[%s787 + $0x8] sm:$0xff]
        %v808 = vld [vmem:[%s787 + $0x10] sm:$0xff]
        %v809 = vld [vmem:[%s787 + $0x18] sm:$0xff]
        %v810 = vld [vmem:[%s741] sm:$0xff]
        %v811 = vld [vmem:[%s741 + $0x8] sm:$0xff]
        %v812 = vld [vmem:[%s741 + $0x10] sm:$0xff]
        %v813 = vld [vmem:[%s741 + $0x18] sm:$0xff]
        %v814 = vld [vmem:[%s741 + $0x20] sm:$0xff]
        %v815 = vld [vmem:[%s741 + $0x28] sm:$0xff]
        %v816 = vld [vmem:[%s741 + $0x30] sm:$0xff]
        %v817 = vld [vmem:[%s741 + $0x38] sm:$0xff]
        %v818 = vld [vmem:[%s741 + $0x40] sm:$0xff]
        %v819 = vld [vmem:[%s741 + $0x48] sm:$0xff]
        %v820 = vld [vmem:[%s741 + $0x50] sm:$0xff]
        %v821 = vld [vmem:[%s741 + $0x58] sm:$0xff]
        %v822 = vld [vmem:[%s741 + $0x60] sm:$0xff]
        %v823 = vld [vmem:[%s741 + $0x68] sm:$0xff]
        %v824 = vld [vmem:[%s741 + $0x70] sm:$0xff]
        %v825 = vld [vmem:[%s741 + $0x78] sm:$0xff]
        %v826 = vld [vmem:[%s741 + $0x80] sm:$0xff]
        %v827 = vld [vmem:[%s741 + $0x88] sm:$0xff]
        %v828 = vld [vmem:[%s741 + $0x90] sm:$0xff]
        %v829 = vld [vmem:[%s741 + $0x98] sm:$0xff]
        %v830 = vld [vmem:[%s741 + $0xa0] sm:$0xff]
        %v831 = vld [vmem:[%s741 + $0xa8] sm:$0xff]
        %v832 = vld [vmem:[%s741 + $0xb0] sm:$0xff]
        %v833 = vld [vmem:[%s741 + $0xb8] sm:$0xff]
        %v834 = vld [vmem:[%s741 + $0xc0] sm:$0xff]
        %v835 = vld [vmem:[%s741 + $0xc8] sm:$0xff]
        %v836 = vld [vmem:[%s741 + $0xd0] sm:$0xff]
        %v837 = vld [vmem:[%s741 + $0xd8] sm:$0xff]
        %v838 = vld [vmem:[%s741 + $0xe0] sm:$0xff]
        %v839 = vld [vmem:[%s741 + $0xe8] sm:$0xff]
        %v840 = vld [vmem:[%s741 + $0xf0] sm:$0xff]
        %v841 = vld [vmem:[%s741 + $0xf8] sm:$0xff]
        %v842 = vld [vmem:[%s741 + $0x100] sm:$0xff]
        %v843 = vld [vmem:[%s741 + $0x108] sm:$0xff]
        %v844 = vld [vmem:[%s741 + $0x110] sm:$0xff]
        %v845 = vld [vmem:[%s741 + $0x118] sm:$0xff]
        %v846 = vld [vmem:[%s741 + $0x120] sm:$0xff]
        %v847 = vld [vmem:[%s741 + $0x128] sm:$0xff]
        %v848 = vld [vmem:[%s741 + $0x130] sm:$0xff]
        %v849 = vld [vmem:[%s741 + $0x138] sm:$0xff]
        %v850 = vld [vmem:[%s741 + $0x140] sm:$0xff]
        %v851 = vld [vmem:[%s741 + $0x148] sm:$0xff]
        %v852 = vld [vmem:[%s741 + $0x150] sm:$0xff]
        %v853 = vld [vmem:[%s741 + $0x158] sm:$0xff]
        %v854 = vld [vmem:[%s741 + $0x160] sm:$0xff]
        %v855 = vld [vmem:[%s741 + $0x168] sm:$0xff]
        %v856 = vld [vmem:[%s741 + $0x170] sm:$0xff]
        %v857 = vld [vmem:[%s741 + $0x178] sm:$0xff]
        %v858 = vld [vmem:[%s741 + $0x180] sm:$0xff]
        %v859 = vld [vmem:[%s741 + $0x188] sm:$0xff]
        %v860 = vld [vmem:[%s741 + $0x190] sm:$0xff]
        %v861 = vld [vmem:[%s741 + $0x198] sm:$0xff]
        %v862 = vld [vmem:[%s741 + $0x1a0] sm:$0xff]
        %v863 = vld [vmem:[%s741 + $0x1a8] sm:$0xff]
        %v864 = vld [vmem:[%s741 + $0x1b0] sm:$0xff]
        %v865 = vld [vmem:[%s741 + $0x1b8] sm:$0xff]
        %v866 = vld [vmem:[%s741 + $0x1c0] sm:$0xff]
        %v867 = vld [vmem:[%s741 + $0x1c8] sm:$0xff]
        %v868 = vld [vmem:[%s741 + $0x1d0] sm:$0xff]
        %v869 = vld [vmem:[%s741 + $0x1d8] sm:$0xff]
        %v870 = vld [vmem:[%s741 + $0x1e0] sm:$0xff]
        %v871 = vld [vmem:[%s741 + $0x1e8] sm:$0xff]
        %v872 = vld [vmem:[%s741 + $0x1f0] sm:$0xff]
        %v873 = vld [vmem:[%s741 + $0x1f8] sm:$0xff]
        %v874 = vld [vmem:[%s741 + $0x200] sm:$0xff]
        %v875 = vld [vmem:[%s741 + $0x208] sm:$0xff]
        %v876 = vld [vmem:[%s741 + $0x210] sm:$0xff]
        %v877 = vld [vmem:[%s741 + $0x218] sm:$0xff]
        %v878 = vld [vmem:[%s741 + $0x220] sm:$0xff]
        %v879 = vld [vmem:[%s741 + $0x228] sm:$0xff]
        %v880 = vld [vmem:[%s741 + $0x230] sm:$0xff]
        %v881 = vld [vmem:[%s741 + $0x238] sm:$0xff]
        %v882 = vld [vmem:[%s741 + $0x240] sm:$0xff]
        %v883 = vld [vmem:[%s741 + $0x248] sm:$0xff]
        %v884 = vld [vmem:[%s741 + $0x250] sm:$0xff]
        %v885 = vld [vmem:[%s741 + $0x258] sm:$0xff]
        %v886 = vld [vmem:[%s741 + $0x260] sm:$0xff]
        %v887 = vld [vmem:[%s741 + $0x268] sm:$0xff]
        %v888 = vld [vmem:[%s741 + $0x270] sm:$0xff]
        %v889 = vld [vmem:[%s741 + $0x278] sm:$0xff]
        %v890 = vld [vmem:[%s741 + $0x280] sm:$0xff]
        %v891 = vld [vmem:[%s741 + $0x288] sm:$0xff]
        %v892 = vld [vmem:[%s741 + $0x290] sm:$0xff]
        %v893 = vld [vmem:[%s741 + $0x298] sm:$0xff]
        %v894 = vld [vmem:[%s741 + $0x2a0] sm:$0xff]
        %v895 = vld [vmem:[%s741 + $0x2a8] sm:$0xff]
        %v896 = vld [vmem:[%s741 + $0x2b0] sm:$0xff]
        %v897 = vld [vmem:[%s741 + $0x2b8] sm:$0xff]
        %v898 = vld [vmem:[%s741 + $0x2c0] sm:$0xff]
        %v899 = vld [vmem:[%s741 + $0x2c8] sm:$0xff]
        %v900 = vld [vmem:[%s741 + $0x2d0] sm:$0xff]
        %v901 = vld [vmem:[%s741 + $0x2d8] sm:$0xff]
        %v902 = vld [vmem:[%s741 + $0x2e0] sm:$0xff]
        %v903 = vld [vmem:[%s741 + $0x2e8] sm:$0xff]
        %v904 = vld [vmem:[%s741 + $0x2f0] sm:$0xff]
        %v905 = vld [vmem:[%s741 + $0x2f8] sm:$0xff]
        %v906 = vld [vmem:[%s741 + $0x300] sm:$0xff]
        %v907 = vld [vmem:[%s741 + $0x308] sm:$0xff]
        %v908 = vld [vmem:[%s741 + $0x310] sm:$0xff]
        %v909 = vld [vmem:[%s741 + $0x318] sm:$0xff]
        %v910 = vld [vmem:[%s741 + $0x320] sm:$0xff]
        %v911 = vld [vmem:[%s741 + $0x328] sm:$0xff]
        %v912 = vld [vmem:[%s741 + $0x330] sm:$0xff]
        %v913 = vld [vmem:[%s741 + $0x338] sm:$0xff]
        %v914 = vld [vmem:[%s741 + $0x340] sm:$0xff]
        %v915 = vld [vmem:[%s741 + $0x348] sm:$0xff]
        %v916 = vld [vmem:[%s741 + $0x350] sm:$0xff]
        %v917 = vld [vmem:[%s741 + $0x358] sm:$0xff]
        %v918 = vld [vmem:[%s741 + $0x360] sm:$0xff]
        %v919 = vld [vmem:[%s741 + $0x368] sm:$0xff]
        %v920 = vld [vmem:[%s741 + $0x370] sm:$0xff]
        %v921 = vld [vmem:[%s741 + $0x378] sm:$0xff]
        %v922 = vld [vmem:[%s741 + $0x380] sm:$0xff]
        %v923 = vld [vmem:[%s741 + $0x388] sm:$0xff]
        %v924 = vld [vmem:[%s741 + $0x390] sm:$0xff]
        %v925 = vld [vmem:[%s741 + $0x398] sm:$0xff]
        %v926 = vld [vmem:[%s741 + $0x3a0] sm:$0xff]
        %v927 = vld [vmem:[%s741 + $0x3a8] sm:$0xff]
        %v928 = vld [vmem:[%s741 + $0x3b0] sm:$0xff]
        %v929 = vld [vmem:[%s741 + $0x3b8] sm:$0xff]
        %v930 = vld [vmem:[%s741 + $0x3c0] sm:$0xff]
        %v931 = vld [vmem:[%s741 + $0x3c8] sm:$0xff]
        %v932 = vld [vmem:[%s741 + $0x3d0] sm:$0xff]
        %v933 = vld [vmem:[%s741 + $0x3d8] sm:$0xff]
        %v934 = vld [vmem:[%s741 + $0x3e0] sm:$0xff]
        %v935 = vld [vmem:[%s741 + $0x3e8] sm:$0xff]
        %v936 = vld [vmem:[%s741 + $0x3f0] sm:$0xff]
        %v937 = vld [vmem:[%s741 + $0x3f8] sm:$0xff]
        %v938 = vld [vmem:[%s794] sm:$0x3]
        %v940 = vlaneseq
        %v941 = vshrl.u32 %v940, 7
        %v942 = vsub.s32 0, %v941
        %v943 = vrot.slane %v938, %v942
        %v944 = vlaneseq
        %v945 = vshrl.u32 %v944, 7
        %v946 = vsub.s32 1, %v945
        %v947 = vrot.slane %v938, %v946
        %v954 = vunpack.c.l.b16 %v806
        %v955 = vunpack.c.h.b16 %v806
        %v956 = vunpack.c.l.b16 %v807
        %v957 = vunpack.c.h.b16 %v807
        %v958 = vunpack.c.l.b16 %v808
        %v959 = vunpack.c.h.b16 %v808
        %v960 = vunpack.c.l.b16 %v809
        %v961 = vunpack.c.h.b16 %v809
        %v962 = vpack.c.b16 %v954, %v954
        %v963 = vpack.c.b16 %v955, %v955
        %v964 = vpack.c.b16 %v956, %v956
        %v965 = vpack.c.b16 %v957, %v957
        %v966 = vpack.c.b16 %v958, %v958
        %v967 = vpack.c.b16 %v959, %v959
        %v968 = vpack.c.b16 %v960, %v960
        %v969 = vpack.c.b16 %v961, %v961
        %v1106 = vunpack.c.l.b16 %v810
        %v1107 = vunpack.c.h.b16 %v810
        %v1108 = vunpack.c.l.b16 %v811
        %v1109 = vunpack.c.h.b16 %v811
        %v1110 = vunpack.c.l.b16 %v812
        %v1111 = vunpack.c.h.b16 %v812
        %v1112 = vunpack.c.l.b16 %v813
        %v1113 = vunpack.c.h.b16 %v813
        %v1114 = vunpack.c.l.b16 %v814
        %v1115 = vunpack.c.h.b16 %v814
        %v1116 = vunpack.c.l.b16 %v815
        %v1117 = vunpack.c.h.b16 %v815
        %v1118 = vunpack.c.l.b16 %v816
        %v1119 = vunpack.c.h.b16 %v816
        %v1120 = vunpack.c.l.b16 %v817
        %v1121 = vunpack.c.h.b16 %v817
        %v1122 = vunpack.c.l.b16 %v818
        %v1123 = vunpack.c.h.b16 %v818
        %v1124 = vunpack.c.l.b16 %v819
        %v1125 = vunpack.c.h.b16 %v819
        %v1126 = vunpack.c.l.b16 %v820
        %v1127 = vunpack.c.h.b16 %v820
        %v1128 = vunpack.c.l.b16 %v821
        %v1129 = vunpack.c.h.b16 %v821
        %v1130 = vunpack.c.l.b16 %v822
        %v1131 = vunpack.c.h.b16 %v822
        %v1132 = vunpack.c.l.b16 %v823
        %v1133 = vunpack.c.h.b16 %v823
        %v1134 = vunpack.c.l.b16 %v824
        %v1135 = vunpack.c.h.b16 %v824
        %v1136 = vunpack.c.l.b16 %v825
        %v1137 = vunpack.c.h.b16 %v825
        %v1138 = vunpack.c.l.b16 %v826
        %v1139 = vunpack.c.h.b16 %v826
        %v1140 = vunpack.c.l.b16 %v827
        %v1141 = vunpack.c.h.b16 %v827
        %v1142 = vunpack.c.l.b16 %v828
        %v1143 = vunpack.c.h.b16 %v828
        %v1144 = vunpack.c.l.b16 %v829
        %v1145 = vunpack.c.h.b16 %v829
        %v1146 = vunpack.c.l.b16 %v830
        %v1147 = vunpack.c.h.b16 %v830
        %v1148 = vunpack.c.l.b16 %v831
        %v1149 = vunpack.c.h.b16 %v831
        %v1150 = vunpack.c.l.b16 %v832
        %v1151 = vunpack.c.h.b16 %v832
        %v1152 = vunpack.c.l.b16 %v833
        %v1153 = vunpack.c.h.b16 %v833
        %v1154 = vunpack.c.l.b16 %v834
        %v1155 = vunpack.c.h.b16 %v834
        %v1156 = vunpack.c.l.b16 %v835
        %v1157 = vunpack.c.h.b16 %v835
        %v1158 = vunpack.c.l.b16 %v836
        %v1159 = vunpack.c.h.b16 %v836
        %v1160 = vunpack.c.l.b16 %v837
        %v1161 = vunpack.c.h.b16 %v837
        %v1162 = vunpack.c.l.b16 %v838
        %v1163 = vunpack.c.h.b16 %v838
        %v1164 = vunpack.c.l.b16 %v839
        %v1165 = vunpack.c.h.b16 %v839
        %v1166 = vunpack.c.l.b16 %v840
        %v1167 = vunpack.c.h.b16 %v840
        %v1168 = vunpack.c.l.b16 %v841
        %v1169 = vunpack.c.h.b16 %v841
        %v1170 = vunpack.c.l.b16 %v842
        %v1171 = vunpack.c.h.b16 %v842
        %v1172 = vunpack.c.l.b16 %v843
        %v1173 = vunpack.c.h.b16 %v843
        %v1174 = vunpack.c.l.b16 %v844
        %v1175 = vunpack.c.h.b16 %v844
        %v1176 = vunpack.c.l.b16 %v845
        %v1177 = vunpack.c.h.b16 %v845
        %v1178 = vunpack.c.l.b16 %v846
        %v1179 = vunpack.c.h.b16 %v846
        %v1180 = vunpack.c.l.b16 %v847
        %v1181 = vunpack.c.h.b16 %v847
        %v1182 = vunpack.c.l.b16 %v848
        %v1183 = vunpack.c.h.b16 %v848
        %v1184 = vunpack.c.l.b16 %v849
        %v1185 = vunpack.c.h.b16 %v849
        %v1186 = vunpack.c.l.b16 %v850
        %v1187 = vunpack.c.h.b16 %v850
        %v1188 = vunpack.c.l.b16 %v851
        %v1189 = vunpack.c.h.b16 %v851
        %v1190 = vunpack.c.l.b16 %v852
        %v1191 = vunpack.c.h.b16 %v852
        %v1192 = vunpack.c.l.b16 %v853
        %v1193 = vunpack.c.h.b16 %v853
        %v1194 = vunpack.c.l.b16 %v854
        %v1195 = vunpack.c.h.b16 %v854
        %v1196 = vunpack.c.l.b16 %v855
        %v1197 = vunpack.c.h.b16 %v855
        %v1198 = vunpack.c.l.b16 %v856
        %v1199 = vunpack.c.h.b16 %v856
        %v1200 = vunpack.c.l.b16 %v857
        %v1201 = vunpack.c.h.b16 %v857
        %v1202 = vunpack.c.l.b16 %v858
        %v1203 = vunpack.c.h.b16 %v858
        %v1204 = vunpack.c.l.b16 %v859
        %v1205 = vunpack.c.h.b16 %v859
        %v1206 = vunpack.c.l.b16 %v860
        %v1207 = vunpack.c.h.b16 %v860
        %v1208 = vunpack.c.l.b16 %v861
        %v1209 = vunpack.c.h.b16 %v861
        %v1210 = vunpack.c.l.b16 %v862
        %v1211 = vunpack.c.h.b16 %v862
        %v1212 = vunpack.c.l.b16 %v863
        %v1213 = vunpack.c.h.b16 %v863
        %v1214 = vunpack.c.l.b16 %v864
        %v1215 = vunpack.c.h.b16 %v864
        %v1216 = vunpack.c.l.b16 %v865
        %v1217 = vunpack.c.h.b16 %v865
        %v1218 = vunpack.c.l.b16 %v866
        %v1219 = vunpack.c.h.b16 %v866
        %v1220 = vunpack.c.l.b16 %v867
        %v1221 = vunpack.c.h.b16 %v867
        %v1222 = vunpack.c.l.b16 %v868
        %v1223 = vunpack.c.h.b16 %v868
        %v1224 = vunpack.c.l.b16 %v869
        %v1225 = vunpack.c.h.b16 %v869
        %v1226 = vunpack.c.l.b16 %v870
        %v1227 = vunpack.c.h.b16 %v870
        %v1228 = vunpack.c.l.b16 %v871
        %v1229 = vunpack.c.h.b16 %v871
        %v1230 = vunpack.c.l.b16 %v872
        %v1231 = vunpack.c.h.b16 %v872
        %v1232 = vunpack.c.l.b16 %v873
        %v1233 = vunpack.c.h.b16 %v873
        %v1234 = vunpack.c.l.b16 %v874
        %v1235 = vunpack.c.h.b16 %v874
        %v1236 = vunpack.c.l.b16 %v875
        %v1237 = vunpack.c.h.b16 %v875
        %v1238 = vunpack.c.l.b16 %v876
        %v1239 = vunpack.c.h.b16 %v876
        %v1240 = vunpack.c.l.b16 %v877
        %v1241 = vunpack.c.h.b16 %v877
        %v1242 = vunpack.c.l.b16 %v878
        %v1243 = vunpack.c.h.b16 %v878
        %v1244 = vunpack.c.l.b16 %v879
        %v1245 = vunpack.c.h.b16 %v879
        %v1246 = vunpack.c.l.b16 %v880
        %v1247 = vunpack.c.h.b16 %v880
        %v1248 = vunpack.c.l.b16 %v881
        %v1249 = vunpack.c.h.b16 %v881
        %v1250 = vunpack.c.l.b16 %v882
        %v1251 = vunpack.c.h.b16 %v882
        %v1252 = vunpack.c.l.b16 %v883
        %v1253 = vunpack.c.h.b16 %v883
        %v1254 = vunpack.c.l.b16 %v884
        %v1255 = vunpack.c.h.b16 %v884
        %v1256 = vunpack.c.l.b16 %v885
        %v1257 = vunpack.c.h.b16 %v885
        %v1258 = vunpack.c.l.b16 %v886
        %v1259 = vunpack.c.h.b16 %v886
        %v1260 = vunpack.c.l.b16 %v887
        %v1261 = vunpack.c.h.b16 %v887
        %v1262 = vunpack.c.l.b16 %v888
        %v1263 = vunpack.c.h.b16 %v888
        %v1264 = vunpack.c.l.b16 %v889
        %v1265 = vunpack.c.h.b16 %v889
        %v1266 = vunpack.c.l.b16 %v890
        %v1267 = vunpack.c.h.b16 %v890
        %v1268 = vunpack.c.l.b16 %v891
        %v1269 = vunpack.c.h.b16 %v891
        %v1270 = vunpack.c.l.b16 %v892
        %v1271 = vunpack.c.h.b16 %v892
        %v1272 = vunpack.c.l.b16 %v893
        %v1273 = vunpack.c.h.b16 %v893
        %v1274 = vunpack.c.l.b16 %v894
        %v1275 = vunpack.c.h.b16 %v894
        %v1276 = vunpack.c.l.b16 %v895
        %v1277 = vunpack.c.h.b16 %v895
        %v1278 = vunpack.c.l.b16 %v896
        %v1279 = vunpack.c.h.b16 %v896
        %v1280 = vunpack.c.l.b16 %v897
        %v1281 = vunpack.c.h.b16 %v897
        %v1282 = vunpack.c.l.b16 %v898
        %v1283 = vunpack.c.h.b16 %v898
        %v1284 = vunpack.c.l.b16 %v899
        %v1285 = vunpack.c.h.b16 %v899
        %v1286 = vunpack.c.l.b16 %v900
        %v1287 = vunpack.c.h.b16 %v900
        %v1288 = vunpack.c.l.b16 %v901
        %v1289 = vunpack.c.h.b16 %v901
        %v1290 = vunpack.c.l.b16 %v902
        %v1291 = vunpack.c.h.b16 %v902
        %v1292 = vunpack.c.l.b16 %v903
        %v1293 = vunpack.c.h.b16 %v903
        %v1294 = vunpack.c.l.b16 %v904
        %v1295 = vunpack.c.h.b16 %v904
        %v1296 = vunpack.c.l.b16 %v905
        %v1297 = vunpack.c.h.b16 %v905
        %v1298 = vunpack.c.l.b16 %v906
        %v1299 = vunpack.c.h.b16 %v906
        %v1300 = vunpack.c.l.b16 %v907
        %v1301 = vunpack.c.h.b16 %v907
        %v1302 = vunpack.c.l.b16 %v908
        %v1303 = vunpack.c.h.b16 %v908
        %v1304 = vunpack.c.l.b16 %v909
        %v1305 = vunpack.c.h.b16 %v909
        %v1306 = vunpack.c.l.b16 %v910
        %v1307 = vunpack.c.h.b16 %v910
        %v1308 = vunpack.c.l.b16 %v911
        %v1309 = vunpack.c.h.b16 %v911
        %v1310 = vunpack.c.l.b16 %v912
        %v1311 = vunpack.c.h.b16 %v912
        %v1312 = vunpack.c.l.b16 %v913
        %v1313 = vunpack.c.h.b16 %v913
        %v1314 = vunpack.c.l.b16 %v914
        %v1315 = vunpack.c.h.b16 %v914
        %v1316 = vunpack.c.l.b16 %v915
        %v1317 = vunpack.c.h.b16 %v915
        %v1318 = vunpack.c.l.b16 %v916
        %v1319 = vunpack.c.h.b16 %v916
        %v1320 = vunpack.c.l.b16 %v917
        %v1321 = vunpack.c.h.b16 %v917
        %v1322 = vunpack.c.l.b16 %v918
        %v1323 = vunpack.c.h.b16 %v918
        %v1324 = vunpack.c.l.b16 %v919
        %v1325 = vunpack.c.h.b16 %v919
        %v1326 = vunpack.c.l.b16 %v920
        %v1327 = vunpack.c.h.b16 %v920
        %v1328 = vunpack.c.l.b16 %v921
        %v1329 = vunpack.c.h.b16 %v921
        %v1330 = vunpack.c.l.b16 %v922
        %v1331 = vunpack.c.h.b16 %v922
        %v1332 = vunpack.c.l.b16 %v923
        %v1333 = vunpack.c.h.b16 %v923
        %v1334 = vunpack.c.l.b16 %v924
        %v1335 = vunpack.c.h.b16 %v924
        %v1336 = vunpack.c.l.b16 %v925
        %v1337 = vunpack.c.h.b16 %v925
        %v1338 = vunpack.c.l.b16 %v926
        %v1339 = vunpack.c.h.b16 %v926
        %v1340 = vunpack.c.l.b16 %v927
        %v1341 = vunpack.c.h.b16 %v927
        %v1342 = vunpack.c.l.b16 %v928
        %v1343 = vunpack.c.h.b16 %v928
        %v1344 = vunpack.c.l.b16 %v929
        %v1345 = vunpack.c.h.b16 %v929
        %v1346 = vunpack.c.l.b16 %v930
        %v1347 = vunpack.c.h.b16 %v930
        %v1348 = vunpack.c.l.b16 %v931
        %v1349 = vunpack.c.h.b16 %v931
        %v1350 = vunpack.c.l.b16 %v932
        %v1351 = vunpack.c.h.b16 %v932
        %v1352 = vunpack.c.l.b16 %v933
        %v1353 = vunpack.c.h.b16 %v933
        %v1354 = vunpack.c.l.b16 %v934
        %v1355 = vunpack.c.h.b16 %v934
        %v1356 = vunpack.c.l.b16 %v935
        %v1357 = vunpack.c.h.b16 %v935
        %v1358 = vunpack.c.l.b16 %v936
        %v1359 = vunpack.c.h.b16 %v936
        %v1360 = vunpack.c.l.b16 %v937
        %v1361 = vunpack.c.h.b16 %v937
        %v1362 = vpack.c.b16 %v1108, %v1106
        %v1363 = vpack.c.b16 %v1109, %v1107
        %v1364 = vpack.c.b16 %v1112, %v1110
        %v1365 = vpack.c.b16 %v1113, %v1111
        %v1366 = vpack.c.b16 %v1116, %v1114
        %v1367 = vpack.c.b16 %v1117, %v1115
        %v1368 = vpack.c.b16 %v1120, %v1118
        %v1369 = vpack.c.b16 %v1121, %v1119
        %v1370 = vpack.c.b16 %v1124, %v1122
        %v1371 = vpack.c.b16 %v1125, %v1123
        %v1372 = vpack.c.b16 %v1128, %v1126
        %v1373 = vpack.c.b16 %v1129, %v1127
        %v1374 = vpack.c.b16 %v1132, %v1130
        %v1375 = vpack.c.b16 %v1133, %v1131
        %v1376 = vpack.c.b16 %v1136, %v1134
        %v1377 = vpack.c.b16 %v1137, %v1135
        %v1378 = vpack.c.b16 %v1140, %v1138
        %v1379 = vpack.c.b16 %v1141, %v1139
        %v1380 = vpack.c.b16 %v1144, %v1142
        %v1381 = vpack.c.b16 %v1145, %v1143
        %v1382 = vpack.c.b16 %v1148, %v1146
        %v1383 = vpack.c.b16 %v1149, %v1147
        %v1384 = vpack.c.b16 %v1152, %v1150
        %v1385 = vpack.c.b16 %v1153, %v1151
        %v1386 = vpack.c.b16 %v1156, %v1154
        %v1387 = vpack.c.b16 %v1157, %v1155
        %v1388 = vpack.c.b16 %v1160, %v1158
        %v1389 = vpack.c.b16 %v1161, %v1159
        %v1390 = vpack.c.b16 %v1164, %v1162
        %v1391 = vpack.c.b16 %v1165, %v1163
        %v1392 = vpack.c.b16 %v1168, %v1166
        %v1393 = vpack.c.b16 %v1169, %v1167
        %v1394 = vpack.c.b16 %v1172, %v1170
        %v1395 = vpack.c.b16 %v1173, %v1171
        %v1396 = vpack.c.b16 %v1176, %v1174
        %v1397 = vpack.c.b16 %v1177, %v1175
        %v1398 = vpack.c.b16 %v1180, %v1178
        %v1399 = vpack.c.b16 %v1181, %v1179
        %v1400 = vpack.c.b16 %v1184, %v1182
        %v1401 = vpack.c.b16 %v1185, %v1183
        %v1402 = vpack.c.b16 %v1188, %v1186
        %v1403 = vpack.c.b16 %v1189, %v1187
        %v1404 = vpack.c.b16 %v1192, %v1190
        %v1405 = vpack.c.b16 %v1193, %v1191
        %v1406 = vpack.c.b16 %v1196, %v1194
        %v1407 = vpack.c.b16 %v1197, %v1195
        %v1408 = vpack.c.b16 %v1200, %v1198
        %v1409 = vpack.c.b16 %v1201, %v1199
        %v1410 = vpack.c.b16 %v1204, %v1202
        %v1411 = vpack.c.b16 %v1205, %v1203
        %v1412 = vpack.c.b16 %v1208, %v1206
        %v1413 = vpack.c.b16 %v1209, %v1207
        %v1414 = vpack.c.b16 %v1212, %v1210
        %v1415 = vpack.c.b16 %v1213, %v1211
        %v1416 = vpack.c.b16 %v1216, %v1214
        %v1417 = vpack.c.b16 %v1217, %v1215
        %v1418 = vpack.c.b16 %v1220, %v1218
        %v1419 = vpack.c.b16 %v1221, %v1219
        %v1420 = vpack.c.b16 %v1224, %v1222
        %v1421 = vpack.c.b16 %v1225, %v1223
        %v1422 = vpack.c.b16 %v1228, %v1226
        %v1423 = vpack.c.b16 %v1229, %v1227
        %v1424 = vpack.c.b16 %v1232, %v1230
        %v1425 = vpack.c.b16 %v1233, %v1231
        %v1426 = vpack.c.b16 %v1236, %v1234
        %v1427 = vpack.c.b16 %v1237, %v1235
        %v1428 = vpack.c.b16 %v1240, %v1238
        %v1429 = vpack.c.b16 %v1241, %v1239
        %v1430 = vpack.c.b16 %v1244, %v1242
        %v1431 = vpack.c.b16 %v1245, %v1243
        %v1432 = vpack.c.b16 %v1248, %v1246
        %v1433 = vpack.c.b16 %v1249, %v1247
        %v1434 = vpack.c.b16 %v1252, %v1250
        %v1435 = vpack.c.b16 %v1253, %v1251
        %v1436 = vpack.c.b16 %v1256, %v1254
        %v1437 = vpack.c.b16 %v1257, %v1255
        %v1438 = vpack.c.b16 %v1260, %v1258
        %v1439 = vpack.c.b16 %v1261, %v1259
        %v1440 = vpack.c.b16 %v1264, %v1262
        %v1441 = vpack.c.b16 %v1265, %v1263
        %v1442 = vpack.c.b16 %v1268, %v1266
        %v1443 = vpack.c.b16 %v1269, %v1267
        %v1444 = vpack.c.b16 %v1272, %v1270
        %v1445 = vpack.c.b16 %v1273, %v1271
        %v1446 = vpack.c.b16 %v1276, %v1274
        %v1447 = vpack.c.b16 %v1277, %v1275
        %v1448 = vpack.c.b16 %v1280, %v1278
        %v1449 = vpack.c.b16 %v1281, %v1279
        %v1450 = vpack.c.b16 %v1284, %v1282
        %v1451 = vpack.c.b16 %v1285, %v1283
        %v1452 = vpack.c.b16 %v1288, %v1286
        %v1453 = vpack.c.b16 %v1289, %v1287
        %v1454 = vpack.c.b16 %v1292, %v1290
        %v1455 = vpack.c.b16 %v1293, %v1291
        %v1456 = vpack.c.b16 %v1296, %v1294
        %v1457 = vpack.c.b16 %v1297, %v1295
        %v1458 = vpack.c.b16 %v1300, %v1298
        %v1459 = vpack.c.b16 %v1301, %v1299
        %v1460 = vpack.c.b16 %v1304, %v1302
        %v1461 = vpack.c.b16 %v1305, %v1303
        %v1462 = vpack.c.b16 %v1308, %v1306
        %v1463 = vpack.c.b16 %v1309, %v1307
        %v1464 = vpack.c.b16 %v1312, %v1310
        %v1465 = vpack.c.b16 %v1313, %v1311
        %v1466 = vpack.c.b16 %v1316, %v1314
        %v1467 = vpack.c.b16 %v1317, %v1315
        %v1468 = vpack.c.b16 %v1320, %v1318
        %v1469 = vpack.c.b16 %v1321, %v1319
        %v1470 = vpack.c.b16 %v1324, %v1322
        %v1471 = vpack.c.b16 %v1325, %v1323
        %v1472 = vpack.c.b16 %v1328, %v1326
        %v1473 = vpack.c.b16 %v1329, %v1327
        %v1474 = vpack.c.b16 %v1332, %v1330
        %v1475 = vpack.c.b16 %v1333, %v1331
        %v1476 = vpack.c.b16 %v1336, %v1334
        %v1477 = vpack.c.b16 %v1337, %v1335
        %v1478 = vpack.c.b16 %v1340, %v1338
        %v1479 = vpack.c.b16 %v1341, %v1339
        %v1480 = vpack.c.b16 %v1344, %v1342
        %v1481 = vpack.c.b16 %v1345, %v1343
        %v1482 = vpack.c.b16 %v1348, %v1346
        %v1483 = vpack.c.b16 %v1349, %v1347
        %v1484 = vpack.c.b16 %v1352, %v1350
        %v1485 = vpack.c.b16 %v1353, %v1351
        %v1486 = vpack.c.b16 %v1356, %v1354
        %v1487 = vpack.c.b16 %v1357, %v1355
        %v1488 = vpack.c.b16 %v1360, %v1358
        %v1489 = vpack.c.b16 %v1361, %v1359
        %1618 = vmatprep.subr.bf16.mxu0 %v1363
        %1619 = vmatpush1.bf16.msra.mxu0 %v1362
        %1620 = vmatprep.subr.bf16.mxu0 %v1365
        %1621 = vmatpush1.bf16.msra.mxu0 %v1364
        %1622 = vmatprep.subr.bf16.mxu0 %v1367
        %1623 = vmatpush1.bf16.msra.mxu0 %v1366
        %1624 = vmatprep.subr.bf16.mxu0 %v1369
        %1625 = vmatpush1.bf16.msra.mxu0 %v1368
        %1626 = vmatprep.subr.bf16.mxu0 %v1371
        %1627 = vmatpush1.bf16.msra.mxu0 %v1370
        %1628 = vmatprep.subr.bf16.mxu0 %v1373
        %1629 = vmatpush1.bf16.msra.mxu0 %v1372
        %1630 = vmatprep.subr.bf16.mxu0 %v1375
        %1631 = vmatpush1.bf16.msra.mxu0 %v1374
        %1632 = vmatprep.subr.bf16.mxu0 %v1377
        %1633 = vmatpush1.bf16.msra.mxu0 %v1376
        %1634 = vmatprep.subr.bf16.mxu0 %v1379
        %1635 = vmatpush1.bf16.msra.mxu0 %v1378
        %1636 = vmatprep.subr.bf16.mxu0 %v1381
        %1637 = vmatpush1.bf16.msra.mxu0 %v1380
        %1638 = vmatprep.subr.bf16.mxu0 %v1383
        %1639 = vmatpush1.bf16.msra.mxu0 %v1382
        %1640 = vmatprep.subr.bf16.mxu0 %v1385
        %1641 = vmatpush1.bf16.msra.mxu0 %v1384
        %1642 = vmatprep.subr.bf16.mxu0 %v1387
        %1643 = vmatpush1.bf16.msra.mxu0 %v1386
        %1644 = vmatprep.subr.bf16.mxu0 %v1389
        %1645 = vmatpush1.bf16.msra.mxu0 %v1388
        %1646 = vmatprep.subr.bf16.mxu0 %v1391
        %1647 = vmatpush1.bf16.msra.mxu0 %v1390
        %1648 = vmatprep.subr.bf16.mxu0 %v1393
        %1649 = vmatpush1.bf16.msra.mxu0 %v1392
        %1650 = vmatprep.mubr.bf16.mxu0 %v963
        %1651 = vmatmul.mubr.bf16.gmra.mrb[0].mxu0 %v962
        %v1652 = vpop.f32.mrb[0].mxu0
        %v1653 = vadd.f32 %v943, %v1652
        %v1654 = vpop.f32.mrb[0].mxu0
        %v1655 = vadd.f32 %v947, %v1654
        %v1656 = vpop.f32.mrb[0].mxu0
        %v1657 = vpop.f32.mrb[0].mxu0
        %1658 = vdwg.mxu0
        %1659 = vmatprep.subr.bf16.mxu0 %v1395
        %1660 = vmatpush1.bf16.msra.mxu0 %v1394
        %1661 = vmatprep.subr.bf16.mxu0 %v1397
        %1662 = vmatpush1.bf16.msra.mxu0 %v1396
        %1663 = vmatprep.subr.bf16.mxu0 %v1399
        %1664 = vmatpush1.bf16.msra.mxu0 %v1398
        %1665 = vmatprep.subr.bf16.mxu0 %v1401
        %1666 = vmatpush1.bf16.msra.mxu0 %v1400
        %1667 = vmatprep.subr.bf16.mxu0 %v1403
        %1668 = vmatpush1.bf16.msra.mxu0 %v1402
        %1669 = vmatprep.subr.bf16.mxu0 %v1405
        %1670 = vmatpush1.bf16.msra.mxu0 %v1404
        %1671 = vmatprep.subr.bf16.mxu0 %v1407
        %1672 = vmatpush1.bf16.msra.mxu0 %v1406
        %1673 = vmatprep.subr.bf16.mxu0 %v1409
        %1674 = vmatpush1.bf16.msra.mxu0 %v1408
        %1675 = vmatprep.subr.bf16.mxu0 %v1411
        %1676 = vmatpush1.bf16.msra.mxu0 %v1410
        %1677 = vmatprep.subr.bf16.mxu0 %v1413
        %1678 = vmatpush1.bf16.msra.mxu0 %v1412
        %1679 = vmatprep.subr.bf16.mxu0 %v1415
        %1680 = vmatpush1.bf16.msra.mxu0 %v1414
        %1681 = vmatprep.subr.bf16.mxu0 %v1417
        %1682 = vmatpush1.bf16.msra.mxu0 %v1416
        %1683 = vmatprep.subr.bf16.mxu0 %v1419
        %1684 = vmatpush1.bf16.msra.mxu0 %v1418
        %1685 = vmatprep.subr.bf16.mxu0 %v1421
        %1686 = vmatpush1.bf16.msra.mxu0 %v1420
        %1687 = vmatprep.subr.bf16.mxu0 %v1423
        %1688 = vmatpush1.bf16.msra.mxu0 %v1422
        %1689 = vmatprep.subr.bf16.mxu0 %v1425
        %1690 = vmatpush1.bf16.msra.mxu0 %v1424
        %1691 = vmatprep.mubr.bf16.mxu0 %v965
        %1692 = vmatmul.mubr.bf16.gmra.mrb[0].mxu0 %v964
        %v1693 = vpop.f32.mrb[0].mxu0
        %v1694 = vadd.f32 %v1653, %v1693
        %v1695 = vpop.f32.mrb[0].mxu0
        %v1696 = vadd.f32 %v1655, %v1695
        %v1697 = vpop.f32.mrb[0].mxu0
        %v1698 = vpop.f32.mrb[0].mxu0
        %1699 = vdwg.mxu0
        %1700 = vmatprep.subr.bf16.mxu0 %v1427
        %1701 = vmatpush1.bf16.msra.mxu0 %v1426
        %1702 = vmatprep.subr.bf16.mxu0 %v1429
        %1703 = vmatpush1.bf16.msra.mxu0 %v1428
        %1704 = vmatprep.subr.bf16.mxu0 %v1431
        %1705 = vmatpush1.bf16.msra.mxu0 %v1430
        %1706 = vmatprep.subr.bf16.mxu0 %v1433
        %1707 = vmatpush1.bf16.msra.mxu0 %v1432
        %1708 = vmatprep.subr.bf16.mxu0 %v1435
        %1709 = vmatpush1.bf16.msra.mxu0 %v1434
        %1710 = vmatprep.subr.bf16.mxu0 %v1437
        %1711 = vmatpush1.bf16.msra.mxu0 %v1436
        %1712 = vmatprep.subr.bf16.mxu0 %v1439
        %1713 = vmatpush1.bf16.msra.mxu0 %v1438
        %1714 = vmatprep.subr.bf16.mxu0 %v1441
        %1715 = vmatpush1.bf16.msra.mxu0 %v1440
        %1716 = vmatprep.subr.bf16.mxu0 %v1443
        %1717 = vmatpush1.bf16.msra.mxu0 %v1442
        %1718 = vmatprep.subr.bf16.mxu0 %v1445
        %1719 = vmatpush1.bf16.msra.mxu0 %v1444
        %1720 = vmatprep.subr.bf16.mxu0 %v1447
        %1721 = vmatpush1.bf16.msra.mxu0 %v1446
        %1722 = vmatprep.subr.bf16.mxu0 %v1449
        %1723 = vmatpush1.bf16.msra.mxu0 %v1448
        %1724 = vmatprep.subr.bf16.mxu0 %v1451
        %1725 = vmatpush1.bf16.msra.mxu0 %v1450
        %1726 = vmatprep.subr.bf16.mxu0 %v1453
        %1727 = vmatpush1.bf16.msra.mxu0 %v1452
        %1728 = vmatprep.subr.bf16.mxu0 %v1455
        %1729 = vmatpush1.bf16.msra.mxu0 %v1454
        %1730 = vmatprep.subr.bf16.mxu0 %v1457
        %1731 = vmatpush1.bf16.msra.mxu0 %v1456
        %1732 = vmatprep.mubr.bf16.mxu0 %v967
        %1733 = vmatmul.mubr.bf16.gmra.mrb[0].mxu0 %v966
        %v1734 = vpop.f32.mrb[0].mxu0
        %v1735 = vadd.f32 %v1694, %v1734
        %v1736 = vpop.f32.mrb[0].mxu0
        %v1737 = vadd.f32 %v1696, %v1736
        %v1738 = vpop.f32.mrb[0].mxu0
        %v1739 = vpop.f32.mrb[0].mxu0
        %1740 = vdwg.mxu0
        %1741 = vmatprep.subr.bf16.mxu0 %v1459
        %1742 = vmatpush1.bf16.msra.mxu0 %v1458
        %1743 = vmatprep.subr.bf16.mxu0 %v1461
        %1744 = vmatpush1.bf16.msra.mxu0 %v1460
        %1745 = vmatprep.subr.bf16.mxu0 %v1463
        %1746 = vmatpush1.bf16.msra.mxu0 %v1462
        %1747 = vmatprep.subr.bf16.mxu0 %v1465
        %1748 = vmatpush1.bf16.msra.mxu0 %v1464
        %1749 = vmatprep.subr.bf16.mxu0 %v1467
        %1750 = vmatpush1.bf16.msra.mxu0 %v1466
        %1751 = vmatprep.subr.bf16.mxu0 %v1469
        %1752 = vmatpush1.bf16.msra.mxu0 %v1468
        %1753 = vmatprep.subr.bf16.mxu0 %v1471
        %1754 = vmatpush1.bf16.msra.mxu0 %v1470
        %1755 = vmatprep.subr.bf16.mxu0 %v1473
        %1756 = vmatpush1.bf16.msra.mxu0 %v1472
        %1757 = vmatprep.subr.bf16.mxu0 %v1475
        %1758 = vmatpush1.bf16.msra.mxu0 %v1474
        %1759 = vmatprep.subr.bf16.mxu0 %v1477
        %1760 = vmatpush1.bf16.msra.mxu0 %v1476
        %1761 = vmatprep.subr.bf16.mxu0 %v1479
        %1762 = vmatpush1.bf16.msra.mxu0 %v1478
        %1763 = vmatprep.subr.bf16.mxu0 %v1481
        %1764 = vmatpush1.bf16.msra.mxu0 %v1480
        %1765 = vmatprep.subr.bf16.mxu0 %v1483
        %1766 = vmatpush1.bf16.msra.mxu0 %v1482
        %1767 = vmatprep.subr.bf16.mxu0 %v1485
        %1768 = vmatpush1.bf16.msra.mxu0 %v1484
        %1769 = vmatprep.subr.bf16.mxu0 %v1487
        %1770 = vmatpush1.bf16.msra.mxu0 %v1486
        %1771 = vmatprep.subr.bf16.mxu0 %v1489
        %1772 = vmatpush1.bf16.msra.mxu0 %v1488
        %1773 = vmatprep.mubr.bf16.mxu0 %v969
        %1774 = vmatmul.mubr.bf16.gmra.mrb[0].mxu0 %v968
        %v1775 = vpop.f32.mrb[0].mxu0
        %v1776 = vadd.f32 %v1735, %v1775
        %v1777 = vpop.f32.mrb[0].mxu0
        %v1778 = vadd.f32 %v1737, %v1777
        %v1779 = vpop.f32.mrb[0].mxu0
        %v1780 = vpop.f32.mrb[0].mxu0
        %1781 = vdwg.mxu0
        %1782 = vst [vmem:[%s804] sm:$0xff] %v1776
        %1783 = vst [vmem:[%s804 + $0x8] sm:$0xff] %v1778
        %s1784 = smul.u32 2, %s20
        %p1785 = scmp.lt.s32.totalorder %s19, 0
        %s1786 = scalar_select %p1785, %s19, 0
        %p1787 = scmp.lt.s32.totalorder %s1784, 7
        %s1788 = scalar_select %p1787, %s1784, 7
        %s1789 = smul.addr %s1786, 8
        %s1790 = sadd.s32 %s1788, %s1789
        %s1791 = smul.addr %s1790, 8
        %s1792 = scalar_lea.vmem %s3, %s1791
        // Predicated region
        $region71: #{resnet18_dense_forward.44} parent=65 // pred_check
          %p1793 = pneg %p135
        $region72: #{resnet18_dense_forward.44} parent=65 // pred_check_branch
          %1795 = sbr.rel (%p1793) target = $region74
        $region73: #{resnet18_dense_forward.44} parent=65 // pred_region
          %s1796 = smul.u32 2, %s20
        $region74: #{resnet18_dense_forward.44} parent=65 // pred_fallthru
          _
      $region66: #{resnet18_dense_forward.44} parent=5 // pred_fallthru
        _
      %p1797 = scmp.le.s32.totalorder 2, %s9
      // Predicated region
      $region75: #{resnet18_dense_forward.44} parent=5 // pred_check
        %p1798 = pneg %p1797
      $region76: #{resnet18_dense_forward.44} parent=5 // pred_check_branch
        %1800 = sbr.rel (%p1798) target = $region78
      $region77: #{resnet18_dense_forward.44} parent=5 // pred_region
        %s1801 = ssub.s32 %s9, 2
        // Predicated region
        $region79: #{resnet18_dense_forward.44} parent=77 // pred_check
          %p1802 = pneg %p141
        $region80: #{resnet18_dense_forward.44} parent=77 // pred_check_branch
          %1804 = sbr.rel (%p1802) target = $region82
        $region81: #{resnet18_dense_forward.44} parent=77 // pred_region
          %s1805 = smul.u32 2, %s23
          %p1806 = scmp.lt.s32.totalorder %s22, 0
          %s1807 = scalar_select %p1806, %s22, 0
          %p1808 = scmp.lt.s32.totalorder %s1805, 7
          %s1809 = scalar_select %p1808, %s1805, 7
          %s1810 = smul.addr %s1807, 8
          %s1811 = sadd.s32 %s1809, %s1810
          %s1812 = smul.addr %s1811, 8
          %s1813 = scalar_lea.vmem %s3, %s1812
        $region82: #{resnet18_dense_forward.44} parent=77 // pred_fallthru
          _
      $region78: #{resnet18_dense_forward.44} parent=5 // pred_fallthru
        _
    $region6: #{resnet18_dense_forward.44} parent=1 // loop_footer
      %s13 = sadd.s32 1, %s9
    $region7: #{resnet18_dense_forward.44} parent=1 // loop_footer_branch
      %8 = sbr.rel target = $region3
    $region8: #{resnet18_dense_forward.44} parent=1 // loop_exit
      _

</llo_original>
